<compile_context>
chip_gen: v6e
topology: v6e:2x2x1
jax: 0.10.0
libtpu: 0.0.40
codegen_flags: <defaults>
</compile_context>

<pallas_src>
import functools

import numpy as np

import jax
import jax.numpy as jnp
from jax.experimental import pallas as pl
from jax.experimental.pallas import tpu as pltpu


# Set to jnp.float32 for exact f32 matmuls (bf16 operands + f32 accumulation
# per perf review for v6e/v7x MXU throughput).
_MXU_DTYPE = jnp.bfloat16


def _mdot(a, b):
    """MXU matmul with bf16 operands and f32 accumulation."""
    return jnp.dot(a.astype(_MXU_DTYPE), b.astype(_MXU_DTYPE),
                   preferred_element_type=jnp.float32)


def _gelu(x):
    # TODO(synk): PyTorch nn.GELU() uses exact erf; tanh approx used here.
    return jax.nn.gelu(x, approximate=True)


def _tap(x, sy, sx, H, W, h_idx, w_idx):
    """Shifted conv tap with zero padding, channel-major.

    x: (Cch, HW).  Returns y with y[:, h*W + w] = x[:, (h+sy)*W + (w+sx)],
    zero where (h+sy, w+sx) is out of bounds.  Implemented as a static lane
    rotation (XLU) plus a border mask -- no padded slabs, no concats.
    """
    HW = H * W
    s = sy * W + sx
    shift = (-s) % HW
    xs = x if shift == 0 else pltpu.roll(x, shift=shift, axis=1)
    if sy == 0 and sx == 0:
        return xs
    m = None
    if sy > 0:
        m = h_idx < (H - sy)
    elif sy < 0:
        m = h_idx >= (-sy)
    if sx > 0:
        c = w_idx < (W - sx)
        m = c if m is None else (m & c)
    elif sx < 0:
        c = w_idx >= (-sx)
        m = c if m is None else (m & c)
    return xs * m.astype(xs.dtype)


def _dwconv(x, wt_ref, K, H, W, h_idx, w_idx):
    """Depthwise KxK SAME conv, channel-major.

    x: (Cch, HW); wt_ref: (K*K, Cch, 1) tap-major per-channel weights."""
    p = K // 2
    acc = jnp.zeros(x.shape, jnp.float32)
    t = 0
    for dy in range(K):
        for dx in range(K):
            xv = _tap(x, dy - p, dx - p, H, W, h_idx, w_idx)
            acc = acc + wt_ref[t] * xv          # (Cch,1) lane-broadcast FMA
            t += 1
    return acc


def _conv3x3(x, wt_ref, H, W, h_idx, w_idx):
    """Dense 3x3 SAME conv (no bias) as 9 accumulating MXU dots.

    x: (Cin, HW); wt_ref: (9, Cout, Cin).  Returns (Cout, HW) f32."""
    Cout = wt_ref.shape[1]
    acc = jnp.zeros((Cout, x.shape[1]), jnp.float32)
    t = 0
    for dy in range(3):
        for dx in range(3):
            xv = _tap(x, dy - 1, dx - 1, H, W, h_idx, w_idx)
            acc = acc + _mdot(wt_ref[t], xv)
            t += 1
    return acc


# --------------------------------------------------------------------------
# Fully fused kernel: estimator + modulation + denoiser (per batch element)
# --------------------------------------------------------------------------

def _retinexformer_kernel(idx_ref, x_ref,
                          w1_ref, b1_ref, wd_ref, bd_ref, w2_ref, b2_ref,
                          we_ref, wqkv_ref, wproj_ref, bproj_ref,
                          wpe1_ref, wpe2_ref, lng_ref, lnb_ref,
                          wffin_ref, wffdw_ref, wffout_ref, wmap_ref,
                          rescale_ref, o_ref, *, H, W):
    HW = H * W
    F = w1_ref.shape[0]

    h_idx = idx_ref[0]                                   # (1, HW) int32
    w_idx = idx_ref[1]                                   # (1, HW) int32
    x2d = x_ref[0]                                       # (C, HW)

    # ---- Illumination_Estimator ----
    # conv1 1x1: mean-channel already folded into w1_eff by the wrapper.
    fea = _mdot(w1_ref[...], x2d) + b1_ref[...]          # (F, HW)
    # depth_conv 5x5 (depthwise) + bias -> illu_fea
    illu_fea = _dwconv(fea, wd_ref, 5, H, W, h_idx, w_idx) + bd_ref[...]
    # conv2 1x1 + bias -> illu_map ; retinex modulation
    illu_map = _mdot(w2_ref[...], illu_fea) + b2_ref[...]  # (C, HW)
    img = x2d * illu_map + x2d                             # (C, HW)

    # ---- Denoiser: embedding 3x3 conv (C -> F, no bias) ----
    emb = _conv3x3(img, we_ref, H, W, h_idx, w_idx)        # (F, HW)

    # ---- IG-MSA (heads = 1): fused QKV, channel-major is the natural layout ----
    qkv = _mdot(wqkv_ref[...], emb)                        # (3F, HW)
    q = qkv[0:F]
    k = qkv[F:2 * F]
    v_inp = qkv[2 * F:3 * F]
    v = v_inp * illu_fea

    # F.normalize over the HW axis (eps=1e-12) via MXU ones-dots (f32).
    ones_hw = jnp.ones((HW, 1), jnp.float32)
    qss = jnp.dot(q * q, ones_hw, preferred_element_type=jnp.float32)  # (F, 1)
    kss = jnp.dot(k * k, ones_hw, preferred_element_type=jnp.float32)
    qn = q * jax.lax.rsqrt(jnp.maximum(qss, 1e-24))
    kn = k * jax.lax.rsqrt(jnp.maximum(kss, 1e-24))

    # (F, F) channel attention: contract over HW directly (kn @ qn^T).
    attn = jax.lax.dot_general(kn.astype(_MXU_DTYPE), qn.astype(_MXU_DTYPE),
                               (((1,), (1,)), ((), ())),
                               preferred_element_type=jnp.float32)
    attn = attn * rescale_ref[0]
    attn = attn - jnp.max(attn, axis=-1, keepdims=True)
    attn = jnp.exp(attn)
    attn = attn / jnp.sum(attn, axis=-1, keepdims=True)
    y = _mdot(attn, v)                                     # (F, HW)
    out_c = _mdot(wproj_ref[...], y) + bproj_ref[...]

    # pos_emb(v_inp): dw3x3 -> GELU -> dw3x3 (SAME, no bias)
    t = _gelu(_dwconv(v_inp, wpe1_ref, 3, H, W, h_idx, w_idx))
    out_p = _dwconv(t, wpe2_ref, 3, H, W, h_idx, w_idx)

    x1 = out_c + out_p + emb                               # (F, HW)

    # ---- PreNorm(LayerNorm over channels) + FeedForward + residual ----
    onesF = jnp.full((1, F), 1.0 / F, jnp.float32)
    mu = jnp.dot(onesF, x1, preferred_element_type=jnp.float32)        # (1, HW)
    xc = x1 - mu
    var = jnp.dot(onesF, xc * xc, preferred_element_type=jnp.float32)  # (1, HW)
    xn = xc * jax.lax.rsqrt(var + 1e-5)
    xn = xn * lng_ref[...] + lnb_ref[...]

    h1 = _gelu(_mdot(wffin_ref[...], xn))                  # (Fh, HW)
    h2 = _gelu(_dwconv(h1, wffdw_ref, 3, H, W, h_idx, w_idx))
    x2 = _mdot(wffout_ref[...], h2) + x1                   # (F, HW)

    # ---- mapping: dense 3x3 conv (F -> C, no bias) + global residual ----
    o_ref[0] = _conv3x3(x2, wmap_ref, H, W, h_idx, w_idx) + img


# --------------------------------------------------------------------------
# Wrapper: layout plumbing + tiny weight preprocessing (done once per jit)
# --------------------------------------------------------------------------

# TODO(synk): raise vmem_limit_bytes (v5e/v6e) and add H row-blocking (v7x)
# when moving to large H*W; the whole-image blocks here are tiny.
_CP = pltpu.CompilerParams(
    dimension_semantics=("parallel",),
    vmem_limit_bytes=32 * 1024 * 1024,
)


def retinexformer_forward(x_nchw, params):
    B, C, H, W = x_nchw.shape
    HW = H * W
    F = params["w1"].shape[0]

    # NCHW is already channel-major: just flatten the spatial dims (no transpose).
    x = x_nchw.astype(jnp.float32).reshape(B, C, HW)

    # Static (h, w) coordinate per flattened position, for the tap border masks.
    hh, ww = np.meshgrid(np.arange(H), np.arange(W), indexing="ij")
    idx = jnp.asarray(
        np.stack([hh.reshape(1, HW), ww.reshape(1, HW)], axis=0), dtype=jnp.int32)

    # Fold the mean channel of conv1 into its weight:
    #   conv1([x, mean_c(x)]) == (Wx + Wmean/C) @ x + b1.
    w1 = params["w1"]                                  # (F, C+1)
    w1_eff = w1[:, :C] + w1[:, C:] / C                 # (F, C)

    # Fused QKV weight (single (3F, F) matmul in-kernel).
    wqkv = jnp.concatenate([params["wq"], params["wk"], params["wv"]], axis=0)

    weights = (
        w1_eff, params["b1"], params["wd"], params["bd"], params["w2"], params["b2"],
        params["we"], wqkv, params["wproj"], params["bproj"],
        params["wpe1"], params["wpe2"], params["ln_g"], params["ln_b"],
        params["wff_in"], params["wff_dw"], params["wff_out"], params["wmap"],
    )

    def w_spec(a):
        nd = a.ndim
        return pl.BlockSpec(a.shape, lambda b, nd=nd: (0,) * nd)

    act_spec = pl.BlockSpec((1, C, HW), lambda b: (b, 0, 0))
    idx_spec = pl.BlockSpec((2, 1, HW), lambda b: (0, 0, 0))
    smem_spec = pl.BlockSpec(memory_space=pltpu.MemorySpace.SMEM)

    out = pl.pallas_call(
        functools.partial(_retinexformer_kernel, H=H, W=W),
        grid=(B,),
        out_shape=jax.ShapeDtypeStruct((B, C, HW), jnp.float32),
        in_specs=[idx_spec, act_spec] + [w_spec(a) for a in weights] + [smem_spec],
        out_specs=act_spec,
        compiler_params=_CP,
    )(idx, x, *weights, params["rescale"])

    return out.reshape(B, C, H, W)


# --------------------------------------------------------------------------
# Deterministic parameter init (kernel-friendly layouts: (out, in) matrices,
# tap-major (K*K, C, 1) depthwise weights, (K*K, Cout, Cin) dense conv taps)
# --------------------------------------------------------------------------

def init_params(key, C=3, F=16, mult=4):
    Fh = F * mult
    keys = jax.random.split(key, 16)

    def nrm(k, shape, scale=0.05):
        return (scale * jax.random.normal(k, shape)).astype(jnp.float32)

    p = {}
    # Illumination estimator
    p["w1"] = nrm(keys[0], (F, C + 1))          # 1x1 conv (C+1 -> F), bias
    p["b1"] = jnp.zeros((F, 1), jnp.float32)
    p["wd"] = nrm(keys[1], (25, F, 1))          # depthwise 5x5 (tap-major), bias
    p["bd"] = jnp.zeros((F, 1), jnp.float32)
    p["w2"] = nrm(keys[2], (C, F))              # 1x1 conv (F -> C), bias
    p["b2"] = jnp.zeros((C, 1), jnp.float32)
    # Denoiser embedding / mapping (3x3, no bias)
    p["we"] = nrm(keys[3], (9, F, C))
    p["wmap"] = nrm(keys[4], (9, C, F))
    # IG-MSA (heads = 1, dim_head = F)
    p["wq"] = nrm(keys[5], (F, F))
    p["wk"] = nrm(keys[6], (F, F))
    p["wv"] = nrm(keys[7], (F, F))
    p["rescale"] = jnp.ones((1,), jnp.float32)
    p["wproj"] = nrm(keys[8], (F, F))
    p["bproj"] = jnp.zeros((F, 1), jnp.float32)
    p["wpe1"] = nrm(keys[9], (9, F, 1))         # pos_emb depthwise, no bias
    p["wpe2"] = nrm(keys[10], (9, F, 1))
    # PreNorm + FeedForward (mult=4)
    p["ln_g"] = jnp.ones((F, 1), jnp.float32)
    p["ln_b"] = jnp.zeros((F, 1), jnp.float32)
    p["wff_in"] = nrm(keys[11], (Fh, F))
    p["wff_dw"] = nrm(keys[12], (9, Fh, 1))
    p["wff_out"] = nrm(keys[13], (F, Fh))
    return p


if __name__ == "__main__":
    key = jax.random.PRNGKey(0)
    x = jax.random.normal(key, (2, 3, 16, 16), jnp.float32)   # [b, c, h, w]
    params = init_params(jax.random.PRNGKey(42), C=3, F=16)

    fwd = jax.jit(functools.partial(retinexformer_forward, params=params))
    out = fwd(x)
    jax.block_until_ready(out)

    assert out.shape == x.shape, (out.shape, x.shape)
    assert out.dtype == jnp.float32
    assert bool(jnp.all(jnp.isfinite(out)))
    print("KERNEL_OK")
</pallas_src>

<mosaic_0001>
module attributes {stable_mosaic.version = 11 : i64} {
  func.func @_retinexformer_kernel(%arg0: i32, %arg1: memref<2x1x256xi32, #tpu.memory_space<vmem>>, %arg2: memref<1x3x256xf32, #tpu.memory_space<vmem>>, %arg3: memref<16x3xf32, #tpu.memory_space<vmem>>, %arg4: memref<16x1xf32, #tpu.memory_space<vmem>>, %arg5: memref<25x16x1xf32, #tpu.memory_space<vmem>>, %arg6: memref<16x1xf32, #tpu.memory_space<vmem>>, %arg7: memref<3x16xf32, #tpu.memory_space<vmem>>, %arg8: memref<3x1xf32, #tpu.memory_space<vmem>>, %arg9: memref<9x16x3xf32, #tpu.memory_space<vmem>>, %arg10: memref<48x16xf32, #tpu.memory_space<vmem>>, %arg11: memref<16x16xf32, #tpu.memory_space<vmem>>, %arg12: memref<16x1xf32, #tpu.memory_space<vmem>>, %arg13: memref<9x16x1xf32, #tpu.memory_space<vmem>>, %arg14: memref<9x16x1xf32, #tpu.memory_space<vmem>>, %arg15: memref<16x1xf32, #tpu.memory_space<vmem>>, %arg16: memref<16x1xf32, #tpu.memory_space<vmem>>, %arg17: memref<64x16xf32, #tpu.memory_space<vmem>>, %arg18: memref<9x64x1xf32, #tpu.memory_space<vmem>>, %arg19: memref<16x64xf32, #tpu.memory_space<vmem>>, %arg20: memref<9x3x16xf32, #tpu.memory_space<vmem>>, %arg21: memref<1xf32, #tpu.memory_space<smem>>, %arg22: memref<1x3x256xf32, #tpu.memory_space<vmem>>) attributes {dimension_semantics = [#tpu.dimension_semantics<parallel>], iteration_bounds = array<i64: 2>, scalar_prefetch = 0 : i64, scratch_operands = 0 : i64, tpu.core_type = #tpu.core_type<tc>, window_params = [{pipeline_mode = #tpu.pipeline_mode<synchronous>, transform_indices = @transform_0, window_bounds = array<i64: 2, 1, 256>}, {transform_indices = @transform_1, window_bounds = array<i64: 1, 3, 256>}, {pipeline_mode = #tpu.pipeline_mode<synchronous>, transform_indices = @transform_2, window_bounds = array<i64: 16, 3>}, {pipeline_mode = #tpu.pipeline_mode<synchronous>, transform_indices = @transform_3, window_bounds = array<i64: 16, 1>}, {pipeline_mode = #tpu.pipeline_mode<synchronous>, transform_indices = @transform_4, window_bounds = array<i64: 25, 16, 1>}, {pipeline_mode = #tpu.pipeline_mode<synchronous>, transform_indices = @transform_5, window_bounds = array<i64: 16, 1>}, {pipeline_mode = #tpu.pipeline_mode<synchronous>, transform_indices = @transform_6, window_bounds = array<i64: 3, 16>}, {pipeline_mode = #tpu.pipeline_mode<synchronous>, transform_indices = @transform_7, window_bounds = array<i64: 3, 1>}, {pipeline_mode = #tpu.pipeline_mode<synchronous>, transform_indices = @transform_8, window_bounds = array<i64: 9, 16, 3>}, {pipeline_mode = #tpu.pipeline_mode<synchronous>, transform_indices = @transform_9, window_bounds = array<i64: 48, 16>}, {pipeline_mode = #tpu.pipeline_mode<synchronous>, transform_indices = @transform_10, window_bounds = array<i64: 16, 16>}, {pipeline_mode = #tpu.pipeline_mode<synchronous>, transform_indices = @transform_11, window_bounds = array<i64: 16, 1>}, {pipeline_mode = #tpu.pipeline_mode<synchronous>, transform_indices = @transform_12, window_bounds = array<i64: 9, 16, 1>}, {pipeline_mode = #tpu.pipeline_mode<synchronous>, transform_indices = @transform_13, window_bounds = array<i64: 9, 16, 1>}, {pipeline_mode = #tpu.pipeline_mode<synchronous>, transform_indices = @transform_14, window_bounds = array<i64: 16, 1>}, {pipeline_mode = #tpu.pipeline_mode<synchronous>, transform_indices = @transform_15, window_bounds = array<i64: 16, 1>}, {pipeline_mode = #tpu.pipeline_mode<synchronous>, transform_indices = @transform_16, window_bounds = array<i64: 64, 16>}, {pipeline_mode = #tpu.pipeline_mode<synchronous>, transform_indices = @transform_17, window_bounds = array<i64: 9, 64, 1>}, {pipeline_mode = #tpu.pipeline_mode<synchronous>, transform_indices = @transform_18, window_bounds = array<i64: 16, 64>}, {pipeline_mode = #tpu.pipeline_mode<synchronous>, transform_indices = @transform_19, window_bounds = array<i64: 9, 3, 16>}, {transform_indices = @transform_20, window_bounds = array<i64: 1>}, {transform_indices = @transform_21, window_bounds = array<i64: 1, 3, 256>}]} {
    %c0 = arith.constant 0 : index
    %c0_0 = arith.constant 0 : index
    %c0_1 = arith.constant 0 : index
    %0 = vector.load %arg1[%c0, %c0_0, %c0_1] : memref<2x1x256xi32, #tpu.memory_space<vmem>>, vector<1x1x256xi32>
    %1 = vector.shape_cast %0 : vector<1x1x256xi32> to vector<1x256xi32>
    %c1 = arith.constant 1 : index
    %c0_2 = arith.constant 0 : index
    %c0_3 = arith.constant 0 : index
    %2 = vector.load %arg1[%c1, %c0_2, %c0_3] : memref<2x1x256xi32, #tpu.memory_space<vmem>>, vector<1x1x256xi32>
    %3 = vector.shape_cast %2 : vector<1x1x256xi32> to vector<1x256xi32>
    %c0_4 = arith.constant 0 : index
    %c0_5 = arith.constant 0 : index
    %c0_6 = arith.constant 0 : index
    %4 = vector.load %arg2[%c0_4, %c0_5, %c0_6] : memref<1x3x256xf32, #tpu.memory_space<vmem>>, vector<1x3x256xf32>
    %5 = vector.shape_cast %4 : vector<1x3x256xf32> to vector<3x256xf32>
    %c0_7 = arith.constant 0 : index
    %c0_8 = arith.constant 0 : index
    %6 = vector.load %arg3[%c0_7, %c0_8] : memref<16x3xf32, #tpu.memory_space<vmem>>, vector<16x3xf32>
    %7 = arith.truncf %6 : vector<16x3xf32> to vector<16x3xbf16>
    %8 = arith.truncf %5 : vector<3x256xf32> to vector<3x256xbf16>
    %cst = arith.constant dense<0.000000e+00> : vector<16x256xf32>
    %9 = tpu.matmul %7, %8, %cst {dimension_numbers = #tpu.dot_dimension_numbers<[1], [0], [0], [1], [0, 0, 1, 1], [], []>} : vector<16x3xbf16>, vector<3x256xbf16>, vector<16x256xf32> -> vector<16x256xf32>
    %c0_9 = arith.constant 0 : index
    %c0_10 = arith.constant 0 : index
    %10 = vector.load %arg4[%c0_9, %c0_10] : memref<16x1xf32, #tpu.memory_space<vmem>>, vector<16x1xf32>
    %11 = vector.broadcast %10 : vector<16x1xf32> to vector<16x256xf32>
    %12 = arith.addf %9, %11 : vector<16x256xf32>
    %cst_11 = arith.constant 0.000000e+00 : f32
    %13 = vector.broadcast %cst_11 : f32 to vector<16x256xf32>
    %c34_i32 = arith.constant 34 : i32
    %14 = tpu.dynamic_rotate %12 by %c34_i32 dim 1 : vector<16x256xf32>, i32 -> vector<16x256xf32>
    %c2_i32 = arith.constant 2 : i32
    %15 = vector.broadcast %c2_i32 : i32 to vector<1x256xi32>
    %16 = arith.cmpi sge, %1, %15 : vector<1x256xi32>
    %c2_i32_12 = arith.constant 2 : i32
    %17 = vector.broadcast %c2_i32_12 : i32 to vector<1x256xi32>
    %18 = arith.cmpi sge, %3, %17 : vector<1x256xi32>
    %19 = arith.andi %16, %18 : vector<1x256xi1>
    %20 = arith.extui %19 : vector<1x256xi1> to vector<1x256xi32>
    %21 = arith.sitofp %20 : vector<1x256xi32> to vector<1x256xf32>
    %22 = vector.broadcast %21 : vector<1x256xf32> to vector<16x256xf32>
    %23 = arith.mulf %14, %22 : vector<16x256xf32>
    %c0_13 = arith.constant 0 : index
    %c0_14 = arith.constant 0 : index
    %c0_15 = arith.constant 0 : index
    %24 = vector.load %arg5[%c0_13, %c0_14, %c0_15] : memref<25x16x1xf32, #tpu.memory_space<vmem>>, vector<1x16x1xf32>
    %25 = vector.shape_cast %24 : vector<1x16x1xf32> to vector<16x1xf32>
    %26 = vector.broadcast %25 : vector<16x1xf32> to vector<16x256xf32>
    %27 = arith.mulf %26, %23 : vector<16x256xf32>
    %28 = arith.addf %13, %27 : vector<16x256xf32>
    %c33_i32 = arith.constant 33 : i32
    %29 = tpu.dynamic_rotate %12 by %c33_i32 dim 1 : vector<16x256xf32>, i32 -> vector<16x256xf32>
    %c2_i32_16 = arith.constant 2 : i32
    %30 = vector.broadcast %c2_i32_16 : i32 to vector<1x256xi32>
    %31 = arith.cmpi sge, %1, %30 : vector<1x256xi32>
    %c1_i32 = arith.constant 1 : i32
    %32 = vector.broadcast %c1_i32 : i32 to vector<1x256xi32>
    %33 = arith.cmpi sge, %3, %32 : vector<1x256xi32>
    %34 = arith.andi %31, %33 : vector<1x256xi1>
    %35 = arith.extui %34 : vector<1x256xi1> to vector<1x256xi32>
    %36 = arith.sitofp %35 : vector<1x256xi32> to vector<1x256xf32>
    %37 = vector.broadcast %36 : vector<1x256xf32> to vector<16x256xf32>
    %38 = arith.mulf %29, %37 : vector<16x256xf32>
    %c1_17 = arith.constant 1 : index
    %c0_18 = arith.constant 0 : index
    %c0_19 = arith.constant 0 : index
    %39 = vector.load %arg5[%c1_17, %c0_18, %c0_19] : memref<25x16x1xf32, #tpu.memory_space<vmem>>, vector<1x16x1xf32>
    %40 = vector.shape_cast %39 : vector<1x16x1xf32> to vector<16x1xf32>
    %41 = vector.broadcast %40 : vector<16x1xf32> to vector<16x256xf32>
    %42 = arith.mulf %41, %38 : vector<16x256xf32>
    %43 = arith.addf %28, %42 : vector<16x256xf32>
    %c32_i32 = arith.constant 32 : i32
    %44 = tpu.dynamic_rotate %12 by %c32_i32 dim 1 : vector<16x256xf32>, i32 -> vector<16x256xf32>
    %c2_i32_20 = arith.constant 2 : i32
    %45 = vector.broadcast %c2_i32_20 : i32 to vector<1x256xi32>
    %46 = arith.cmpi sge, %1, %45 : vector<1x256xi32>
    %47 = arith.extui %46 : vector<1x256xi1> to vector<1x256xi32>
    %48 = arith.sitofp %47 : vector<1x256xi32> to vector<1x256xf32>
    %49 = vector.broadcast %48 : vector<1x256xf32> to vector<16x256xf32>
    %50 = arith.mulf %44, %49 : vector<16x256xf32>
    %c2 = arith.constant 2 : index
    %c0_21 = arith.constant 0 : index
    %c0_22 = arith.constant 0 : index
    %51 = vector.load %arg5[%c2, %c0_21, %c0_22] : memref<25x16x1xf32, #tpu.memory_space<vmem>>, vector<1x16x1xf32>
    %52 = vector.shape_cast %51 : vector<1x16x1xf32> to vector<16x1xf32>
    %53 = vector.broadcast %52 : vector<16x1xf32> to vector<16x256xf32>
    %54 = arith.mulf %53, %50 : vector<16x256xf32>
    %55 = arith.addf %43, %54 : vector<16x256xf32>
    %c31_i32 = arith.constant 31 : i32
    %56 = tpu.dynamic_rotate %12 by %c31_i32 dim 1 : vector<16x256xf32>, i32 -> vector<16x256xf32>
    %c2_i32_23 = arith.constant 2 : i32
    %57 = vector.broadcast %c2_i32_23 : i32 to vector<1x256xi32>
    %58 = arith.cmpi sge, %1, %57 : vector<1x256xi32>
    %c15_i32 = arith.constant 15 : i32
    %59 = vector.broadcast %c15_i32 : i32 to vector<1x256xi32>
    %60 = arith.cmpi slt, %3, %59 : vector<1x256xi32>
    %61 = arith.andi %58, %60 : vector<1x256xi1>
    %62 = arith.extui %61 : vector<1x256xi1> to vector<1x256xi32>
    %63 = arith.sitofp %62 : vector<1x256xi32> to vector<1x256xf32>
    %64 = vector.broadcast %63 : vector<1x256xf32> to vector<16x256xf32>
    %65 = arith.mulf %56, %64 : vector<16x256xf32>
    %c3 = arith.constant 3 : index
    %c0_24 = arith.constant 0 : index
    %c0_25 = arith.constant 0 : index
    %66 = vector.load %arg5[%c3, %c0_24, %c0_25] : memref<25x16x1xf32, #tpu.memory_space<vmem>>, vector<1x16x1xf32>
    %67 = vector.shape_cast %66 : vector<1x16x1xf32> to vector<16x1xf32>
    %68 = vector.broadcast %67 : vector<16x1xf32> to vector<16x256xf32>
    %69 = arith.mulf %68, %65 : vector<16x256xf32>
    %70 = arith.addf %55, %69 : vector<16x256xf32>
    %c30_i32 = arith.constant 30 : i32
    %71 = tpu.dynamic_rotate %12 by %c30_i32 dim 1 : vector<16x256xf32>, i32 -> vector<16x256xf32>
    %c2_i32_26 = arith.constant 2 : i32
    %72 = vector.broadcast %c2_i32_26 : i32 to vector<1x256xi32>
    %73 = arith.cmpi sge, %1, %72 : vector<1x256xi32>
    %c14_i32 = arith.constant 14 : i32
    %74 = vector.broadcast %c14_i32 : i32 to vector<1x256xi32>
    %75 = arith.cmpi slt, %3, %74 : vector<1x256xi32>
    %76 = arith.andi %73, %75 : vector<1x256xi1>
    %77 = arith.extui %76 : vector<1x256xi1> to vector<1x256xi32>
    %78 = arith.sitofp %77 : vector<1x256xi32> to vector<1x256xf32>
    %79 = vector.broadcast %78 : vector<1x256xf32> to vector<16x256xf32>
    %80 = arith.mulf %71, %79 : vector<16x256xf32>
    %c4 = arith.constant 4 : index
    %c0_27 = arith.constant 0 : index
    %c0_28 = arith.constant 0 : index
    %81 = vector.load %arg5[%c4, %c0_27, %c0_28] : memref<25x16x1xf32, #tpu.memory_space<vmem>>, vector<1x16x1xf32>
    %82 = vector.shape_cast %81 : vector<1x16x1xf32> to vector<16x1xf32>
    %83 = vector.broadcast %82 : vector<16x1xf32> to vector<16x256xf32>
    %84 = arith.mulf %83, %80 : vector<16x256xf32>
    %85 = arith.addf %70, %84 : vector<16x256xf32>
    %c18_i32 = arith.constant 18 : i32
    %86 = tpu.dynamic_rotate %12 by %c18_i32 dim 1 : vector<16x256xf32>, i32 -> vector<16x256xf32>
    %c1_i32_29 = arith.constant 1 : i32
    %87 = vector.broadcast %c1_i32_29 : i32 to vector<1x256xi32>
    %88 = arith.cmpi sge, %1, %87 : vector<1x256xi32>
    %c2_i32_30 = arith.constant 2 : i32
    %89 = vector.broadcast %c2_i32_30 : i32 to vector<1x256xi32>
    %90 = arith.cmpi sge, %3, %89 : vector<1x256xi32>
    %91 = arith.andi %88, %90 : vector<1x256xi1>
    %92 = arith.extui %91 : vector<1x256xi1> to vector<1x256xi32>
    %93 = arith.sitofp %92 : vector<1x256xi32> to vector<1x256xf32>
    %94 = vector.broadcast %93 : vector<1x256xf32> to vector<16x256xf32>
    %95 = arith.mulf %86, %94 : vector<16x256xf32>
    %c5 = arith.constant 5 : index
    %c0_31 = arith.constant 0 : index
    %c0_32 = arith.constant 0 : index
    %96 = vector.load %arg5[%c5, %c0_31, %c0_32] : memref<25x16x1xf32, #tpu.memory_space<vmem>>, vector<1x16x1xf32>
    %97 = vector.shape_cast %96 : vector<1x16x1xf32> to vector<16x1xf32>
    %98 = vector.broadcast %97 : vector<16x1xf32> to vector<16x256xf32>
    %99 = arith.mulf %98, %95 : vector<16x256xf32>
    %100 = arith.addf %85, %99 : vector<16x256xf32>
    %c17_i32 = arith.constant 17 : i32
    %101 = tpu.dynamic_rotate %12 by %c17_i32 dim 1 : vector<16x256xf32>, i32 -> vector<16x256xf32>
    %c1_i32_33 = arith.constant 1 : i32
    %102 = vector.broadcast %c1_i32_33 : i32 to vector<1x256xi32>
    %103 = arith.cmpi sge, %1, %102 : vector<1x256xi32>
    %c1_i32_34 = arith.constant 1 : i32
    %104 = vector.broadcast %c1_i32_34 : i32 to vector<1x256xi32>
    %105 = arith.cmpi sge, %3, %104 : vector<1x256xi32>
    %106 = arith.andi %103, %105 : vector<1x256xi1>
    %107 = arith.extui %106 : vector<1x256xi1> to vector<1x256xi32>
    %108 = arith.sitofp %107 : vector<1x256xi32> to vector<1x256xf32>
    %109 = vector.broadcast %108 : vector<1x256xf32> to vector<16x256xf32>
    %110 = arith.mulf %101, %109 : vector<16x256xf32>
    %c6 = arith.constant 6 : index
    %c0_35 = arith.constant 0 : index
    %c0_36 = arith.constant 0 : index
    %111 = vector.load %arg5[%c6, %c0_35, %c0_36] : memref<25x16x1xf32, #tpu.memory_space<vmem>>, vector<1x16x1xf32>
    %112 = vector.shape_cast %111 : vector<1x16x1xf32> to vector<16x1xf32>
    %113 = vector.broadcast %112 : vector<16x1xf32> to vector<16x256xf32>
    %114 = arith.mulf %113, %110 : vector<16x256xf32>
    %115 = arith.addf %100, %114 : vector<16x256xf32>
    %c16_i32 = arith.constant 16 : i32
    %116 = tpu.dynamic_rotate %12 by %c16_i32 dim 1 : vector<16x256xf32>, i32 -> vector<16x256xf32>
    %c1_i32_37 = arith.constant 1 : i32
    %117 = vector.broadcast %c1_i32_37 : i32 to vector<1x256xi32>
    %118 = arith.cmpi sge, %1, %117 : vector<1x256xi32>
    %119 = arith.extui %118 : vector<1x256xi1> to vector<1x256xi32>
    %120 = arith.sitofp %119 : vector<1x256xi32> to vector<1x256xf32>
    %121 = vector.broadcast %120 : vector<1x256xf32> to vector<16x256xf32>
    %122 = arith.mulf %116, %121 : vector<16x256xf32>
    %c7 = arith.constant 7 : index
    %c0_38 = arith.constant 0 : index
    %c0_39 = arith.constant 0 : index
    %123 = vector.load %arg5[%c7, %c0_38, %c0_39] : memref<25x16x1xf32, #tpu.memory_space<vmem>>, vector<1x16x1xf32>
    %124 = vector.shape_cast %123 : vector<1x16x1xf32> to vector<16x1xf32>
    %125 = vector.broadcast %124 : vector<16x1xf32> to vector<16x256xf32>
    %126 = arith.mulf %125, %122 : vector<16x256xf32>
    %127 = arith.addf %115, %126 : vector<16x256xf32>
    %c15_i32_40 = arith.constant 15 : i32
    %128 = tpu.dynamic_rotate %12 by %c15_i32_40 dim 1 : vector<16x256xf32>, i32 -> vector<16x256xf32>
    %c1_i32_41 = arith.constant 1 : i32
    %129 = vector.broadcast %c1_i32_41 : i32 to vector<1x256xi32>
    %130 = arith.cmpi sge, %1, %129 : vector<1x256xi32>
    %c15_i32_42 = arith.constant 15 : i32
    %131 = vector.broadcast %c15_i32_42 : i32 to vector<1x256xi32>
    %132 = arith.cmpi slt, %3, %131 : vector<1x256xi32>
    %133 = arith.andi %130, %132 : vector<1x256xi1>
    %134 = arith.extui %133 : vector<1x256xi1> to vector<1x256xi32>
    %135 = arith.sitofp %134 : vector<1x256xi32> to vector<1x256xf32>
    %136 = vector.broadcast %135 : vector<1x256xf32> to vector<16x256xf32>
    %137 = arith.mulf %128, %136 : vector<16x256xf32>
    %c8 = arith.constant 8 : index
    %c0_43 = arith.constant 0 : index
    %c0_44 = arith.constant 0 : index
    %138 = vector.load %arg5[%c8, %c0_43, %c0_44] : memref<25x16x1xf32, #tpu.memory_space<vmem>>, vector<1x16x1xf32>
    %139 = vector.shape_cast %138 : vector<1x16x1xf32> to vector<16x1xf32>
    %140 = vector.broadcast %139 : vector<16x1xf32> to vector<16x256xf32>
    %141 = arith.mulf %140, %137 : vector<16x256xf32>
    %142 = arith.addf %127, %141 : vector<16x256xf32>
    %c14_i32_45 = arith.constant 14 : i32
    %143 = tpu.dynamic_rotate %12 by %c14_i32_45 dim 1 : vector<16x256xf32>, i32 -> vector<16x256xf32>
    %c1_i32_46 = arith.constant 1 : i32
    %144 = vector.broadcast %c1_i32_46 : i32 to vector<1x256xi32>
    %145 = arith.cmpi sge, %1, %144 : vector<1x256xi32>
    %c14_i32_47 = arith.constant 14 : i32
    %146 = vector.broadcast %c14_i32_47 : i32 to vector<1x256xi32>
    %147 = arith.cmpi slt, %3, %146 : vector<1x256xi32>
    %148 = arith.andi %145, %147 : vector<1x256xi1>
    %149 = arith.extui %148 : vector<1x256xi1> to vector<1x256xi32>
    %150 = arith.sitofp %149 : vector<1x256xi32> to vector<1x256xf32>
    %151 = vector.broadcast %150 : vector<1x256xf32> to vector<16x256xf32>
    %152 = arith.mulf %143, %151 : vector<16x256xf32>
    %c9 = arith.constant 9 : index
    %c0_48 = arith.constant 0 : index
    %c0_49 = arith.constant 0 : index
    %153 = vector.load %arg5[%c9, %c0_48, %c0_49] : memref<25x16x1xf32, #tpu.memory_space<vmem>>, vector<1x16x1xf32>
    %154 = vector.shape_cast %153 : vector<1x16x1xf32> to vector<16x1xf32>
    %155 = vector.broadcast %154 : vector<16x1xf32> to vector<16x256xf32>
    %156 = arith.mulf %155, %152 : vector<16x256xf32>
    %157 = arith.addf %142, %156 : vector<16x256xf32>
    %c2_i32_50 = arith.constant 2 : i32
    %158 = tpu.dynamic_rotate %12 by %c2_i32_50 dim 1 : vector<16x256xf32>, i32 -> vector<16x256xf32>
    %c2_i32_51 = arith.constant 2 : i32
    %159 = vector.broadcast %c2_i32_51 : i32 to vector<1x256xi32>
    %160 = arith.cmpi sge, %3, %159 : vector<1x256xi32>
    %161 = arith.extui %160 : vector<1x256xi1> to vector<1x256xi32>
    %162 = arith.sitofp %161 : vector<1x256xi32> to vector<1x256xf32>
    %163 = vector.broadcast %162 : vector<1x256xf32> to vector<16x256xf32>
    %164 = arith.mulf %158, %163 : vector<16x256xf32>
    %c10 = arith.constant 10 : index
    %c0_52 = arith.constant 0 : index
    %c0_53 = arith.constant 0 : index
    %165 = vector.load %arg5[%c10, %c0_52, %c0_53] : memref<25x16x1xf32, #tpu.memory_space<vmem>>, vector<1x16x1xf32>
    %166 = vector.shape_cast %165 : vector<1x16x1xf32> to vector<16x1xf32>
    %167 = vector.broadcast %166 : vector<16x1xf32> to vector<16x256xf32>
    %168 = arith.mulf %167, %164 : vector<16x256xf32>
    %169 = arith.addf %157, %168 : vector<16x256xf32>
    %c1_i32_54 = arith.constant 1 : i32
    %170 = tpu.dynamic_rotate %12 by %c1_i32_54 dim 1 : vector<16x256xf32>, i32 -> vector<16x256xf32>
    %c1_i32_55 = arith.constant 1 : i32
    %171 = vector.broadcast %c1_i32_55 : i32 to vector<1x256xi32>
    %172 = arith.cmpi sge, %3, %171 : vector<1x256xi32>
    %173 = arith.extui %172 : vector<1x256xi1> to vector<1x256xi32>
    %174 = arith.sitofp %173 : vector<1x256xi32> to vector<1x256xf32>
    %175 = vector.broadcast %174 : vector<1x256xf32> to vector<16x256xf32>
    %176 = arith.mulf %170, %175 : vector<16x256xf32>
    %c11 = arith.constant 11 : index
    %c0_56 = arith.constant 0 : index
    %c0_57 = arith.constant 0 : index
    %177 = vector.load %arg5[%c11, %c0_56, %c0_57] : memref<25x16x1xf32, #tpu.memory_space<vmem>>, vector<1x16x1xf32>
    %178 = vector.shape_cast %177 : vector<1x16x1xf32> to vector<16x1xf32>
    %179 = vector.broadcast %178 : vector<16x1xf32> to vector<16x256xf32>
    %180 = arith.mulf %179, %176 : vector<16x256xf32>
    %181 = arith.addf %169, %180 : vector<16x256xf32>
    %c12 = arith.constant 12 : index
    %c0_58 = arith.constant 0 : index
    %c0_59 = arith.constant 0 : index
    %182 = vector.load %arg5[%c12, %c0_58, %c0_59] : memref<25x16x1xf32, #tpu.memory_space<vmem>>, vector<1x16x1xf32>
    %183 = vector.shape_cast %182 : vector<1x16x1xf32> to vector<16x1xf32>
    %184 = vector.broadcast %183 : vector<16x1xf32> to vector<16x256xf32>
    %185 = arith.mulf %184, %12 : vector<16x256xf32>
    %186 = arith.addf %181, %185 : vector<16x256xf32>
    %c255_i32 = arith.constant 255 : i32
    %187 = tpu.dynamic_rotate %12 by %c255_i32 dim 1 : vector<16x256xf32>, i32 -> vector<16x256xf32>
    %c15_i32_60 = arith.constant 15 : i32
    %188 = vector.broadcast %c15_i32_60 : i32 to vector<1x256xi32>
    %189 = arith.cmpi slt, %3, %188 : vector<1x256xi32>
    %190 = arith.extui %189 : vector<1x256xi1> to vector<1x256xi32>
    %191 = arith.sitofp %190 : vector<1x256xi32> to vector<1x256xf32>
    %192 = vector.broadcast %191 : vector<1x256xf32> to vector<16x256xf32>
    %193 = arith.mulf %187, %192 : vector<16x256xf32>
    %c13 = arith.constant 13 : index
    %c0_61 = arith.constant 0 : index
    %c0_62 = arith.constant 0 : index
    %194 = vector.load %arg5[%c13, %c0_61, %c0_62] : memref<25x16x1xf32, #tpu.memory_space<vmem>>, vector<1x16x1xf32>
    %195 = vector.shape_cast %194 : vector<1x16x1xf32> to vector<16x1xf32>
    %196 = vector.broadcast %195 : vector<16x1xf32> to vector<16x256xf32>
    %197 = arith.mulf %196, %193 : vector<16x256xf32>
    %198 = arith.addf %186, %197 : vector<16x256xf32>
    %c254_i32 = arith.constant 254 : i32
    %199 = tpu.dynamic_rotate %12 by %c254_i32 dim 1 : vector<16x256xf32>, i32 -> vector<16x256xf32>
    %c14_i32_63 = arith.constant 14 : i32
    %200 = vector.broadcast %c14_i32_63 : i32 to vector<1x256xi32>
    %201 = arith.cmpi slt, %3, %200 : vector<1x256xi32>
    %202 = arith.extui %201 : vector<1x256xi1> to vector<1x256xi32>
    %203 = arith.sitofp %202 : vector<1x256xi32> to vector<1x256xf32>
    %204 = vector.broadcast %203 : vector<1x256xf32> to vector<16x256xf32>
    %205 = arith.mulf %199, %204 : vector<16x256xf32>
    %c14 = arith.constant 14 : index
    %c0_64 = arith.constant 0 : index
    %c0_65 = arith.constant 0 : index
    %206 = vector.load %arg5[%c14, %c0_64, %c0_65] : memref<25x16x1xf32, #tpu.memory_space<vmem>>, vector<1x16x1xf32>
    %207 = vector.shape_cast %206 : vector<1x16x1xf32> to vector<16x1xf32>
    %208 = vector.broadcast %207 : vector<16x1xf32> to vector<16x256xf32>
    %209 = arith.mulf %208, %205 : vector<16x256xf32>
    %210 = arith.addf %198, %209 : vector<16x256xf32>
    %c242_i32 = arith.constant 242 : i32
    %211 = tpu.dynamic_rotate %12 by %c242_i32 dim 1 : vector<16x256xf32>, i32 -> vector<16x256xf32>
    %c15_i32_66 = arith.constant 15 : i32
    %212 = vector.broadcast %c15_i32_66 : i32 to vector<1x256xi32>
    %213 = arith.cmpi slt, %1, %212 : vector<1x256xi32>
    %c2_i32_67 = arith.constant 2 : i32
    %214 = vector.broadcast %c2_i32_67 : i32 to vector<1x256xi32>
    %215 = arith.cmpi sge, %3, %214 : vector<1x256xi32>
    %216 = arith.andi %213, %215 : vector<1x256xi1>
    %217 = arith.extui %216 : vector<1x256xi1> to vector<1x256xi32>
    %218 = arith.sitofp %217 : vector<1x256xi32> to vector<1x256xf32>
    %219 = vector.broadcast %218 : vector<1x256xf32> to vector<16x256xf32>
    %220 = arith.mulf %211, %219 : vector<16x256xf32>
    %c15 = arith.constant 15 : index
    %c0_68 = arith.constant 0 : index
    %c0_69 = arith.constant 0 : index
    %221 = vector.load %arg5[%c15, %c0_68, %c0_69] : memref<25x16x1xf32, #tpu.memory_space<vmem>>, vector<1x16x1xf32>
    %222 = vector.shape_cast %221 : vector<1x16x1xf32> to vector<16x1xf32>
    %223 = vector.broadcast %222 : vector<16x1xf32> to vector<16x256xf32>
    %224 = arith.mulf %223, %220 : vector<16x256xf32>
    %225 = arith.addf %210, %224 : vector<16x256xf32>
    %c241_i32 = arith.constant 241 : i32
    %226 = tpu.dynamic_rotate %12 by %c241_i32 dim 1 : vector<16x256xf32>, i32 -> vector<16x256xf32>
    %c15_i32_70 = arith.constant 15 : i32
    %227 = vector.broadcast %c15_i32_70 : i32 to vector<1x256xi32>
    %228 = arith.cmpi slt, %1, %227 : vector<1x256xi32>
    %c1_i32_71 = arith.constant 1 : i32
    %229 = vector.broadcast %c1_i32_71 : i32 to vector<1x256xi32>
    %230 = arith.cmpi sge, %3, %229 : vector<1x256xi32>
    %231 = arith.andi %228, %230 : vector<1x256xi1>
    %232 = arith.extui %231 : vector<1x256xi1> to vector<1x256xi32>
    %233 = arith.sitofp %232 : vector<1x256xi32> to vector<1x256xf32>
    %234 = vector.broadcast %233 : vector<1x256xf32> to vector<16x256xf32>
    %235 = arith.mulf %226, %234 : vector<16x256xf32>
    %c16 = arith.constant 16 : index
    %c0_72 = arith.constant 0 : index
    %c0_73 = arith.constant 0 : index
    %236 = vector.load %arg5[%c16, %c0_72, %c0_73] : memref<25x16x1xf32, #tpu.memory_space<vmem>>, vector<1x16x1xf32>
    %237 = vector.shape_cast %236 : vector<1x16x1xf32> to vector<16x1xf32>
    %238 = vector.broadcast %237 : vector<16x1xf32> to vector<16x256xf32>
    %239 = arith.mulf %238, %235 : vector<16x256xf32>
    %240 = arith.addf %225, %239 : vector<16x256xf32>
    %c240_i32 = arith.constant 240 : i32
    %241 = tpu.dynamic_rotate %12 by %c240_i32 dim 1 : vector<16x256xf32>, i32 -> vector<16x256xf32>
    %c15_i32_74 = arith.constant 15 : i32
    %242 = vector.broadcast %c15_i32_74 : i32 to vector<1x256xi32>
    %243 = arith.cmpi slt, %1, %242 : vector<1x256xi32>
    %244 = arith.extui %243 : vector<1x256xi1> to vector<1x256xi32>
    %245 = arith.sitofp %244 : vector<1x256xi32> to vector<1x256xf32>
    %246 = vector.broadcast %245 : vector<1x256xf32> to vector<16x256xf32>
    %247 = arith.mulf %241, %246 : vector<16x256xf32>
    %c17 = arith.constant 17 : index
    %c0_75 = arith.constant 0 : index
    %c0_76 = arith.constant 0 : index
    %248 = vector.load %arg5[%c17, %c0_75, %c0_76] : memref<25x16x1xf32, #tpu.memory_space<vmem>>, vector<1x16x1xf32>
    %249 = vector.shape_cast %248 : vector<1x16x1xf32> to vector<16x1xf32>
    %250 = vector.broadcast %249 : vector<16x1xf32> to vector<16x256xf32>
    %251 = arith.mulf %250, %247 : vector<16x256xf32>
    %252 = arith.addf %240, %251 : vector<16x256xf32>
    %c239_i32 = arith.constant 239 : i32
    %253 = tpu.dynamic_rotate %12 by %c239_i32 dim 1 : vector<16x256xf32>, i32 -> vector<16x256xf32>
    %c15_i32_77 = arith.constant 15 : i32
    %254 = vector.broadcast %c15_i32_77 : i32 to vector<1x256xi32>
    %255 = arith.cmpi slt, %1, %254 : vector<1x256xi32>
    %c15_i32_78 = arith.constant 15 : i32
    %256 = vector.broadcast %c15_i32_78 : i32 to vector<1x256xi32>
    %257 = arith.cmpi slt, %3, %256 : vector<1x256xi32>
    %258 = arith.andi %255, %257 : vector<1x256xi1>
    %259 = arith.extui %258 : vector<1x256xi1> to vector<1x256xi32>
    %260 = arith.sitofp %259 : vector<1x256xi32> to vector<1x256xf32>
    %261 = vector.broadcast %260 : vector<1x256xf32> to vector<16x256xf32>
    %262 = arith.mulf %253, %261 : vector<16x256xf32>
    %c18 = arith.constant 18 : index
    %c0_79 = arith.constant 0 : index
    %c0_80 = arith.constant 0 : index
    %263 = vector.load %arg5[%c18, %c0_79, %c0_80] : memref<25x16x1xf32, #tpu.memory_space<vmem>>, vector<1x16x1xf32>
    %264 = vector.shape_cast %263 : vector<1x16x1xf32> to vector<16x1xf32>
    %265 = vector.broadcast %264 : vector<16x1xf32> to vector<16x256xf32>
    %266 = arith.mulf %265, %262 : vector<16x256xf32>
    %267 = arith.addf %252, %266 : vector<16x256xf32>
    %c238_i32 = arith.constant 238 : i32
    %268 = tpu.dynamic_rotate %12 by %c238_i32 dim 1 : vector<16x256xf32>, i32 -> vector<16x256xf32>
    %c15_i32_81 = arith.constant 15 : i32
    %269 = vector.broadcast %c15_i32_81 : i32 to vector<1x256xi32>
    %270 = arith.cmpi slt, %1, %269 : vector<1x256xi32>
    %c14_i32_82 = arith.constant 14 : i32
    %271 = vector.broadcast %c14_i32_82 : i32 to vector<1x256xi32>
    %272 = arith.cmpi slt, %3, %271 : vector<1x256xi32>
    %273 = arith.andi %270, %272 : vector<1x256xi1>
    %274 = arith.extui %273 : vector<1x256xi1> to vector<1x256xi32>
    %275 = arith.sitofp %274 : vector<1x256xi32> to vector<1x256xf32>
    %276 = vector.broadcast %275 : vector<1x256xf32> to vector<16x256xf32>
    %277 = arith.mulf %268, %276 : vector<16x256xf32>
    %c19 = arith.constant 19 : index
    %c0_83 = arith.constant 0 : index
    %c0_84 = arith.constant 0 : index
    %278 = vector.load %arg5[%c19, %c0_83, %c0_84] : memref<25x16x1xf32, #tpu.memory_space<vmem>>, vector<1x16x1xf32>
    %279 = vector.shape_cast %278 : vector<1x16x1xf32> to vector<16x1xf32>
    %280 = vector.broadcast %279 : vector<16x1xf32> to vector<16x256xf32>
    %281 = arith.mulf %280, %277 : vector<16x256xf32>
    %282 = arith.addf %267, %281 : vector<16x256xf32>
    %c226_i32 = arith.constant 226 : i32
    %283 = tpu.dynamic_rotate %12 by %c226_i32 dim 1 : vector<16x256xf32>, i32 -> vector<16x256xf32>
    %c14_i32_85 = arith.constant 14 : i32
    %284 = vector.broadcast %c14_i32_85 : i32 to vector<1x256xi32>
    %285 = arith.cmpi slt, %1, %284 : vector<1x256xi32>
    %c2_i32_86 = arith.constant 2 : i32
    %286 = vector.broadcast %c2_i32_86 : i32 to vector<1x256xi32>
    %287 = arith.cmpi sge, %3, %286 : vector<1x256xi32>
    %288 = arith.andi %285, %287 : vector<1x256xi1>
    %289 = arith.extui %288 : vector<1x256xi1> to vector<1x256xi32>
    %290 = arith.sitofp %289 : vector<1x256xi32> to vector<1x256xf32>
    %291 = vector.broadcast %290 : vector<1x256xf32> to vector<16x256xf32>
    %292 = arith.mulf %283, %291 : vector<16x256xf32>
    %c20 = arith.constant 20 : index
    %c0_87 = arith.constant 0 : index
    %c0_88 = arith.constant 0 : index
    %293 = vector.load %arg5[%c20, %c0_87, %c0_88] : memref<25x16x1xf32, #tpu.memory_space<vmem>>, vector<1x16x1xf32>
    %294 = vector.shape_cast %293 : vector<1x16x1xf32> to vector<16x1xf32>
    %295 = vector.broadcast %294 : vector<16x1xf32> to vector<16x256xf32>
    %296 = arith.mulf %295, %292 : vector<16x256xf32>
    %297 = arith.addf %282, %296 : vector<16x256xf32>
    %c225_i32 = arith.constant 225 : i32
    %298 = tpu.dynamic_rotate %12 by %c225_i32 dim 1 : vector<16x256xf32>, i32 -> vector<16x256xf32>
    %c14_i32_89 = arith.constant 14 : i32
    %299 = vector.broadcast %c14_i32_89 : i32 to vector<1x256xi32>
    %300 = arith.cmpi slt, %1, %299 : vector<1x256xi32>
    %c1_i32_90 = arith.constant 1 : i32
    %301 = vector.broadcast %c1_i32_90 : i32 to vector<1x256xi32>
    %302 = arith.cmpi sge, %3, %301 : vector<1x256xi32>
    %303 = arith.andi %300, %302 : vector<1x256xi1>
    %304 = arith.extui %303 : vector<1x256xi1> to vector<1x256xi32>
    %305 = arith.sitofp %304 : vector<1x256xi32> to vector<1x256xf32>
    %306 = vector.broadcast %305 : vector<1x256xf32> to vector<16x256xf32>
    %307 = arith.mulf %298, %306 : vector<16x256xf32>
    %c21 = arith.constant 21 : index
    %c0_91 = arith.constant 0 : index
    %c0_92 = arith.constant 0 : index
    %308 = vector.load %arg5[%c21, %c0_91, %c0_92] : memref<25x16x1xf32, #tpu.memory_space<vmem>>, vector<1x16x1xf32>
    %309 = vector.shape_cast %308 : vector<1x16x1xf32> to vector<16x1xf32>
    %310 = vector.broadcast %309 : vector<16x1xf32> to vector<16x256xf32>
    %311 = arith.mulf %310, %307 : vector<16x256xf32>
    %312 = arith.addf %297, %311 : vector<16x256xf32>
    %c224_i32 = arith.constant 224 : i32
    %313 = tpu.dynamic_rotate %12 by %c224_i32 dim 1 : vector<16x256xf32>, i32 -> vector<16x256xf32>
    %c14_i32_93 = arith.constant 14 : i32
    %314 = vector.broadcast %c14_i32_93 : i32 to vector<1x256xi32>
    %315 = arith.cmpi slt, %1, %314 : vector<1x256xi32>
    %316 = arith.extui %315 : vector<1x256xi1> to vector<1x256xi32>
    %317 = arith.sitofp %316 : vector<1x256xi32> to vector<1x256xf32>
    %318 = vector.broadcast %317 : vector<1x256xf32> to vector<16x256xf32>
    %319 = arith.mulf %313, %318 : vector<16x256xf32>
    %c22 = arith.constant 22 : index
    %c0_94 = arith.constant 0 : index
    %c0_95 = arith.constant 0 : index
    %320 = vector.load %arg5[%c22, %c0_94, %c0_95] : memref<25x16x1xf32, #tpu.memory_space<vmem>>, vector<1x16x1xf32>
    %321 = vector.shape_cast %320 : vector<1x16x1xf32> to vector<16x1xf32>
    %322 = vector.broadcast %321 : vector<16x1xf32> to vector<16x256xf32>
    %323 = arith.mulf %322, %319 : vector<16x256xf32>
    %324 = arith.addf %312, %323 : vector<16x256xf32>
    %c223_i32 = arith.constant 223 : i32
    %325 = tpu.dynamic_rotate %12 by %c223_i32 dim 1 : vector<16x256xf32>, i32 -> vector<16x256xf32>
    %c14_i32_96 = arith.constant 14 : i32
    %326 = vector.broadcast %c14_i32_96 : i32 to vector<1x256xi32>
    %327 = arith.cmpi slt, %1, %326 : vector<1x256xi32>
    %c15_i32_97 = arith.constant 15 : i32
    %328 = vector.broadcast %c15_i32_97 : i32 to vector<1x256xi32>
    %329 = arith.cmpi slt, %3, %328 : vector<1x256xi32>
    %330 = arith.andi %327, %329 : vector<1x256xi1>
    %331 = arith.extui %330 : vector<1x256xi1> to vector<1x256xi32>
    %332 = arith.sitofp %331 : vector<1x256xi32> to vector<1x256xf32>
    %333 = vector.broadcast %332 : vector<1x256xf32> to vector<16x256xf32>
    %334 = arith.mulf %325, %333 : vector<16x256xf32>
    %c23 = arith.constant 23 : index
    %c0_98 = arith.constant 0 : index
    %c0_99 = arith.constant 0 : index
    %335 = vector.load %arg5[%c23, %c0_98, %c0_99] : memref<25x16x1xf32, #tpu.memory_space<vmem>>, vector<1x16x1xf32>
    %336 = vector.shape_cast %335 : vector<1x16x1xf32> to vector<16x1xf32>
    %337 = vector.broadcast %336 : vector<16x1xf32> to vector<16x256xf32>
    %338 = arith.mulf %337, %334 : vector<16x256xf32>
    %339 = arith.addf %324, %338 : vector<16x256xf32>
    %c222_i32 = arith.constant 222 : i32
    %340 = tpu.dynamic_rotate %12 by %c222_i32 dim 1 : vector<16x256xf32>, i32 -> vector<16x256xf32>
    %c14_i32_100 = arith.constant 14 : i32
    %341 = vector.broadcast %c14_i32_100 : i32 to vector<1x256xi32>
    %342 = arith.cmpi slt, %1, %341 : vector<1x256xi32>
    %c14_i32_101 = arith.constant 14 : i32
    %343 = vector.broadcast %c14_i32_101 : i32 to vector<1x256xi32>
    %344 = arith.cmpi slt, %3, %343 : vector<1x256xi32>
    %345 = arith.andi %342, %344 : vector<1x256xi1>
    %346 = arith.extui %345 : vector<1x256xi1> to vector<1x256xi32>
    %347 = arith.sitofp %346 : vector<1x256xi32> to vector<1x256xf32>
    %348 = vector.broadcast %347 : vector<1x256xf32> to vector<16x256xf32>
    %349 = arith.mulf %340, %348 : vector<16x256xf32>
    %c24 = arith.constant 24 : index
    %c0_102 = arith.constant 0 : index
    %c0_103 = arith.constant 0 : index
    %350 = vector.load %arg5[%c24, %c0_102, %c0_103] : memref<25x16x1xf32, #tpu.memory_space<vmem>>, vector<1x16x1xf32>
    %351 = vector.shape_cast %350 : vector<1x16x1xf32> to vector<16x1xf32>
    %352 = vector.broadcast %351 : vector<16x1xf32> to vector<16x256xf32>
    %353 = arith.mulf %352, %349 : vector<16x256xf32>
    %354 = arith.addf %339, %353 : vector<16x256xf32>
    %c0_104 = arith.constant 0 : index
    %c0_105 = arith.constant 0 : index
    %355 = vector.load %arg6[%c0_104, %c0_105] : memref<16x1xf32, #tpu.memory_space<vmem>>, vector<16x1xf32>
    %356 = vector.broadcast %355 : vector<16x1xf32> to vector<16x256xf32>
    %357 = arith.addf %354, %356 : vector<16x256xf32>
    %c0_106 = arith.constant 0 : index
    %c0_107 = arith.constant 0 : index
    %358 = vector.load %arg7[%c0_106, %c0_107] : memref<3x16xf32, #tpu.memory_space<vmem>>, vector<3x16xf32>
    %359 = arith.truncf %358 : vector<3x16xf32> to vector<3x16xbf16>
    %360 = arith.truncf %357 : vector<16x256xf32> to vector<16x256xbf16>
    %cst_108 = arith.constant dense<0.000000e+00> : vector<3x256xf32>
    %361 = tpu.matmul %359, %360, %cst_108 {dimension_numbers = #tpu.dot_dimension_numbers<[1], [0], [0], [1], [0, 0, 1, 1], [], []>} : vector<3x16xbf16>, vector<16x256xbf16>, vector<3x256xf32> -> vector<3x256xf32>
    %c0_109 = arith.constant 0 : index
    %c0_110 = arith.constant 0 : index
    %362 = vector.load %arg8[%c0_109, %c0_110] : memref<3x1xf32, #tpu.memory_space<vmem>>, vector<3x1xf32>
    %363 = vector.broadcast %362 : vector<3x1xf32> to vector<3x256xf32>
    %364 = arith.addf %361, %363 : vector<3x256xf32>
    %365 = arith.mulf %5, %364 : vector<3x256xf32>
    %366 = arith.addf %365, %5 : vector<3x256xf32>
    %cst_111 = arith.constant 0.000000e+00 : f32
    %367 = vector.broadcast %cst_111 : f32 to vector<16x256xf32>
    %c17_i32_112 = arith.constant 17 : i32
    %368 = tpu.dynamic_rotate %366 by %c17_i32_112 dim 1 : vector<3x256xf32>, i32 -> vector<3x256xf32>
    %c1_i32_113 = arith.constant 1 : i32
    %369 = vector.broadcast %c1_i32_113 : i32 to vector<1x256xi32>
    %370 = arith.cmpi sge, %1, %369 : vector<1x256xi32>
    %c1_i32_114 = arith.constant 1 : i32
    %371 = vector.broadcast %c1_i32_114 : i32 to vector<1x256xi32>
    %372 = arith.cmpi sge, %3, %371 : vector<1x256xi32>
    %373 = arith.andi %370, %372 : vector<1x256xi1>
    %374 = arith.extui %373 : vector<1x256xi1> to vector<1x256xi32>
    %375 = arith.sitofp %374 : vector<1x256xi32> to vector<1x256xf32>
    %376 = vector.broadcast %375 : vector<1x256xf32> to vector<3x256xf32>
    %377 = arith.mulf %368, %376 : vector<3x256xf32>
    %c0_115 = arith.constant 0 : index
    %c0_116 = arith.constant 0 : index
    %c0_117 = arith.constant 0 : index
    %378 = vector.load %arg9[%c0_115, %c0_116, %c0_117] : memref<9x16x3xf32, #tpu.memory_space<vmem>>, vector<1x16x3xf32>
    %379 = vector.shape_cast %378 : vector<1x16x3xf32> to vector<16x3xf32>
    %380 = arith.truncf %379 : vector<16x3xf32> to vector<16x3xbf16>
    %381 = arith.truncf %377 : vector<3x256xf32> to vector<3x256xbf16>
    %cst_118 = arith.constant dense<0.000000e+00> : vector<16x256xf32>
    %382 = tpu.matmul %380, %381, %cst_118 {dimension_numbers = #tpu.dot_dimension_numbers<[1], [0], [0], [1], [0, 0, 1, 1], [], []>} : vector<16x3xbf16>, vector<3x256xbf16>, vector<16x256xf32> -> vector<16x256xf32>
    %383 = arith.addf %367, %382 : vector<16x256xf32>
    %c16_i32_119 = arith.constant 16 : i32
    %384 = tpu.dynamic_rotate %366 by %c16_i32_119 dim 1 : vector<3x256xf32>, i32 -> vector<3x256xf32>
    %c1_i32_120 = arith.constant 1 : i32
    %385 = vector.broadcast %c1_i32_120 : i32 to vector<1x256xi32>
    %386 = arith.cmpi sge, %1, %385 : vector<1x256xi32>
    %387 = arith.extui %386 : vector<1x256xi1> to vector<1x256xi32>
    %388 = arith.sitofp %387 : vector<1x256xi32> to vector<1x256xf32>
    %389 = vector.broadcast %388 : vector<1x256xf32> to vector<3x256xf32>
    %390 = arith.mulf %384, %389 : vector<3x256xf32>
    %c1_121 = arith.constant 1 : index
    %c0_122 = arith.constant 0 : index
    %c0_123 = arith.constant 0 : index
    %391 = vector.load %arg9[%c1_121, %c0_122, %c0_123] : memref<9x16x3xf32, #tpu.memory_space<vmem>>, vector<1x16x3xf32>
    %392 = vector.shape_cast %391 : vector<1x16x3xf32> to vector<16x3xf32>
    %393 = arith.truncf %392 : vector<16x3xf32> to vector<16x3xbf16>
    %394 = arith.truncf %390 : vector<3x256xf32> to vector<3x256xbf16>
    %cst_124 = arith.constant dense<0.000000e+00> : vector<16x256xf32>
    %395 = tpu.matmul %393, %394, %cst_124 {dimension_numbers = #tpu.dot_dimension_numbers<[1], [0], [0], [1], [0, 0, 1, 1], [], []>} : vector<16x3xbf16>, vector<3x256xbf16>, vector<16x256xf32> -> vector<16x256xf32>
    %396 = arith.addf %383, %395 : vector<16x256xf32>
    %c15_i32_125 = arith.constant 15 : i32
    %397 = tpu.dynamic_rotate %366 by %c15_i32_125 dim 1 : vector<3x256xf32>, i32 -> vector<3x256xf32>
    %c1_i32_126 = arith.constant 1 : i32
    %398 = vector.broadcast %c1_i32_126 : i32 to vector<1x256xi32>
    %399 = arith.cmpi sge, %1, %398 : vector<1x256xi32>
    %c15_i32_127 = arith.constant 15 : i32
    %400 = vector.broadcast %c15_i32_127 : i32 to vector<1x256xi32>
    %401 = arith.cmpi slt, %3, %400 : vector<1x256xi32>
    %402 = arith.andi %399, %401 : vector<1x256xi1>
    %403 = arith.extui %402 : vector<1x256xi1> to vector<1x256xi32>
    %404 = arith.sitofp %403 : vector<1x256xi32> to vector<1x256xf32>
    %405 = vector.broadcast %404 : vector<1x256xf32> to vector<3x256xf32>
    %406 = arith.mulf %397, %405 : vector<3x256xf32>
    %c2_128 = arith.constant 2 : index
    %c0_129 = arith.constant 0 : index
    %c0_130 = arith.constant 0 : index
    %407 = vector.load %arg9[%c2_128, %c0_129, %c0_130] : memref<9x16x3xf32, #tpu.memory_space<vmem>>, vector<1x16x3xf32>
    %408 = vector.shape_cast %407 : vector<1x16x3xf32> to vector<16x3xf32>
    %409 = arith.truncf %408 : vector<16x3xf32> to vector<16x3xbf16>
    %410 = arith.truncf %406 : vector<3x256xf32> to vector<3x256xbf16>
    %cst_131 = arith.constant dense<0.000000e+00> : vector<16x256xf32>
    %411 = tpu.matmul %409, %410, %cst_131 {dimension_numbers = #tpu.dot_dimension_numbers<[1], [0], [0], [1], [0, 0, 1, 1], [], []>} : vector<16x3xbf16>, vector<3x256xbf16>, vector<16x256xf32> -> vector<16x256xf32>
    %412 = arith.addf %396, %411 : vector<16x256xf32>
    %c1_i32_132 = arith.constant 1 : i32
    %413 = tpu.dynamic_rotate %366 by %c1_i32_132 dim 1 : vector<3x256xf32>, i32 -> vector<3x256xf32>
    %c1_i32_133 = arith.constant 1 : i32
    %414 = vector.broadcast %c1_i32_133 : i32 to vector<1x256xi32>
    %415 = arith.cmpi sge, %3, %414 : vector<1x256xi32>
    %416 = arith.extui %415 : vector<1x256xi1> to vector<1x256xi32>
    %417 = arith.sitofp %416 : vector<1x256xi32> to vector<1x256xf32>
    %418 = vector.broadcast %417 : vector<1x256xf32> to vector<3x256xf32>
    %419 = arith.mulf %413, %418 : vector<3x256xf32>
    %c3_134 = arith.constant 3 : index
    %c0_135 = arith.constant 0 : index
    %c0_136 = arith.constant 0 : index
    %420 = vector.load %arg9[%c3_134, %c0_135, %c0_136] : memref<9x16x3xf32, #tpu.memory_space<vmem>>, vector<1x16x3xf32>
    %421 = vector.shape_cast %420 : vector<1x16x3xf32> to vector<16x3xf32>
    %422 = arith.truncf %421 : vector<16x3xf32> to vector<16x3xbf16>
    %423 = arith.truncf %419 : vector<3x256xf32> to vector<3x256xbf16>
    %cst_137 = arith.constant dense<0.000000e+00> : vector<16x256xf32>
    %424 = tpu.matmul %422, %423, %cst_137 {dimension_numbers = #tpu.dot_dimension_numbers<[1], [0], [0], [1], [0, 0, 1, 1], [], []>} : vector<16x3xbf16>, vector<3x256xbf16>, vector<16x256xf32> -> vector<16x256xf32>
    %425 = arith.addf %412, %424 : vector<16x256xf32>
    %c4_138 = arith.constant 4 : index
    %c0_139 = arith.constant 0 : index
    %c0_140 = arith.constant 0 : index
    %426 = vector.load %arg9[%c4_138, %c0_139, %c0_140] : memref<9x16x3xf32, #tpu.memory_space<vmem>>, vector<1x16x3xf32>
    %427 = vector.shape_cast %426 : vector<1x16x3xf32> to vector<16x3xf32>
    %428 = arith.truncf %427 : vector<16x3xf32> to vector<16x3xbf16>
    %429 = arith.truncf %366 : vector<3x256xf32> to vector<3x256xbf16>
    %cst_141 = arith.constant dense<0.000000e+00> : vector<16x256xf32>
    %430 = tpu.matmul %428, %429, %cst_141 {dimension_numbers = #tpu.dot_dimension_numbers<[1], [0], [0], [1], [0, 0, 1, 1], [], []>} : vector<16x3xbf16>, vector<3x256xbf16>, vector<16x256xf32> -> vector<16x256xf32>
    %431 = arith.addf %425, %430 : vector<16x256xf32>
    %c255_i32_142 = arith.constant 255 : i32
    %432 = tpu.dynamic_rotate %366 by %c255_i32_142 dim 1 : vector<3x256xf32>, i32 -> vector<3x256xf32>
    %c15_i32_143 = arith.constant 15 : i32
    %433 = vector.broadcast %c15_i32_143 : i32 to vector<1x256xi32>
    %434 = arith.cmpi slt, %3, %433 : vector<1x256xi32>
    %435 = arith.extui %434 : vector<1x256xi1> to vector<1x256xi32>
    %436 = arith.sitofp %435 : vector<1x256xi32> to vector<1x256xf32>
    %437 = vector.broadcast %436 : vector<1x256xf32> to vector<3x256xf32>
    %438 = arith.mulf %432, %437 : vector<3x256xf32>
    %c5_144 = arith.constant 5 : index
    %c0_145 = arith.constant 0 : index
    %c0_146 = arith.constant 0 : index
    %439 = vector.load %arg9[%c5_144, %c0_145, %c0_146] : memref<9x16x3xf32, #tpu.memory_space<vmem>>, vector<1x16x3xf32>
    %440 = vector.shape_cast %439 : vector<1x16x3xf32> to vector<16x3xf32>
    %441 = arith.truncf %440 : vector<16x3xf32> to vector<16x3xbf16>
    %442 = arith.truncf %438 : vector<3x256xf32> to vector<3x256xbf16>
    %cst_147 = arith.constant dense<0.000000e+00> : vector<16x256xf32>
    %443 = tpu.matmul %441, %442, %cst_147 {dimension_numbers = #tpu.dot_dimension_numbers<[1], [0], [0], [1], [0, 0, 1, 1], [], []>} : vector<16x3xbf16>, vector<3x256xbf16>, vector<16x256xf32> -> vector<16x256xf32>
    %444 = arith.addf %431, %443 : vector<16x256xf32>
    %c241_i32_148 = arith.constant 241 : i32
    %445 = tpu.dynamic_rotate %366 by %c241_i32_148 dim 1 : vector<3x256xf32>, i32 -> vector<3x256xf32>
    %c15_i32_149 = arith.constant 15 : i32
    %446 = vector.broadcast %c15_i32_149 : i32 to vector<1x256xi32>
    %447 = arith.cmpi slt, %1, %446 : vector<1x256xi32>
    %c1_i32_150 = arith.constant 1 : i32
    %448 = vector.broadcast %c1_i32_150 : i32 to vector<1x256xi32>
    %449 = arith.cmpi sge, %3, %448 : vector<1x256xi32>
    %450 = arith.andi %447, %449 : vector<1x256xi1>
    %451 = arith.extui %450 : vector<1x256xi1> to vector<1x256xi32>
    %452 = arith.sitofp %451 : vector<1x256xi32> to vector<1x256xf32>
    %453 = vector.broadcast %452 : vector<1x256xf32> to vector<3x256xf32>
    %454 = arith.mulf %445, %453 : vector<3x256xf32>
    %c6_151 = arith.constant 6 : index
    %c0_152 = arith.constant 0 : index
    %c0_153 = arith.constant 0 : index
    %455 = vector.load %arg9[%c6_151, %c0_152, %c0_153] : memref<9x16x3xf32, #tpu.memory_space<vmem>>, vector<1x16x3xf32>
    %456 = vector.shape_cast %455 : vector<1x16x3xf32> to vector<16x3xf32>
    %457 = arith.truncf %456 : vector<16x3xf32> to vector<16x3xbf16>
    %458 = arith.truncf %454 : vector<3x256xf32> to vector<3x256xbf16>
    %cst_154 = arith.constant dense<0.000000e+00> : vector<16x256xf32>
    %459 = tpu.matmul %457, %458, %cst_154 {dimension_numbers = #tpu.dot_dimension_numbers<[1], [0], [0], [1], [0, 0, 1, 1], [], []>} : vector<16x3xbf16>, vector<3x256xbf16>, vector<16x256xf32> -> vector<16x256xf32>
    %460 = arith.addf %444, %459 : vector<16x256xf32>
    %c240_i32_155 = arith.constant 240 : i32
    %461 = tpu.dynamic_rotate %366 by %c240_i32_155 dim 1 : vector<3x256xf32>, i32 -> vector<3x256xf32>
    %c15_i32_156 = arith.constant 15 : i32
    %462 = vector.broadcast %c15_i32_156 : i32 to vector<1x256xi32>
    %463 = arith.cmpi slt, %1, %462 : vector<1x256xi32>
    %464 = arith.extui %463 : vector<1x256xi1> to vector<1x256xi32>
    %465 = arith.sitofp %464 : vector<1x256xi32> to vector<1x256xf32>
    %466 = vector.broadcast %465 : vector<1x256xf32> to vector<3x256xf32>
    %467 = arith.mulf %461, %466 : vector<3x256xf32>
    %c7_157 = arith.constant 7 : index
    %c0_158 = arith.constant 0 : index
    %c0_159 = arith.constant 0 : index
    %468 = vector.load %arg9[%c7_157, %c0_158, %c0_159] : memref<9x16x3xf32, #tpu.memory_space<vmem>>, vector<1x16x3xf32>
    %469 = vector.shape_cast %468 : vector<1x16x3xf32> to vector<16x3xf32>
    %470 = arith.truncf %469 : vector<16x3xf32> to vector<16x3xbf16>
    %471 = arith.truncf %467 : vector<3x256xf32> to vector<3x256xbf16>
    %cst_160 = arith.constant dense<0.000000e+00> : vector<16x256xf32>
    %472 = tpu.matmul %470, %471, %cst_160 {dimension_numbers = #tpu.dot_dimension_numbers<[1], [0], [0], [1], [0, 0, 1, 1], [], []>} : vector<16x3xbf16>, vector<3x256xbf16>, vector<16x256xf32> -> vector<16x256xf32>
    %473 = arith.addf %460, %472 : vector<16x256xf32>
    %c239_i32_161 = arith.constant 239 : i32
    %474 = tpu.dynamic_rotate %366 by %c239_i32_161 dim 1 : vector<3x256xf32>, i32 -> vector<3x256xf32>
    %c15_i32_162 = arith.constant 15 : i32
    %475 = vector.broadcast %c15_i32_162 : i32 to vector<1x256xi32>
    %476 = arith.cmpi slt, %1, %475 : vector<1x256xi32>
    %c15_i32_163 = arith.constant 15 : i32
    %477 = vector.broadcast %c15_i32_163 : i32 to vector<1x256xi32>
    %478 = arith.cmpi slt, %3, %477 : vector<1x256xi32>
    %479 = arith.andi %476, %478 : vector<1x256xi1>
    %480 = arith.extui %479 : vector<1x256xi1> to vector<1x256xi32>
    %481 = arith.sitofp %480 : vector<1x256xi32> to vector<1x256xf32>
    %482 = vector.broadcast %481 : vector<1x256xf32> to vector<3x256xf32>
    %483 = arith.mulf %474, %482 : vector<3x256xf32>
    %c8_164 = arith.constant 8 : index
    %c0_165 = arith.constant 0 : index
    %c0_166 = arith.constant 0 : index
    %484 = vector.load %arg9[%c8_164, %c0_165, %c0_166] : memref<9x16x3xf32, #tpu.memory_space<vmem>>, vector<1x16x3xf32>
    %485 = vector.shape_cast %484 : vector<1x16x3xf32> to vector<16x3xf32>
    %486 = arith.truncf %485 : vector<16x3xf32> to vector<16x3xbf16>
    %487 = arith.truncf %483 : vector<3x256xf32> to vector<3x256xbf16>
    %cst_167 = arith.constant dense<0.000000e+00> : vector<16x256xf32>
    %488 = tpu.matmul %486, %487, %cst_167 {dimension_numbers = #tpu.dot_dimension_numbers<[1], [0], [0], [1], [0, 0, 1, 1], [], []>} : vector<16x3xbf16>, vector<3x256xbf16>, vector<16x256xf32> -> vector<16x256xf32>
    %489 = arith.addf %473, %488 : vector<16x256xf32>
    %c0_168 = arith.constant 0 : index
    %c0_169 = arith.constant 0 : index
    %490 = vector.load %arg10[%c0_168, %c0_169] : memref<48x16xf32, #tpu.memory_space<vmem>>, vector<48x16xf32>
    %491 = arith.truncf %490 : vector<48x16xf32> to vector<48x16xbf16>
    %492 = arith.truncf %489 : vector<16x256xf32> to vector<16x256xbf16>
    %cst_170 = arith.constant dense<0.000000e+00> : vector<48x256xf32>
    %493 = tpu.matmul %491, %492, %cst_170 {dimension_numbers = #tpu.dot_dimension_numbers<[1], [0], [0], [1], [0, 0, 1, 1], [], []>} : vector<48x16xbf16>, vector<16x256xbf16>, vector<48x256xf32> -> vector<48x256xf32>
    %494 = vector.extract_strided_slice %493 {offsets = [0, 0], sizes = [16, 256], strides = [1, 1]} : vector<48x256xf32> to vector<16x256xf32>
    %495 = vector.extract_strided_slice %493 {offsets = [16, 0], sizes = [16, 256], strides = [1, 1]} : vector<48x256xf32> to vector<16x256xf32>
    %496 = vector.extract_strided_slice %493 {offsets = [32, 0], sizes = [16, 256], strides = [1, 1]} : vector<48x256xf32> to vector<16x256xf32>
    %497 = arith.mulf %496, %357 : vector<16x256xf32>
    %cst_171 = arith.constant 1.000000e+00 : f32
    %498 = vector.broadcast %cst_171 : f32 to vector<256x1xf32>
    %499 = arith.mulf %494, %494 : vector<16x256xf32>
    %cst_172 = arith.constant dense<0.000000e+00> : vector<16x1xf32>
    %500 = tpu.matmul %499, %498, %cst_172 {dimension_numbers = #tpu.dot_dimension_numbers<[1], [0], [0], [1], [0, 0, 1, 1], [], []>} : vector<16x256xf32>, vector<256x1xf32>, vector<16x1xf32> -> vector<16x1xf32>
    %501 = arith.mulf %495, %495 : vector<16x256xf32>
    %cst_173 = arith.constant dense<0.000000e+00> : vector<16x1xf32>
    %502 = tpu.matmul %501, %498, %cst_173 {dimension_numbers = #tpu.dot_dimension_numbers<[1], [0], [0], [1], [0, 0, 1, 1], [], []>} : vector<16x256xf32>, vector<256x1xf32>, vector<16x1xf32> -> vector<16x1xf32>
    %cst_174 = arith.constant 1.000000e-24 : f32
    %503 = vector.broadcast %cst_174 : f32 to vector<16x1xf32>
    %504 = arith.maximumf %500, %503 : vector<16x1xf32>
    %505 = math.rsqrt %504 : vector<16x1xf32>
    %506 = vector.broadcast %505 : vector<16x1xf32> to vector<16x256xf32>
    %507 = arith.mulf %494, %506 : vector<16x256xf32>
    %cst_175 = arith.constant 1.000000e-24 : f32
    %508 = vector.broadcast %cst_175 : f32 to vector<16x1xf32>
    %509 = arith.maximumf %502, %508 : vector<16x1xf32>
    %510 = math.rsqrt %509 : vector<16x1xf32>
    %511 = vector.broadcast %510 : vector<16x1xf32> to vector<16x256xf32>
    %512 = arith.mulf %495, %511 : vector<16x256xf32>
    %513 = arith.truncf %512 : vector<16x256xf32> to vector<16x256xbf16>
    %514 = arith.truncf %507 : vector<16x256xf32> to vector<16x256xbf16>
    %cst_176 = arith.constant dense<0.000000e+00> : vector<16x16xf32>
    %515 = tpu.matmul %513, %514, %cst_176 {dimension_numbers = #tpu.dot_dimension_numbers<[1], [1], [0], [0], [0, 0, 1, 0], [], []>} : vector<16x256xbf16>, vector<16x256xbf16>, vector<16x16xf32> -> vector<16x16xf32>
    %c0_177 = arith.constant 0 : index
    %516 = memref.load %arg21[%c0_177] : memref<1xf32, #tpu.memory_space<smem>>
    %517 = vector.broadcast %516 : f32 to vector<16x16xf32>
    %518 = arith.mulf %515, %517 : vector<16x16xf32>
    %cst_178 = arith.constant dense<0xFF800000> : vector<16xf32>
    %519 = vector.multi_reduction <maximumf>, %518, %cst_178 [1] : vector<16x16xf32> to vector<16xf32>
    %520 = vector.shape_cast %519 : vector<16xf32> to vector<16x1xf32>
    %521 = vector.broadcast %520 : vector<16x1xf32> to vector<16x16xf32>
    %522 = arith.subf %518, %521 : vector<16x16xf32>
    %523 = math.exp %522 : vector<16x16xf32>
    %cst_179 = arith.constant dense<0.000000e+00> : vector<16xf32>
    %524 = vector.multi_reduction <add>, %523, %cst_179 [1] : vector<16x16xf32> to vector<16xf32>
    %525 = vector.shape_cast %524 : vector<16xf32> to vector<16x1xf32>
    %526 = vector.broadcast %525 : vector<16x1xf32> to vector<16x16xf32>
    %527 = arith.divf %523, %526 : vector<16x16xf32>
    %528 = arith.truncf %527 : vector<16x16xf32> to vector<16x16xbf16>
    %529 = arith.truncf %497 : vector<16x256xf32> to vector<16x256xbf16>
    %cst_180 = arith.constant dense<0.000000e+00> : vector<16x256xf32>
    %530 = tpu.matmul %528, %529, %cst_180 {dimension_numbers = #tpu.dot_dimension_numbers<[1], [0], [0], [1], [0, 0, 1, 1], [], []>} : vector<16x16xbf16>, vector<16x256xbf16>, vector<16x256xf32> -> vector<16x256xf32>
    %c0_181 = arith.constant 0 : index
    %c0_182 = arith.constant 0 : index
    %531 = vector.load %arg11[%c0_181, %c0_182] : memref<16x16xf32, #tpu.memory_space<vmem>>, vector<16x16xf32>
    %532 = arith.truncf %531 : vector<16x16xf32> to vector<16x16xbf16>
    %533 = arith.truncf %530 : vector<16x256xf32> to vector<16x256xbf16>
    %cst_183 = arith.constant dense<0.000000e+00> : vector<16x256xf32>
    %534 = tpu.matmul %532, %533, %cst_183 {dimension_numbers = #tpu.dot_dimension_numbers<[1], [0], [0], [1], [0, 0, 1, 1], [], []>} : vector<16x16xbf16>, vector<16x256xbf16>, vector<16x256xf32> -> vector<16x256xf32>
    %c0_184 = arith.constant 0 : index
    %c0_185 = arith.constant 0 : index
    %535 = vector.load %arg12[%c0_184, %c0_185] : memref<16x1xf32, #tpu.memory_space<vmem>>, vector<16x1xf32>
    %536 = vector.broadcast %535 : vector<16x1xf32> to vector<16x256xf32>
    %537 = arith.addf %534, %536 : vector<16x256xf32>
    %cst_186 = arith.constant 0.000000e+00 : f32
    %538 = vector.broadcast %cst_186 : f32 to vector<16x256xf32>
    %c17_i32_187 = arith.constant 17 : i32
    %539 = tpu.dynamic_rotate %496 by %c17_i32_187 dim 1 : vector<16x256xf32>, i32 -> vector<16x256xf32>
    %c1_i32_188 = arith.constant 1 : i32
    %540 = vector.broadcast %c1_i32_188 : i32 to vector<1x256xi32>
    %541 = arith.cmpi sge, %1, %540 : vector<1x256xi32>
    %c1_i32_189 = arith.constant 1 : i32
    %542 = vector.broadcast %c1_i32_189 : i32 to vector<1x256xi32>
    %543 = arith.cmpi sge, %3, %542 : vector<1x256xi32>
    %544 = arith.andi %541, %543 : vector<1x256xi1>
    %545 = arith.extui %544 : vector<1x256xi1> to vector<1x256xi32>
    %546 = arith.sitofp %545 : vector<1x256xi32> to vector<1x256xf32>
    %547 = vector.broadcast %546 : vector<1x256xf32> to vector<16x256xf32>
    %548 = arith.mulf %539, %547 : vector<16x256xf32>
    %c0_190 = arith.constant 0 : index
    %c0_191 = arith.constant 0 : index
    %c0_192 = arith.constant 0 : index
    %549 = vector.load %arg13[%c0_190, %c0_191, %c0_192] : memref<9x16x1xf32, #tpu.memory_space<vmem>>, vector<1x16x1xf32>
    %550 = vector.shape_cast %549 : vector<1x16x1xf32> to vector<16x1xf32>
    %551 = vector.broadcast %550 : vector<16x1xf32> to vector<16x256xf32>
    %552 = arith.mulf %551, %548 : vector<16x256xf32>
    %553 = arith.addf %538, %552 : vector<16x256xf32>
    %c16_i32_193 = arith.constant 16 : i32
    %554 = tpu.dynamic_rotate %496 by %c16_i32_193 dim 1 : vector<16x256xf32>, i32 -> vector<16x256xf32>
    %c1_i32_194 = arith.constant 1 : i32
    %555 = vector.broadcast %c1_i32_194 : i32 to vector<1x256xi32>
    %556 = arith.cmpi sge, %1, %555 : vector<1x256xi32>
    %557 = arith.extui %556 : vector<1x256xi1> to vector<1x256xi32>
    %558 = arith.sitofp %557 : vector<1x256xi32> to vector<1x256xf32>
    %559 = vector.broadcast %558 : vector<1x256xf32> to vector<16x256xf32>
    %560 = arith.mulf %554, %559 : vector<16x256xf32>
    %c1_195 = arith.constant 1 : index
    %c0_196 = arith.constant 0 : index
    %c0_197 = arith.constant 0 : index
    %561 = vector.load %arg13[%c1_195, %c0_196, %c0_197] : memref<9x16x1xf32, #tpu.memory_space<vmem>>, vector<1x16x1xf32>
    %562 = vector.shape_cast %561 : vector<1x16x1xf32> to vector<16x1xf32>
    %563 = vector.broadcast %562 : vector<16x1xf32> to vector<16x256xf32>
    %564 = arith.mulf %563, %560 : vector<16x256xf32>
    %565 = arith.addf %553, %564 : vector<16x256xf32>
    %c15_i32_198 = arith.constant 15 : i32
    %566 = tpu.dynamic_rotate %496 by %c15_i32_198 dim 1 : vector<16x256xf32>, i32 -> vector<16x256xf32>
    %c1_i32_199 = arith.constant 1 : i32
    %567 = vector.broadcast %c1_i32_199 : i32 to vector<1x256xi32>
    %568 = arith.cmpi sge, %1, %567 : vector<1x256xi32>
    %c15_i32_200 = arith.constant 15 : i32
    %569 = vector.broadcast %c15_i32_200 : i32 to vector<1x256xi32>
    %570 = arith.cmpi slt, %3, %569 : vector<1x256xi32>
    %571 = arith.andi %568, %570 : vector<1x256xi1>
    %572 = arith.extui %571 : vector<1x256xi1> to vector<1x256xi32>
    %573 = arith.sitofp %572 : vector<1x256xi32> to vector<1x256xf32>
    %574 = vector.broadcast %573 : vector<1x256xf32> to vector<16x256xf32>
    %575 = arith.mulf %566, %574 : vector<16x256xf32>
    %c2_201 = arith.constant 2 : index
    %c0_202 = arith.constant 0 : index
    %c0_203 = arith.constant 0 : index
    %576 = vector.load %arg13[%c2_201, %c0_202, %c0_203] : memref<9x16x1xf32, #tpu.memory_space<vmem>>, vector<1x16x1xf32>
    %577 = vector.shape_cast %576 : vector<1x16x1xf32> to vector<16x1xf32>
    %578 = vector.broadcast %577 : vector<16x1xf32> to vector<16x256xf32>
    %579 = arith.mulf %578, %575 : vector<16x256xf32>
    %580 = arith.addf %565, %579 : vector<16x256xf32>
    %c1_i32_204 = arith.constant 1 : i32
    %581 = tpu.dynamic_rotate %496 by %c1_i32_204 dim 1 : vector<16x256xf32>, i32 -> vector<16x256xf32>
    %c1_i32_205 = arith.constant 1 : i32
    %582 = vector.broadcast %c1_i32_205 : i32 to vector<1x256xi32>
    %583 = arith.cmpi sge, %3, %582 : vector<1x256xi32>
    %584 = arith.extui %583 : vector<1x256xi1> to vector<1x256xi32>
    %585 = arith.sitofp %584 : vector<1x256xi32> to vector<1x256xf32>
    %586 = vector.broadcast %585 : vector<1x256xf32> to vector<16x256xf32>
    %587 = arith.mulf %581, %586 : vector<16x256xf32>
    %c3_206 = arith.constant 3 : index
    %c0_207 = arith.constant 0 : index
    %c0_208 = arith.constant 0 : index
    %588 = vector.load %arg13[%c3_206, %c0_207, %c0_208] : memref<9x16x1xf32, #tpu.memory_space<vmem>>, vector<1x16x1xf32>
    %589 = vector.shape_cast %588 : vector<1x16x1xf32> to vector<16x1xf32>
    %590 = vector.broadcast %589 : vector<16x1xf32> to vector<16x256xf32>
    %591 = arith.mulf %590, %587 : vector<16x256xf32>
    %592 = arith.addf %580, %591 : vector<16x256xf32>
    %c4_209 = arith.constant 4 : index
    %c0_210 = arith.constant 0 : index
    %c0_211 = arith.constant 0 : index
    %593 = vector.load %arg13[%c4_209, %c0_210, %c0_211] : memref<9x16x1xf32, #tpu.memory_space<vmem>>, vector<1x16x1xf32>
    %594 = vector.shape_cast %593 : vector<1x16x1xf32> to vector<16x1xf32>
    %595 = vector.broadcast %594 : vector<16x1xf32> to vector<16x256xf32>
    %596 = arith.mulf %595, %496 : vector<16x256xf32>
    %597 = arith.addf %592, %596 : vector<16x256xf32>
    %c255_i32_212 = arith.constant 255 : i32
    %598 = tpu.dynamic_rotate %496 by %c255_i32_212 dim 1 : vector<16x256xf32>, i32 -> vector<16x256xf32>
    %c15_i32_213 = arith.constant 15 : i32
    %599 = vector.broadcast %c15_i32_213 : i32 to vector<1x256xi32>
    %600 = arith.cmpi slt, %3, %599 : vector<1x256xi32>
    %601 = arith.extui %600 : vector<1x256xi1> to vector<1x256xi32>
    %602 = arith.sitofp %601 : vector<1x256xi32> to vector<1x256xf32>
    %603 = vector.broadcast %602 : vector<1x256xf32> to vector<16x256xf32>
    %604 = arith.mulf %598, %603 : vector<16x256xf32>
    %c5_214 = arith.constant 5 : index
    %c0_215 = arith.constant 0 : index
    %c0_216 = arith.constant 0 : index
    %605 = vector.load %arg13[%c5_214, %c0_215, %c0_216] : memref<9x16x1xf32, #tpu.memory_space<vmem>>, vector<1x16x1xf32>
    %606 = vector.shape_cast %605 : vector<1x16x1xf32> to vector<16x1xf32>
    %607 = vector.broadcast %606 : vector<16x1xf32> to vector<16x256xf32>
    %608 = arith.mulf %607, %604 : vector<16x256xf32>
    %609 = arith.addf %597, %608 : vector<16x256xf32>
    %c241_i32_217 = arith.constant 241 : i32
    %610 = tpu.dynamic_rotate %496 by %c241_i32_217 dim 1 : vector<16x256xf32>, i32 -> vector<16x256xf32>
    %c15_i32_218 = arith.constant 15 : i32
    %611 = vector.broadcast %c15_i32_218 : i32 to vector<1x256xi32>
    %612 = arith.cmpi slt, %1, %611 : vector<1x256xi32>
    %c1_i32_219 = arith.constant 1 : i32
    %613 = vector.broadcast %c1_i32_219 : i32 to vector<1x256xi32>
    %614 = arith.cmpi sge, %3, %613 : vector<1x256xi32>
    %615 = arith.andi %612, %614 : vector<1x256xi1>
    %616 = arith.extui %615 : vector<1x256xi1> to vector<1x256xi32>
    %617 = arith.sitofp %616 : vector<1x256xi32> to vector<1x256xf32>
    %618 = vector.broadcast %617 : vector<1x256xf32> to vector<16x256xf32>
    %619 = arith.mulf %610, %618 : vector<16x256xf32>
    %c6_220 = arith.constant 6 : index
    %c0_221 = arith.constant 0 : index
    %c0_222 = arith.constant 0 : index
    %620 = vector.load %arg13[%c6_220, %c0_221, %c0_222] : memref<9x16x1xf32, #tpu.memory_space<vmem>>, vector<1x16x1xf32>
    %621 = vector.shape_cast %620 : vector<1x16x1xf32> to vector<16x1xf32>
    %622 = vector.broadcast %621 : vector<16x1xf32> to vector<16x256xf32>
    %623 = arith.mulf %622, %619 : vector<16x256xf32>
    %624 = arith.addf %609, %623 : vector<16x256xf32>
    %c240_i32_223 = arith.constant 240 : i32
    %625 = tpu.dynamic_rotate %496 by %c240_i32_223 dim 1 : vector<16x256xf32>, i32 -> vector<16x256xf32>
    %c15_i32_224 = arith.constant 15 : i32
    %626 = vector.broadcast %c15_i32_224 : i32 to vector<1x256xi32>
    %627 = arith.cmpi slt, %1, %626 : vector<1x256xi32>
    %628 = arith.extui %627 : vector<1x256xi1> to vector<1x256xi32>
    %629 = arith.sitofp %628 : vector<1x256xi32> to vector<1x256xf32>
    %630 = vector.broadcast %629 : vector<1x256xf32> to vector<16x256xf32>
    %631 = arith.mulf %625, %630 : vector<16x256xf32>
    %c7_225 = arith.constant 7 : index
    %c0_226 = arith.constant 0 : index
    %c0_227 = arith.constant 0 : index
    %632 = vector.load %arg13[%c7_225, %c0_226, %c0_227] : memref<9x16x1xf32, #tpu.memory_space<vmem>>, vector<1x16x1xf32>
    %633 = vector.shape_cast %632 : vector<1x16x1xf32> to vector<16x1xf32>
    %634 = vector.broadcast %633 : vector<16x1xf32> to vector<16x256xf32>
    %635 = arith.mulf %634, %631 : vector<16x256xf32>
    %636 = arith.addf %624, %635 : vector<16x256xf32>
    %c239_i32_228 = arith.constant 239 : i32
    %637 = tpu.dynamic_rotate %496 by %c239_i32_228 dim 1 : vector<16x256xf32>, i32 -> vector<16x256xf32>
    %c15_i32_229 = arith.constant 15 : i32
    %638 = vector.broadcast %c15_i32_229 : i32 to vector<1x256xi32>
    %639 = arith.cmpi slt, %1, %638 : vector<1x256xi32>
    %c15_i32_230 = arith.constant 15 : i32
    %640 = vector.broadcast %c15_i32_230 : i32 to vector<1x256xi32>
    %641 = arith.cmpi slt, %3, %640 : vector<1x256xi32>
    %642 = arith.andi %639, %641 : vector<1x256xi1>
    %643 = arith.extui %642 : vector<1x256xi1> to vector<1x256xi32>
    %644 = arith.sitofp %643 : vector<1x256xi32> to vector<1x256xf32>
    %645 = vector.broadcast %644 : vector<1x256xf32> to vector<16x256xf32>
    %646 = arith.mulf %637, %645 : vector<16x256xf32>
    %c8_231 = arith.constant 8 : index
    %c0_232 = arith.constant 0 : index
    %c0_233 = arith.constant 0 : index
    %647 = vector.load %arg13[%c8_231, %c0_232, %c0_233] : memref<9x16x1xf32, #tpu.memory_space<vmem>>, vector<1x16x1xf32>
    %648 = vector.shape_cast %647 : vector<1x16x1xf32> to vector<16x1xf32>
    %649 = vector.broadcast %648 : vector<16x1xf32> to vector<16x256xf32>
    %650 = arith.mulf %649, %646 : vector<16x256xf32>
    %651 = arith.addf %636, %650 : vector<16x256xf32>
    %652 = arith.mulf %651, %651 : vector<16x256xf32>
    %653 = arith.mulf %651, %652 : vector<16x256xf32>
    %cst_234 = arith.constant 4.471500e-02 : f32
    %654 = vector.broadcast %cst_234 : f32 to vector<16x256xf32>
    %655 = arith.mulf %654, %653 : vector<16x256xf32>
    %656 = arith.addf %651, %655 : vector<16x256xf32>
    %cst_235 = arith.constant 0.797884583 : f32
    %657 = vector.broadcast %cst_235 : f32 to vector<16x256xf32>
    %658 = arith.mulf %657, %656 : vector<16x256xf32>
    %659 = math.tanh %658 : vector<16x256xf32>
    %cst_236 = arith.constant 1.000000e+00 : f32
    %660 = vector.broadcast %cst_236 : f32 to vector<16x256xf32>
    %661 = arith.addf %660, %659 : vector<16x256xf32>
    %cst_237 = arith.constant 5.000000e-01 : f32
    %662 = vector.broadcast %cst_237 : f32 to vector<16x256xf32>
    %663 = arith.mulf %662, %661 : vector<16x256xf32>
    %664 = arith.mulf %651, %663 : vector<16x256xf32>
    %cst_238 = arith.constant 0.000000e+00 : f32
    %665 = vector.broadcast %cst_238 : f32 to vector<16x256xf32>
    %c17_i32_239 = arith.constant 17 : i32
    %666 = tpu.dynamic_rotate %664 by %c17_i32_239 dim 1 : vector<16x256xf32>, i32 -> vector<16x256xf32>
    %c1_i32_240 = arith.constant 1 : i32
    %667 = vector.broadcast %c1_i32_240 : i32 to vector<1x256xi32>
    %668 = arith.cmpi sge, %1, %667 : vector<1x256xi32>
    %c1_i32_241 = arith.constant 1 : i32
    %669 = vector.broadcast %c1_i32_241 : i32 to vector<1x256xi32>
    %670 = arith.cmpi sge, %3, %669 : vector<1x256xi32>
    %671 = arith.andi %668, %670 : vector<1x256xi1>
    %672 = arith.extui %671 : vector<1x256xi1> to vector<1x256xi32>
    %673 = arith.sitofp %672 : vector<1x256xi32> to vector<1x256xf32>
    %674 = vector.broadcast %673 : vector<1x256xf32> to vector<16x256xf32>
    %675 = arith.mulf %666, %674 : vector<16x256xf32>
    %c0_242 = arith.constant 0 : index
    %c0_243 = arith.constant 0 : index
    %c0_244 = arith.constant 0 : index
    %676 = vector.load %arg14[%c0_242, %c0_243, %c0_244] : memref<9x16x1xf32, #tpu.memory_space<vmem>>, vector<1x16x1xf32>
    %677 = vector.shape_cast %676 : vector<1x16x1xf32> to vector<16x1xf32>
    %678 = vector.broadcast %677 : vector<16x1xf32> to vector<16x256xf32>
    %679 = arith.mulf %678, %675 : vector<16x256xf32>
    %680 = arith.addf %665, %679 : vector<16x256xf32>
    %c16_i32_245 = arith.constant 16 : i32
    %681 = tpu.dynamic_rotate %664 by %c16_i32_245 dim 1 : vector<16x256xf32>, i32 -> vector<16x256xf32>
    %c1_i32_246 = arith.constant 1 : i32
    %682 = vector.broadcast %c1_i32_246 : i32 to vector<1x256xi32>
    %683 = arith.cmpi sge, %1, %682 : vector<1x256xi32>
    %684 = arith.extui %683 : vector<1x256xi1> to vector<1x256xi32>
    %685 = arith.sitofp %684 : vector<1x256xi32> to vector<1x256xf32>
    %686 = vector.broadcast %685 : vector<1x256xf32> to vector<16x256xf32>
    %687 = arith.mulf %681, %686 : vector<16x256xf32>
    %c1_247 = arith.constant 1 : index
    %c0_248 = arith.constant 0 : index
    %c0_249 = arith.constant 0 : index
    %688 = vector.load %arg14[%c1_247, %c0_248, %c0_249] : memref<9x16x1xf32, #tpu.memory_space<vmem>>, vector<1x16x1xf32>
    %689 = vector.shape_cast %688 : vector<1x16x1xf32> to vector<16x1xf32>
    %690 = vector.broadcast %689 : vector<16x1xf32> to vector<16x256xf32>
    %691 = arith.mulf %690, %687 : vector<16x256xf32>
    %692 = arith.addf %680, %691 : vector<16x256xf32>
    %c15_i32_250 = arith.constant 15 : i32
    %693 = tpu.dynamic_rotate %664 by %c15_i32_250 dim 1 : vector<16x256xf32>, i32 -> vector<16x256xf32>
    %c1_i32_251 = arith.constant 1 : i32
    %694 = vector.broadcast %c1_i32_251 : i32 to vector<1x256xi32>
    %695 = arith.cmpi sge, %1, %694 : vector<1x256xi32>
    %c15_i32_252 = arith.constant 15 : i32
    %696 = vector.broadcast %c15_i32_252 : i32 to vector<1x256xi32>
    %697 = arith.cmpi slt, %3, %696 : vector<1x256xi32>
    %698 = arith.andi %695, %697 : vector<1x256xi1>
    %699 = arith.extui %698 : vector<1x256xi1> to vector<1x256xi32>
    %700 = arith.sitofp %699 : vector<1x256xi32> to vector<1x256xf32>
    %701 = vector.broadcast %700 : vector<1x256xf32> to vector<16x256xf32>
    %702 = arith.mulf %693, %701 : vector<16x256xf32>
    %c2_253 = arith.constant 2 : index
    %c0_254 = arith.constant 0 : index
    %c0_255 = arith.constant 0 : index
    %703 = vector.load %arg14[%c2_253, %c0_254, %c0_255] : memref<9x16x1xf32, #tpu.memory_space<vmem>>, vector<1x16x1xf32>
    %704 = vector.shape_cast %703 : vector<1x16x1xf32> to vector<16x1xf32>
    %705 = vector.broadcast %704 : vector<16x1xf32> to vector<16x256xf32>
    %706 = arith.mulf %705, %702 : vector<16x256xf32>
    %707 = arith.addf %692, %706 : vector<16x256xf32>
    %c1_i32_256 = arith.constant 1 : i32
    %708 = tpu.dynamic_rotate %664 by %c1_i32_256 dim 1 : vector<16x256xf32>, i32 -> vector<16x256xf32>
    %c1_i32_257 = arith.constant 1 : i32
    %709 = vector.broadcast %c1_i32_257 : i32 to vector<1x256xi32>
    %710 = arith.cmpi sge, %3, %709 : vector<1x256xi32>
    %711 = arith.extui %710 : vector<1x256xi1> to vector<1x256xi32>
    %712 = arith.sitofp %711 : vector<1x256xi32> to vector<1x256xf32>
    %713 = vector.broadcast %712 : vector<1x256xf32> to vector<16x256xf32>
    %714 = arith.mulf %708, %713 : vector<16x256xf32>
    %c3_258 = arith.constant 3 : index
    %c0_259 = arith.constant 0 : index
    %c0_260 = arith.constant 0 : index
    %715 = vector.load %arg14[%c3_258, %c0_259, %c0_260] : memref<9x16x1xf32, #tpu.memory_space<vmem>>, vector<1x16x1xf32>
    %716 = vector.shape_cast %715 : vector<1x16x1xf32> to vector<16x1xf32>
    %717 = vector.broadcast %716 : vector<16x1xf32> to vector<16x256xf32>
    %718 = arith.mulf %717, %714 : vector<16x256xf32>
    %719 = arith.addf %707, %718 : vector<16x256xf32>
    %c4_261 = arith.constant 4 : index
    %c0_262 = arith.constant 0 : index
    %c0_263 = arith.constant 0 : index
    %720 = vector.load %arg14[%c4_261, %c0_262, %c0_263] : memref<9x16x1xf32, #tpu.memory_space<vmem>>, vector<1x16x1xf32>
    %721 = vector.shape_cast %720 : vector<1x16x1xf32> to vector<16x1xf32>
    %722 = vector.broadcast %721 : vector<16x1xf32> to vector<16x256xf32>
    %723 = arith.mulf %722, %664 : vector<16x256xf32>
    %724 = arith.addf %719, %723 : vector<16x256xf32>
    %c255_i32_264 = arith.constant 255 : i32
    %725 = tpu.dynamic_rotate %664 by %c255_i32_264 dim 1 : vector<16x256xf32>, i32 -> vector<16x256xf32>
    %c15_i32_265 = arith.constant 15 : i32
    %726 = vector.broadcast %c15_i32_265 : i32 to vector<1x256xi32>
    %727 = arith.cmpi slt, %3, %726 : vector<1x256xi32>
    %728 = arith.extui %727 : vector<1x256xi1> to vector<1x256xi32>
    %729 = arith.sitofp %728 : vector<1x256xi32> to vector<1x256xf32>
    %730 = vector.broadcast %729 : vector<1x256xf32> to vector<16x256xf32>
    %731 = arith.mulf %725, %730 : vector<16x256xf32>
    %c5_266 = arith.constant 5 : index
    %c0_267 = arith.constant 0 : index
    %c0_268 = arith.constant 0 : index
    %732 = vector.load %arg14[%c5_266, %c0_267, %c0_268] : memref<9x16x1xf32, #tpu.memory_space<vmem>>, vector<1x16x1xf32>
    %733 = vector.shape_cast %732 : vector<1x16x1xf32> to vector<16x1xf32>
    %734 = vector.broadcast %733 : vector<16x1xf32> to vector<16x256xf32>
    %735 = arith.mulf %734, %731 : vector<16x256xf32>
    %736 = arith.addf %724, %735 : vector<16x256xf32>
    %c241_i32_269 = arith.constant 241 : i32
    %737 = tpu.dynamic_rotate %664 by %c241_i32_269 dim 1 : vector<16x256xf32>, i32 -> vector<16x256xf32>
    %c15_i32_270 = arith.constant 15 : i32
    %738 = vector.broadcast %c15_i32_270 : i32 to vector<1x256xi32>
    %739 = arith.cmpi slt, %1, %738 : vector<1x256xi32>
    %c1_i32_271 = arith.constant 1 : i32
    %740 = vector.broadcast %c1_i32_271 : i32 to vector<1x256xi32>
    %741 = arith.cmpi sge, %3, %740 : vector<1x256xi32>
    %742 = arith.andi %739, %741 : vector<1x256xi1>
    %743 = arith.extui %742 : vector<1x256xi1> to vector<1x256xi32>
    %744 = arith.sitofp %743 : vector<1x256xi32> to vector<1x256xf32>
    %745 = vector.broadcast %744 : vector<1x256xf32> to vector<16x256xf32>
    %746 = arith.mulf %737, %745 : vector<16x256xf32>
    %c6_272 = arith.constant 6 : index
    %c0_273 = arith.constant 0 : index
    %c0_274 = arith.constant 0 : index
    %747 = vector.load %arg14[%c6_272, %c0_273, %c0_274] : memref<9x16x1xf32, #tpu.memory_space<vmem>>, vector<1x16x1xf32>
    %748 = vector.shape_cast %747 : vector<1x16x1xf32> to vector<16x1xf32>
    %749 = vector.broadcast %748 : vector<16x1xf32> to vector<16x256xf32>
    %750 = arith.mulf %749, %746 : vector<16x256xf32>
    %751 = arith.addf %736, %750 : vector<16x256xf32>
    %c240_i32_275 = arith.constant 240 : i32
    %752 = tpu.dynamic_rotate %664 by %c240_i32_275 dim 1 : vector<16x256xf32>, i32 -> vector<16x256xf32>
    %c15_i32_276 = arith.constant 15 : i32
    %753 = vector.broadcast %c15_i32_276 : i32 to vector<1x256xi32>
    %754 = arith.cmpi slt, %1, %753 : vector<1x256xi32>
    %755 = arith.extui %754 : vector<1x256xi1> to vector<1x256xi32>
    %756 = arith.sitofp %755 : vector<1x256xi32> to vector<1x256xf32>
    %757 = vector.broadcast %756 : vector<1x256xf32> to vector<16x256xf32>
    %758 = arith.mulf %752, %757 : vector<16x256xf32>
    %c7_277 = arith.constant 7 : index
    %c0_278 = arith.constant 0 : index
    %c0_279 = arith.constant 0 : index
    %759 = vector.load %arg14[%c7_277, %c0_278, %c0_279] : memref<9x16x1xf32, #tpu.memory_space<vmem>>, vector<1x16x1xf32>
    %760 = vector.shape_cast %759 : vector<1x16x1xf32> to vector<16x1xf32>
    %761 = vector.broadcast %760 : vector<16x1xf32> to vector<16x256xf32>
    %762 = arith.mulf %761, %758 : vector<16x256xf32>
    %763 = arith.addf %751, %762 : vector<16x256xf32>
    %c239_i32_280 = arith.constant 239 : i32
    %764 = tpu.dynamic_rotate %664 by %c239_i32_280 dim 1 : vector<16x256xf32>, i32 -> vector<16x256xf32>
    %c15_i32_281 = arith.constant 15 : i32
    %765 = vector.broadcast %c15_i32_281 : i32 to vector<1x256xi32>
    %766 = arith.cmpi slt, %1, %765 : vector<1x256xi32>
    %c15_i32_282 = arith.constant 15 : i32
    %767 = vector.broadcast %c15_i32_282 : i32 to vector<1x256xi32>
    %768 = arith.cmpi slt, %3, %767 : vector<1x256xi32>
    %769 = arith.andi %766, %768 : vector<1x256xi1>
    %770 = arith.extui %769 : vector<1x256xi1> to vector<1x256xi32>
    %771 = arith.sitofp %770 : vector<1x256xi32> to vector<1x256xf32>
    %772 = vector.broadcast %771 : vector<1x256xf32> to vector<16x256xf32>
    %773 = arith.mulf %764, %772 : vector<16x256xf32>
    %c8_283 = arith.constant 8 : index
    %c0_284 = arith.constant 0 : index
    %c0_285 = arith.constant 0 : index
    %774 = vector.load %arg14[%c8_283, %c0_284, %c0_285] : memref<9x16x1xf32, #tpu.memory_space<vmem>>, vector<1x16x1xf32>
    %775 = vector.shape_cast %774 : vector<1x16x1xf32> to vector<16x1xf32>
    %776 = vector.broadcast %775 : vector<16x1xf32> to vector<16x256xf32>
    %777 = arith.mulf %776, %773 : vector<16x256xf32>
    %778 = arith.addf %763, %777 : vector<16x256xf32>
    %779 = arith.addf %537, %778 : vector<16x256xf32>
    %780 = arith.addf %779, %489 : vector<16x256xf32>
    %cst_286 = arith.constant 6.250000e-02 : f32
    %781 = vector.broadcast %cst_286 : f32 to vector<1x16xf32>
    %cst_287 = arith.constant dense<0.000000e+00> : vector<1x256xf32>
    %782 = tpu.matmul %781, %780, %cst_287 {dimension_numbers = #tpu.dot_dimension_numbers<[1], [0], [0], [1], [0, 0, 1, 1], [], []>} : vector<1x16xf32>, vector<16x256xf32>, vector<1x256xf32> -> vector<1x256xf32>
    %783 = vector.broadcast %782 : vector<1x256xf32> to vector<16x256xf32>
    %784 = arith.subf %780, %783 : vector<16x256xf32>
    %785 = arith.mulf %784, %784 : vector<16x256xf32>
    %cst_288 = arith.constant dense<0.000000e+00> : vector<1x256xf32>
    %786 = tpu.matmul %781, %785, %cst_288 {dimension_numbers = #tpu.dot_dimension_numbers<[1], [0], [0], [1], [0, 0, 1, 1], [], []>} : vector<1x16xf32>, vector<16x256xf32>, vector<1x256xf32> -> vector<1x256xf32>
    %cst_289 = arith.constant 9.99999974E-6 : f32
    %787 = vector.broadcast %cst_289 : f32 to vector<1x256xf32>
    %788 = arith.addf %786, %787 : vector<1x256xf32>
    %789 = math.rsqrt %788 : vector<1x256xf32>
    %790 = vector.broadcast %789 : vector<1x256xf32> to vector<16x256xf32>
    %791 = arith.mulf %784, %790 : vector<16x256xf32>
    %c0_290 = arith.constant 0 : index
    %c0_291 = arith.constant 0 : index
    %792 = vector.load %arg15[%c0_290, %c0_291] : memref<16x1xf32, #tpu.memory_space<vmem>>, vector<16x1xf32>
    %793 = vector.broadcast %792 : vector<16x1xf32> to vector<16x256xf32>
    %794 = arith.mulf %791, %793 : vector<16x256xf32>
    %c0_292 = arith.constant 0 : index
    %c0_293 = arith.constant 0 : index
    %795 = vector.load %arg16[%c0_292, %c0_293] : memref<16x1xf32, #tpu.memory_space<vmem>>, vector<16x1xf32>
    %796 = vector.broadcast %795 : vector<16x1xf32> to vector<16x256xf32>
    %797 = arith.addf %794, %796 : vector<16x256xf32>
    %c0_294 = arith.constant 0 : index
    %c0_295 = arith.constant 0 : index
    %798 = vector.load %arg17[%c0_294, %c0_295] : memref<64x16xf32, #tpu.memory_space<vmem>>, vector<64x16xf32>
    %799 = arith.truncf %798 : vector<64x16xf32> to vector<64x16xbf16>
    %800 = arith.truncf %797 : vector<16x256xf32> to vector<16x256xbf16>
    %cst_296 = arith.constant dense<0.000000e+00> : vector<64x256xf32>
    %801 = tpu.matmul %799, %800, %cst_296 {dimension_numbers = #tpu.dot_dimension_numbers<[1], [0], [0], [1], [0, 0, 1, 1], [], []>} : vector<64x16xbf16>, vector<16x256xbf16>, vector<64x256xf32> -> vector<64x256xf32>
    %802 = arith.mulf %801, %801 : vector<64x256xf32>
    %803 = arith.mulf %801, %802 : vector<64x256xf32>
    %cst_297 = arith.constant 4.471500e-02 : f32
    %804 = vector.broadcast %cst_297 : f32 to vector<64x256xf32>
    %805 = arith.mulf %804, %803 : vector<64x256xf32>
    %806 = arith.addf %801, %805 : vector<64x256xf32>
    %cst_298 = arith.constant 0.797884583 : f32
    %807 = vector.broadcast %cst_298 : f32 to vector<64x256xf32>
    %808 = arith.mulf %807, %806 : vector<64x256xf32>
    %809 = math.tanh %808 : vector<64x256xf32>
    %cst_299 = arith.constant 1.000000e+00 : f32
    %810 = vector.broadcast %cst_299 : f32 to vector<64x256xf32>
    %811 = arith.addf %810, %809 : vector<64x256xf32>
    %cst_300 = arith.constant 5.000000e-01 : f32
    %812 = vector.broadcast %cst_300 : f32 to vector<64x256xf32>
    %813 = arith.mulf %812, %811 : vector<64x256xf32>
    %814 = arith.mulf %801, %813 : vector<64x256xf32>
    %cst_301 = arith.constant 0.000000e+00 : f32
    %815 = vector.broadcast %cst_301 : f32 to vector<64x256xf32>
    %c17_i32_302 = arith.constant 17 : i32
    %816 = tpu.dynamic_rotate %814 by %c17_i32_302 dim 1 : vector<64x256xf32>, i32 -> vector<64x256xf32>
    %c1_i32_303 = arith.constant 1 : i32
    %817 = vector.broadcast %c1_i32_303 : i32 to vector<1x256xi32>
    %818 = arith.cmpi sge, %1, %817 : vector<1x256xi32>
    %c1_i32_304 = arith.constant 1 : i32
    %819 = vector.broadcast %c1_i32_304 : i32 to vector<1x256xi32>
    %820 = arith.cmpi sge, %3, %819 : vector<1x256xi32>
    %821 = arith.andi %818, %820 : vector<1x256xi1>
    %822 = arith.extui %821 : vector<1x256xi1> to vector<1x256xi32>
    %823 = arith.sitofp %822 : vector<1x256xi32> to vector<1x256xf32>
    %824 = vector.broadcast %823 : vector<1x256xf32> to vector<64x256xf32>
    %825 = arith.mulf %816, %824 : vector<64x256xf32>
    %c0_305 = arith.constant 0 : index
    %c0_306 = arith.constant 0 : index
    %c0_307 = arith.constant 0 : index
    %826 = vector.load %arg18[%c0_305, %c0_306, %c0_307] : memref<9x64x1xf32, #tpu.memory_space<vmem>>, vector<1x64x1xf32>
    %827 = vector.shape_cast %826 : vector<1x64x1xf32> to vector<64x1xf32>
    %828 = vector.broadcast %827 : vector<64x1xf32> to vector<64x256xf32>
    %829 = arith.mulf %828, %825 : vector<64x256xf32>
    %830 = arith.addf %815, %829 : vector<64x256xf32>
    %c16_i32_308 = arith.constant 16 : i32
    %831 = tpu.dynamic_rotate %814 by %c16_i32_308 dim 1 : vector<64x256xf32>, i32 -> vector<64x256xf32>
    %c1_i32_309 = arith.constant 1 : i32
    %832 = vector.broadcast %c1_i32_309 : i32 to vector<1x256xi32>
    %833 = arith.cmpi sge, %1, %832 : vector<1x256xi32>
    %834 = arith.extui %833 : vector<1x256xi1> to vector<1x256xi32>
    %835 = arith.sitofp %834 : vector<1x256xi32> to vector<1x256xf32>
    %836 = vector.broadcast %835 : vector<1x256xf32> to vector<64x256xf32>
    %837 = arith.mulf %831, %836 : vector<64x256xf32>
    %c1_310 = arith.constant 1 : index
    %c0_311 = arith.constant 0 : index
    %c0_312 = arith.constant 0 : index
    %838 = vector.load %arg18[%c1_310, %c0_311, %c0_312] : memref<9x64x1xf32, #tpu.memory_space<vmem>>, vector<1x64x1xf32>
    %839 = vector.shape_cast %838 : vector<1x64x1xf32> to vector<64x1xf32>
    %840 = vector.broadcast %839 : vector<64x1xf32> to vector<64x256xf32>
    %841 = arith.mulf %840, %837 : vector<64x256xf32>
    %842 = arith.addf %830, %841 : vector<64x256xf32>
    %c15_i32_313 = arith.constant 15 : i32
    %843 = tpu.dynamic_rotate %814 by %c15_i32_313 dim 1 : vector<64x256xf32>, i32 -> vector<64x256xf32>
    %c1_i32_314 = arith.constant 1 : i32
    %844 = vector.broadcast %c1_i32_314 : i32 to vector<1x256xi32>
    %845 = arith.cmpi sge, %1, %844 : vector<1x256xi32>
    %c15_i32_315 = arith.constant 15 : i32
    %846 = vector.broadcast %c15_i32_315 : i32 to vector<1x256xi32>
    %847 = arith.cmpi slt, %3, %846 : vector<1x256xi32>
    %848 = arith.andi %845, %847 : vector<1x256xi1>
    %849 = arith.extui %848 : vector<1x256xi1> to vector<1x256xi32>
    %850 = arith.sitofp %849 : vector<1x256xi32> to vector<1x256xf32>
    %851 = vector.broadcast %850 : vector<1x256xf32> to vector<64x256xf32>
    %852 = arith.mulf %843, %851 : vector<64x256xf32>
    %c2_316 = arith.constant 2 : index
    %c0_317 = arith.constant 0 : index
    %c0_318 = arith.constant 0 : index
    %853 = vector.load %arg18[%c2_316, %c0_317, %c0_318] : memref<9x64x1xf32, #tpu.memory_space<vmem>>, vector<1x64x1xf32>
    %854 = vector.shape_cast %853 : vector<1x64x1xf32> to vector<64x1xf32>
    %855 = vector.broadcast %854 : vector<64x1xf32> to vector<64x256xf32>
    %856 = arith.mulf %855, %852 : vector<64x256xf32>
    %857 = arith.addf %842, %856 : vector<64x256xf32>
    %c1_i32_319 = arith.constant 1 : i32
    %858 = tpu.dynamic_rotate %814 by %c1_i32_319 dim 1 : vector<64x256xf32>, i32 -> vector<64x256xf32>
    %c1_i32_320 = arith.constant 1 : i32
    %859 = vector.broadcast %c1_i32_320 : i32 to vector<1x256xi32>
    %860 = arith.cmpi sge, %3, %859 : vector<1x256xi32>
    %861 = arith.extui %860 : vector<1x256xi1> to vector<1x256xi32>
    %862 = arith.sitofp %861 : vector<1x256xi32> to vector<1x256xf32>
    %863 = vector.broadcast %862 : vector<1x256xf32> to vector<64x256xf32>
    %864 = arith.mulf %858, %863 : vector<64x256xf32>
    %c3_321 = arith.constant 3 : index
    %c0_322 = arith.constant 0 : index
    %c0_323 = arith.constant 0 : index
    %865 = vector.load %arg18[%c3_321, %c0_322, %c0_323] : memref<9x64x1xf32, #tpu.memory_space<vmem>>, vector<1x64x1xf32>
    %866 = vector.shape_cast %865 : vector<1x64x1xf32> to vector<64x1xf32>
    %867 = vector.broadcast %866 : vector<64x1xf32> to vector<64x256xf32>
    %868 = arith.mulf %867, %864 : vector<64x256xf32>
    %869 = arith.addf %857, %868 : vector<64x256xf32>
    %c4_324 = arith.constant 4 : index
    %c0_325 = arith.constant 0 : index
    %c0_326 = arith.constant 0 : index
    %870 = vector.load %arg18[%c4_324, %c0_325, %c0_326] : memref<9x64x1xf32, #tpu.memory_space<vmem>>, vector<1x64x1xf32>
    %871 = vector.shape_cast %870 : vector<1x64x1xf32> to vector<64x1xf32>
    %872 = vector.broadcast %871 : vector<64x1xf32> to vector<64x256xf32>
    %873 = arith.mulf %872, %814 : vector<64x256xf32>
    %874 = arith.addf %869, %873 : vector<64x256xf32>
    %c255_i32_327 = arith.constant 255 : i32
    %875 = tpu.dynamic_rotate %814 by %c255_i32_327 dim 1 : vector<64x256xf32>, i32 -> vector<64x256xf32>
    %c15_i32_328 = arith.constant 15 : i32
    %876 = vector.broadcast %c15_i32_328 : i32 to vector<1x256xi32>
    %877 = arith.cmpi slt, %3, %876 : vector<1x256xi32>
    %878 = arith.extui %877 : vector<1x256xi1> to vector<1x256xi32>
    %879 = arith.sitofp %878 : vector<1x256xi32> to vector<1x256xf32>
    %880 = vector.broadcast %879 : vector<1x256xf32> to vector<64x256xf32>
    %881 = arith.mulf %875, %880 : vector<64x256xf32>
    %c5_329 = arith.constant 5 : index
    %c0_330 = arith.constant 0 : index
    %c0_331 = arith.constant 0 : index
    %882 = vector.load %arg18[%c5_329, %c0_330, %c0_331] : memref<9x64x1xf32, #tpu.memory_space<vmem>>, vector<1x64x1xf32>
    %883 = vector.shape_cast %882 : vector<1x64x1xf32> to vector<64x1xf32>
    %884 = vector.broadcast %883 : vector<64x1xf32> to vector<64x256xf32>
    %885 = arith.mulf %884, %881 : vector<64x256xf32>
    %886 = arith.addf %874, %885 : vector<64x256xf32>
    %c241_i32_332 = arith.constant 241 : i32
    %887 = tpu.dynamic_rotate %814 by %c241_i32_332 dim 1 : vector<64x256xf32>, i32 -> vector<64x256xf32>
    %c15_i32_333 = arith.constant 15 : i32
    %888 = vector.broadcast %c15_i32_333 : i32 to vector<1x256xi32>
    %889 = arith.cmpi slt, %1, %888 : vector<1x256xi32>
    %c1_i32_334 = arith.constant 1 : i32
    %890 = vector.broadcast %c1_i32_334 : i32 to vector<1x256xi32>
    %891 = arith.cmpi sge, %3, %890 : vector<1x256xi32>
    %892 = arith.andi %889, %891 : vector<1x256xi1>
    %893 = arith.extui %892 : vector<1x256xi1> to vector<1x256xi32>
    %894 = arith.sitofp %893 : vector<1x256xi32> to vector<1x256xf32>
    %895 = vector.broadcast %894 : vector<1x256xf32> to vector<64x256xf32>
    %896 = arith.mulf %887, %895 : vector<64x256xf32>
    %c6_335 = arith.constant 6 : index
    %c0_336 = arith.constant 0 : index
    %c0_337 = arith.constant 0 : index
    %897 = vector.load %arg18[%c6_335, %c0_336, %c0_337] : memref<9x64x1xf32, #tpu.memory_space<vmem>>, vector<1x64x1xf32>
    %898 = vector.shape_cast %897 : vector<1x64x1xf32> to vector<64x1xf32>
    %899 = vector.broadcast %898 : vector<64x1xf32> to vector<64x256xf32>
    %900 = arith.mulf %899, %896 : vector<64x256xf32>
    %901 = arith.addf %886, %900 : vector<64x256xf32>
    %c240_i32_338 = arith.constant 240 : i32
    %902 = tpu.dynamic_rotate %814 by %c240_i32_338 dim 1 : vector<64x256xf32>, i32 -> vector<64x256xf32>
    %c15_i32_339 = arith.constant 15 : i32
    %903 = vector.broadcast %c15_i32_339 : i32 to vector<1x256xi32>
    %904 = arith.cmpi slt, %1, %903 : vector<1x256xi32>
    %905 = arith.extui %904 : vector<1x256xi1> to vector<1x256xi32>
    %906 = arith.sitofp %905 : vector<1x256xi32> to vector<1x256xf32>
    %907 = vector.broadcast %906 : vector<1x256xf32> to vector<64x256xf32>
    %908 = arith.mulf %902, %907 : vector<64x256xf32>
    %c7_340 = arith.constant 7 : index
    %c0_341 = arith.constant 0 : index
    %c0_342 = arith.constant 0 : index
    %909 = vector.load %arg18[%c7_340, %c0_341, %c0_342] : memref<9x64x1xf32, #tpu.memory_space<vmem>>, vector<1x64x1xf32>
    %910 = vector.shape_cast %909 : vector<1x64x1xf32> to vector<64x1xf32>
    %911 = vector.broadcast %910 : vector<64x1xf32> to vector<64x256xf32>
    %912 = arith.mulf %911, %908 : vector<64x256xf32>
    %913 = arith.addf %901, %912 : vector<64x256xf32>
    %c239_i32_343 = arith.constant 239 : i32
    %914 = tpu.dynamic_rotate %814 by %c239_i32_343 dim 1 : vector<64x256xf32>, i32 -> vector<64x256xf32>
    %c15_i32_344 = arith.constant 15 : i32
    %915 = vector.broadcast %c15_i32_344 : i32 to vector<1x256xi32>
    %916 = arith.cmpi slt, %1, %915 : vector<1x256xi32>
    %c15_i32_345 = arith.constant 15 : i32
    %917 = vector.broadcast %c15_i32_345 : i32 to vector<1x256xi32>
    %918 = arith.cmpi slt, %3, %917 : vector<1x256xi32>
    %919 = arith.andi %916, %918 : vector<1x256xi1>
    %920 = arith.extui %919 : vector<1x256xi1> to vector<1x256xi32>
    %921 = arith.sitofp %920 : vector<1x256xi32> to vector<1x256xf32>
    %922 = vector.broadcast %921 : vector<1x256xf32> to vector<64x256xf32>
    %923 = arith.mulf %914, %922 : vector<64x256xf32>
    %c8_346 = arith.constant 8 : index
    %c0_347 = arith.constant 0 : index
    %c0_348 = arith.constant 0 : index
    %924 = vector.load %arg18[%c8_346, %c0_347, %c0_348] : memref<9x64x1xf32, #tpu.memory_space<vmem>>, vector<1x64x1xf32>
    %925 = vector.shape_cast %924 : vector<1x64x1xf32> to vector<64x1xf32>
    %926 = vector.broadcast %925 : vector<64x1xf32> to vector<64x256xf32>
    %927 = arith.mulf %926, %923 : vector<64x256xf32>
    %928 = arith.addf %913, %927 : vector<64x256xf32>
    %929 = arith.mulf %928, %928 : vector<64x256xf32>
    %930 = arith.mulf %928, %929 : vector<64x256xf32>
    %cst_349 = arith.constant 4.471500e-02 : f32
    %931 = vector.broadcast %cst_349 : f32 to vector<64x256xf32>
    %932 = arith.mulf %931, %930 : vector<64x256xf32>
    %933 = arith.addf %928, %932 : vector<64x256xf32>
    %cst_350 = arith.constant 0.797884583 : f32
    %934 = vector.broadcast %cst_350 : f32 to vector<64x256xf32>
    %935 = arith.mulf %934, %933 : vector<64x256xf32>
    %936 = math.tanh %935 : vector<64x256xf32>
    %cst_351 = arith.constant 1.000000e+00 : f32
    %937 = vector.broadcast %cst_351 : f32 to vector<64x256xf32>
    %938 = arith.addf %937, %936 : vector<64x256xf32>
    %cst_352 = arith.constant 5.000000e-01 : f32
    %939 = vector.broadcast %cst_352 : f32 to vector<64x256xf32>
    %940 = arith.mulf %939, %938 : vector<64x256xf32>
    %941 = arith.mulf %928, %940 : vector<64x256xf32>
    %c0_353 = arith.constant 0 : index
    %c0_354 = arith.constant 0 : index
    %942 = vector.load %arg19[%c0_353, %c0_354] : memref<16x64xf32, #tpu.memory_space<vmem>>, vector<16x64xf32>
    %943 = arith.truncf %942 : vector<16x64xf32> to vector<16x64xbf16>
    %944 = arith.truncf %941 : vector<64x256xf32> to vector<64x256xbf16>
    %cst_355 = arith.constant dense<0.000000e+00> : vector<16x256xf32>
    %945 = tpu.matmul %943, %944, %cst_355 {dimension_numbers = #tpu.dot_dimension_numbers<[1], [0], [0], [1], [0, 0, 1, 1], [], []>} : vector<16x64xbf16>, vector<64x256xbf16>, vector<16x256xf32> -> vector<16x256xf32>
    %946 = arith.addf %945, %780 : vector<16x256xf32>
    %cst_356 = arith.constant 0.000000e+00 : f32
    %947 = vector.broadcast %cst_356 : f32 to vector<3x256xf32>
    %c17_i32_357 = arith.constant 17 : i32
    %948 = tpu.dynamic_rotate %946 by %c17_i32_357 dim 1 : vector<16x256xf32>, i32 -> vector<16x256xf32>
    %c1_i32_358 = arith.constant 1 : i32
    %949 = vector.broadcast %c1_i32_358 : i32 to vector<1x256xi32>
    %950 = arith.cmpi sge, %1, %949 : vector<1x256xi32>
    %c1_i32_359 = arith.constant 1 : i32
    %951 = vector.broadcast %c1_i32_359 : i32 to vector<1x256xi32>
    %952 = arith.cmpi sge, %3, %951 : vector<1x256xi32>
    %953 = arith.andi %950, %952 : vector<1x256xi1>
    %954 = arith.extui %953 : vector<1x256xi1> to vector<1x256xi32>
    %955 = arith.sitofp %954 : vector<1x256xi32> to vector<1x256xf32>
    %956 = vector.broadcast %955 : vector<1x256xf32> to vector<16x256xf32>
    %957 = arith.mulf %948, %956 : vector<16x256xf32>
    %c0_360 = arith.constant 0 : index
    %c0_361 = arith.constant 0 : index
    %c0_362 = arith.constant 0 : index
    %958 = vector.load %arg20[%c0_360, %c0_361, %c0_362] : memref<9x3x16xf32, #tpu.memory_space<vmem>>, vector<1x3x16xf32>
    %959 = vector.shape_cast %958 : vector<1x3x16xf32> to vector<3x16xf32>
    %960 = arith.truncf %959 : vector<3x16xf32> to vector<3x16xbf16>
    %961 = arith.truncf %957 : vector<16x256xf32> to vector<16x256xbf16>
    %cst_363 = arith.constant dense<0.000000e+00> : vector<3x256xf32>
    %962 = tpu.matmul %960, %961, %cst_363 {dimension_numbers = #tpu.dot_dimension_numbers<[1], [0], [0], [1], [0, 0, 1, 1], [], []>} : vector<3x16xbf16>, vector<16x256xbf16>, vector<3x256xf32> -> vector<3x256xf32>
    %963 = arith.addf %947, %962 : vector<3x256xf32>
    %c16_i32_364 = arith.constant 16 : i32
    %964 = tpu.dynamic_rotate %946 by %c16_i32_364 dim 1 : vector<16x256xf32>, i32 -> vector<16x256xf32>
    %c1_i32_365 = arith.constant 1 : i32
    %965 = vector.broadcast %c1_i32_365 : i32 to vector<1x256xi32>
    %966 = arith.cmpi sge, %1, %965 : vector<1x256xi32>
    %967 = arith.extui %966 : vector<1x256xi1> to vector<1x256xi32>
    %968 = arith.sitofp %967 : vector<1x256xi32> to vector<1x256xf32>
    %969 = vector.broadcast %968 : vector<1x256xf32> to vector<16x256xf32>
    %970 = arith.mulf %964, %969 : vector<16x256xf32>
    %c1_366 = arith.constant 1 : index
    %c0_367 = arith.constant 0 : index
    %c0_368 = arith.constant 0 : index
    %971 = vector.load %arg20[%c1_366, %c0_367, %c0_368] : memref<9x3x16xf32, #tpu.memory_space<vmem>>, vector<1x3x16xf32>
    %972 = vector.shape_cast %971 : vector<1x3x16xf32> to vector<3x16xf32>
    %973 = arith.truncf %972 : vector<3x16xf32> to vector<3x16xbf16>
    %974 = arith.truncf %970 : vector<16x256xf32> to vector<16x256xbf16>
    %cst_369 = arith.constant dense<0.000000e+00> : vector<3x256xf32>
    %975 = tpu.matmul %973, %974, %cst_369 {dimension_numbers = #tpu.dot_dimension_numbers<[1], [0], [0], [1], [0, 0, 1, 1], [], []>} : vector<3x16xbf16>, vector<16x256xbf16>, vector<3x256xf32> -> vector<3x256xf32>
    %976 = arith.addf %963, %975 : vector<3x256xf32>
    %c15_i32_370 = arith.constant 15 : i32
    %977 = tpu.dynamic_rotate %946 by %c15_i32_370 dim 1 : vector<16x256xf32>, i32 -> vector<16x256xf32>
    %c1_i32_371 = arith.constant 1 : i32
    %978 = vector.broadcast %c1_i32_371 : i32 to vector<1x256xi32>
    %979 = arith.cmpi sge, %1, %978 : vector<1x256xi32>
    %c15_i32_372 = arith.constant 15 : i32
    %980 = vector.broadcast %c15_i32_372 : i32 to vector<1x256xi32>
    %981 = arith.cmpi slt, %3, %980 : vector<1x256xi32>
    %982 = arith.andi %979, %981 : vector<1x256xi1>
    %983 = arith.extui %982 : vector<1x256xi1> to vector<1x256xi32>
    %984 = arith.sitofp %983 : vector<1x256xi32> to vector<1x256xf32>
    %985 = vector.broadcast %984 : vector<1x256xf32> to vector<16x256xf32>
    %986 = arith.mulf %977, %985 : vector<16x256xf32>
    %c2_373 = arith.constant 2 : index
    %c0_374 = arith.constant 0 : index
    %c0_375 = arith.constant 0 : index
    %987 = vector.load %arg20[%c2_373, %c0_374, %c0_375] : memref<9x3x16xf32, #tpu.memory_space<vmem>>, vector<1x3x16xf32>
    %988 = vector.shape_cast %987 : vector<1x3x16xf32> to vector<3x16xf32>
    %989 = arith.truncf %988 : vector<3x16xf32> to vector<3x16xbf16>
    %990 = arith.truncf %986 : vector<16x256xf32> to vector<16x256xbf16>
    %cst_376 = arith.constant dense<0.000000e+00> : vector<3x256xf32>
    %991 = tpu.matmul %989, %990, %cst_376 {dimension_numbers = #tpu.dot_dimension_numbers<[1], [0], [0], [1], [0, 0, 1, 1], [], []>} : vector<3x16xbf16>, vector<16x256xbf16>, vector<3x256xf32> -> vector<3x256xf32>
    %992 = arith.addf %976, %991 : vector<3x256xf32>
    %c1_i32_377 = arith.constant 1 : i32
    %993 = tpu.dynamic_rotate %946 by %c1_i32_377 dim 1 : vector<16x256xf32>, i32 -> vector<16x256xf32>
    %c1_i32_378 = arith.constant 1 : i32
    %994 = vector.broadcast %c1_i32_378 : i32 to vector<1x256xi32>
    %995 = arith.cmpi sge, %3, %994 : vector<1x256xi32>
    %996 = arith.extui %995 : vector<1x256xi1> to vector<1x256xi32>
    %997 = arith.sitofp %996 : vector<1x256xi32> to vector<1x256xf32>
    %998 = vector.broadcast %997 : vector<1x256xf32> to vector<16x256xf32>
    %999 = arith.mulf %993, %998 : vector<16x256xf32>
    %c3_379 = arith.constant 3 : index
    %c0_380 = arith.constant 0 : index
    %c0_381 = arith.constant 0 : index
    %1000 = vector.load %arg20[%c3_379, %c0_380, %c0_381] : memref<9x3x16xf32, #tpu.memory_space<vmem>>, vector<1x3x16xf32>
    %1001 = vector.shape_cast %1000 : vector<1x3x16xf32> to vector<3x16xf32>
    %1002 = arith.truncf %1001 : vector<3x16xf32> to vector<3x16xbf16>
    %1003 = arith.truncf %999 : vector<16x256xf32> to vector<16x256xbf16>
    %cst_382 = arith.constant dense<0.000000e+00> : vector<3x256xf32>
    %1004 = tpu.matmul %1002, %1003, %cst_382 {dimension_numbers = #tpu.dot_dimension_numbers<[1], [0], [0], [1], [0, 0, 1, 1], [], []>} : vector<3x16xbf16>, vector<16x256xbf16>, vector<3x256xf32> -> vector<3x256xf32>
    %1005 = arith.addf %992, %1004 : vector<3x256xf32>
    %c4_383 = arith.constant 4 : index
    %c0_384 = arith.constant 0 : index
    %c0_385 = arith.constant 0 : index
    %1006 = vector.load %arg20[%c4_383, %c0_384, %c0_385] : memref<9x3x16xf32, #tpu.memory_space<vmem>>, vector<1x3x16xf32>
    %1007 = vector.shape_cast %1006 : vector<1x3x16xf32> to vector<3x16xf32>
    %1008 = arith.truncf %1007 : vector<3x16xf32> to vector<3x16xbf16>
    %1009 = arith.truncf %946 : vector<16x256xf32> to vector<16x256xbf16>
    %cst_386 = arith.constant dense<0.000000e+00> : vector<3x256xf32>
    %1010 = tpu.matmul %1008, %1009, %cst_386 {dimension_numbers = #tpu.dot_dimension_numbers<[1], [0], [0], [1], [0, 0, 1, 1], [], []>} : vector<3x16xbf16>, vector<16x256xbf16>, vector<3x256xf32> -> vector<3x256xf32>
    %1011 = arith.addf %1005, %1010 : vector<3x256xf32>
    %c255_i32_387 = arith.constant 255 : i32
    %1012 = tpu.dynamic_rotate %946 by %c255_i32_387 dim 1 : vector<16x256xf32>, i32 -> vector<16x256xf32>
    %c15_i32_388 = arith.constant 15 : i32
    %1013 = vector.broadcast %c15_i32_388 : i32 to vector<1x256xi32>
    %1014 = arith.cmpi slt, %3, %1013 : vector<1x256xi32>
    %1015 = arith.extui %1014 : vector<1x256xi1> to vector<1x256xi32>
    %1016 = arith.sitofp %1015 : vector<1x256xi32> to vector<1x256xf32>
    %1017 = vector.broadcast %1016 : vector<1x256xf32> to vector<16x256xf32>
    %1018 = arith.mulf %1012, %1017 : vector<16x256xf32>
    %c5_389 = arith.constant 5 : index
    %c0_390 = arith.constant 0 : index
    %c0_391 = arith.constant 0 : index
    %1019 = vector.load %arg20[%c5_389, %c0_390, %c0_391] : memref<9x3x16xf32, #tpu.memory_space<vmem>>, vector<1x3x16xf32>
    %1020 = vector.shape_cast %1019 : vector<1x3x16xf32> to vector<3x16xf32>
    %1021 = arith.truncf %1020 : vector<3x16xf32> to vector<3x16xbf16>
    %1022 = arith.truncf %1018 : vector<16x256xf32> to vector<16x256xbf16>
    %cst_392 = arith.constant dense<0.000000e+00> : vector<3x256xf32>
    %1023 = tpu.matmul %1021, %1022, %cst_392 {dimension_numbers = #tpu.dot_dimension_numbers<[1], [0], [0], [1], [0, 0, 1, 1], [], []>} : vector<3x16xbf16>, vector<16x256xbf16>, vector<3x256xf32> -> vector<3x256xf32>
    %1024 = arith.addf %1011, %1023 : vector<3x256xf32>
    %c241_i32_393 = arith.constant 241 : i32
    %1025 = tpu.dynamic_rotate %946 by %c241_i32_393 dim 1 : vector<16x256xf32>, i32 -> vector<16x256xf32>
    %c15_i32_394 = arith.constant 15 : i32
    %1026 = vector.broadcast %c15_i32_394 : i32 to vector<1x256xi32>
    %1027 = arith.cmpi slt, %1, %1026 : vector<1x256xi32>
    %c1_i32_395 = arith.constant 1 : i32
    %1028 = vector.broadcast %c1_i32_395 : i32 to vector<1x256xi32>
    %1029 = arith.cmpi sge, %3, %1028 : vector<1x256xi32>
    %1030 = arith.andi %1027, %1029 : vector<1x256xi1>
    %1031 = arith.extui %1030 : vector<1x256xi1> to vector<1x256xi32>
    %1032 = arith.sitofp %1031 : vector<1x256xi32> to vector<1x256xf32>
    %1033 = vector.broadcast %1032 : vector<1x256xf32> to vector<16x256xf32>
    %1034 = arith.mulf %1025, %1033 : vector<16x256xf32>
    %c6_396 = arith.constant 6 : index
    %c0_397 = arith.constant 0 : index
    %c0_398 = arith.constant 0 : index
    %1035 = vector.load %arg20[%c6_396, %c0_397, %c0_398] : memref<9x3x16xf32, #tpu.memory_space<vmem>>, vector<1x3x16xf32>
    %1036 = vector.shape_cast %1035 : vector<1x3x16xf32> to vector<3x16xf32>
    %1037 = arith.truncf %1036 : vector<3x16xf32> to vector<3x16xbf16>
    %1038 = arith.truncf %1034 : vector<16x256xf32> to vector<16x256xbf16>
    %cst_399 = arith.constant dense<0.000000e+00> : vector<3x256xf32>
    %1039 = tpu.matmul %1037, %1038, %cst_399 {dimension_numbers = #tpu.dot_dimension_numbers<[1], [0], [0], [1], [0, 0, 1, 1], [], []>} : vector<3x16xbf16>, vector<16x256xbf16>, vector<3x256xf32> -> vector<3x256xf32>
    %1040 = arith.addf %1024, %1039 : vector<3x256xf32>
    %c240_i32_400 = arith.constant 240 : i32
    %1041 = tpu.dynamic_rotate %946 by %c240_i32_400 dim 1 : vector<16x256xf32>, i32 -> vector<16x256xf32>
    %c15_i32_401 = arith.constant 15 : i32
    %1042 = vector.broadcast %c15_i32_401 : i32 to vector<1x256xi32>
    %1043 = arith.cmpi slt, %1, %1042 : vector<1x256xi32>
    %1044 = arith.extui %1043 : vector<1x256xi1> to vector<1x256xi32>
    %1045 = arith.sitofp %1044 : vector<1x256xi32> to vector<1x256xf32>
    %1046 = vector.broadcast %1045 : vector<1x256xf32> to vector<16x256xf32>
    %1047 = arith.mulf %1041, %1046 : vector<16x256xf32>
    %c7_402 = arith.constant 7 : index
    %c0_403 = arith.constant 0 : index
    %c0_404 = arith.constant 0 : index
    %1048 = vector.load %arg20[%c7_402, %c0_403, %c0_404] : memref<9x3x16xf32, #tpu.memory_space<vmem>>, vector<1x3x16xf32>
    %1049 = vector.shape_cast %1048 : vector<1x3x16xf32> to vector<3x16xf32>
    %1050 = arith.truncf %1049 : vector<3x16xf32> to vector<3x16xbf16>
    %1051 = arith.truncf %1047 : vector<16x256xf32> to vector<16x256xbf16>
    %cst_405 = arith.constant dense<0.000000e+00> : vector<3x256xf32>
    %1052 = tpu.matmul %1050, %1051, %cst_405 {dimension_numbers = #tpu.dot_dimension_numbers<[1], [0], [0], [1], [0, 0, 1, 1], [], []>} : vector<3x16xbf16>, vector<16x256xbf16>, vector<3x256xf32> -> vector<3x256xf32>
    %1053 = arith.addf %1040, %1052 : vector<3x256xf32>
    %c239_i32_406 = arith.constant 239 : i32
    %1054 = tpu.dynamic_rotate %946 by %c239_i32_406 dim 1 : vector<16x256xf32>, i32 -> vector<16x256xf32>
    %c15_i32_407 = arith.constant 15 : i32
    %1055 = vector.broadcast %c15_i32_407 : i32 to vector<1x256xi32>
    %1056 = arith.cmpi slt, %1, %1055 : vector<1x256xi32>
    %c15_i32_408 = arith.constant 15 : i32
    %1057 = vector.broadcast %c15_i32_408 : i32 to vector<1x256xi32>
    %1058 = arith.cmpi slt, %3, %1057 : vector<1x256xi32>
    %1059 = arith.andi %1056, %1058 : vector<1x256xi1>
    %1060 = arith.extui %1059 : vector<1x256xi1> to vector<1x256xi32>
    %1061 = arith.sitofp %1060 : vector<1x256xi32> to vector<1x256xf32>
    %1062 = vector.broadcast %1061 : vector<1x256xf32> to vector<16x256xf32>
    %1063 = arith.mulf %1054, %1062 : vector<16x256xf32>
    %c8_409 = arith.constant 8 : index
    %c0_410 = arith.constant 0 : index
    %c0_411 = arith.constant 0 : index
    %1064 = vector.load %arg20[%c8_409, %c0_410, %c0_411] : memref<9x3x16xf32, #tpu.memory_space<vmem>>, vector<1x3x16xf32>
    %1065 = vector.shape_cast %1064 : vector<1x3x16xf32> to vector<3x16xf32>
    %1066 = arith.truncf %1065 : vector<3x16xf32> to vector<3x16xbf16>
    %1067 = arith.truncf %1063 : vector<16x256xf32> to vector<16x256xbf16>
    %cst_412 = arith.constant dense<0.000000e+00> : vector<3x256xf32>
    %1068 = tpu.matmul %1066, %1067, %cst_412 {dimension_numbers = #tpu.dot_dimension_numbers<[1], [0], [0], [1], [0, 0, 1, 1], [], []>} : vector<3x16xbf16>, vector<16x256xbf16>, vector<3x256xf32> -> vector<3x256xf32>
    %1069 = arith.addf %1053, %1068 : vector<3x256xf32>
    %1070 = arith.addf %1069, %366 : vector<3x256xf32>
    %c0_413 = arith.constant 0 : index
    %c0_414 = arith.constant 0 : index
    %c0_415 = arith.constant 0 : index
    %1071 = vector.load %arg22[%c0_413, %c0_414, %c0_415] : memref<1x3x256xf32, #tpu.memory_space<vmem>>, vector<1x3x256xf32>
    %1072 = vector.shape_cast %1071 : vector<1x3x256xf32> to vector<3x256xf32>
    %1073 = vector.shape_cast %1070 : vector<3x256xf32> to vector<1x3x256xf32>
    tpu.vector_store %arg22[%c0_413, %c0_414, %c0_415], %1073 {strides = array<i32>} : memref<1x3x256xf32, #tpu.memory_space<vmem>>, vector<1x3x256xf32>,
    return
  }
  func.func @transform_0(%arg0: i32) -> (i32, i32, i32) {
    %c0_i32 = arith.constant 0 : i32
    %c0_i32_0 = arith.constant 0 : i32
    %c0_i32_1 = arith.constant 0 : i32
    %c0_i32_2 = arith.constant 0 : i32
    return %c0_i32, %c0_i32_0, %c0_i32_1 : i32, i32, i32
  }
  func.func @transform_1(%arg0: i32) -> (i32, i32, i32) {
    %c0_i32 = arith.constant 0 : i32
    %c0_i32_0 = arith.constant 0 : i32
    %c0_i32_1 = arith.constant 0 : i32
    return %arg0, %c0_i32, %c0_i32_0 : i32, i32, i32
  }
  func.func @transform_2(%arg0: i32) -> (i32, i32) {
    %c0_i32 = arith.constant 0 : i32
    %c0_i32_0 = arith.constant 0 : i32
    %c0_i32_1 = arith.constant 0 : i32
    return %c0_i32, %c0_i32_0 : i32, i32
  }
  func.func @transform_3(%arg0: i32) -> (i32, i32) {
    %c0_i32 = arith.constant 0 : i32
    %c0_i32_0 = arith.constant 0 : i32
    %c0_i32_1 = arith.constant 0 : i32
    return %c0_i32, %c0_i32_0 : i32, i32
  }
  func.func @transform_4(%arg0: i32) -> (i32, i32, i32) {
    %c0_i32 = arith.constant 0 : i32
    %c0_i32_0 = arith.constant 0 : i32
    %c0_i32_1 = arith.constant 0 : i32
    %c0_i32_2 = arith.constant 0 : i32
    return %c0_i32, %c0_i32_0, %c0_i32_1 : i32, i32, i32
  }
  func.func @transform_5(%arg0: i32) -> (i32, i32) {
    %c0_i32 = arith.constant 0 : i32
    %c0_i32_0 = arith.constant 0 : i32
    %c0_i32_1 = arith.constant 0 : i32
    return %c0_i32, %c0_i32_0 : i32, i32
  }
  func.func @transform_6(%arg0: i32) -> (i32, i32) {
    %c0_i32 = arith.constant 0 : i32
    %c0_i32_0 = arith.constant 0 : i32
    %c0_i32_1 = arith.constant 0 : i32
    return %c0_i32, %c0_i32_0 : i32, i32
  }
  func.func @transform_7(%arg0: i32) -> (i32, i32) {
    %c0_i32 = arith.constant 0 : i32
    %c0_i32_0 = arith.constant 0 : i32
    %c0_i32_1 = arith.constant 0 : i32
    return %c0_i32, %c0_i32_0 : i32, i32
  }
  func.func @transform_8(%arg0: i32) -> (i32, i32, i32) {
    %c0_i32 = arith.constant 0 : i32
    %c0_i32_0 = arith.constant 0 : i32
    %c0_i32_1 = arith.constant 0 : i32
    %c0_i32_2 = arith.constant 0 : i32
    return %c0_i32, %c0_i32_0, %c0_i32_1 : i32, i32, i32
  }
  func.func @transform_9(%arg0: i32) -> (i32, i32) {
    %c0_i32 = arith.constant 0 : i32
    %c0_i32_0 = arith.constant 0 : i32
    %c0_i32_1 = arith.constant 0 : i32
    return %c0_i32, %c0_i32_0 : i32, i32
  }
  func.func @transform_10(%arg0: i32) -> (i32, i32) {
    %c0_i32 = arith.constant 0 : i32
    %c0_i32_0 = arith.constant 0 : i32
    %c0_i32_1 = arith.constant 0 : i32
    return %c0_i32, %c0_i32_0 : i32, i32
  }
  func.func @transform_11(%arg0: i32) -> (i32, i32) {
    %c0_i32 = arith.constant 0 : i32
    %c0_i32_0 = arith.constant 0 : i32
    %c0_i32_1 = arith.constant 0 : i32
    return %c0_i32, %c0_i32_0 : i32, i32
  }
  func.func @transform_12(%arg0: i32) -> (i32, i32, i32) {
    %c0_i32 = arith.constant 0 : i32
    %c0_i32_0 = arith.constant 0 : i32
    %c0_i32_1 = arith.constant 0 : i32
    %c0_i32_2 = arith.constant 0 : i32
    return %c0_i32, %c0_i32_0, %c0_i32_1 : i32, i32, i32
  }
  func.func @transform_13(%arg0: i32) -> (i32, i32, i32) {
    %c0_i32 = arith.constant 0 : i32
    %c0_i32_0 = arith.constant 0 : i32
    %c0_i32_1 = arith.constant 0 : i32
    %c0_i32_2 = arith.constant 0 : i32
    return %c0_i32, %c0_i32_0, %c0_i32_1 : i32, i32, i32
  }
  func.func @transform_14(%arg0: i32) -> (i32, i32) {
    %c0_i32 = arith.constant 0 : i32
    %c0_i32_0 = arith.constant 0 : i32
    %c0_i32_1 = arith.constant 0 : i32
    return %c0_i32, %c0_i32_0 : i32, i32
  }
  func.func @transform_15(%arg0: i32) -> (i32, i32) {
    %c0_i32 = arith.constant 0 : i32
    %c0_i32_0 = arith.constant 0 : i32
    %c0_i32_1 = arith.constant 0 : i32
    return %c0_i32, %c0_i32_0 : i32, i32
  }
  func.func @transform_16(%arg0: i32) -> (i32, i32) {
    %c0_i32 = arith.constant 0 : i32
    %c0_i32_0 = arith.constant 0 : i32
    %c0_i32_1 = arith.constant 0 : i32
    return %c0_i32, %c0_i32_0 : i32, i32
  }
  func.func @transform_17(%arg0: i32) -> (i32, i32, i32) {
    %c0_i32 = arith.constant 0 : i32
    %c0_i32_0 = arith.constant 0 : i32
    %c0_i32_1 = arith.constant 0 : i32
    %c0_i32_2 = arith.constant 0 : i32
    return %c0_i32, %c0_i32_0, %c0_i32_1 : i32, i32, i32
  }
  func.func @transform_18(%arg0: i32) -> (i32, i32) {
    %c0_i32 = arith.constant 0 : i32
    %c0_i32_0 = arith.constant 0 : i32
    %c0_i32_1 = arith.constant 0 : i32
    return %c0_i32, %c0_i32_0 : i32, i32
  }
  func.func @transform_19(%arg0: i32) -> (i32, i32, i32) {
    %c0_i32 = arith.constant 0 : i32
    %c0_i32_0 = arith.constant 0 : i32
    %c0_i32_1 = arith.constant 0 : i32
    %c0_i32_2 = arith.constant 0 : i32
    return %c0_i32, %c0_i32_0, %c0_i32_1 : i32, i32, i32
  }
  func.func @transform_20(%arg0: i32) -> i32 {
    %c0_i32 = arith.constant 0 : i32
    %c0_i32_0 = arith.constant 0 : i32
    return %c0_i32 : i32
  }
  func.func @transform_21(%arg0: i32) -> (i32, i32, i32) {
    %c0_i32 = arith.constant 0 : i32
    %c0_i32_0 = arith.constant 0 : i32
    %c0_i32_1 = arith.constant 0 : i32
    return %arg0, %c0_i32, %c0_i32_0 : i32, i32, i32
  }
}

</mosaic_0001>

<llo_original>
// kernel: retinexformer_forward.1
$region0: #{retinexformer_forward.1}
  #allocation0 [shape = 'u32[]', space=smem, size = 0x4, offset = 0x4, fixed_abs, tag = 'smem constant byte address 0x4 - core index']
  #allocation1 [shape = 'u32[144,128]{1,0:T(1,128)}', space=vmem, size = 0x12000, scoped, tag = 'internal scratch']
  #allocation2 [shape = 'f32[1]{0:T(128)S(6)}', space=smem, size = 0x200, scoped, tag = 'scoped memory for retinexformer_forward.1']
  %s0 = inlined_call_operand.vmem [shape: s32[2,1,256], index: 0, kind: input, shape index: {}]
  %s1 = inlined_call_operand.vmem [shape: f32[2,3,256], index: 1, kind: input, shape index: {}]
  %s2 = inlined_call_operand.vmem [shape: f32[16,3], index: 2, kind: input, shape index: {}]
  %s3 = inlined_call_operand.vmem [shape: f32[16,1], index: 3, kind: input, shape index: {}, may-alias: {3,5,11,15}]
  %s4 = inlined_call_operand.hbm [shape: f32[25,16,1], index: 4, kind: input, shape index: {}]
  %s5 = inlined_call_operand.vmem [shape: f32[16,1], index: 5, kind: input, shape index: {}, may-alias: {3,5,11,15}]
  %s6 = inlined_call_operand.vmem [shape: f32[3,16], index: 6, kind: input, shape index: {}]
  %s7 = inlined_call_operand.vmem [shape: f32[3,1], index: 7, kind: input, shape index: {}]
  %s8 = inlined_call_operand.hbm [shape: f32[9,16,3], index: 8, kind: input, shape index: {}]
  %s9 = inlined_call_operand.hbm [shape: f32[48,16], index: 9, kind: input, shape index: {}]
  %s10 = inlined_call_operand.hbm [shape: f32[16,16], index: 10, kind: input, shape index: {}]
  %s11 = inlined_call_operand.vmem [shape: f32[16,1], index: 11, kind: input, shape index: {}, may-alias: {3,5,11,15}]
  %s12 = inlined_call_operand.hbm [shape: f32[9,16,1], index: 12, kind: input, shape index: {}]
  %s13 = inlined_call_operand.vmem [shape: f32[9,16,1], index: 13, kind: input, shape index: {}]
  %s14 = inlined_call_operand.vmem [shape: f32[16,1], index: 14, kind: input, shape index: {}]
  %s15 = inlined_call_operand.vmem [shape: f32[16,1], index: 15, kind: input, shape index: {}, may-alias: {3,5,11,15}]
  %s16 = inlined_call_operand.hbm [shape: f32[64,16], index: 16, kind: input, shape index: {}]
  %s17 = inlined_call_operand.hbm [shape: f32[9,64,1], index: 17, kind: input, shape index: {}]
  %s18 = inlined_call_operand.hbm [shape: f32[16,64], index: 18, kind: input, shape index: {}]
  %s19 = inlined_call_operand.hbm [shape: f32[9,3,16], index: 19, kind: input, shape index: {}]
  %s20 = inlined_call_operand.<no memory space> [shape: f32[1], index: 20, kind: input, shape index: {}]
  %s21 = inlined_call_operand.vmem [shape: f32[2,3,256], index: 21, kind: output, shape index: {}]
  %s22 = sld [smem:[#allocation0]]
  $region153: #{retinexformer_forward.1} parent=0
    _
  %s24 = ssub.s32 1, %s22
  %s25 = scalar_select 0, %s24, %s22
  %26 = sst [smem:[#allocation2]] %s20
  $region1: #{retinexformer_forward.1} parent=0
    #allocation3 [shape = 'u8[204800]{0}', space=vmem, size = 0x32000, scoped, tag = 'input window, operand 4, single buffered']
    #allocation4 [shape = 's32[2]{0}', space=sflag, size = 0x8, scoped, tag = 'scoped memory for retinexformer_forward.1']
    #allocation5 [shape = 'u8[73728]{0}', space=vmem, size = 0x12000, scoped, tag = 'input window, operand 8, single buffered']
    #allocation6 [shape = 's32[1]{0}', space=sflag, size = 0x4, scoped, tag = 'scoped memory for retinexformer_forward.1']
    #allocation7 [shape = 'u8[24576]{0}', space=vmem, size = 0x6000, scoped, tag = 'input window, operand 9, single buffered']
    #allocation8 [shape = 'u8[8192]{0}', space=vmem, size = 0x2000, scoped, tag = 'input window, operand 10, single buffered']
    #allocation9 [shape = 's32[1]{0}', space=sflag, size = 0x4, scoped, tag = 'scoped memory for retinexformer_forward.1']
    #allocation10 [shape = 'u8[73728]{0}', space=vmem, size = 0x12000, scoped, tag = 'input window, operand 12, single buffered']
    #allocation11 [shape = 'u8[32768]{0}', space=vmem, size = 0x8000, scoped, tag = 'input window, operand 16, single buffered']
    #allocation12 [shape = 's32[1]{0}', space=sflag, size = 0x4, scoped, tag = 'scoped memory for retinexformer_forward.1']
    #allocation13 [shape = 'u8[294912]{0}', space=vmem, size = 0x48000, scoped, tag = 'input window, operand 17, single buffered']
    #allocation14 [shape = 'u8[8192]{0}', space=vmem, size = 0x2000, scoped, tag = 'input window, operand 18, single buffered']
    #allocation15 [shape = 's32[1]{0}', space=sflag, size = 0x4, scoped, tag = 'scoped memory for retinexformer_forward.1']
    #allocation16 [shape = 'u8[18432]{0}', space=vmem, size = 0x4800, scoped, tag = 'input window, operand 19, single buffered']
    %27 = vsyncpa [#allocation4], 0
    %28 = vsyncpa [#allocation6], 0
    %29 = vsyncpa [#allocation9], 0
    %30 = vsyncpa [#allocation12], 0
    %31 = vsyncpa [#allocation15], 0
    loop: start=0, step=1, limit=4
    $region2: #{retinexformer_forward.1} parent=1 // loop_pre_header
      _
    $region3: #{retinexformer_forward.1} parent=1 // loop_header
      %s33 = sphi 0, %s37
      %p34 = scmp.ge.s32.totalorder %s33, 4
      %s41 = sphi 0, %s41
      %s43 = sphi 0, %s41
      %s44 = sphi 0, %s43
      %s58 = sphi 0, %s44
      %s64 = sphi 0, %s66
      %s67 = sphi 0, %s64
      %s68 = sphi 0, %s67
      %s84 = sphi 0, %s68
      %s88 = sphi 0, %s88
      %s90 = sphi 0, %s88
      %s91 = sphi 0, %s90
      %s105 = sphi 0, %s91
      %s109 = sphi 0, %s109
      %s111 = sphi 0, %s109
      %s112 = sphi 0, %s111
      %s126 = sphi 0, %s112
      %s130 = sphi 0, %s130
      %s132 = sphi 0, %s130
      %s133 = sphi 0, %s132
      %s147 = sphi 0, %s133
      %s151 = sphi 0, %s151
      %s153 = sphi 0, %s151
      %s154 = sphi 0, %s153
      %s168 = sphi 0, %s154
      %s172 = sphi 0, %s172
      %s174 = sphi 0, %s172
      %s175 = sphi 0, %s174
      %s189 = sphi 0, %s175
      %s193 = sphi 0, %s193
      %s195 = sphi 0, %s193
      %s196 = sphi 0, %s195
      %s210 = sphi 0, %s196
      %s214 = sphi 0, %s214
      %s216 = sphi 0, %s214
      %s217 = sphi 0, %s216
      %s231 = sphi 0, %s217
      %s235 = sphi 0, %s235
      %s237 = sphi 0, %s235
      %s238 = sphi 0, %s237
      %s252 = sphi 0, %s238
      %s256 = sphi 0, %s256
      %s258 = sphi 0, %s256
      %s259 = sphi 0, %s258
      %s273 = sphi 0, %s259
      %s277 = sphi 0, %s277
      %s279 = sphi 0, %s277
      %s280 = sphi 0, %s279
      %s294 = sphi 0, %s280
      %s298 = sphi 0, %s298
      %s300 = sphi 0, %s298
      %s301 = sphi 0, %s300
      %s315 = sphi 0, %s301
      %s319 = sphi 0, %s319
      %s321 = sphi 0, %s319
      %s322 = sphi 0, %s321
      %s336 = sphi 0, %s322
      %s340 = sphi 0, %s340
      %s342 = sphi 0, %s340
      %s343 = sphi 0, %s342
      %s357 = sphi 0, %s343
      %s361 = sphi 0, %s361
      %s363 = sphi 0, %s361
      %s364 = sphi 0, %s363
      %s378 = sphi 0, %s364
      %s382 = sphi 0, %s382
      %s384 = sphi 0, %s382
      %s385 = sphi 0, %s384
      %s399 = sphi 0, %s385
      %s403 = sphi 0, %s403
      %s405 = sphi 0, %s403
      %s406 = sphi 0, %s405
      %s420 = sphi 0, %s406
      %s424 = sphi 0, %s424
      %s426 = sphi 0, %s424
      %s427 = sphi 0, %s426
      %s441 = sphi 0, %s427
      %s445 = sphi 0, %s445
      %s447 = sphi 0, %s445
      %s448 = sphi 0, %s447
      %s462 = sphi 0, %s448
      %s466 = sphi 0, %s466
      %s468 = sphi 0, %s466
      %s469 = sphi 0, %s468
      %s483 = sphi 0, %s469
      %s489 = sphi 0, %s491
      %s492 = sphi 0, %s489
      %s493 = sphi 0, %s492
      %s509 = sphi 0, %s493
    $region4: #{retinexformer_forward.1} parent=1 // loop_header_branch
      %36 = sbr.rel (%p34) target = $region8
    $region5: #{retinexformer_forward.1} parent=1 // loop_body
      %s38 = ssub.s32 %s33, 1
      %s39 = ssub.s32 %s33, 2
      %s40 = sadd.s32 %s33, 1
      %s42 = sadd.s32 %s41, 1
      %p45 = scmp.eq.s32.totalorder %s33, 1
      %p46 = scmp.ne.s32.totalorder %s41, %s43
      %p47 = scmp.eq.s32.totalorder %s33, 0
      %p48 = por %p46, %p47
      %p49 = scmp.ne.s32.totalorder %s41, %s43
      %p50 = scmp.eq.s32.totalorder %s38, 1
      %p51 = por %p49, %p50
      %p52 = scmp.ne.s32.totalorder %s43, %s44
      %p53 = scmp.eq.s32.totalorder %s38, 0
      %p54 = por %p52, %p53
      %p55 = scmp.ne.s32.totalorder %s43, %s44
      %p56 = scmp.eq.s32.totalorder %s39, 1
      %p57 = por %p55, %p56
      %p59 = scmp.ne.s32.totalorder %s44, %s58
      %p60 = scmp.eq.s32.totalorder %s39, 0
      %p61 = por %p59, %p60
      %s62 = ssub.s32 %s33, %s40
      %p63 = scmp.eq.s32.totalorder %s62, 0
      %s65 = sadd.s32 %s64, 1
      %s66 = scalar_select %p63, %s64, %s65
      %p69 = pneg %p63
      %p70 = scmp.eq.s32.totalorder %s33, 1
      %p71 = por %p69, %p70
      %p72 = scmp.ne.s32.totalorder %s64, %s67
      %p73 = scmp.eq.s32.totalorder %s33, 0
      %p74 = por %p72, %p73
      %p75 = scmp.ne.s32.totalorder %s64, %s67
      %p76 = scmp.eq.s32.totalorder %s38, 1
      %p77 = por %p75, %p76
      %p78 = scmp.ne.s32.totalorder %s67, %s68
      %p79 = scmp.eq.s32.totalorder %s38, 0
      %p80 = por %p78, %p79
      %p81 = scmp.ne.s32.totalorder %s67, %s68
      %p82 = scmp.eq.s32.totalorder %s39, 1
      %p83 = por %p81, %p82
      %p85 = scmp.ne.s32.totalorder %s68, %s84
      %p86 = scmp.eq.s32.totalorder %s39, 0
      %p87 = por %p85, %p86
      %s89 = sadd.s32 %s88, 1
      %p92 = scmp.eq.s32.totalorder %s33, 1
      %p93 = scmp.ne.s32.totalorder %s88, %s90
      %p94 = scmp.eq.s32.totalorder %s33, 0
      %p95 = por %p93, %p94
      %p96 = scmp.ne.s32.totalorder %s88, %s90
      %p97 = scmp.eq.s32.totalorder %s38, 1
      %p98 = por %p96, %p97
      %p99 = scmp.ne.s32.totalorder %s90, %s91
      %p100 = scmp.eq.s32.totalorder %s38, 0
      %p101 = por %p99, %p100
      %p102 = scmp.ne.s32.totalorder %s90, %s91
      %p103 = scmp.eq.s32.totalorder %s39, 1
      %p104 = por %p102, %p103
      %p106 = scmp.ne.s32.totalorder %s91, %s105
      %p107 = scmp.eq.s32.totalorder %s39, 0
      %p108 = por %p106, %p107
      %s110 = sadd.s32 %s109, 1
      %p113 = scmp.eq.s32.totalorder %s33, 1
      %p114 = scmp.ne.s32.totalorder %s109, %s111
      %p115 = scmp.eq.s32.totalorder %s33, 0
      %p116 = por %p114, %p115
      %p117 = scmp.ne.s32.totalorder %s109, %s111
      %p118 = scmp.eq.s32.totalorder %s38, 1
      %p119 = por %p117, %p118
      %p120 = scmp.ne.s32.totalorder %s111, %s112
      %p121 = scmp.eq.s32.totalorder %s38, 0
      %p122 = por %p120, %p121
      %p123 = scmp.ne.s32.totalorder %s111, %s112
      %p124 = scmp.eq.s32.totalorder %s39, 1
      %p125 = por %p123, %p124
      %p127 = scmp.ne.s32.totalorder %s112, %s126
      %p128 = scmp.eq.s32.totalorder %s39, 0
      %p129 = por %p127, %p128
      %s131 = sadd.s32 %s130, 1
      %p134 = scmp.eq.s32.totalorder %s33, 1
      %p135 = scmp.ne.s32.totalorder %s130, %s132
      %p136 = scmp.eq.s32.totalorder %s33, 0
      %p137 = por %p135, %p136
      %p138 = scmp.ne.s32.totalorder %s130, %s132
      %p139 = scmp.eq.s32.totalorder %s38, 1
      %p140 = por %p138, %p139
      %p141 = scmp.ne.s32.totalorder %s132, %s133
      %p142 = scmp.eq.s32.totalorder %s38, 0
      %p143 = por %p141, %p142
      %p144 = scmp.ne.s32.totalorder %s132, %s133
      %p145 = scmp.eq.s32.totalorder %s39, 1
      %p146 = por %p144, %p145
      %p148 = scmp.ne.s32.totalorder %s133, %s147
      %p149 = scmp.eq.s32.totalorder %s39, 0
      %p150 = por %p148, %p149
      %s152 = sadd.s32 %s151, 1
      %p155 = scmp.eq.s32.totalorder %s33, 1
      %p156 = scmp.ne.s32.totalorder %s151, %s153
      %p157 = scmp.eq.s32.totalorder %s33, 0
      %p158 = por %p156, %p157
      %p159 = scmp.ne.s32.totalorder %s151, %s153
      %p160 = scmp.eq.s32.totalorder %s38, 1
      %p161 = por %p159, %p160
      %p162 = scmp.ne.s32.totalorder %s153, %s154
      %p163 = scmp.eq.s32.totalorder %s38, 0
      %p164 = por %p162, %p163
      %p165 = scmp.ne.s32.totalorder %s153, %s154
      %p166 = scmp.eq.s32.totalorder %s39, 1
      %p167 = por %p165, %p166
      %p169 = scmp.ne.s32.totalorder %s154, %s168
      %p170 = scmp.eq.s32.totalorder %s39, 0
      %p171 = por %p169, %p170
      %s173 = sadd.s32 %s172, 1
      %p176 = scmp.eq.s32.totalorder %s33, 1
      %p177 = scmp.ne.s32.totalorder %s172, %s174
      %p178 = scmp.eq.s32.totalorder %s33, 0
      %p179 = por %p177, %p178
      %p180 = scmp.ne.s32.totalorder %s172, %s174
      %p181 = scmp.eq.s32.totalorder %s38, 1
      %p182 = por %p180, %p181
      %p183 = scmp.ne.s32.totalorder %s174, %s175
      %p184 = scmp.eq.s32.totalorder %s38, 0
      %p185 = por %p183, %p184
      %p186 = scmp.ne.s32.totalorder %s174, %s175
      %p187 = scmp.eq.s32.totalorder %s39, 1
      %p188 = por %p186, %p187
      %p190 = scmp.ne.s32.totalorder %s175, %s189
      %p191 = scmp.eq.s32.totalorder %s39, 0
      %p192 = por %p190, %p191
      %s194 = sadd.s32 %s193, 1
      %p197 = scmp.eq.s32.totalorder %s33, 1
      %p198 = scmp.ne.s32.totalorder %s193, %s195
      %p199 = scmp.eq.s32.totalorder %s33, 0
      %p200 = por %p198, %p199
      %p201 = scmp.ne.s32.totalorder %s193, %s195
      %p202 = scmp.eq.s32.totalorder %s38, 1
      %p203 = por %p201, %p202
      %p204 = scmp.ne.s32.totalorder %s195, %s196
      %p205 = scmp.eq.s32.totalorder %s38, 0
      %p206 = por %p204, %p205
      %p207 = scmp.ne.s32.totalorder %s195, %s196
      %p208 = scmp.eq.s32.totalorder %s39, 1
      %p209 = por %p207, %p208
      %p211 = scmp.ne.s32.totalorder %s196, %s210
      %p212 = scmp.eq.s32.totalorder %s39, 0
      %p213 = por %p211, %p212
      %s215 = sadd.s32 %s214, 1
      %p218 = scmp.eq.s32.totalorder %s33, 1
      %p219 = scmp.ne.s32.totalorder %s214, %s216
      %p220 = scmp.eq.s32.totalorder %s33, 0
      %p221 = por %p219, %p220
      %p222 = scmp.ne.s32.totalorder %s214, %s216
      %p223 = scmp.eq.s32.totalorder %s38, 1
      %p224 = por %p222, %p223
      %p225 = scmp.ne.s32.totalorder %s216, %s217
      %p226 = scmp.eq.s32.totalorder %s38, 0
      %p227 = por %p225, %p226
      %p228 = scmp.ne.s32.totalorder %s216, %s217
      %p229 = scmp.eq.s32.totalorder %s39, 1
      %p230 = por %p228, %p229
      %p232 = scmp.ne.s32.totalorder %s217, %s231
      %p233 = scmp.eq.s32.totalorder %s39, 0
      %p234 = por %p232, %p233
      %s236 = sadd.s32 %s235, 1
      %p239 = scmp.eq.s32.totalorder %s33, 1
      %p240 = scmp.ne.s32.totalorder %s235, %s237
      %p241 = scmp.eq.s32.totalorder %s33, 0
      %p242 = por %p240, %p241
      %p243 = scmp.ne.s32.totalorder %s235, %s237
      %p244 = scmp.eq.s32.totalorder %s38, 1
      %p245 = por %p243, %p244
      %p246 = scmp.ne.s32.totalorder %s237, %s238
      %p247 = scmp.eq.s32.totalorder %s38, 0
      %p248 = por %p246, %p247
      %p249 = scmp.ne.s32.totalorder %s237, %s238
      %p250 = scmp.eq.s32.totalorder %s39, 1
      %p251 = por %p249, %p250
      %p253 = scmp.ne.s32.totalorder %s238, %s252
      %p254 = scmp.eq.s32.totalorder %s39, 0
      %p255 = por %p253, %p254
      %s257 = sadd.s32 %s256, 1
      %p260 = scmp.eq.s32.totalorder %s33, 1
      %p261 = scmp.ne.s32.totalorder %s256, %s258
      %p262 = scmp.eq.s32.totalorder %s33, 0
      %p263 = por %p261, %p262
      %p264 = scmp.ne.s32.totalorder %s256, %s258
      %p265 = scmp.eq.s32.totalorder %s38, 1
      %p266 = por %p264, %p265
      %p267 = scmp.ne.s32.totalorder %s258, %s259
      %p268 = scmp.eq.s32.totalorder %s38, 0
      %p269 = por %p267, %p268
      %p270 = scmp.ne.s32.totalorder %s258, %s259
      %p271 = scmp.eq.s32.totalorder %s39, 1
      %p272 = por %p270, %p271
      %p274 = scmp.ne.s32.totalorder %s259, %s273
      %p275 = scmp.eq.s32.totalorder %s39, 0
      %p276 = por %p274, %p275
      %s278 = sadd.s32 %s277, 1
      %p281 = scmp.eq.s32.totalorder %s33, 1
      %p282 = scmp.ne.s32.totalorder %s277, %s279
      %p283 = scmp.eq.s32.totalorder %s33, 0
      %p284 = por %p282, %p283
      %p285 = scmp.ne.s32.totalorder %s277, %s279
      %p286 = scmp.eq.s32.totalorder %s38, 1
      %p287 = por %p285, %p286
      %p288 = scmp.ne.s32.totalorder %s279, %s280
      %p289 = scmp.eq.s32.totalorder %s38, 0
      %p290 = por %p288, %p289
      %p291 = scmp.ne.s32.totalorder %s279, %s280
      %p292 = scmp.eq.s32.totalorder %s39, 1
      %p293 = por %p291, %p292
      %p295 = scmp.ne.s32.totalorder %s280, %s294
      %p296 = scmp.eq.s32.totalorder %s39, 0
      %p297 = por %p295, %p296
      %s299 = sadd.s32 %s298, 1
      %p302 = scmp.eq.s32.totalorder %s33, 1
      %p303 = scmp.ne.s32.totalorder %s298, %s300
      %p304 = scmp.eq.s32.totalorder %s33, 0
      %p305 = por %p303, %p304
      %p306 = scmp.ne.s32.totalorder %s298, %s300
      %p307 = scmp.eq.s32.totalorder %s38, 1
      %p308 = por %p306, %p307
      %p309 = scmp.ne.s32.totalorder %s300, %s301
      %p310 = scmp.eq.s32.totalorder %s38, 0
      %p311 = por %p309, %p310
      %p312 = scmp.ne.s32.totalorder %s300, %s301
      %p313 = scmp.eq.s32.totalorder %s39, 1
      %p314 = por %p312, %p313
      %p316 = scmp.ne.s32.totalorder %s301, %s315
      %p317 = scmp.eq.s32.totalorder %s39, 0
      %p318 = por %p316, %p317
      %s320 = sadd.s32 %s319, 1
      %p323 = scmp.eq.s32.totalorder %s33, 1
      %p324 = scmp.ne.s32.totalorder %s319, %s321
      %p325 = scmp.eq.s32.totalorder %s33, 0
      %p326 = por %p324, %p325
      %p327 = scmp.ne.s32.totalorder %s319, %s321
      %p328 = scmp.eq.s32.totalorder %s38, 1
      %p329 = por %p327, %p328
      %p330 = scmp.ne.s32.totalorder %s321, %s322
      %p331 = scmp.eq.s32.totalorder %s38, 0
      %p332 = por %p330, %p331
      %p333 = scmp.ne.s32.totalorder %s321, %s322
      %p334 = scmp.eq.s32.totalorder %s39, 1
      %p335 = por %p333, %p334
      %p337 = scmp.ne.s32.totalorder %s322, %s336
      %p338 = scmp.eq.s32.totalorder %s39, 0
      %p339 = por %p337, %p338
      %s341 = sadd.s32 %s340, 1
      %p344 = scmp.eq.s32.totalorder %s33, 1
      %p345 = scmp.ne.s32.totalorder %s340, %s342
      %p346 = scmp.eq.s32.totalorder %s33, 0
      %p347 = por %p345, %p346
      %p348 = scmp.ne.s32.totalorder %s340, %s342
      %p349 = scmp.eq.s32.totalorder %s38, 1
      %p350 = por %p348, %p349
      %p351 = scmp.ne.s32.totalorder %s342, %s343
      %p352 = scmp.eq.s32.totalorder %s38, 0
      %p353 = por %p351, %p352
      %p354 = scmp.ne.s32.totalorder %s342, %s343
      %p355 = scmp.eq.s32.totalorder %s39, 1
      %p356 = por %p354, %p355
      %p358 = scmp.ne.s32.totalorder %s343, %s357
      %p359 = scmp.eq.s32.totalorder %s39, 0
      %p360 = por %p358, %p359
      %s362 = sadd.s32 %s361, 1
      %p365 = scmp.eq.s32.totalorder %s33, 1
      %p366 = scmp.ne.s32.totalorder %s361, %s363
      %p367 = scmp.eq.s32.totalorder %s33, 0
      %p368 = por %p366, %p367
      %p369 = scmp.ne.s32.totalorder %s361, %s363
      %p370 = scmp.eq.s32.totalorder %s38, 1
      %p371 = por %p369, %p370
      %p372 = scmp.ne.s32.totalorder %s363, %s364
      %p373 = scmp.eq.s32.totalorder %s38, 0
      %p374 = por %p372, %p373
      %p375 = scmp.ne.s32.totalorder %s363, %s364
      %p376 = scmp.eq.s32.totalorder %s39, 1
      %p377 = por %p375, %p376
      %p379 = scmp.ne.s32.totalorder %s364, %s378
      %p380 = scmp.eq.s32.totalorder %s39, 0
      %p381 = por %p379, %p380
      %s383 = sadd.s32 %s382, 1
      %p386 = scmp.eq.s32.totalorder %s33, 1
      %p387 = scmp.ne.s32.totalorder %s382, %s384
      %p388 = scmp.eq.s32.totalorder %s33, 0
      %p389 = por %p387, %p388
      %p390 = scmp.ne.s32.totalorder %s382, %s384
      %p391 = scmp.eq.s32.totalorder %s38, 1
      %p392 = por %p390, %p391
      %p393 = scmp.ne.s32.totalorder %s384, %s385
      %p394 = scmp.eq.s32.totalorder %s38, 0
      %p395 = por %p393, %p394
      %p396 = scmp.ne.s32.totalorder %s384, %s385
      %p397 = scmp.eq.s32.totalorder %s39, 1
      %p398 = por %p396, %p397
      %p400 = scmp.ne.s32.totalorder %s385, %s399
      %p401 = scmp.eq.s32.totalorder %s39, 0
      %p402 = por %p400, %p401
      %s404 = sadd.s32 %s403, 1
      %p407 = scmp.eq.s32.totalorder %s33, 1
      %p408 = scmp.ne.s32.totalorder %s403, %s405
      %p409 = scmp.eq.s32.totalorder %s33, 0
      %p410 = por %p408, %p409
      %p411 = scmp.ne.s32.totalorder %s403, %s405
      %p412 = scmp.eq.s32.totalorder %s38, 1
      %p413 = por %p411, %p412
      %p414 = scmp.ne.s32.totalorder %s405, %s406
      %p415 = scmp.eq.s32.totalorder %s38, 0
      %p416 = por %p414, %p415
      %p417 = scmp.ne.s32.totalorder %s405, %s406
      %p418 = scmp.eq.s32.totalorder %s39, 1
      %p419 = por %p417, %p418
      %p421 = scmp.ne.s32.totalorder %s406, %s420
      %p422 = scmp.eq.s32.totalorder %s39, 0
      %p423 = por %p421, %p422
      %s425 = sadd.s32 %s424, 1
      %p428 = scmp.eq.s32.totalorder %s33, 1
      %p429 = scmp.ne.s32.totalorder %s424, %s426
      %p430 = scmp.eq.s32.totalorder %s33, 0
      %p431 = por %p429, %p430
      %p432 = scmp.ne.s32.totalorder %s424, %s426
      %p433 = scmp.eq.s32.totalorder %s38, 1
      %p434 = por %p432, %p433
      %p435 = scmp.ne.s32.totalorder %s426, %s427
      %p436 = scmp.eq.s32.totalorder %s38, 0
      %p437 = por %p435, %p436
      %p438 = scmp.ne.s32.totalorder %s426, %s427
      %p439 = scmp.eq.s32.totalorder %s39, 1
      %p440 = por %p438, %p439
      %p442 = scmp.ne.s32.totalorder %s427, %s441
      %p443 = scmp.eq.s32.totalorder %s39, 0
      %p444 = por %p442, %p443
      %s446 = sadd.s32 %s445, 1
      %p449 = scmp.eq.s32.totalorder %s33, 1
      %p450 = scmp.ne.s32.totalorder %s445, %s447
      %p451 = scmp.eq.s32.totalorder %s33, 0
      %p452 = por %p450, %p451
      %p453 = scmp.ne.s32.totalorder %s445, %s447
      %p454 = scmp.eq.s32.totalorder %s38, 1
      %p455 = por %p453, %p454
      %p456 = scmp.ne.s32.totalorder %s447, %s448
      %p457 = scmp.eq.s32.totalorder %s38, 0
      %p458 = por %p456, %p457
      %p459 = scmp.ne.s32.totalorder %s447, %s448
      %p460 = scmp.eq.s32.totalorder %s39, 1
      %p461 = por %p459, %p460
      %p463 = scmp.ne.s32.totalorder %s448, %s462
      %p464 = scmp.eq.s32.totalorder %s39, 0
      %p465 = por %p463, %p464
      %s467 = sadd.s32 %s466, 1
      %p470 = scmp.eq.s32.totalorder %s33, 1
      %p471 = scmp.ne.s32.totalorder %s466, %s468
      %p472 = scmp.eq.s32.totalorder %s33, 0
      %p473 = por %p471, %p472
      %p474 = scmp.ne.s32.totalorder %s466, %s468
      %p475 = scmp.eq.s32.totalorder %s38, 1
      %p476 = por %p474, %p475
      %p477 = scmp.ne.s32.totalorder %s468, %s469
      %p478 = scmp.eq.s32.totalorder %s38, 0
      %p479 = por %p477, %p478
      %p480 = scmp.ne.s32.totalorder %s468, %s469
      %p481 = scmp.eq.s32.totalorder %s39, 1
      %p482 = por %p480, %p481
      %p484 = scmp.ne.s32.totalorder %s469, %s483
      %p485 = scmp.eq.s32.totalorder %s39, 0
      %p486 = por %p484, %p485
      %s487 = ssub.s32 %s33, %s40
      %p488 = scmp.eq.s32.totalorder %s487, 0
      %s490 = sadd.s32 %s489, 1
      %s491 = scalar_select %p488, %s489, %s490
      %p494 = pneg %p488
      %p495 = scmp.eq.s32.totalorder %s33, 1
      %p496 = por %p494, %p495
      %p497 = scmp.ne.s32.totalorder %s489, %s492
      %p498 = scmp.eq.s32.totalorder %s33, 0
      %p499 = por %p497, %p498
      %p500 = scmp.ne.s32.totalorder %s489, %s492
      %p501 = scmp.eq.s32.totalorder %s38, 1
      %p502 = por %p500, %p501
      %p503 = scmp.ne.s32.totalorder %s492, %s493
      %p504 = scmp.eq.s32.totalorder %s38, 0
      %p505 = por %p503, %p504
      %p506 = scmp.ne.s32.totalorder %s492, %s493
      %p507 = scmp.eq.s32.totalorder %s39, 1
      %p508 = por %p506, %p507
      %p510 = scmp.ne.s32.totalorder %s493, %s509
      %p511 = scmp.eq.s32.totalorder %s39, 0
      %p512 = por %p510, %p511
      %p513 = scmp.le.s32.totalorder 1, %s33
      %p514 = scmp.lt.s32.totalorder %s33, 3
      %p515 = pnand %p513, %p514
      %p516 = pneg %p515
      // Predicated region
      $region9: #{retinexformer_forward.1} parent=5 // pred_check
        _
      $region10: #{retinexformer_forward.1} parent=5 // pred_check_branch
        %518 = sbr.rel (%p515) target = $region12
      $region11: #{retinexformer_forward.1} parent=5 // pred_region
        %s519 = ssub.s32 %s33, 1
        // Predicated region
        $region13: #{retinexformer_forward.1} parent=11 // pred_check
          %p520 = pneg %p54
        $region14: #{retinexformer_forward.1} parent=11 // pred_check_branch
          %522 = sbr.rel (%p520) target = $region16
        $region15: #{retinexformer_forward.1} parent=11 // pred_region
          _
        $region16: #{retinexformer_forward.1} parent=11 // pred_fallthru
          _
        // Predicated region
        $region17: #{retinexformer_forward.1} parent=11 // pred_check
          %p523 = pneg %p101
        $region18: #{retinexformer_forward.1} parent=11 // pred_check_branch
          %525 = sbr.rel (%p523) target = $region20
        $region19: #{retinexformer_forward.1} parent=11 // pred_region
          _
        $region20: #{retinexformer_forward.1} parent=11 // pred_fallthru
          _
        // Predicated region
        $region21: #{retinexformer_forward.1} parent=11 // pred_check
          %p526 = pneg %p122
        $region22: #{retinexformer_forward.1} parent=11 // pred_check_branch
          %528 = sbr.rel (%p526) target = $region24
        $region23: #{retinexformer_forward.1} parent=11 // pred_region
          _
        $region24: #{retinexformer_forward.1} parent=11 // pred_fallthru
          _
        // Predicated region
        $region25: #{retinexformer_forward.1} parent=11 // pred_check
          %p529 = pneg %p143
        $region26: #{retinexformer_forward.1} parent=11 // pred_check_branch
          %531 = sbr.rel (%p529) target = $region28
        $region27: #{retinexformer_forward.1} parent=11 // pred_region
          %s533 = ssub.s32 6400, 6400
          %534 = vsyncadd [#allocation4], %s533
          %s535 = sshll.u32 [#allocation3], 4
          %s536 = int_to_ptr.vmem [resolvable:$true] %s535
          %541 = dma.hbm_to_vmem [thread:$0]  %s4, 6400, %s536, [#allocation4], 128, 128, 8
        $region28: #{retinexformer_forward.1} parent=11 // pred_fallthru
          _
        // Predicated region
        $region29: #{retinexformer_forward.1} parent=11 // pred_check
          %p542 = pneg %p164
        $region30: #{retinexformer_forward.1} parent=11 // pred_check_branch
          %544 = sbr.rel (%p542) target = $region32
        $region31: #{retinexformer_forward.1} parent=11 // pred_region
          _
        $region32: #{retinexformer_forward.1} parent=11 // pred_fallthru
          _
        // Predicated region
        $region33: #{retinexformer_forward.1} parent=11 // pred_check
          %p545 = pneg %p185
        $region34: #{retinexformer_forward.1} parent=11 // pred_check_branch
          %547 = sbr.rel (%p545) target = $region36
        $region35: #{retinexformer_forward.1} parent=11 // pred_region
          _
        $region36: #{retinexformer_forward.1} parent=11 // pred_fallthru
          _
        // Predicated region
        $region37: #{retinexformer_forward.1} parent=11 // pred_check
          %p548 = pneg %p206
        $region38: #{retinexformer_forward.1} parent=11 // pred_check_branch
          %550 = sbr.rel (%p548) target = $region40
        $region39: #{retinexformer_forward.1} parent=11 // pred_region
          _
        $region40: #{retinexformer_forward.1} parent=11 // pred_fallthru
          _
        // Predicated region
        $region41: #{retinexformer_forward.1} parent=11 // pred_check
          %p551 = pneg %p227
        $region42: #{retinexformer_forward.1} parent=11 // pred_check_branch
          %553 = sbr.rel (%p551) target = $region44
        $region43: #{retinexformer_forward.1} parent=11 // pred_region
          %s555 = ssub.s32 2304, 2304
          %556 = vsyncadd [#allocation6], %s555
          %s557 = sshll.u32 [#allocation5], 4
          %s558 = int_to_ptr.vmem [resolvable:$true] %s557
          %563 = dma.hbm_to_vmem [thread:$0]  %s8, 2304, %s558, [#allocation6], 128, 128, 8
        $region44: #{retinexformer_forward.1} parent=11 // pred_fallthru
          _
        // Predicated region
        $region45: #{retinexformer_forward.1} parent=11 // pred_check
          %p564 = pneg %p248
        $region46: #{retinexformer_forward.1} parent=11 // pred_check_branch
          %566 = sbr.rel (%p564) target = $region48
        $region47: #{retinexformer_forward.1} parent=11 // pred_region
          %s568 = ssub.s32 768, 768
          %569 = vsyncadd [#allocation6], %s568
          %s570 = sshll.u32 [#allocation7], 4
          %s571 = int_to_ptr.vmem [resolvable:$true] %s570
          %576 = dma.hbm_to_vmem [thread:$0]  %s9, 768, %s571, [#allocation6], 128, 128, 8
        $region48: #{retinexformer_forward.1} parent=11 // pred_fallthru
          _
        // Predicated region
        $region49: #{retinexformer_forward.1} parent=11 // pred_check
          %p577 = pneg %p269
        $region50: #{retinexformer_forward.1} parent=11 // pred_check_branch
          %579 = sbr.rel (%p577) target = $region52
        $region51: #{retinexformer_forward.1} parent=11 // pred_region
          %s581 = ssub.s32 256, 256
          %582 = vsyncadd [#allocation9], %s581
          %s583 = sshll.u32 [#allocation8], 4
          %s584 = int_to_ptr.vmem [resolvable:$true] %s583
          %589 = dma.hbm_to_vmem [thread:$0]  %s10, 256, %s584, [#allocation9], 128, 128, 8
        $region52: #{retinexformer_forward.1} parent=11 // pred_fallthru
          _
        // Predicated region
        $region53: #{retinexformer_forward.1} parent=11 // pred_check
          %p590 = pneg %p290
        $region54: #{retinexformer_forward.1} parent=11 // pred_check_branch
          %592 = sbr.rel (%p590) target = $region56
        $region55: #{retinexformer_forward.1} parent=11 // pred_region
          _
        $region56: #{retinexformer_forward.1} parent=11 // pred_fallthru
          _
        // Predicated region
        $region57: #{retinexformer_forward.1} parent=11 // pred_check
          %p593 = pneg %p311
        $region58: #{retinexformer_forward.1} parent=11 // pred_check_branch
          %595 = sbr.rel (%p593) target = $region60
        $region59: #{retinexformer_forward.1} parent=11 // pred_region
          %s597 = ssub.s32 2304, 2304
          %598 = vsyncadd [#allocation9], %s597
          %s599 = sshll.u32 [#allocation10], 4
          %s600 = int_to_ptr.vmem [resolvable:$true] %s599
          %605 = dma.hbm_to_vmem [thread:$0]  %s12, 2304, %s600, [#allocation9], 128, 128, 8
        $region60: #{retinexformer_forward.1} parent=11 // pred_fallthru
          _
        // Predicated region
        $region61: #{retinexformer_forward.1} parent=11 // pred_check
          %p606 = pneg %p332
        $region62: #{retinexformer_forward.1} parent=11 // pred_check_branch
          %608 = sbr.rel (%p606) target = $region64
        $region63: #{retinexformer_forward.1} parent=11 // pred_region
          _
        $region64: #{retinexformer_forward.1} parent=11 // pred_fallthru
          _
        // Predicated region
        $region65: #{retinexformer_forward.1} parent=11 // pred_check
          %p609 = pneg %p353
        $region66: #{retinexformer_forward.1} parent=11 // pred_check_branch
          %611 = sbr.rel (%p609) target = $region68
        $region67: #{retinexformer_forward.1} parent=11 // pred_region
          _
        $region68: #{retinexformer_forward.1} parent=11 // pred_fallthru
          _
        // Predicated region
        $region69: #{retinexformer_forward.1} parent=11 // pred_check
          %p612 = pneg %p374
        $region70: #{retinexformer_forward.1} parent=11 // pred_check_branch
          %614 = sbr.rel (%p612) target = $region72
        $region71: #{retinexformer_forward.1} parent=11 // pred_region
          _
        $region72: #{retinexformer_forward.1} parent=11 // pred_fallthru
          _
        // Predicated region
        $region73: #{retinexformer_forward.1} parent=11 // pred_check
          %p615 = pneg %p395
        $region74: #{retinexformer_forward.1} parent=11 // pred_check_branch
          %617 = sbr.rel (%p615) target = $region76
        $region75: #{retinexformer_forward.1} parent=11 // pred_region
          %s619 = ssub.s32 1024, 1024
          %620 = vsyncadd [#allocation12], %s619
          %s621 = sshll.u32 [#allocation11], 4
          %s622 = int_to_ptr.vmem [resolvable:$true] %s621
          %627 = dma.hbm_to_vmem [thread:$0]  %s16, 1024, %s622, [#allocation12], 128, 128, 8
        $region76: #{retinexformer_forward.1} parent=11 // pred_fallthru
          _
        // Predicated region
        $region77: #{retinexformer_forward.1} parent=11 // pred_check
          %p628 = pneg %p416
        $region78: #{retinexformer_forward.1} parent=11 // pred_check_branch
          %630 = sbr.rel (%p628) target = $region80
        $region79: #{retinexformer_forward.1} parent=11 // pred_region
          %s632 = ssub.s32 9216, 9216
          %633 = vsyncadd [#allocation12], %s632
          %s634 = sshll.u32 [#allocation13], 4
          %s635 = int_to_ptr.vmem [resolvable:$true] %s634
          %640 = dma.hbm_to_vmem [thread:$0]  %s17, 9216, %s635, [#allocation12], 128, 128, 8
        $region80: #{retinexformer_forward.1} parent=11 // pred_fallthru
          _
        // Predicated region
        $region81: #{retinexformer_forward.1} parent=11 // pred_check
          %p641 = pneg %p437
        $region82: #{retinexformer_forward.1} parent=11 // pred_check_branch
          %643 = sbr.rel (%p641) target = $region84
        $region83: #{retinexformer_forward.1} parent=11 // pred_region
          %s645 = ssub.s32 256, 256
          %646 = vsyncadd [#allocation15], %s645
          %s647 = sshll.u32 [#allocation14], 4
          %s648 = int_to_ptr.vmem [resolvable:$true] %s647
          %653 = dma.hbm_to_vmem [thread:$0]  %s18, 256, %s648, [#allocation15], 128, 128, 8
        $region84: #{retinexformer_forward.1} parent=11 // pred_fallthru
          _
        // Predicated region
        $region85: #{retinexformer_forward.1} parent=11 // pred_check
          %p654 = pneg %p458
        $region86: #{retinexformer_forward.1} parent=11 // pred_check_branch
          %656 = sbr.rel (%p654) target = $region88
        $region87: #{retinexformer_forward.1} parent=11 // pred_region
          %s658 = ssub.s32 576, 576
          %659 = vsyncadd [#allocation15], %s658
          %s660 = sshll.u32 [#allocation16], 4
          %s661 = int_to_ptr.vmem [resolvable:$true] %s660
          %666 = dma.hbm_to_vmem [thread:$0]  %s19, 576, %s661, [#allocation15], 64, 64, 4
        $region88: #{retinexformer_forward.1} parent=11 // pred_fallthru
          _
        // Predicated region
        $region89: #{retinexformer_forward.1} parent=11 // pred_check
          %p667 = pneg %p479
        $region90: #{retinexformer_forward.1} parent=11 // pred_check_branch
          %669 = sbr.rel (%p667) target = $region92
        $region91: #{retinexformer_forward.1} parent=11 // pred_region
          _
        $region92: #{retinexformer_forward.1} parent=11 // pred_fallthru
          _
      $region12: #{retinexformer_forward.1} parent=5 // pred_fallthru
        _
      %p670 = scmp.lt.s32.totalorder %s33, 2
      // Predicated region
      $region93: #{retinexformer_forward.1} parent=5 // pred_check
        %p671 = pneg %p670
      $region94: #{retinexformer_forward.1} parent=5 // pred_check_branch
        %673 = sbr.rel (%p671) target = $region96
      $region95: #{retinexformer_forward.1} parent=5 // pred_region
        // Predicated region
        $region97: #{retinexformer_forward.1} parent=95 // pred_check
          %p674 = pneg %p74
        $region98: #{retinexformer_forward.1} parent=95 // pred_check_branch
          %676 = sbr.rel (%p674) target = $region100
        $region99: #{retinexformer_forward.1} parent=95 // pred_region
          %p677 = scmp.lt.s32.totalorder %s33, 1
          %s678 = scalar_select %p677, %s33, 1
          %s679 = smul.addr %s678, 2
          %s680 = smul.addr %s679, 4
          %s681 = scalar_lea.vmem %s1, %s680
        $region100: #{retinexformer_forward.1} parent=95 // pred_fallthru
          _
      $region96: #{retinexformer_forward.1} parent=5 // pred_fallthru
        _
      %p682 = scmp.le.s32.totalorder 1, %s33
      %p683 = scmp.lt.s32.totalorder %s33, 3
      %p684 = pnand %p682, %p683
      %p685 = pneg %p684
      // Predicated region
      $region101: #{retinexformer_forward.1} parent=5 // pred_check
        _
      $region102: #{retinexformer_forward.1} parent=5 // pred_check_branch
        %687 = sbr.rel (%p684) target = $region104
      $region103: #{retinexformer_forward.1} parent=5 // pred_region
        %s688 = ssub.s32 %s33, 1
        // Predicated region
        $region105: #{retinexformer_forward.1} parent=103 // pred_check
          %p689 = pneg %p143
        $region106: #{retinexformer_forward.1} parent=103 // pred_check_branch
          %691 = sbr.rel (%p689) target = $region108
        $region107: #{retinexformer_forward.1} parent=103 // pred_region
          %692 = dma.done [#allocation4], 6400
        $region108: #{retinexformer_forward.1} parent=103 // pred_fallthru
          _
        // Predicated region
        $region109: #{retinexformer_forward.1} parent=103 // pred_check
          %p693 = pneg %p227
        $region110: #{retinexformer_forward.1} parent=103 // pred_check_branch
          %695 = sbr.rel (%p693) target = $region112
        $region111: #{retinexformer_forward.1} parent=103 // pred_region
          %696 = dma.done [#allocation6], 2304
        $region112: #{retinexformer_forward.1} parent=103 // pred_fallthru
          _
        // Predicated region
        $region113: #{retinexformer_forward.1} parent=103 // pred_check
          %p697 = pneg %p248
        $region114: #{retinexformer_forward.1} parent=103 // pred_check_branch
          %699 = sbr.rel (%p697) target = $region116
        $region115: #{retinexformer_forward.1} parent=103 // pred_region
          %700 = dma.done [#allocation6], 768
        $region116: #{retinexformer_forward.1} parent=103 // pred_fallthru
          _
        // Predicated region
        $region117: #{retinexformer_forward.1} parent=103 // pred_check
          %p701 = pneg %p269
        $region118: #{retinexformer_forward.1} parent=103 // pred_check_branch
          %703 = sbr.rel (%p701) target = $region120
        $region119: #{retinexformer_forward.1} parent=103 // pred_region
          %704 = dma.done [#allocation9], 256
        $region120: #{retinexformer_forward.1} parent=103 // pred_fallthru
          _
        // Predicated region
        $region121: #{retinexformer_forward.1} parent=103 // pred_check
          %p705 = pneg %p311
        $region122: #{retinexformer_forward.1} parent=103 // pred_check_branch
          %707 = sbr.rel (%p705) target = $region124
        $region123: #{retinexformer_forward.1} parent=103 // pred_region
          %708 = dma.done [#allocation9], 2304
        $region124: #{retinexformer_forward.1} parent=103 // pred_fallthru
          _
        // Predicated region
        $region125: #{retinexformer_forward.1} parent=103 // pred_check
          %p709 = pneg %p395
        $region126: #{retinexformer_forward.1} parent=103 // pred_check_branch
          %711 = sbr.rel (%p709) target = $region128
        $region127: #{retinexformer_forward.1} parent=103 // pred_region
          %712 = dma.done [#allocation12], 1024
        $region128: #{retinexformer_forward.1} parent=103 // pred_fallthru
          _
        // Predicated region
        $region129: #{retinexformer_forward.1} parent=103 // pred_check
          %p713 = pneg %p416
        $region130: #{retinexformer_forward.1} parent=103 // pred_check_branch
          %715 = sbr.rel (%p713) target = $region132
        $region131: #{retinexformer_forward.1} parent=103 // pred_region
          %716 = dma.done [#allocation12], 9216
        $region132: #{retinexformer_forward.1} parent=103 // pred_fallthru
          _
        // Predicated region
        $region133: #{retinexformer_forward.1} parent=103 // pred_check
          %p717 = pneg %p437
        $region134: #{retinexformer_forward.1} parent=103 // pred_check_branch
          %719 = sbr.rel (%p717) target = $region136
        $region135: #{retinexformer_forward.1} parent=103 // pred_region
          %720 = dma.done [#allocation15], 256
        $region136: #{retinexformer_forward.1} parent=103 // pred_fallthru
          _
        // Predicated region
        $region137: #{retinexformer_forward.1} parent=103 // pred_check
          %p721 = pneg %p458
        $region138: #{retinexformer_forward.1} parent=103 // pred_check_branch
          %723 = sbr.rel (%p721) target = $region140
        $region139: #{retinexformer_forward.1} parent=103 // pred_region
          %724 = dma.done [#allocation15], 576
        $region140: #{retinexformer_forward.1} parent=103 // pred_fallthru
          _
        %p725 = pneg %p54
        %p726 = pneg %p51
        %p727 = scmp.lt.s32.totalorder %s38, 1
        %s728 = scalar_select %p727, %s38, 1
        %s729 = smul.addr %s728, 2
        %s730 = smul.addr %s729, 4
        %s731 = scalar_lea.vmem %s1, %s730
        %p732 = pneg %p80
        %p733 = pneg %p77
        %p734 = pneg %p101
        %p735 = pneg %p98
        %p736 = pneg %p122
        %p737 = pneg %p119
        %p738 = pneg %p143
        %p739 = pneg %p140
        %p740 = pneg %p164
        %p741 = pneg %p161
        %p742 = pneg %p185
        %p743 = pneg %p182
        %p744 = pneg %p206
        %p745 = pneg %p203
        %p746 = pneg %p227
        %p747 = pneg %p224
        %p748 = pneg %p248
        %p749 = pneg %p245
        %p750 = pneg %p269
        %p751 = pneg %p266
        %p752 = pneg %p290
        %p753 = pneg %p287
        %p754 = pneg %p311
        %p755 = pneg %p308
        %p756 = pneg %p332
        %p757 = pneg %p329
        %p758 = pneg %p353
        %p759 = pneg %p350
        %p760 = pneg %p374
        %p761 = pneg %p371
        %p762 = pneg %p395
        %p763 = pneg %p392
        %p764 = pneg %p416
        %p765 = pneg %p413
        %p766 = pneg %p437
        %p767 = pneg %p434
        %p768 = pneg %p458
        %p769 = pneg %p455
        %p770 = pneg %p479
        %p771 = pneg %p476
        %p772 = pneg %p505
        %p773 = pneg %p502
        %p774 = scmp.lt.s32.totalorder %s38, 1
        %s775 = scalar_select %p774, %s38, 1
        %s776 = smul.addr %s775, 2
        %s777 = smul.addr %s776, 4
        %s778 = scalar_lea.vmem %s21, %s777
        %p779 = scmp.lt.s32.totalorder %s38, 1
        %s780 = scalar_select %p779, %s38, 1
        %s781 = smul.addr %s780, 2
        %s782 = smul.addr %s781, 4
        %s783 = scalar_lea.vmem %s1, %s782
        %p784 = scmp.lt.s32.totalorder %s38, 1
        %s785 = scalar_select %p784, %s38, 1
        %s786 = smul.addr %s785, 2
        %s787 = smul.addr %s786, 4
        %s788 = scalar_lea.vmem %s21, %s787
        %v790 = vld [vmem:[%s0] sm:$0x3]
        %s791 = scalar_lea.vmem %s0, 2
        %v792 = vld [vmem:[%s791] sm:$0x3]
        %v793 = vld [vmem:[%s783] sm:$0x77]
        %v794 = vld [vmem:[%s2] sm:$0xff]
        %v795 = vld [vmem:[%s2 + $0x8] sm:$0xff]
        %v796 = vpack.c.bf16 %v795, %v794
        %v798 = vcombine.high %v793, %v793
        %v800 = vpack.c.bf16 %v793, %v793
        %v801 = vpack.c.bf16 %v798, %v798
        %v802 = vld [vmem:[%s3] sm:$0xff]
        %v803 = vld [vmem:[%s3 + $0x8] sm:$0xff]
        %805 = vset.pattern.permute.xlu0 0
        %806 = vperm.xlu0 %805, %v802
        %v807 = vpop.permute.xlu0 %806
        %810 = vset.pattern.permute.xlu0 0
        %811 = vperm.xlu0 %810, %v803
        %v812 = vpop.permute.xlu0 %811
        %vm814 = vcmask 23552
        %v816 = vsel %vm814, %v796, 0
        %vm818 = vcmask 1040384
        %vm819 = vcmask 1041408
        %v820 = vsel %vm818, 4294967295, 65535
        %v821 = vsel %vm819, %v820, 0
        %v823 = vand.u32 %v800, %v821
        %v826 = vand.u32 %v801, %v821
        %828 = vmatprep.subr.bf16.mxu0 0
        %829 = vmatpush1.bf16.msra.mxu0 0
        %830 = vmatprep.subr.bf16.mxu0 0
        %831 = vmatpush1.bf16.msra.mxu0 0
        %832 = vmatprep.subr.bf16.mxu0 0
        %833 = vmatpush1.bf16.msra.mxu0 0
        %834 = vmatprep.subr.bf16.mxu0 0
        %835 = vmatpush1.bf16.msra.mxu0 0
        %836 = vmatprep.subr.bf16.mxu0 0
        %837 = vmatpush1.bf16.msra.mxu0 0
        %838 = vmatprep.subr.bf16.mxu0 0
        %839 = vmatpush1.bf16.msra.mxu0 0
        %840 = vmatprep.subr.bf16.mxu0 0
        %841 = vmatpush1.bf16.msra.mxu0 0
        %842 = vmatprep.subr.bf16.mxu0 %v826
        %843 = vmatpush1.bf16.msra.mxu0 %v823
        %844 = vmatprep.subr.bf16.mxu0 0
        %845 = vmatpush2.bf16.msra.mxu0 0
        %846 = vmatprep.subr.bf16.mxu0 0
        %847 = vmatpush2.bf16.msra.mxu0 0
        %848 = vmatprep.subr.bf16.mxu0 0
        %849 = vmatpush2.bf16.msra.mxu0 0
        %850 = vmatprep.subr.bf16.mxu0 0
        %851 = vmatpush2.bf16.msra.mxu0 0
        %852 = vmatprep.subr.bf16.mxu0 0
        %853 = vmatpush2.bf16.msra.mxu0 0
        %854 = vmatprep.subr.bf16.mxu0 0
        %855 = vmatpush2.bf16.msra.mxu0 0
        %856 = vmatprep.subr.bf16.mxu0 0
        %857 = vmatpush2.bf16.msra.mxu0 0
        %858 = vmatprep.subr.bf16.mxu0 0
        %859 = vmatpush2.bf16.msra.mxu0 0
        %860 = vmatprep.mubr.bf16.mxu0 0
        %861 = vmatmul.mubr.bf16.gmra.mxu0 %v816
        %v862 = vpop.f32.mrf.mxu0
        %v863 = vadd.f32 %v807, %v862
        %v864 = vpop.f32.mrf.mxu0
        %v865 = vadd.f32 %v807, %v864
        %v866 = vpop.f32.mrf.mxu0
        %v867 = vadd.f32 %v812, %v866
        %v868 = vpop.f32.mrf.mxu0
        %v869 = vadd.f32 %v812, %v868
        %870 = vdwg.mxu0
        %871 = vrot.lane.b32.xlu0 %v863, 34
        %v872 = vpop.permute.xlu0 %871
        %873 = vrot.lane.b32.xlu0 %v867, 34
        %v874 = vpop.permute.xlu0 %873
        %875 = vrot.lane.b32.xlu0 %v865, 34
        %v876 = vpop.permute.xlu0 %875
        %877 = vrot.lane.b32.xlu0 %v869, 34
        %v878 = vpop.permute.xlu0 %877
        %v879 = vlaneseq
        %v880 = vand.u32 %v879, 127
        %vm881 = vcmp.lt.s32.totalorder %v880, 34
        %v882 = vsel %vm881, %v872, %v876
        %v883 = vsel %vm881, %v874, %v878
        %v884 = vsel %vm881, %v876, %v872
        %v885 = vsel %vm881, %v878, %v874
        %vm886 = vcmp.ge.s32.totalorder %v790, 2
        %vm887 = vcmp.ge.s32.totalorder %v792, 2
        %vm888 = vmand %vm886, %vm887
        %v889 = vsel %vm888, 1, 0
        %v890 = vcvt.s32.f32 %v889
        %v892 = vlaneseq
        %v893 = vshrl.u32 %v892, 7
        %v894 = vsub.s32 0, %v893
        %v895 = vrot.slane %v890, %v894
        %v896 = vlaneseq
        %v897 = vshrl.u32 %v896, 7
        %v898 = vsub.s32 1, %v897
        %v899 = vrot.slane %v890, %v898
        %v902 = vmul.f32 %v884, %v895
        %v903 = vmul.f32 %v882, %v899
        %v904 = vmul.f32 %v885, %v895
        %v905 = vmul.f32 %v883, %v899
        %v906 = vld [vmem:[#allocation3] sm:$0xff]
        %v907 = vld [vmem:[#allocation3 + $0x8] sm:$0xff]
        %909 = vset.pattern.permute.xlu0 0
        %910 = vperm.xlu0 %909, %v906
        %v911 = vpop.permute.xlu0 %910
        %914 = vset.pattern.permute.xlu0 0
        %915 = vperm.xlu0 %914, %v907
        %v916 = vpop.permute.xlu0 %915
        %v918 = vmul.f32 %v911, %v902
        %v919 = vmul.f32 %v911, %v903
        %v920 = vmul.f32 %v916, %v904
        %v921 = vmul.f32 %v916, %v905
        %v922 = vadd.f32 %v918, 0.0
        %v923 = vadd.f32 %v919, 0.0
        %v924 = vadd.f32 %v920, 0.0
        %v925 = vadd.f32 %v921, 0.0
        %926 = vrot.lane.b32.xlu0 %v863, 33
        %v927 = vpop.permute.xlu0 %926
        %928 = vrot.lane.b32.xlu0 %v867, 33
        %v929 = vpop.permute.xlu0 %928
        %930 = vrot.lane.b32.xlu0 %v865, 33
        %v931 = vpop.permute.xlu0 %930
        %932 = vrot.lane.b32.xlu0 %v869, 33
        %v933 = vpop.permute.xlu0 %932
        %vm934 = vcmp.lt.s32.totalorder %v880, 33
        %v935 = vsel %vm934, %v927, %v931
        %v936 = vsel %vm934, %v929, %v933
        %v937 = vsel %vm934, %v931, %v927
        %v938 = vsel %vm934, %v933, %v929
        %vm939 = vcmp.ge.s32.totalorder %v792, 1
        %vm940 = vmand %vm886, %vm939
        %v941 = vsel %vm940, 1, 0
        %v942 = vcvt.s32.f32 %v941
        %v944 = vlaneseq
        %v945 = vshrl.u32 %v944, 7
        %v946 = vsub.s32 0, %v945
        %v947 = vrot.slane %v942, %v946
        %v948 = vlaneseq
        %v949 = vshrl.u32 %v948, 7
        %v950 = vsub.s32 1, %v949
        %v951 = vrot.slane %v942, %v950
        %v954 = vmul.f32 %v937, %v947
        %v955 = vmul.f32 %v935, %v951
        %v956 = vmul.f32 %v938, %v947
        %v957 = vmul.f32 %v936, %v951
        %s958 = scalar_lea.vmem [#allocation3], 16
        %v959 = vld [vmem:[%s958] sm:$0xff]
        %v960 = vld [vmem:[%s958 + $0x8] sm:$0xff]
        %962 = vset.pattern.permute.xlu0 0
        %963 = vperm.xlu0 %962, %v959
        %v964 = vpop.permute.xlu0 %963
        %967 = vset.pattern.permute.xlu0 0
        %968 = vperm.xlu0 %967, %v960
        %v969 = vpop.permute.xlu0 %968
        %v971 = vmul.f32 %v964, %v954
        %v972 = vmul.f32 %v964, %v955
        %v973 = vmul.f32 %v969, %v956
        %v974 = vmul.f32 %v969, %v957
        %v975 = vadd.f32 %v922, %v971
        %v976 = vadd.f32 %v923, %v972
        %v977 = vadd.f32 %v924, %v973
        %v978 = vadd.f32 %v925, %v974
        %979 = vrot.lane.b32.xlu0 %v863, 32
        %v980 = vpop.permute.xlu0 %979
        %981 = vrot.lane.b32.xlu0 %v867, 32
        %v982 = vpop.permute.xlu0 %981
        %983 = vrot.lane.b32.xlu0 %v865, 32
        %v984 = vpop.permute.xlu0 %983
        %985 = vrot.lane.b32.xlu0 %v869, 32
        %v986 = vpop.permute.xlu0 %985
        %vm987 = vcmp.lt.s32.totalorder %v880, 32
        %v988 = vsel %vm987, %v980, %v984
        %v989 = vsel %vm987, %v982, %v986
        %v990 = vsel %vm987, %v984, %v980
        %v991 = vsel %vm987, %v986, %v982
        %v992 = vsel %vm886, 1, 0
        %v993 = vcvt.s32.f32 %v992
        %v995 = vlaneseq
        %v996 = vshrl.u32 %v995, 7
        %v997 = vsub.s32 0, %v996
        %v998 = vrot.slane %v993, %v997
        %v999 = vlaneseq
        %v1000 = vshrl.u32 %v999, 7
        %v1001 = vsub.s32 1, %v1000
        %v1002 = vrot.slane %v993, %v1001
        %v1005 = vmul.f32 %v990, %v998
        %v1006 = vmul.f32 %v988, %v1002
        %v1007 = vmul.f32 %v991, %v998
        %v1008 = vmul.f32 %v989, %v1002
        %s1009 = scalar_lea.vmem [#allocation3], 32
        %v1010 = vld [vmem:[%s1009] sm:$0xff]
        %v1011 = vld [vmem:[%s1009 + $0x8] sm:$0xff]
        %1013 = vset.pattern.permute.xlu0 0
        %1014 = vperm.xlu0 %1013, %v1010
        %v1015 = vpop.permute.xlu0 %1014
        %1018 = vset.pattern.permute.xlu0 0
        %1019 = vperm.xlu0 %1018, %v1011
        %v1020 = vpop.permute.xlu0 %1019
        %v1022 = vmul.f32 %v1015, %v1005
        %v1023 = vmul.f32 %v1015, %v1006
        %v1024 = vmul.f32 %v1020, %v1007
        %v1025 = vmul.f32 %v1020, %v1008
        %v1026 = vadd.f32 %v975, %v1022
        %v1027 = vadd.f32 %v976, %v1023
        %v1028 = vadd.f32 %v977, %v1024
        %v1029 = vadd.f32 %v978, %v1025
        %1030 = vrot.lane.b32.xlu0 %v863, 31
        %v1031 = vpop.permute.xlu0 %1030
        %1032 = vrot.lane.b32.xlu0 %v867, 31
        %v1033 = vpop.permute.xlu0 %1032
        %1034 = vrot.lane.b32.xlu0 %v865, 31
        %v1035 = vpop.permute.xlu0 %1034
        %1036 = vrot.lane.b32.xlu0 %v869, 31
        %v1037 = vpop.permute.xlu0 %1036
        %vm1038 = vcmp.lt.s32.totalorder %v880, 31
        %v1039 = vsel %vm1038, %v1031, %v1035
        %v1040 = vsel %vm1038, %v1033, %v1037
        %v1041 = vsel %vm1038, %v1035, %v1031
        %v1042 = vsel %vm1038, %v1037, %v1033
        %vm1043 = vcmp.lt.s32.totalorder %v792, 15
        %vm1044 = vmand %vm886, %vm1043
        %v1045 = vsel %vm1044, 1, 0
        %v1046 = vcvt.s32.f32 %v1045
        %v1048 = vlaneseq
        %v1049 = vshrl.u32 %v1048, 7
        %v1050 = vsub.s32 0, %v1049
        %v1051 = vrot.slane %v1046, %v1050
        %v1052 = vlaneseq
        %v1053 = vshrl.u32 %v1052, 7
        %v1054 = vsub.s32 1, %v1053
        %v1055 = vrot.slane %v1046, %v1054
        %v1058 = vmul.f32 %v1041, %v1051
        %v1059 = vmul.f32 %v1039, %v1055
        %v1060 = vmul.f32 %v1042, %v1051
        %v1061 = vmul.f32 %v1040, %v1055
        %s1062 = scalar_lea.vmem [#allocation3], 48
        %v1063 = vld [vmem:[%s1062] sm:$0xff]
        %v1064 = vld [vmem:[%s1062 + $0x8] sm:$0xff]
        %1066 = vset.pattern.permute.xlu0 0
        %1067 = vperm.xlu0 %1066, %v1063
        %v1068 = vpop.permute.xlu0 %1067
        %1071 = vset.pattern.permute.xlu0 0
        %1072 = vperm.xlu0 %1071, %v1064
        %v1073 = vpop.permute.xlu0 %1072
        %v1075 = vmul.f32 %v1068, %v1058
        %v1076 = vmul.f32 %v1068, %v1059
        %v1077 = vmul.f32 %v1073, %v1060
        %v1078 = vmul.f32 %v1073, %v1061
        %v1079 = vadd.f32 %v1026, %v1075
        %v1080 = vadd.f32 %v1027, %v1076
        %v1081 = vadd.f32 %v1028, %v1077
        %v1082 = vadd.f32 %v1029, %v1078
        %1083 = vrot.lane.b32.xlu0 %v863, 30
        %v1084 = vpop.permute.xlu0 %1083
        %1085 = vrot.lane.b32.xlu0 %v867, 30
        %v1086 = vpop.permute.xlu0 %1085
        %1087 = vrot.lane.b32.xlu0 %v865, 30
        %v1088 = vpop.permute.xlu0 %1087
        %1089 = vrot.lane.b32.xlu0 %v869, 30
        %v1090 = vpop.permute.xlu0 %1089
        %vm1091 = vcmp.lt.s32.totalorder %v880, 30
        %v1092 = vsel %vm1091, %v1084, %v1088
        %v1093 = vsel %vm1091, %v1086, %v1090
        %v1094 = vsel %vm1091, %v1088, %v1084
        %v1095 = vsel %vm1091, %v1090, %v1086
        %vm1096 = vcmp.lt.s32.totalorder %v792, 14
        %vm1097 = vmand %vm886, %vm1096
        %v1098 = vsel %vm1097, 1, 0
        %v1099 = vcvt.s32.f32 %v1098
        %v1101 = vlaneseq
        %v1102 = vshrl.u32 %v1101, 7
        %v1103 = vsub.s32 0, %v1102
        %v1104 = vrot.slane %v1099, %v1103
        %v1105 = vlaneseq
        %v1106 = vshrl.u32 %v1105, 7
        %v1107 = vsub.s32 1, %v1106
        %v1108 = vrot.slane %v1099, %v1107
        %v1111 = vmul.f32 %v1094, %v1104
        %v1112 = vmul.f32 %v1092, %v1108
        %v1113 = vmul.f32 %v1095, %v1104
        %v1114 = vmul.f32 %v1093, %v1108
        %s1115 = scalar_lea.vmem [#allocation3], 64
        %v1116 = vld [vmem:[%s1115] sm:$0xff]
        %v1117 = vld [vmem:[%s1115 + $0x8] sm:$0xff]
        %1119 = vset.pattern.permute.xlu0 0
        %1120 = vperm.xlu0 %1119, %v1116
        %v1121 = vpop.permute.xlu0 %1120
        %1124 = vset.pattern.permute.xlu0 0
        %1125 = vperm.xlu0 %1124, %v1117
        %v1126 = vpop.permute.xlu0 %1125
        %v1128 = vmul.f32 %v1121, %v1111
        %v1129 = vmul.f32 %v1121, %v1112
        %v1130 = vmul.f32 %v1126, %v1113
        %v1131 = vmul.f32 %v1126, %v1114
        %v1132 = vadd.f32 %v1079, %v1128
        %v1133 = vadd.f32 %v1080, %v1129
        %v1134 = vadd.f32 %v1081, %v1130
        %v1135 = vadd.f32 %v1082, %v1131
        %1136 = vrot.lane.b32.xlu0 %v863, 18
        %v1137 = vpop.permute.xlu0 %1136
        %1138 = vrot.lane.b32.xlu0 %v867, 18
        %v1139 = vpop.permute.xlu0 %1138
        %1140 = vrot.lane.b32.xlu0 %v865, 18
        %v1141 = vpop.permute.xlu0 %1140
        %1142 = vrot.lane.b32.xlu0 %v869, 18
        %v1143 = vpop.permute.xlu0 %1142
        %vm1144 = vcmp.lt.s32.totalorder %v880, 18
        %v1145 = vsel %vm1144, %v1137, %v1141
        %v1146 = vsel %vm1144, %v1139, %v1143
        %v1147 = vsel %vm1144, %v1141, %v1137
        %v1148 = vsel %vm1144, %v1143, %v1139
        %vm1149 = vcmp.ge.s32.totalorder %v790, 1
        %vm1150 = vmand %vm1149, %vm887
        %v1151 = vsel %vm1150, 1, 0
        %v1152 = vcvt.s32.f32 %v1151
        %v1154 = vlaneseq
        %v1155 = vshrl.u32 %v1154, 7
        %v1156 = vsub.s32 0, %v1155
        %v1157 = vrot.slane %v1152, %v1156
        %v1158 = vlaneseq
        %v1159 = vshrl.u32 %v1158, 7
        %v1160 = vsub.s32 1, %v1159
        %v1161 = vrot.slane %v1152, %v1160
        %v1164 = vmul.f32 %v1147, %v1157
        %v1165 = vmul.f32 %v1145, %v1161
        %v1166 = vmul.f32 %v1148, %v1157
        %v1167 = vmul.f32 %v1146, %v1161
        %s1168 = scalar_lea.vmem [#allocation3], 80
        %v1169 = vld [vmem:[%s1168] sm:$0xff]
        %v1170 = vld [vmem:[%s1168 + $0x8] sm:$0xff]
        %1172 = vset.pattern.permute.xlu0 0
        %1173 = vperm.xlu0 %1172, %v1169
        %v1174 = vpop.permute.xlu0 %1173
        %1177 = vset.pattern.permute.xlu0 0
        %1178 = vperm.xlu0 %1177, %v1170
        %v1179 = vpop.permute.xlu0 %1178
        %v1181 = vmul.f32 %v1174, %v1164
        %v1182 = vmul.f32 %v1174, %v1165
        %v1183 = vmul.f32 %v1179, %v1166
        %v1184 = vmul.f32 %v1179, %v1167
        %v1185 = vadd.f32 %v1132, %v1181
        %v1186 = vadd.f32 %v1133, %v1182
        %v1187 = vadd.f32 %v1134, %v1183
        %v1188 = vadd.f32 %v1135, %v1184
        %1189 = vrot.lane.b32.xlu0 %v863, 17
        %v1190 = vpop.permute.xlu0 %1189
        %1191 = vrot.lane.b32.xlu0 %v867, 17
        %v1192 = vpop.permute.xlu0 %1191
        %1193 = vrot.lane.b32.xlu0 %v865, 17
        %v1194 = vpop.permute.xlu0 %1193
        %1195 = vrot.lane.b32.xlu0 %v869, 17
        %v1196 = vpop.permute.xlu0 %1195
        %vm1197 = vcmp.lt.s32.totalorder %v880, 17
        %v1198 = vsel %vm1197, %v1190, %v1194
        %v1199 = vsel %vm1197, %v1192, %v1196
        %v1200 = vsel %vm1197, %v1194, %v1190
        %v1201 = vsel %vm1197, %v1196, %v1192
        %vm1202 = vmand %vm1149, %vm939
        %v1203 = vsel %vm1202, 1, 0
        %v1204 = vcvt.s32.f32 %v1203
        %v1206 = vlaneseq
        %v1207 = vshrl.u32 %v1206, 7
        %v1208 = vsub.s32 0, %v1207
        %v1209 = vrot.slane %v1204, %v1208
        %v1210 = vlaneseq
        %v1211 = vshrl.u32 %v1210, 7
        %v1212 = vsub.s32 1, %v1211
        %v1213 = vrot.slane %v1204, %v1212
        %v1216 = vmul.f32 %v1200, %v1209
        %v1217 = vmul.f32 %v1198, %v1213
        %v1218 = vmul.f32 %v1201, %v1209
        %v1219 = vmul.f32 %v1199, %v1213
        %s1220 = scalar_lea.vmem [#allocation3], 96
        %v1221 = vld [vmem:[%s1220] sm:$0xff]
        %v1222 = vld [vmem:[%s1220 + $0x8] sm:$0xff]
        %1224 = vset.pattern.permute.xlu0 0
        %1225 = vperm.xlu0 %1224, %v1221
        %v1226 = vpop.permute.xlu0 %1225
        %1229 = vset.pattern.permute.xlu0 0
        %1230 = vperm.xlu0 %1229, %v1222
        %v1231 = vpop.permute.xlu0 %1230
        %v1233 = vmul.f32 %v1226, %v1216
        %v1234 = vmul.f32 %v1226, %v1217
        %v1235 = vmul.f32 %v1231, %v1218
        %v1236 = vmul.f32 %v1231, %v1219
        %v1237 = vadd.f32 %v1185, %v1233
        %v1238 = vadd.f32 %v1186, %v1234
        %v1239 = vadd.f32 %v1187, %v1235
        %v1240 = vadd.f32 %v1188, %v1236
        %1241 = vrot.lane.b32.xlu0 %v863, 16
        %v1242 = vpop.permute.xlu0 %1241
        %1243 = vrot.lane.b32.xlu0 %v867, 16
        %v1244 = vpop.permute.xlu0 %1243
        %1245 = vrot.lane.b32.xlu0 %v865, 16
        %v1246 = vpop.permute.xlu0 %1245
        %1247 = vrot.lane.b32.xlu0 %v869, 16
        %v1248 = vpop.permute.xlu0 %1247
        %vm1249 = vcmp.lt.s32.totalorder %v880, 16
        %v1250 = vsel %vm1249, %v1242, %v1246
        %v1251 = vsel %vm1249, %v1244, %v1248
        %v1252 = vsel %vm1249, %v1246, %v1242
        %v1253 = vsel %vm1249, %v1248, %v1244
        %v1254 = vsel %vm1149, 1, 0
        %v1255 = vcvt.s32.f32 %v1254
        %v1257 = vlaneseq
        %v1258 = vshrl.u32 %v1257, 7
        %v1259 = vsub.s32 0, %v1258
        %v1260 = vrot.slane %v1255, %v1259
        %v1261 = vlaneseq
        %v1262 = vshrl.u32 %v1261, 7
        %v1263 = vsub.s32 1, %v1262
        %v1264 = vrot.slane %v1255, %v1263
        %v1267 = vmul.f32 %v1252, %v1260
        %v1268 = vmul.f32 %v1250, %v1264
        %v1269 = vmul.f32 %v1253, %v1260
        %v1270 = vmul.f32 %v1251, %v1264
        %s1271 = scalar_lea.vmem [#allocation3], 112
        %v1272 = vld [vmem:[%s1271] sm:$0xff]
        %v1273 = vld [vmem:[%s1271 + $0x8] sm:$0xff]
        %1275 = vset.pattern.permute.xlu0 0
        %1276 = vperm.xlu0 %1275, %v1272
        %v1277 = vpop.permute.xlu0 %1276
        %1280 = vset.pattern.permute.xlu0 0
        %1281 = vperm.xlu0 %1280, %v1273
        %v1282 = vpop.permute.xlu0 %1281
        %v1284 = vmul.f32 %v1277, %v1267
        %v1285 = vmul.f32 %v1277, %v1268
        %v1286 = vmul.f32 %v1282, %v1269
        %v1287 = vmul.f32 %v1282, %v1270
        %v1288 = vadd.f32 %v1237, %v1284
        %v1289 = vadd.f32 %v1238, %v1285
        %v1290 = vadd.f32 %v1239, %v1286
        %v1291 = vadd.f32 %v1240, %v1287
        %1292 = vrot.lane.b32.xlu0 %v863, 15
        %v1293 = vpop.permute.xlu0 %1292
        %1294 = vrot.lane.b32.xlu0 %v867, 15
        %v1295 = vpop.permute.xlu0 %1294
        %1296 = vrot.lane.b32.xlu0 %v865, 15
        %v1297 = vpop.permute.xlu0 %1296
        %1298 = vrot.lane.b32.xlu0 %v869, 15
        %v1299 = vpop.permute.xlu0 %1298
        %vm1300 = vcmp.lt.s32.totalorder %v880, 15
        %v1301 = vsel %vm1300, %v1293, %v1297
        %v1302 = vsel %vm1300, %v1295, %v1299
        %v1303 = vsel %vm1300, %v1297, %v1293
        %v1304 = vsel %vm1300, %v1299, %v1295
        %vm1305 = vmand %vm1149, %vm1043
        %v1306 = vsel %vm1305, 1, 0
        %v1307 = vcvt.s32.f32 %v1306
        %v1309 = vlaneseq
        %v1310 = vshrl.u32 %v1309, 7
        %v1311 = vsub.s32 0, %v1310
        %v1312 = vrot.slane %v1307, %v1311
        %v1313 = vlaneseq
        %v1314 = vshrl.u32 %v1313, 7
        %v1315 = vsub.s32 1, %v1314
        %v1316 = vrot.slane %v1307, %v1315
        %v1319 = vmul.f32 %v1303, %v1312
        %v1320 = vmul.f32 %v1301, %v1316
        %v1321 = vmul.f32 %v1304, %v1312
        %v1322 = vmul.f32 %v1302, %v1316
        %s1323 = scalar_lea.vmem [#allocation3], 128
        %v1324 = vld [vmem:[%s1323] sm:$0xff]
        %v1325 = vld [vmem:[%s1323 + $0x8] sm:$0xff]
        %1327 = vset.pattern.permute.xlu0 0
        %1328 = vperm.xlu0 %1327, %v1324
        %v1329 = vpop.permute.xlu0 %1328
        %1332 = vset.pattern.permute.xlu0 0
        %1333 = vperm.xlu0 %1332, %v1325
        %v1334 = vpop.permute.xlu0 %1333
        %v1336 = vmul.f32 %v1329, %v1319
        %v1337 = vmul.f32 %v1329, %v1320
        %v1338 = vmul.f32 %v1334, %v1321
        %v1339 = vmul.f32 %v1334, %v1322
        %v1340 = vadd.f32 %v1288, %v1336
        %v1341 = vadd.f32 %v1289, %v1337
        %v1342 = vadd.f32 %v1290, %v1338
        %v1343 = vadd.f32 %v1291, %v1339
        %1344 = vrot.lane.b32.xlu0 %v863, 14
        %v1345 = vpop.permute.xlu0 %1344
        %1346 = vrot.lane.b32.xlu0 %v867, 14
        %v1347 = vpop.permute.xlu0 %1346
        %1348 = vrot.lane.b32.xlu0 %v865, 14
        %v1349 = vpop.permute.xlu0 %1348
        %1350 = vrot.lane.b32.xlu0 %v869, 14
        %v1351 = vpop.permute.xlu0 %1350
        %vm1352 = vcmp.lt.s32.totalorder %v880, 14
        %v1353 = vsel %vm1352, %v1345, %v1349
        %v1354 = vsel %vm1352, %v1347, %v1351
        %v1355 = vsel %vm1352, %v1349, %v1345
        %v1356 = vsel %vm1352, %v1351, %v1347
        %vm1357 = vmand %vm1149, %vm1096
        %v1358 = vsel %vm1357, 1, 0
        %v1359 = vcvt.s32.f32 %v1358
        %v1361 = vlaneseq
        %v1362 = vshrl.u32 %v1361, 7
        %v1363 = vsub.s32 0, %v1362
        %v1364 = vrot.slane %v1359, %v1363
        %v1365 = vlaneseq
        %v1366 = vshrl.u32 %v1365, 7
        %v1367 = vsub.s32 1, %v1366
        %v1368 = vrot.slane %v1359, %v1367
        %v1371 = vmul.f32 %v1355, %v1364
        %v1372 = vmul.f32 %v1353, %v1368
        %v1373 = vmul.f32 %v1356, %v1364
        %v1374 = vmul.f32 %v1354, %v1368
        %s1375 = scalar_lea.vmem [#allocation3], 144
        %v1376 = vld [vmem:[%s1375] sm:$0xff]
        %v1377 = vld [vmem:[%s1375 + $0x8] sm:$0xff]
        %1379 = vset.pattern.permute.xlu0 0
        %1380 = vperm.xlu0 %1379, %v1376
        %v1381 = vpop.permute.xlu0 %1380
        %1384 = vset.pattern.permute.xlu0 0
        %1385 = vperm.xlu0 %1384, %v1377
        %v1386 = vpop.permute.xlu0 %1385
        %v1388 = vmul.f32 %v1381, %v1371
        %v1389 = vmul.f32 %v1381, %v1372
        %v1390 = vmul.f32 %v1386, %v1373
        %v1391 = vmul.f32 %v1386, %v1374
        %v1392 = vadd.f32 %v1340, %v1388
        %v1393 = vadd.f32 %v1341, %v1389
        %v1394 = vadd.f32 %v1342, %v1390
        %v1395 = vadd.f32 %v1343, %v1391
        %1396 = vrot.lane.b32.xlu0 %v863, 2
        %v1397 = vpop.permute.xlu0 %1396
        %1398 = vrot.lane.b32.xlu0 %v867, 2
        %v1399 = vpop.permute.xlu0 %1398
        %1400 = vrot.lane.b32.xlu0 %v865, 2
        %v1401 = vpop.permute.xlu0 %1400
        %1402 = vrot.lane.b32.xlu0 %v869, 2
        %v1403 = vpop.permute.xlu0 %1402
        %vm1404 = vcmp.lt.s32.totalorder %v880, 2
        %v1405 = vsel %vm1404, %v1397, %v1401
        %v1406 = vsel %vm1404, %v1399, %v1403
        %v1407 = vsel %vm1404, %v1401, %v1397
        %v1408 = vsel %vm1404, %v1403, %v1399
        %v1409 = vsel %vm887, 1, 0
        %v1410 = vcvt.s32.f32 %v1409
        %v1412 = vlaneseq
        %v1413 = vshrl.u32 %v1412, 7
        %v1414 = vsub.s32 0, %v1413
        %v1415 = vrot.slane %v1410, %v1414
        %v1416 = vlaneseq
        %v1417 = vshrl.u32 %v1416, 7
        %v1418 = vsub.s32 1, %v1417
        %v1419 = vrot.slane %v1410, %v1418
        %v1422 = vmul.f32 %v1407, %v1415
        %v1423 = vmul.f32 %v1405, %v1419
        %v1424 = vmul.f32 %v1408, %v1415
        %v1425 = vmul.f32 %v1406, %v1419
        %s1426 = scalar_lea.vmem [#allocation3], 160
        %v1427 = vld [vmem:[%s1426] sm:$0xff]
        %v1428 = vld [vmem:[%s1426 + $0x8] sm:$0xff]
        %1430 = vset.pattern.permute.xlu0 0
        %1431 = vperm.xlu0 %1430, %v1427
        %v1432 = vpop.permute.xlu0 %1431
        %1435 = vset.pattern.permute.xlu0 0
        %1436 = vperm.xlu0 %1435, %v1428
        %v1437 = vpop.permute.xlu0 %1436
        %v1439 = vmul.f32 %v1432, %v1422
        %v1440 = vmul.f32 %v1432, %v1423
        %v1441 = vmul.f32 %v1437, %v1424
        %v1442 = vmul.f32 %v1437, %v1425
        %v1443 = vadd.f32 %v1392, %v1439
        %v1444 = vadd.f32 %v1393, %v1440
        %v1445 = vadd.f32 %v1394, %v1441
        %v1446 = vadd.f32 %v1395, %v1442
        %1447 = vrot.lane.b32.xlu0 %v863, 1
        %v1448 = vpop.permute.xlu0 %1447
        %1449 = vrot.lane.b32.xlu0 %v867, 1
        %v1450 = vpop.permute.xlu0 %1449
        %1451 = vrot.lane.b32.xlu0 %v865, 1
        %v1452 = vpop.permute.xlu0 %1451
        %1453 = vrot.lane.b32.xlu0 %v869, 1
        %v1454 = vpop.permute.xlu0 %1453
        %vm1455 = vcmp.lt.s32.totalorder %v880, 1
        %v1456 = vsel %vm1455, %v1448, %v1452
        %v1457 = vsel %vm1455, %v1450, %v1454
        %v1458 = vsel %vm1455, %v1452, %v1448
        %v1459 = vsel %vm1455, %v1454, %v1450
        %v1460 = vsel %vm939, 1, 0
        %v1461 = vcvt.s32.f32 %v1460
        %v1463 = vlaneseq
        %v1464 = vshrl.u32 %v1463, 7
        %v1465 = vsub.s32 0, %v1464
        %v1466 = vrot.slane %v1461, %v1465
        %v1467 = vlaneseq
        %v1468 = vshrl.u32 %v1467, 7
        %v1469 = vsub.s32 1, %v1468
        %v1470 = vrot.slane %v1461, %v1469
        %v1473 = vmul.f32 %v1458, %v1466
        %v1474 = vmul.f32 %v1456, %v1470
        %v1475 = vmul.f32 %v1459, %v1466
        %v1476 = vmul.f32 %v1457, %v1470
        %s1477 = scalar_lea.vmem [#allocation3], 176
        %v1478 = vld [vmem:[%s1477] sm:$0xff]
        %v1479 = vld [vmem:[%s1477 + $0x8] sm:$0xff]
        %1481 = vset.pattern.permute.xlu0 0
        %1482 = vperm.xlu0 %1481, %v1478
        %v1483 = vpop.permute.xlu0 %1482
        %1486 = vset.pattern.permute.xlu0 0
        %1487 = vperm.xlu0 %1486, %v1479
        %v1488 = vpop.permute.xlu0 %1487
        %v1490 = vmul.f32 %v1483, %v1473
        %v1491 = vmul.f32 %v1483, %v1474
        %v1492 = vmul.f32 %v1488, %v1475
        %v1493 = vmul.f32 %v1488, %v1476
        %v1494 = vadd.f32 %v1443, %v1490
        %v1495 = vadd.f32 %v1444, %v1491
        %v1496 = vadd.f32 %v1445, %v1492
        %v1497 = vadd.f32 %v1446, %v1493
        %s1498 = scalar_lea.vmem [#allocation3], 192
        %v1499 = vld [vmem:[%s1498] sm:$0xff]
        %v1500 = vld [vmem:[%s1498 + $0x8] sm:$0xff]
        %1502 = vset.pattern.permute.xlu0 0
        %1503 = vperm.xlu0 %1502, %v1499
        %v1504 = vpop.permute.xlu0 %1503
        %1507 = vset.pattern.permute.xlu0 0
        %1508 = vperm.xlu0 %1507, %v1500
        %v1509 = vpop.permute.xlu0 %1508
        %v1511 = vmul.f32 %v1504, %v863
        %v1512 = vmul.f32 %v1504, %v865
        %v1513 = vmul.f32 %v1509, %v867
        %v1514 = vmul.f32 %v1509, %v869
        %v1515 = vadd.f32 %v1494, %v1511
        %v1516 = vadd.f32 %v1495, %v1512
        %v1517 = vadd.f32 %v1496, %v1513
        %v1518 = vadd.f32 %v1497, %v1514
        %1519 = vrot.lane.b32.xlu0 %v863, 127
        %v1520 = vpop.permute.xlu0 %1519
        %1521 = vrot.lane.b32.xlu0 %v867, 127
        %v1522 = vpop.permute.xlu0 %1521
        %1523 = vrot.lane.b32.xlu0 %v865, 127
        %v1524 = vpop.permute.xlu0 %1523
        %1525 = vrot.lane.b32.xlu0 %v869, 127
        %v1526 = vpop.permute.xlu0 %1525
        %vm1527 = vcmp.lt.s32.totalorder %v880, 127
        %v1528 = vsel %vm1527, %v1520, %v1524
        %v1529 = vsel %vm1527, %v1522, %v1526
        %v1530 = vsel %vm1527, %v1524, %v1520
        %v1531 = vsel %vm1527, %v1526, %v1522
        %v1532 = vsel %vm1043, 1, 0
        %v1533 = vcvt.s32.f32 %v1532
        %v1535 = vlaneseq
        %v1536 = vshrl.u32 %v1535, 7
        %v1537 = vsub.s32 0, %v1536
        %v1538 = vrot.slane %v1533, %v1537
        %v1539 = vlaneseq
        %v1540 = vshrl.u32 %v1539, 7
        %v1541 = vsub.s32 1, %v1540
        %v1542 = vrot.slane %v1533, %v1541
        %v1545 = vmul.f32 %v1528, %v1538
        %v1546 = vmul.f32 %v1530, %v1542
        %v1547 = vmul.f32 %v1529, %v1538
        %v1548 = vmul.f32 %v1531, %v1542
        %s1549 = scalar_lea.vmem [#allocation3], 208
        %v1550 = vld [vmem:[%s1549] sm:$0xff]
        %v1551 = vld [vmem:[%s1549 + $0x8] sm:$0xff]
        %1553 = vset.pattern.permute.xlu0 0
        %1554 = vperm.xlu0 %1553, %v1550
        %v1555 = vpop.permute.xlu0 %1554
        %1558 = vset.pattern.permute.xlu0 0
        %1559 = vperm.xlu0 %1558, %v1551
        %v1560 = vpop.permute.xlu0 %1559
        %v1562 = vmul.f32 %v1555, %v1545
        %v1563 = vmul.f32 %v1555, %v1546
        %v1564 = vmul.f32 %v1560, %v1547
        %v1565 = vmul.f32 %v1560, %v1548
        %v1566 = vadd.f32 %v1515, %v1562
        %v1567 = vadd.f32 %v1516, %v1563
        %v1568 = vadd.f32 %v1517, %v1564
        %v1569 = vadd.f32 %v1518, %v1565
        %1570 = vrot.lane.b32.xlu0 %v863, 126
        %v1571 = vpop.permute.xlu0 %1570
        %1572 = vrot.lane.b32.xlu0 %v867, 126
        %v1573 = vpop.permute.xlu0 %1572
        %1574 = vrot.lane.b32.xlu0 %v865, 126
        %v1575 = vpop.permute.xlu0 %1574
        %1576 = vrot.lane.b32.xlu0 %v869, 126
        %v1577 = vpop.permute.xlu0 %1576
        %vm1578 = vcmp.lt.s32.totalorder %v880, 126
        %v1579 = vsel %vm1578, %v1571, %v1575
        %v1580 = vsel %vm1578, %v1573, %v1577
        %v1581 = vsel %vm1578, %v1575, %v1571
        %v1582 = vsel %vm1578, %v1577, %v1573
        %v1583 = vsel %vm1096, 1, 0
        %v1584 = vcvt.s32.f32 %v1583
        %v1586 = vlaneseq
        %v1587 = vshrl.u32 %v1586, 7
        %v1588 = vsub.s32 0, %v1587
        %v1589 = vrot.slane %v1584, %v1588
        %v1590 = vlaneseq
        %v1591 = vshrl.u32 %v1590, 7
        %v1592 = vsub.s32 1, %v1591
        %v1593 = vrot.slane %v1584, %v1592
        %v1596 = vmul.f32 %v1579, %v1589
        %v1597 = vmul.f32 %v1581, %v1593
        %v1598 = vmul.f32 %v1580, %v1589
        %v1599 = vmul.f32 %v1582, %v1593
        %s1600 = scalar_lea.vmem [#allocation3], 224
        %v1601 = vld [vmem:[%s1600] sm:$0xff]
        %v1602 = vld [vmem:[%s1600 + $0x8] sm:$0xff]
        %1604 = vset.pattern.permute.xlu0 0
        %1605 = vperm.xlu0 %1604, %v1601
        %v1606 = vpop.permute.xlu0 %1605
        %1609 = vset.pattern.permute.xlu0 0
        %1610 = vperm.xlu0 %1609, %v1602
        %v1611 = vpop.permute.xlu0 %1610
        %v1613 = vmul.f32 %v1606, %v1596
        %v1614 = vmul.f32 %v1606, %v1597
        %v1615 = vmul.f32 %v1611, %v1598
        %v1616 = vmul.f32 %v1611, %v1599
        %v1617 = vadd.f32 %v1566, %v1613
        %v1618 = vadd.f32 %v1567, %v1614
        %v1619 = vadd.f32 %v1568, %v1615
        %v1620 = vadd.f32 %v1569, %v1616
        %1621 = vrot.lane.b32.xlu0 %v863, 114
        %v1622 = vpop.permute.xlu0 %1621
        %1623 = vrot.lane.b32.xlu0 %v867, 114
        %v1624 = vpop.permute.xlu0 %1623
        %1625 = vrot.lane.b32.xlu0 %v865, 114
        %v1626 = vpop.permute.xlu0 %1625
        %1627 = vrot.lane.b32.xlu0 %v869, 114
        %v1628 = vpop.permute.xlu0 %1627
        %vm1629 = vcmp.lt.s32.totalorder %v880, 114
        %v1630 = vsel %vm1629, %v1622, %v1626
        %v1631 = vsel %vm1629, %v1624, %v1628
        %v1632 = vsel %vm1629, %v1626, %v1622
        %v1633 = vsel %vm1629, %v1628, %v1624
        %vm1634 = vcmp.lt.s32.totalorder %v790, 15
        %vm1635 = vmand %vm1634, %vm887
        %v1636 = vsel %vm1635, 1, 0
        %v1637 = vcvt.s32.f32 %v1636
        %v1639 = vlaneseq
        %v1640 = vshrl.u32 %v1639, 7
        %v1641 = vsub.s32 0, %v1640
        %v1642 = vrot.slane %v1637, %v1641
        %v1643 = vlaneseq
        %v1644 = vshrl.u32 %v1643, 7
        %v1645 = vsub.s32 1, %v1644
        %v1646 = vrot.slane %v1637, %v1645
        %v1649 = vmul.f32 %v1630, %v1642
        %v1650 = vmul.f32 %v1632, %v1646
        %v1651 = vmul.f32 %v1631, %v1642
        %v1652 = vmul.f32 %v1633, %v1646
        %s1653 = scalar_lea.vmem [#allocation3], 240
        %v1654 = vld [vmem:[%s1653] sm:$0xff]
        %v1655 = vld [vmem:[%s1653 + $0x8] sm:$0xff]
        %1657 = vset.pattern.permute.xlu0 0
        %1658 = vperm.xlu0 %1657, %v1654
        %v1659 = vpop.permute.xlu0 %1658
        %1662 = vset.pattern.permute.xlu0 0
        %1663 = vperm.xlu0 %1662, %v1655
        %v1664 = vpop.permute.xlu0 %1663
        %v1666 = vmul.f32 %v1659, %v1649
        %v1667 = vmul.f32 %v1659, %v1650
        %v1668 = vmul.f32 %v1664, %v1651
        %v1669 = vmul.f32 %v1664, %v1652
        %v1670 = vadd.f32 %v1617, %v1666
        %v1671 = vadd.f32 %v1618, %v1667
        %v1672 = vadd.f32 %v1619, %v1668
        %v1673 = vadd.f32 %v1620, %v1669
        %1674 = vrot.lane.b32.xlu0 %v863, 113
        %v1675 = vpop.permute.xlu0 %1674
        %1676 = vrot.lane.b32.xlu0 %v867, 113
        %v1677 = vpop.permute.xlu0 %1676
        %1678 = vrot.lane.b32.xlu0 %v865, 113
        %v1679 = vpop.permute.xlu0 %1678
        %1680 = vrot.lane.b32.xlu0 %v869, 113
        %v1681 = vpop.permute.xlu0 %1680
        %vm1682 = vcmp.lt.s32.totalorder %v880, 113
        %v1683 = vsel %vm1682, %v1675, %v1679
        %v1684 = vsel %vm1682, %v1677, %v1681
        %v1685 = vsel %vm1682, %v1679, %v1675
        %v1686 = vsel %vm1682, %v1681, %v1677
        %vm1687 = vmand %vm1634, %vm939
        %v1688 = vsel %vm1687, 1, 0
        %v1689 = vcvt.s32.f32 %v1688
        %v1691 = vlaneseq
        %v1692 = vshrl.u32 %v1691, 7
        %v1693 = vsub.s32 0, %v1692
        %v1694 = vrot.slane %v1689, %v1693
        %v1695 = vlaneseq
        %v1696 = vshrl.u32 %v1695, 7
        %v1697 = vsub.s32 1, %v1696
        %v1698 = vrot.slane %v1689, %v1697
        %v1701 = vmul.f32 %v1683, %v1694
        %v1702 = vmul.f32 %v1685, %v1698
        %v1703 = vmul.f32 %v1684, %v1694
        %v1704 = vmul.f32 %v1686, %v1698
        %s1705 = scalar_lea.vmem [#allocation3], 256
        %v1706 = vld [vmem:[%s1705] sm:$0xff]
        %v1707 = vld [vmem:[%s1705 + $0x8] sm:$0xff]
        %1709 = vset.pattern.permute.xlu0 0
        %1710 = vperm.xlu0 %1709, %v1706
        %v1711 = vpop.permute.xlu0 %1710
        %1714 = vset.pattern.permute.xlu0 0
        %1715 = vperm.xlu0 %1714, %v1707
        %v1716 = vpop.permute.xlu0 %1715
        %v1718 = vmul.f32 %v1711, %v1701
        %v1719 = vmul.f32 %v1711, %v1702
        %v1720 = vmul.f32 %v1716, %v1703
        %v1721 = vmul.f32 %v1716, %v1704
        %v1722 = vadd.f32 %v1670, %v1718
        %v1723 = vadd.f32 %v1671, %v1719
        %v1724 = vadd.f32 %v1672, %v1720
        %v1725 = vadd.f32 %v1673, %v1721
        %1726 = vrot.lane.b32.xlu0 %v863, 112
        %v1727 = vpop.permute.xlu0 %1726
        %1728 = vrot.lane.b32.xlu0 %v867, 112
        %v1729 = vpop.permute.xlu0 %1728
        %1730 = vrot.lane.b32.xlu0 %v865, 112
        %v1731 = vpop.permute.xlu0 %1730
        %1732 = vrot.lane.b32.xlu0 %v869, 112
        %v1733 = vpop.permute.xlu0 %1732
        %vm1734 = vcmp.lt.s32.totalorder %v880, 112
        %v1735 = vsel %vm1734, %v1727, %v1731
        %v1736 = vsel %vm1734, %v1729, %v1733
        %v1737 = vsel %vm1734, %v1731, %v1727
        %v1738 = vsel %vm1734, %v1733, %v1729
        %v1739 = vsel %vm1634, 1, 0
        %v1740 = vcvt.s32.f32 %v1739
        %v1742 = vlaneseq
        %v1743 = vshrl.u32 %v1742, 7
        %v1744 = vsub.s32 0, %v1743
        %v1745 = vrot.slane %v1740, %v1744
        %v1746 = vlaneseq
        %v1747 = vshrl.u32 %v1746, 7
        %v1748 = vsub.s32 1, %v1747
        %v1749 = vrot.slane %v1740, %v1748
        %v1752 = vmul.f32 %v1735, %v1745
        %v1753 = vmul.f32 %v1737, %v1749
        %v1754 = vmul.f32 %v1736, %v1745
        %v1755 = vmul.f32 %v1738, %v1749
        %s1756 = scalar_lea.vmem [#allocation3], 272
        %v1757 = vld [vmem:[%s1756] sm:$0xff]
        %v1758 = vld [vmem:[%s1756 + $0x8] sm:$0xff]
        %1760 = vset.pattern.permute.xlu0 0
        %1761 = vperm.xlu0 %1760, %v1757
        %v1762 = vpop.permute.xlu0 %1761
        %1765 = vset.pattern.permute.xlu0 0
        %1766 = vperm.xlu0 %1765, %v1758
        %v1767 = vpop.permute.xlu0 %1766
        %v1769 = vmul.f32 %v1762, %v1752
        %v1770 = vmul.f32 %v1762, %v1753
        %v1771 = vmul.f32 %v1767, %v1754
        %v1772 = vmul.f32 %v1767, %v1755
        %v1773 = vadd.f32 %v1722, %v1769
        %v1774 = vadd.f32 %v1723, %v1770
        %v1775 = vadd.f32 %v1724, %v1771
        %v1776 = vadd.f32 %v1725, %v1772
        %1777 = vrot.lane.b32.xlu0 %v863, 111
        %v1778 = vpop.permute.xlu0 %1777
        %1779 = vrot.lane.b32.xlu0 %v867, 111
        %v1780 = vpop.permute.xlu0 %1779
        %1781 = vrot.lane.b32.xlu0 %v865, 111
        %v1782 = vpop.permute.xlu0 %1781
        %1783 = vrot.lane.b32.xlu0 %v869, 111
        %v1784 = vpop.permute.xlu0 %1783
        %vm1785 = vcmp.lt.s32.totalorder %v880, 111
        %v1786 = vsel %vm1785, %v1778, %v1782
        %v1787 = vsel %vm1785, %v1780, %v1784
        %v1788 = vsel %vm1785, %v1782, %v1778
        %v1789 = vsel %vm1785, %v1784, %v1780
        %vm1790 = vmand %vm1634, %vm1043
        %v1791 = vsel %vm1790, 1, 0
        %v1792 = vcvt.s32.f32 %v1791
        %v1794 = vlaneseq
        %v1795 = vshrl.u32 %v1794, 7
        %v1796 = vsub.s32 0, %v1795
        %v1797 = vrot.slane %v1792, %v1796
        %v1798 = vlaneseq
        %v1799 = vshrl.u32 %v1798, 7
        %v1800 = vsub.s32 1, %v1799
        %v1801 = vrot.slane %v1792, %v1800
        %v1804 = vmul.f32 %v1786, %v1797
        %v1805 = vmul.f32 %v1788, %v1801
        %v1806 = vmul.f32 %v1787, %v1797
        %v1807 = vmul.f32 %v1789, %v1801
        %s1808 = scalar_lea.vmem [#allocation3], 288
        %v1809 = vld [vmem:[%s1808] sm:$0xff]
        %v1810 = vld [vmem:[%s1808 + $0x8] sm:$0xff]
        %1812 = vset.pattern.permute.xlu0 0
        %1813 = vperm.xlu0 %1812, %v1809
        %v1814 = vpop.permute.xlu0 %1813
        %1817 = vset.pattern.permute.xlu0 0
        %1818 = vperm.xlu0 %1817, %v1810
        %v1819 = vpop.permute.xlu0 %1818
        %v1821 = vmul.f32 %v1814, %v1804
        %v1822 = vmul.f32 %v1814, %v1805
        %v1823 = vmul.f32 %v1819, %v1806
        %v1824 = vmul.f32 %v1819, %v1807
        %v1825 = vadd.f32 %v1773, %v1821
        %v1826 = vadd.f32 %v1774, %v1822
        %v1827 = vadd.f32 %v1775, %v1823
        %v1828 = vadd.f32 %v1776, %v1824
        %1829 = vrot.lane.b32.xlu0 %v863, 110
        %v1830 = vpop.permute.xlu0 %1829
        %1831 = vrot.lane.b32.xlu0 %v867, 110
        %v1832 = vpop.permute.xlu0 %1831
        %1833 = vrot.lane.b32.xlu0 %v865, 110
        %v1834 = vpop.permute.xlu0 %1833
        %1835 = vrot.lane.b32.xlu0 %v869, 110
        %v1836 = vpop.permute.xlu0 %1835
        %vm1837 = vcmp.lt.s32.totalorder %v880, 110
        %v1838 = vsel %vm1837, %v1830, %v1834
        %v1839 = vsel %vm1837, %v1832, %v1836
        %v1840 = vsel %vm1837, %v1834, %v1830
        %v1841 = vsel %vm1837, %v1836, %v1832
        %vm1842 = vmand %vm1634, %vm1096
        %v1843 = vsel %vm1842, 1, 0
        %v1844 = vcvt.s32.f32 %v1843
        %v1846 = vlaneseq
        %v1847 = vshrl.u32 %v1846, 7
        %v1848 = vsub.s32 0, %v1847
        %v1849 = vrot.slane %v1844, %v1848
        %v1850 = vlaneseq
        %v1851 = vshrl.u32 %v1850, 7
        %v1852 = vsub.s32 1, %v1851
        %v1853 = vrot.slane %v1844, %v1852
        %v1856 = vmul.f32 %v1838, %v1849
        %v1857 = vmul.f32 %v1840, %v1853
        %v1858 = vmul.f32 %v1839, %v1849
        %v1859 = vmul.f32 %v1841, %v1853
        %s1860 = scalar_lea.vmem [#allocation3], 304
        %v1861 = vld [vmem:[%s1860] sm:$0xff]
        %v1862 = vld [vmem:[%s1860 + $0x8] sm:$0xff]
        %1864 = vset.pattern.permute.xlu0 0
        %1865 = vperm.xlu0 %1864, %v1861
        %v1866 = vpop.permute.xlu0 %1865
        %1869 = vset.pattern.permute.xlu0 0
        %1870 = vperm.xlu0 %1869, %v1862
        %v1871 = vpop.permute.xlu0 %1870
        %v1873 = vmul.f32 %v1866, %v1856
        %v1874 = vmul.f32 %v1866, %v1857
        %v1875 = vmul.f32 %v1871, %v1858
        %v1876 = vmul.f32 %v1871, %v1859
        %v1877 = vadd.f32 %v1825, %v1873
        %v1878 = vadd.f32 %v1826, %v1874
        %v1879 = vadd.f32 %v1827, %v1875
        %v1880 = vadd.f32 %v1828, %v1876
        %1881 = vrot.lane.b32.xlu0 %v863, 98
        %v1882 = vpop.permute.xlu0 %1881
        %1883 = vrot.lane.b32.xlu0 %v867, 98
        %v1884 = vpop.permute.xlu0 %1883
        %1885 = vrot.lane.b32.xlu0 %v865, 98
        %v1886 = vpop.permute.xlu0 %1885
        %1887 = vrot.lane.b32.xlu0 %v869, 98
        %v1888 = vpop.permute.xlu0 %1887
        %vm1889 = vcmp.lt.s32.totalorder %v880, 98
        %v1890 = vsel %vm1889, %v1882, %v1886
        %v1891 = vsel %vm1889, %v1884, %v1888
        %v1892 = vsel %vm1889, %v1886, %v1882
        %v1893 = vsel %vm1889, %v1888, %v1884
        %vm1894 = vcmp.lt.s32.totalorder %v790, 14
        %vm1895 = vmand %vm1894, %vm887
        %v1896 = vsel %vm1895, 1, 0
        %v1897 = vcvt.s32.f32 %v1896
        %v1899 = vlaneseq
        %v1900 = vshrl.u32 %v1899, 7
        %v1901 = vsub.s32 0, %v1900
        %v1902 = vrot.slane %v1897, %v1901
        %v1903 = vlaneseq
        %v1904 = vshrl.u32 %v1903, 7
        %v1905 = vsub.s32 1, %v1904
        %v1906 = vrot.slane %v1897, %v1905
        %v1909 = vmul.f32 %v1890, %v1902
        %v1910 = vmul.f32 %v1892, %v1906
        %v1911 = vmul.f32 %v1891, %v1902
        %v1912 = vmul.f32 %v1893, %v1906
        %s1913 = scalar_lea.vmem [#allocation3], 320
        %v1914 = vld [vmem:[%s1913] sm:$0xff]
        %v1915 = vld [vmem:[%s1913 + $0x8] sm:$0xff]
        %1917 = vset.pattern.permute.xlu0 0
        %1918 = vperm.xlu0 %1917, %v1914
        %v1919 = vpop.permute.xlu0 %1918
        %1922 = vset.pattern.permute.xlu0 0
        %1923 = vperm.xlu0 %1922, %v1915
        %v1924 = vpop.permute.xlu0 %1923
        %v1926 = vmul.f32 %v1919, %v1909
        %v1927 = vmul.f32 %v1919, %v1910
        %v1928 = vmul.f32 %v1924, %v1911
        %v1929 = vmul.f32 %v1924, %v1912
        %v1930 = vadd.f32 %v1877, %v1926
        %v1931 = vadd.f32 %v1878, %v1927
        %v1932 = vadd.f32 %v1879, %v1928
        %v1933 = vadd.f32 %v1880, %v1929
        %1934 = vrot.lane.b32.xlu0 %v863, 97
        %v1935 = vpop.permute.xlu0 %1934
        %1936 = vrot.lane.b32.xlu0 %v867, 97
        %v1937 = vpop.permute.xlu0 %1936
        %1938 = vrot.lane.b32.xlu0 %v865, 97
        %v1939 = vpop.permute.xlu0 %1938
        %1940 = vrot.lane.b32.xlu0 %v869, 97
        %v1941 = vpop.permute.xlu0 %1940
        %vm1942 = vcmp.lt.s32.totalorder %v880, 97
        %v1943 = vsel %vm1942, %v1935, %v1939
        %v1944 = vsel %vm1942, %v1937, %v1941
        %v1945 = vsel %vm1942, %v1939, %v1935
        %v1946 = vsel %vm1942, %v1941, %v1937
        %vm1947 = vmand %vm1894, %vm939
        %v1948 = vsel %vm1947, 1, 0
        %v1949 = vcvt.s32.f32 %v1948
        %v1951 = vlaneseq
        %v1952 = vshrl.u32 %v1951, 7
        %v1953 = vsub.s32 0, %v1952
        %v1954 = vrot.slane %v1949, %v1953
        %v1955 = vlaneseq
        %v1956 = vshrl.u32 %v1955, 7
        %v1957 = vsub.s32 1, %v1956
        %v1958 = vrot.slane %v1949, %v1957
        %v1961 = vmul.f32 %v1943, %v1954
        %v1962 = vmul.f32 %v1945, %v1958
        %v1963 = vmul.f32 %v1944, %v1954
        %v1964 = vmul.f32 %v1946, %v1958
        %s1965 = scalar_lea.vmem [#allocation3], 336
        %v1966 = vld [vmem:[%s1965] sm:$0xff]
        %v1967 = vld [vmem:[%s1965 + $0x8] sm:$0xff]
        %1969 = vset.pattern.permute.xlu0 0
        %1970 = vperm.xlu0 %1969, %v1966
        %v1971 = vpop.permute.xlu0 %1970
        %1974 = vset.pattern.permute.xlu0 0
        %1975 = vperm.xlu0 %1974, %v1967
        %v1976 = vpop.permute.xlu0 %1975
        %v1978 = vmul.f32 %v1971, %v1961
        %v1979 = vmul.f32 %v1971, %v1962
        %v1980 = vmul.f32 %v1976, %v1963
        %v1981 = vmul.f32 %v1976, %v1964
        %v1982 = vadd.f32 %v1930, %v1978
        %v1983 = vadd.f32 %v1931, %v1979
        %v1984 = vadd.f32 %v1932, %v1980
        %v1985 = vadd.f32 %v1933, %v1981
        %1986 = vrot.lane.b32.xlu0 %v863, 96
        %v1987 = vpop.permute.xlu0 %1986
        %1988 = vrot.lane.b32.xlu0 %v867, 96
        %v1989 = vpop.permute.xlu0 %1988
        %1990 = vrot.lane.b32.xlu0 %v865, 96
        %v1991 = vpop.permute.xlu0 %1990
        %1992 = vrot.lane.b32.xlu0 %v869, 96
        %v1993 = vpop.permute.xlu0 %1992
        %vm1994 = vcmp.lt.s32.totalorder %v880, 96
        %v1995 = vsel %vm1994, %v1987, %v1991
        %v1996 = vsel %vm1994, %v1989, %v1993
        %v1997 = vsel %vm1994, %v1991, %v1987
        %v1998 = vsel %vm1994, %v1993, %v1989
        %v1999 = vsel %vm1894, 1, 0
        %v2000 = vcvt.s32.f32 %v1999
        %v2002 = vlaneseq
        %v2003 = vshrl.u32 %v2002, 7
        %v2004 = vsub.s32 0, %v2003
        %v2005 = vrot.slane %v2000, %v2004
        %v2006 = vlaneseq
        %v2007 = vshrl.u32 %v2006, 7
        %v2008 = vsub.s32 1, %v2007
        %v2009 = vrot.slane %v2000, %v2008
        %v2012 = vmul.f32 %v1995, %v2005
        %v2013 = vmul.f32 %v1997, %v2009
        %v2014 = vmul.f32 %v1996, %v2005
        %v2015 = vmul.f32 %v1998, %v2009
        %s2016 = scalar_lea.vmem [#allocation3], 352
        %v2017 = vld [vmem:[%s2016] sm:$0xff]
        %v2018 = vld [vmem:[%s2016 + $0x8] sm:$0xff]
        %2020 = vset.pattern.permute.xlu0 0
        %2021 = vperm.xlu0 %2020, %v2017
        %v2022 = vpop.permute.xlu0 %2021
        %2025 = vset.pattern.permute.xlu0 0
        %2026 = vperm.xlu0 %2025, %v2018
        %v2027 = vpop.permute.xlu0 %2026
        %v2029 = vmul.f32 %v2022, %v2012
        %v2030 = vmul.f32 %v2022, %v2013
        %v2031 = vmul.f32 %v2027, %v2014
        %v2032 = vmul.f32 %v2027, %v2015
        %v2033 = vadd.f32 %v1982, %v2029
        %v2034 = vadd.f32 %v1983, %v2030
        %v2035 = vadd.f32 %v1984, %v2031
        %v2036 = vadd.f32 %v1985, %v2032
        %2037 = vrot.lane.b32.xlu0 %v863, 95
        %v2038 = vpop.permute.xlu0 %2037
        %2039 = vrot.lane.b32.xlu0 %v867, 95
        %v2040 = vpop.permute.xlu0 %2039
        %2041 = vrot.lane.b32.xlu0 %v865, 95
        %v2042 = vpop.permute.xlu0 %2041
        %2043 = vrot.lane.b32.xlu0 %v869, 95
        %v2044 = vpop.permute.xlu0 %2043
        %vm2045 = vcmp.lt.s32.totalorder %v880, 95
        %v2046 = vsel %vm2045, %v2038, %v2042
        %v2047 = vsel %vm2045, %v2040, %v2044
        %v2048 = vsel %vm2045, %v2042, %v2038
        %v2049 = vsel %vm2045, %v2044, %v2040
        %vm2050 = vmand %vm1894, %vm1043
        %v2051 = vsel %vm2050, 1, 0
        %v2052 = vcvt.s32.f32 %v2051
        %v2054 = vlaneseq
        %v2055 = vshrl.u32 %v2054, 7
        %v2056 = vsub.s32 0, %v2055
        %v2057 = vrot.slane %v2052, %v2056
        %v2058 = vlaneseq
        %v2059 = vshrl.u32 %v2058, 7
        %v2060 = vsub.s32 1, %v2059
        %v2061 = vrot.slane %v2052, %v2060
        %v2064 = vmul.f32 %v2046, %v2057
        %v2065 = vmul.f32 %v2048, %v2061
        %v2066 = vmul.f32 %v2047, %v2057
        %v2067 = vmul.f32 %v2049, %v2061
        %s2068 = scalar_lea.vmem [#allocation3], 368
        %v2069 = vld [vmem:[%s2068] sm:$0xff]
        %v2070 = vld [vmem:[%s2068 + $0x8] sm:$0xff]
        %2072 = vset.pattern.permute.xlu0 0
        %2073 = vperm.xlu0 %2072, %v2069
        %v2074 = vpop.permute.xlu0 %2073
        %2077 = vset.pattern.permute.xlu0 0
        %2078 = vperm.xlu0 %2077, %v2070
        %v2079 = vpop.permute.xlu0 %2078
        %v2081 = vmul.f32 %v2074, %v2064
        %v2082 = vmul.f32 %v2074, %v2065
        %v2083 = vmul.f32 %v2079, %v2066
        %v2084 = vmul.f32 %v2079, %v2067
        %v2085 = vadd.f32 %v2033, %v2081
        %v2086 = vadd.f32 %v2034, %v2082
        %v2087 = vadd.f32 %v2035, %v2083
        %v2088 = vadd.f32 %v2036, %v2084
        %2089 = vrot.lane.b32.xlu0 %v863, 94
        %v2090 = vpop.permute.xlu0 %2089
        %2091 = vrot.lane.b32.xlu0 %v867, 94
        %v2092 = vpop.permute.xlu0 %2091
        %2093 = vrot.lane.b32.xlu0 %v865, 94
        %v2094 = vpop.permute.xlu0 %2093
        %2095 = vrot.lane.b32.xlu0 %v869, 94
        %v2096 = vpop.permute.xlu0 %2095
        %vm2097 = vcmp.lt.s32.totalorder %v880, 94
        %v2098 = vsel %vm2097, %v2090, %v2094
        %v2099 = vsel %vm2097, %v2092, %v2096
        %v2100 = vsel %vm2097, %v2094, %v2090
        %v2101 = vsel %vm2097, %v2096, %v2092
        %vm2102 = vmand %vm1894, %vm1096
        %v2103 = vsel %vm2102, 1, 0
        %v2104 = vcvt.s32.f32 %v2103
        %v2106 = vlaneseq
        %v2107 = vshrl.u32 %v2106, 7
        %v2108 = vsub.s32 0, %v2107
        %v2109 = vrot.slane %v2104, %v2108
        %v2110 = vlaneseq
        %v2111 = vshrl.u32 %v2110, 7
        %v2112 = vsub.s32 1, %v2111
        %v2113 = vrot.slane %v2104, %v2112
        %v2116 = vmul.f32 %v2098, %v2109
        %v2117 = vmul.f32 %v2100, %v2113
        %v2118 = vmul.f32 %v2099, %v2109
        %v2119 = vmul.f32 %v2101, %v2113
        %s2120 = scalar_lea.vmem [#allocation3], 384
        %v2121 = vld [vmem:[%s2120] sm:$0xff]
        %v2122 = vld [vmem:[%s2120 + $0x8] sm:$0xff]
        %2124 = vset.pattern.permute.xlu0 0
        %2125 = vperm.xlu0 %2124, %v2121
        %v2126 = vpop.permute.xlu0 %2125
        %2129 = vset.pattern.permute.xlu0 0
        %2130 = vperm.xlu0 %2129, %v2122
        %v2131 = vpop.permute.xlu0 %2130
        %v2133 = vmul.f32 %v2126, %v2116
        %v2134 = vmul.f32 %v2126, %v2117
        %v2135 = vmul.f32 %v2131, %v2118
        %v2136 = vmul.f32 %v2131, %v2119
        %v2137 = vadd.f32 %v2085, %v2133
        %v2138 = vadd.f32 %v2086, %v2134
        %v2139 = vadd.f32 %v2087, %v2135
        %v2140 = vadd.f32 %v2088, %v2136
        %v2141 = vld [vmem:[%s5] sm:$0xff]
        %v2142 = vld [vmem:[%s5 + $0x8] sm:$0xff]
        %2144 = vset.pattern.permute.xlu0 0
        %2145 = vperm.xlu0 %2144, %v2141
        %v2146 = vpop.permute.xlu0 %2145
        %2149 = vset.pattern.permute.xlu0 0
        %2150 = vperm.xlu0 %2149, %v2142
        %v2151 = vpop.permute.xlu0 %2150
        %v2153 = vadd.f32 %v2137, %v2146
        %v2154 = vadd.f32 %v2138, %v2146
        %v2155 = vadd.f32 %v2139, %v2151
        %v2156 = vadd.f32 %v2140, %v2151
        %v2157 = vld [vmem:[%s6] sm:$0x7]
        %v2158 = vpack.c.bf16 %v2157, %v2157
        %v2159 = vpack.c.bf16 %v2155, %v2153
        %v2160 = vpack.c.bf16 %v2156, %v2154
        %v2161 = vld [vmem:[%s7] sm:$0x7]
        %2163 = vset.pattern.permute.xlu0 0
        %2164 = vperm.xlu0 %2163, %v2161
        %v2165 = vpop.permute.xlu0 %2164
        %vm2167 = vcmask 130048
        %v2169 = vsel %vm2167, %v2158, 0
        %2171 = vmatprep.subr.bf16.mxu0 0
        %2172 = vmatpush1.bf16.msra.mxu0 0
        %2173 = vmatprep.subr.bf16.mxu0 0
        %2174 = vmatpush1.bf16.msra.mxu0 0
        %2175 = vmatprep.subr.bf16.mxu0 0
        %2176 = vmatpush1.bf16.msra.mxu0 0
        %2177 = vmatprep.subr.bf16.mxu0 0
        %2178 = vmatpush1.bf16.msra.mxu0 0
        %2179 = vmatprep.subr.bf16.mxu0 0
        %2180 = vmatpush1.bf16.msra.mxu0 0
        %2181 = vmatprep.subr.bf16.mxu0 0
        %2182 = vmatpush1.bf16.msra.mxu0 0
        %2183 = vmatprep.subr.bf16.mxu0 0
        %2184 = vmatpush1.bf16.msra.mxu0 0
        %2185 = vmatprep.subr.bf16.mxu0 %v2160
        %2186 = vmatpush1.bf16.msra.mxu0 %v2159
        %2187 = vmatprep.subr.bf16.mxu0 0
        %2188 = vmatpush2.bf16.msra.mxu0 0
        %2189 = vmatprep.subr.bf16.mxu0 0
        %2190 = vmatpush2.bf16.msra.mxu0 0
        %2191 = vmatprep.subr.bf16.mxu0 0
        %2192 = vmatpush2.bf16.msra.mxu0 0
        %2193 = vmatprep.subr.bf16.mxu0 0
        %2194 = vmatpush2.bf16.msra.mxu0 0
        %2195 = vmatprep.subr.bf16.mxu0 0
        %2196 = vmatpush2.bf16.msra.mxu0 0
        %2197 = vmatprep.subr.bf16.mxu0 0
        %2198 = vmatpush2.bf16.msra.mxu0 0
        %2199 = vmatprep.subr.bf16.mxu0 0
        %2200 = vmatpush2.bf16.msra.mxu0 0
        %2201 = vmatprep.subr.bf16.mxu0 0
        %2202 = vmatpush2.bf16.msra.mxu0 0
        %2203 = vmatprep.mubr.bf16.mxu0 0
        %2204 = vmatmul.mubr.bf16.gmra.mxu0 %v2169
        %v2205 = vpop.f32.mrf.mxu0
        %v2206 = vadd.f32 %v2165, %v2205
        %v2207 = vpop.f32.mrf.mxu0
        %v2208 = vadd.f32 %v2165, %v2207
        %v2209 = vpop.f32.mrf.mxu0
        %v2210 = vpop.f32.mrf.mxu0
        %2211 = vdwg.mxu0
        %v2214 = vcombine.low %v2206, %v2208
        %v2216 = vmul.f32 %v793, %v2214
        %v2217 = vadd.f32 %v2216, %v793
        %v2219 = vcombine.high %v2217, %v2217
        %2221 = vrot.lane.b32.xlu0 %v2217, 17
        %v2222 = vpop.permute.xlu0 %2221
        %2223 = vrot.lane.b32.xlu0 %v2219, 17
        %v2224 = vpop.permute.xlu0 %2223
        %v2225 = vsel %vm1197, %v2222, %v2224
        %v2226 = vsel %vm1197, %v2224, %v2222
        %v2227 = vmul.f32 %v2226, %v1209
        %v2228 = vmul.f32 %v2225, %v1213
        %v2229 = vld [vmem:[#allocation5] sm:$0xff]
        %v2230 = vld [vmem:[#allocation5 + $0x8] sm:$0xff]
        %v2231 = vpack.c.bf16 %v2230, %v2229
        %v2232 = vpack.c.bf16 %v2227, %v2227
        %v2233 = vpack.c.bf16 %v2228, %v2228
        %2234 = vrot.lane.b32.xlu0 %v2217, 16
        %v2235 = vpop.permute.xlu0 %2234
        %2236 = vrot.lane.b32.xlu0 %v2219, 16
        %v2237 = vpop.permute.xlu0 %2236
        %v2238 = vsel %vm1249, %v2235, %v2237
        %v2239 = vsel %vm1249, %v2237, %v2235
        %v2240 = vmul.f32 %v2239, %v1260
        %v2241 = vmul.f32 %v2238, %v1264
        %s2242 = scalar_lea.vmem [#allocation5], 16
        %v2243 = vld [vmem:[%s2242] sm:$0xff]
        %v2244 = vld [vmem:[%s2242 + $0x8] sm:$0xff]
        %v2245 = vpack.c.bf16 %v2244, %v2243
        %v2246 = vpack.c.bf16 %v2240, %v2240
        %v2247 = vpack.c.bf16 %v2241, %v2241
        %v2249 = vsel %vm814, %v2245, 0
        %v2252 = vand.u32 %v2246, %v821
        %v2255 = vand.u32 %v2247, %v821
        %2257 = vmatprep.subr.bf16.mxu0 0
        %2258 = vmatpush1.bf16.msra.mxu0 0
        %2259 = vmatprep.subr.bf16.mxu0 0
        %2260 = vmatpush1.bf16.msra.mxu0 0
        %2261 = vmatprep.subr.bf16.mxu0 0
        %2262 = vmatpush1.bf16.msra.mxu0 0
        %2263 = vmatprep.subr.bf16.mxu0 0
        %2264 = vmatpush1.bf16.msra.mxu0 0
        %2265 = vmatprep.subr.bf16.mxu0 0
        %2266 = vmatpush1.bf16.msra.mxu0 0
        %2267 = vmatprep.subr.bf16.mxu0 0
        %2268 = vmatpush1.bf16.msra.mxu0 0
        %2269 = vmatprep.subr.bf16.mxu0 0
        %2270 = vmatpush1.bf16.msra.mxu0 0
        %2271 = vmatprep.subr.bf16.mxu0 %v2255
        %2272 = vmatpush1.bf16.msra.mxu0 %v2252
        %2273 = vmatprep.subr.bf16.mxu0 0
        %2274 = vmatpush2.bf16.msra.mxu0 0
        %2275 = vmatprep.subr.bf16.mxu0 0
        %2276 = vmatpush2.bf16.msra.mxu0 0
        %2277 = vmatprep.subr.bf16.mxu0 0
        %2278 = vmatpush2.bf16.msra.mxu0 0
        %2279 = vmatprep.subr.bf16.mxu0 0
        %2280 = vmatpush2.bf16.msra.mxu0 0
        %2281 = vmatprep.subr.bf16.mxu0 0
        %2282 = vmatpush2.bf16.msra.mxu0 0
        %2283 = vmatprep.subr.bf16.mxu0 0
        %2284 = vmatpush2.bf16.msra.mxu0 0
        %2285 = vmatprep.subr.bf16.mxu0 0
        %2286 = vmatpush2.bf16.msra.mxu0 0
        %2287 = vmatprep.subr.bf16.mxu0 0
        %2288 = vmatpush2.bf16.msra.mxu0 0
        %2289 = vmatprep.mubr.bf16.mxu0 0
        %2290 = vmatmul.mubr.bf16.gmra.mxu0 %v2249
        %v2291 = vpop.f32.mrf.mxu0
        %v2292 = vadd.f32 0.0, %v2291
        %v2293 = vpop.f32.mrf.mxu0
        %v2294 = vadd.f32 0.0, %v2293
        %v2295 = vpop.f32.mrf.mxu0
        %v2296 = vadd.f32 0.0, %v2295
        %v2297 = vpop.f32.mrf.mxu0
        %v2298 = vadd.f32 0.0, %v2297
        %2299 = vdwg.mxu0
        %v2301 = vsel %vm814, %v2231, 0
        %v2304 = vand.u32 %v2232, %v821
        %v2307 = vand.u32 %v2233, %v821
        %2309 = vmatprep.subr.bf16.mxu0 0
        %2310 = vmatpush1.bf16.msra.mxu0 0
        %2311 = vmatprep.subr.bf16.mxu0 0
        %2312 = vmatpush1.bf16.msra.mxu0 0
        %2313 = vmatprep.subr.bf16.mxu0 0
        %2314 = vmatpush1.bf16.msra.mxu0 0
        %2315 = vmatprep.subr.bf16.mxu0 0
        %2316 = vmatpush1.bf16.msra.mxu0 0
        %2317 = vmatprep.subr.bf16.mxu0 0
        %2318 = vmatpush1.bf16.msra.mxu0 0
        %2319 = vmatprep.subr.bf16.mxu0 0
        %2320 = vmatpush1.bf16.msra.mxu0 0
        %2321 = vmatprep.subr.bf16.mxu0 0
        %2322 = vmatpush1.bf16.msra.mxu0 0
        %2323 = vmatprep.subr.bf16.mxu0 %v2307
        %2324 = vmatpush1.bf16.msra.mxu0 %v2304
        %2325 = vmatprep.subr.bf16.mxu0 0
        %2326 = vmatpush2.bf16.msra.mxu0 0
        %2327 = vmatprep.subr.bf16.mxu0 0
        %2328 = vmatpush2.bf16.msra.mxu0 0
        %2329 = vmatprep.subr.bf16.mxu0 0
        %2330 = vmatpush2.bf16.msra.mxu0 0
        %2331 = vmatprep.subr.bf16.mxu0 0
        %2332 = vmatpush2.bf16.msra.mxu0 0
        %2333 = vmatprep.subr.bf16.mxu0 0
        %2334 = vmatpush2.bf16.msra.mxu0 0
        %2335 = vmatprep.subr.bf16.mxu0 0
        %2336 = vmatpush2.bf16.msra.mxu0 0
        %2337 = vmatprep.subr.bf16.mxu0 0
        %2338 = vmatpush2.bf16.msra.mxu0 0
        %2339 = vmatprep.subr.bf16.mxu0 0
        %2340 = vmatpush2.bf16.msra.mxu0 0
        %2341 = vmatprep.mubr.bf16.mxu0 0
        %2342 = vmatmul.mubr.bf16.gmra.mxu0 %v2301
        %v2343 = vpop.f32.mrf.mxu0
        %v2344 = vadd.f32 %v2292, %v2343
        %v2345 = vpop.f32.mrf.mxu0
        %v2346 = vadd.f32 %v2294, %v2345
        %v2347 = vpop.f32.mrf.mxu0
        %v2348 = vadd.f32 %v2296, %v2347
        %v2349 = vpop.f32.mrf.mxu0
        %v2350 = vadd.f32 %v2298, %v2349
        %2351 = vdwg.mxu0
        %2352 = vrot.lane.b32.xlu0 %v2217, 15
        %v2353 = vpop.permute.xlu0 %2352
        %2354 = vrot.lane.b32.xlu0 %v2219, 15
        %v2355 = vpop.permute.xlu0 %2354
        %v2356 = vsel %vm1300, %v2353, %v2355
        %v2357 = vsel %vm1300, %v2355, %v2353
        %v2358 = vmul.f32 %v2357, %v1312
        %v2359 = vmul.f32 %v2356, %v1316
        %s2360 = scalar_lea.vmem [#allocation5], 32
        %v2361 = vld [vmem:[%s2360] sm:$0xff]
        %v2362 = vld [vmem:[%s2360 + $0x8] sm:$0xff]
        %v2363 = vpack.c.bf16 %v2362, %v2361
        %v2364 = vpack.c.bf16 %v2358, %v2358
        %v2365 = vpack.c.bf16 %v2359, %v2359
        %v2367 = vsel %vm814, %v2363, 0
        %v2370 = vand.u32 %v2364, %v821
        %v2373 = vand.u32 %v2365, %v821
        %2375 = vmatprep.subr.bf16.mxu0 0
        %2376 = vmatpush1.bf16.msra.mxu0 0
        %2377 = vmatprep.subr.bf16.mxu0 0
        %2378 = vmatpush1.bf16.msra.mxu0 0
        %2379 = vmatprep.subr.bf16.mxu0 0
        %2380 = vmatpush1.bf16.msra.mxu0 0
        %2381 = vmatprep.subr.bf16.mxu0 0
        %2382 = vmatpush1.bf16.msra.mxu0 0
        %2383 = vmatprep.subr.bf16.mxu0 0
        %2384 = vmatpush1.bf16.msra.mxu0 0
        %2385 = vmatprep.subr.bf16.mxu0 0
        %2386 = vmatpush1.bf16.msra.mxu0 0
        %2387 = vmatprep.subr.bf16.mxu0 0
        %2388 = vmatpush1.bf16.msra.mxu0 0
        %2389 = vmatprep.subr.bf16.mxu0 %v2373
        %2390 = vmatpush1.bf16.msra.mxu0 %v2370
        %2391 = vmatprep.subr.bf16.mxu0 0
        %2392 = vmatpush2.bf16.msra.mxu0 0
        %2393 = vmatprep.subr.bf16.mxu0 0
        %2394 = vmatpush2.bf16.msra.mxu0 0
        %2395 = vmatprep.subr.bf16.mxu0 0
        %2396 = vmatpush2.bf16.msra.mxu0 0
        %2397 = vmatprep.subr.bf16.mxu0 0
        %2398 = vmatpush2.bf16.msra.mxu0 0
        %2399 = vmatprep.subr.bf16.mxu0 0
        %2400 = vmatpush2.bf16.msra.mxu0 0
        %2401 = vmatprep.subr.bf16.mxu0 0
        %2402 = vmatpush2.bf16.msra.mxu0 0
        %2403 = vmatprep.subr.bf16.mxu0 0
        %2404 = vmatpush2.bf16.msra.mxu0 0
        %2405 = vmatprep.subr.bf16.mxu0 0
        %2406 = vmatpush2.bf16.msra.mxu0 0
        %2407 = vmatprep.mubr.bf16.mxu0 0
        %2408 = vmatmul.mubr.bf16.gmra.mxu0 %v2367
        %v2409 = vpop.f32.mrf.mxu0
        %v2410 = vadd.f32 0.0, %v2409
        %v2411 = vpop.f32.mrf.mxu0
        %v2412 = vadd.f32 0.0, %v2411
        %v2413 = vpop.f32.mrf.mxu0
        %v2414 = vadd.f32 0.0, %v2413
        %v2415 = vpop.f32.mrf.mxu0
        %v2416 = vadd.f32 0.0, %v2415
        %2417 = vdwg.mxu0
        %v2418 = vadd.f32 %v2344, %v2410
        %v2419 = vadd.f32 %v2346, %v2412
        %v2420 = vadd.f32 %v2348, %v2414
        %v2421 = vadd.f32 %v2350, %v2416
        %2422 = vrot.lane.b32.xlu0 %v2217, 1
        %v2423 = vpop.permute.xlu0 %2422
        %2424 = vrot.lane.b32.xlu0 %v2219, 1
        %v2425 = vpop.permute.xlu0 %2424
        %v2426 = vsel %vm1455, %v2423, %v2425
        %v2427 = vsel %vm1455, %v2425, %v2423
        %v2428 = vmul.f32 %v2427, %v1466
        %v2429 = vmul.f32 %v2426, %v1470
        %s2430 = scalar_lea.vmem [#allocation5], 48
        %v2431 = vld [vmem:[%s2430] sm:$0xff]
        %v2432 = vld [vmem:[%s2430 + $0x8] sm:$0xff]
        %v2433 = vpack.c.bf16 %v2432, %v2431
        %v2434 = vpack.c.bf16 %v2428, %v2428
        %v2435 = vpack.c.bf16 %v2429, %v2429
        %v2437 = vsel %vm814, %v2433, 0
        %v2440 = vand.u32 %v2434, %v821
        %v2443 = vand.u32 %v2435, %v821
        %2445 = vmatprep.subr.bf16.mxu0 0
        %2446 = vmatpush1.bf16.msra.mxu0 0
        %2447 = vmatprep.subr.bf16.mxu0 0
        %2448 = vmatpush1.bf16.msra.mxu0 0
        %2449 = vmatprep.subr.bf16.mxu0 0
        %2450 = vmatpush1.bf16.msra.mxu0 0
        %2451 = vmatprep.subr.bf16.mxu0 0
        %2452 = vmatpush1.bf16.msra.mxu0 0
        %2453 = vmatprep.subr.bf16.mxu0 0
        %2454 = vmatpush1.bf16.msra.mxu0 0
        %2455 = vmatprep.subr.bf16.mxu0 0
        %2456 = vmatpush1.bf16.msra.mxu0 0
        %2457 = vmatprep.subr.bf16.mxu0 0
        %2458 = vmatpush1.bf16.msra.mxu0 0
        %2459 = vmatprep.subr.bf16.mxu0 %v2443
        %2460 = vmatpush1.bf16.msra.mxu0 %v2440
        %2461 = vmatprep.subr.bf16.mxu0 0
        %2462 = vmatpush2.bf16.msra.mxu0 0
        %2463 = vmatprep.subr.bf16.mxu0 0
        %2464 = vmatpush2.bf16.msra.mxu0 0
        %2465 = vmatprep.subr.bf16.mxu0 0
        %2466 = vmatpush2.bf16.msra.mxu0 0
        %2467 = vmatprep.subr.bf16.mxu0 0
        %2468 = vmatpush2.bf16.msra.mxu0 0
        %2469 = vmatprep.subr.bf16.mxu0 0
        %2470 = vmatpush2.bf16.msra.mxu0 0
        %2471 = vmatprep.subr.bf16.mxu0 0
        %2472 = vmatpush2.bf16.msra.mxu0 0
        %2473 = vmatprep.subr.bf16.mxu0 0
        %2474 = vmatpush2.bf16.msra.mxu0 0
        %2475 = vmatprep.subr.bf16.mxu0 0
        %2476 = vmatpush2.bf16.msra.mxu0 0
        %2477 = vmatprep.mubr.bf16.mxu0 0
        %2478 = vmatmul.mubr.bf16.gmra.mxu0 %v2437
        %v2479 = vpop.f32.mrf.mxu0
        %v2480 = vadd.f32 0.0, %v2479
        %v2481 = vpop.f32.mrf.mxu0
        %v2482 = vadd.f32 0.0, %v2481
        %v2483 = vpop.f32.mrf.mxu0
        %v2484 = vadd.f32 0.0, %v2483
        %v2485 = vpop.f32.mrf.mxu0
        %v2486 = vadd.f32 0.0, %v2485
        %2487 = vdwg.mxu0
        %v2488 = vadd.f32 %v2418, %v2480
        %v2489 = vadd.f32 %v2419, %v2482
        %v2490 = vadd.f32 %v2420, %v2484
        %v2491 = vadd.f32 %v2421, %v2486
        %s2492 = scalar_lea.vmem [#allocation5], 64
        %v2493 = vld [vmem:[%s2492] sm:$0xff]
        %v2494 = vld [vmem:[%s2492 + $0x8] sm:$0xff]
        %v2495 = vpack.c.bf16 %v2494, %v2493
        %v2496 = vpack.c.bf16 %v2217, %v2217
        %v2497 = vpack.c.bf16 %v2219, %v2219
        %v2499 = vsel %vm814, %v2495, 0
        %v2502 = vand.u32 %v2496, %v821
        %v2505 = vand.u32 %v2497, %v821
        %2507 = vmatprep.subr.bf16.mxu0 0
        %2508 = vmatpush1.bf16.msra.mxu0 0
        %2509 = vmatprep.subr.bf16.mxu0 0
        %2510 = vmatpush1.bf16.msra.mxu0 0
        %2511 = vmatprep.subr.bf16.mxu0 0
        %2512 = vmatpush1.bf16.msra.mxu0 0
        %2513 = vmatprep.subr.bf16.mxu0 0
        %2514 = vmatpush1.bf16.msra.mxu0 0
        %2515 = vmatprep.subr.bf16.mxu0 0
        %2516 = vmatpush1.bf16.msra.mxu0 0
        %2517 = vmatprep.subr.bf16.mxu0 0
        %2518 = vmatpush1.bf16.msra.mxu0 0
        %2519 = vmatprep.subr.bf16.mxu0 0
        %2520 = vmatpush1.bf16.msra.mxu0 0
        %2521 = vmatprep.subr.bf16.mxu0 %v2505
        %2522 = vmatpush1.bf16.msra.mxu0 %v2502
        %2523 = vmatprep.subr.bf16.mxu0 0
        %2524 = vmatpush2.bf16.msra.mxu0 0
        %2525 = vmatprep.subr.bf16.mxu0 0
        %2526 = vmatpush2.bf16.msra.mxu0 0
        %2527 = vmatprep.subr.bf16.mxu0 0
        %2528 = vmatpush2.bf16.msra.mxu0 0
        %2529 = vmatprep.subr.bf16.mxu0 0
        %2530 = vmatpush2.bf16.msra.mxu0 0
        %2531 = vmatprep.subr.bf16.mxu0 0
        %2532 = vmatpush2.bf16.msra.mxu0 0
        %2533 = vmatprep.subr.bf16.mxu0 0
        %2534 = vmatpush2.bf16.msra.mxu0 0
        %2535 = vmatprep.subr.bf16.mxu0 0
        %2536 = vmatpush2.bf16.msra.mxu0 0
        %2537 = vmatprep.subr.bf16.mxu0 0
        %2538 = vmatpush2.bf16.msra.mxu0 0
        %2539 = vmatprep.mubr.bf16.mxu0 0
        %2540 = vmatmul.mubr.bf16.gmra.mxu0 %v2499
        %v2541 = vpop.f32.mrf.mxu0
        %v2542 = vadd.f32 0.0, %v2541
        %v2543 = vpop.f32.mrf.mxu0
        %v2544 = vadd.f32 0.0, %v2543
        %v2545 = vpop.f32.mrf.mxu0
        %v2546 = vadd.f32 0.0, %v2545
        %v2547 = vpop.f32.mrf.mxu0
        %v2548 = vadd.f32 0.0, %v2547
        %2549 = vdwg.mxu0
        %v2550 = vadd.f32 %v2488, %v2542
        %v2551 = vadd.f32 %v2489, %v2544
        %v2552 = vadd.f32 %v2490, %v2546
        %v2553 = vadd.f32 %v2491, %v2548
        %2554 = vrot.lane.b32.xlu0 %v2217, 127
        %v2555 = vpop.permute.xlu0 %2554
        %2556 = vrot.lane.b32.xlu0 %v2219, 127
        %v2557 = vpop.permute.xlu0 %2556
        %v2558 = vsel %vm1527, %v2555, %v2557
        %v2559 = vsel %vm1527, %v2557, %v2555
        %v2560 = vmul.f32 %v2558, %v1538
        %v2561 = vmul.f32 %v2559, %v1542
        %s2562 = scalar_lea.vmem [#allocation5], 80
        %v2563 = vld [vmem:[%s2562] sm:$0xff]
        %v2564 = vld [vmem:[%s2562 + $0x8] sm:$0xff]
        %v2565 = vpack.c.bf16 %v2564, %v2563
        %v2566 = vpack.c.bf16 %v2560, %v2560
        %v2567 = vpack.c.bf16 %v2561, %v2561
        %v2569 = vsel %vm814, %v2565, 0
        %v2572 = vand.u32 %v2566, %v821
        %v2575 = vand.u32 %v2567, %v821
        %2577 = vmatprep.subr.bf16.mxu0 0
        %2578 = vmatpush1.bf16.msra.mxu0 0
        %2579 = vmatprep.subr.bf16.mxu0 0
        %2580 = vmatpush1.bf16.msra.mxu0 0
        %2581 = vmatprep.subr.bf16.mxu0 0
        %2582 = vmatpush1.bf16.msra.mxu0 0
        %2583 = vmatprep.subr.bf16.mxu0 0
        %2584 = vmatpush1.bf16.msra.mxu0 0
        %2585 = vmatprep.subr.bf16.mxu0 0
        %2586 = vmatpush1.bf16.msra.mxu0 0
        %2587 = vmatprep.subr.bf16.mxu0 0
        %2588 = vmatpush1.bf16.msra.mxu0 0
        %2589 = vmatprep.subr.bf16.mxu0 0
        %2590 = vmatpush1.bf16.msra.mxu0 0
        %2591 = vmatprep.subr.bf16.mxu0 %v2575
        %2592 = vmatpush1.bf16.msra.mxu0 %v2572
        %2593 = vmatprep.subr.bf16.mxu0 0
        %2594 = vmatpush2.bf16.msra.mxu0 0
        %2595 = vmatprep.subr.bf16.mxu0 0
        %2596 = vmatpush2.bf16.msra.mxu0 0
        %2597 = vmatprep.subr.bf16.mxu0 0
        %2598 = vmatpush2.bf16.msra.mxu0 0
        %2599 = vmatprep.subr.bf16.mxu0 0
        %2600 = vmatpush2.bf16.msra.mxu0 0
        %2601 = vmatprep.subr.bf16.mxu0 0
        %2602 = vmatpush2.bf16.msra.mxu0 0
        %2603 = vmatprep.subr.bf16.mxu0 0
        %2604 = vmatpush2.bf16.msra.mxu0 0
        %2605 = vmatprep.subr.bf16.mxu0 0
        %2606 = vmatpush2.bf16.msra.mxu0 0
        %2607 = vmatprep.subr.bf16.mxu0 0
        %2608 = vmatpush2.bf16.msra.mxu0 0
        %2609 = vmatprep.mubr.bf16.mxu0 0
        %2610 = vmatmul.mubr.bf16.gmra.mxu0 %v2569
        %v2611 = vpop.f32.mrf.mxu0
        %v2612 = vadd.f32 0.0, %v2611
        %v2613 = vpop.f32.mrf.mxu0
        %v2614 = vadd.f32 0.0, %v2613
        %v2615 = vpop.f32.mrf.mxu0
        %v2616 = vadd.f32 0.0, %v2615
        %v2617 = vpop.f32.mrf.mxu0
        %v2618 = vadd.f32 0.0, %v2617
        %2619 = vdwg.mxu0
        %v2620 = vadd.f32 %v2550, %v2612
        %v2621 = vadd.f32 %v2551, %v2614
        %v2622 = vadd.f32 %v2552, %v2616
        %v2623 = vadd.f32 %v2553, %v2618
        %2624 = vrot.lane.b32.xlu0 %v2217, 113
        %v2625 = vpop.permute.xlu0 %2624
        %2626 = vrot.lane.b32.xlu0 %v2219, 113
        %v2627 = vpop.permute.xlu0 %2626
        %v2628 = vsel %vm1682, %v2625, %v2627
        %v2629 = vsel %vm1682, %v2627, %v2625
        %v2630 = vmul.f32 %v2628, %v1694
        %v2631 = vmul.f32 %v2629, %v1698
        %s2632 = scalar_lea.vmem [#allocation5], 96
        %v2633 = vld [vmem:[%s2632] sm:$0xff]
        %v2634 = vld [vmem:[%s2632 + $0x8] sm:$0xff]
        %v2635 = vpack.c.bf16 %v2634, %v2633
        %v2636 = vpack.c.bf16 %v2630, %v2630
        %v2637 = vpack.c.bf16 %v2631, %v2631
        %v2639 = vsel %vm814, %v2635, 0
        %v2642 = vand.u32 %v2636, %v821
        %v2645 = vand.u32 %v2637, %v821
        %2647 = vmatprep.subr.bf16.mxu0 0
        %2648 = vmatpush1.bf16.msra.mxu0 0
        %2649 = vmatprep.subr.bf16.mxu0 0
        %2650 = vmatpush1.bf16.msra.mxu0 0
        %2651 = vmatprep.subr.bf16.mxu0 0
        %2652 = vmatpush1.bf16.msra.mxu0 0
        %2653 = vmatprep.subr.bf16.mxu0 0
        %2654 = vmatpush1.bf16.msra.mxu0 0
        %2655 = vmatprep.subr.bf16.mxu0 0
        %2656 = vmatpush1.bf16.msra.mxu0 0
        %2657 = vmatprep.subr.bf16.mxu0 0
        %2658 = vmatpush1.bf16.msra.mxu0 0
        %2659 = vmatprep.subr.bf16.mxu0 0
        %2660 = vmatpush1.bf16.msra.mxu0 0
        %2661 = vmatprep.subr.bf16.mxu0 %v2645
        %2662 = vmatpush1.bf16.msra.mxu0 %v2642
        %2663 = vmatprep.subr.bf16.mxu0 0
        %2664 = vmatpush2.bf16.msra.mxu0 0
        %2665 = vmatprep.subr.bf16.mxu0 0
        %2666 = vmatpush2.bf16.msra.mxu0 0
        %2667 = vmatprep.subr.bf16.mxu0 0
        %2668 = vmatpush2.bf16.msra.mxu0 0
        %2669 = vmatprep.subr.bf16.mxu0 0
        %2670 = vmatpush2.bf16.msra.mxu0 0
        %2671 = vmatprep.subr.bf16.mxu0 0
        %2672 = vmatpush2.bf16.msra.mxu0 0
        %2673 = vmatprep.subr.bf16.mxu0 0
        %2674 = vmatpush2.bf16.msra.mxu0 0
        %2675 = vmatprep.subr.bf16.mxu0 0
        %2676 = vmatpush2.bf16.msra.mxu0 0
        %2677 = vmatprep.subr.bf16.mxu0 0
        %2678 = vmatpush2.bf16.msra.mxu0 0
        %2679 = vmatprep.mubr.bf16.mxu0 0
        %2680 = vmatmul.mubr.bf16.gmra.mxu0 %v2639
        %v2681 = vpop.f32.mrf.mxu0
        %v2682 = vadd.f32 0.0, %v2681
        %v2683 = vpop.f32.mrf.mxu0
        %v2684 = vadd.f32 0.0, %v2683
        %v2685 = vpop.f32.mrf.mxu0
        %v2686 = vadd.f32 0.0, %v2685
        %v2687 = vpop.f32.mrf.mxu0
        %v2688 = vadd.f32 0.0, %v2687
        %2689 = vdwg.mxu0
        %v2690 = vadd.f32 %v2620, %v2682
        %v2691 = vadd.f32 %v2621, %v2684
        %v2692 = vadd.f32 %v2622, %v2686
        %v2693 = vadd.f32 %v2623, %v2688
        %2694 = vrot.lane.b32.xlu0 %v2217, 112
        %v2695 = vpop.permute.xlu0 %2694
        %2696 = vrot.lane.b32.xlu0 %v2219, 112
        %v2697 = vpop.permute.xlu0 %2696
        %v2698 = vsel %vm1734, %v2695, %v2697
        %v2699 = vsel %vm1734, %v2697, %v2695
        %v2700 = vmul.f32 %v2698, %v1745
        %v2701 = vmul.f32 %v2699, %v1749
        %s2702 = scalar_lea.vmem [#allocation5], 112
        %v2703 = vld [vmem:[%s2702] sm:$0xff]
        %v2704 = vld [vmem:[%s2702 + $0x8] sm:$0xff]
        %v2705 = vpack.c.bf16 %v2704, %v2703
        %v2706 = vpack.c.bf16 %v2700, %v2700
        %v2707 = vpack.c.bf16 %v2701, %v2701
        %v2709 = vsel %vm814, %v2705, 0
        %v2712 = vand.u32 %v2706, %v821
        %v2715 = vand.u32 %v2707, %v821
        %2717 = vmatprep.subr.bf16.mxu0 0
        %2718 = vmatpush1.bf16.msra.mxu0 0
        %2719 = vmatprep.subr.bf16.mxu0 0
        %2720 = vmatpush1.bf16.msra.mxu0 0
        %2721 = vmatprep.subr.bf16.mxu0 0
        %2722 = vmatpush1.bf16.msra.mxu0 0
        %2723 = vmatprep.subr.bf16.mxu0 0
        %2724 = vmatpush1.bf16.msra.mxu0 0
        %2725 = vmatprep.subr.bf16.mxu0 0
        %2726 = vmatpush1.bf16.msra.mxu0 0
        %2727 = vmatprep.subr.bf16.mxu0 0
        %2728 = vmatpush1.bf16.msra.mxu0 0
        %2729 = vmatprep.subr.bf16.mxu0 0
        %2730 = vmatpush1.bf16.msra.mxu0 0
        %2731 = vmatprep.subr.bf16.mxu0 %v2715
        %2732 = vmatpush1.bf16.msra.mxu0 %v2712
        %2733 = vmatprep.subr.bf16.mxu0 0
        %2734 = vmatpush2.bf16.msra.mxu0 0
        %2735 = vmatprep.subr.bf16.mxu0 0
        %2736 = vmatpush2.bf16.msra.mxu0 0
        %2737 = vmatprep.subr.bf16.mxu0 0
        %2738 = vmatpush2.bf16.msra.mxu0 0
        %2739 = vmatprep.subr.bf16.mxu0 0
        %2740 = vmatpush2.bf16.msra.mxu0 0
        %2741 = vmatprep.subr.bf16.mxu0 0
        %2742 = vmatpush2.bf16.msra.mxu0 0
        %2743 = vmatprep.subr.bf16.mxu0 0
        %2744 = vmatpush2.bf16.msra.mxu0 0
        %2745 = vmatprep.subr.bf16.mxu0 0
        %2746 = vmatpush2.bf16.msra.mxu0 0
        %2747 = vmatprep.subr.bf16.mxu0 0
        %2748 = vmatpush2.bf16.msra.mxu0 0
        %2749 = vmatprep.mubr.bf16.mxu0 0
        %2750 = vmatmul.mubr.bf16.gmra.mxu0 %v2709
        %v2751 = vpop.f32.mrf.mxu0
        %v2752 = vadd.f32 0.0, %v2751
        %v2753 = vpop.f32.mrf.mxu0
        %v2754 = vadd.f32 0.0, %v2753
        %v2755 = vpop.f32.mrf.mxu0
        %v2756 = vadd.f32 0.0, %v2755
        %v2757 = vpop.f32.mrf.mxu0
        %v2758 = vadd.f32 0.0, %v2757
        %2759 = vdwg.mxu0
        %v2760 = vadd.f32 %v2690, %v2752
        %v2761 = vadd.f32 %v2691, %v2754
        %v2762 = vadd.f32 %v2692, %v2756
        %v2763 = vadd.f32 %v2693, %v2758
        %2764 = vrot.lane.b32.xlu0 %v2217, 111
        %v2765 = vpop.permute.xlu0 %2764
        %2766 = vrot.lane.b32.xlu0 %v2219, 111
        %v2767 = vpop.permute.xlu0 %2766
        %v2768 = vsel %vm1785, %v2765, %v2767
        %v2769 = vsel %vm1785, %v2767, %v2765
        %v2770 = vmul.f32 %v2768, %v1797
        %v2771 = vmul.f32 %v2769, %v1801
        %s2772 = scalar_lea.vmem [#allocation5], 128
        %v2773 = vld [vmem:[%s2772] sm:$0xff]
        %v2774 = vld [vmem:[%s2772 + $0x8] sm:$0xff]
        %v2775 = vpack.c.bf16 %v2774, %v2773
        %v2776 = vpack.c.bf16 %v2770, %v2770
        %v2777 = vpack.c.bf16 %v2771, %v2771
        %v2779 = vsel %vm814, %v2775, 0
        %v2782 = vand.u32 %v2776, %v821
        %v2785 = vand.u32 %v2777, %v821
        %2787 = vmatprep.subr.bf16.mxu0 0
        %2788 = vmatpush1.bf16.msra.mxu0 0
        %2789 = vmatprep.subr.bf16.mxu0 0
        %2790 = vmatpush1.bf16.msra.mxu0 0
        %2791 = vmatprep.subr.bf16.mxu0 0
        %2792 = vmatpush1.bf16.msra.mxu0 0
        %2793 = vmatprep.subr.bf16.mxu0 0
        %2794 = vmatpush1.bf16.msra.mxu0 0
        %2795 = vmatprep.subr.bf16.mxu0 0
        %2796 = vmatpush1.bf16.msra.mxu0 0
        %2797 = vmatprep.subr.bf16.mxu0 0
        %2798 = vmatpush1.bf16.msra.mxu0 0
        %2799 = vmatprep.subr.bf16.mxu0 0
        %2800 = vmatpush1.bf16.msra.mxu0 0
        %2801 = vmatprep.subr.bf16.mxu0 %v2785
        %2802 = vmatpush1.bf16.msra.mxu0 %v2782
        %2803 = vmatprep.subr.bf16.mxu0 0
        %2804 = vmatpush2.bf16.msra.mxu0 0
        %2805 = vmatprep.subr.bf16.mxu0 0
        %2806 = vmatpush2.bf16.msra.mxu0 0
        %2807 = vmatprep.subr.bf16.mxu0 0
        %2808 = vmatpush2.bf16.msra.mxu0 0
        %2809 = vmatprep.subr.bf16.mxu0 0
        %2810 = vmatpush2.bf16.msra.mxu0 0
        %2811 = vmatprep.subr.bf16.mxu0 0
        %2812 = vmatpush2.bf16.msra.mxu0 0
        %2813 = vmatprep.subr.bf16.mxu0 0
        %2814 = vmatpush2.bf16.msra.mxu0 0
        %2815 = vmatprep.subr.bf16.mxu0 0
        %2816 = vmatpush2.bf16.msra.mxu0 0
        %2817 = vmatprep.subr.bf16.mxu0 0
        %2818 = vmatpush2.bf16.msra.mxu0 0
        %2819 = vmatprep.mubr.bf16.mxu0 0
        %2820 = vmatmul.mubr.bf16.gmra.mxu0 %v2779
        %v2821 = vpop.f32.mrf.mxu0
        %v2822 = vadd.f32 0.0, %v2821
        %v2823 = vpop.f32.mrf.mxu0
        %v2824 = vadd.f32 0.0, %v2823
        %v2825 = vpop.f32.mrf.mxu0
        %v2826 = vadd.f32 0.0, %v2825
        %v2827 = vpop.f32.mrf.mxu0
        %v2828 = vadd.f32 0.0, %v2827
        %2829 = vdwg.mxu0
        %v2830 = vadd.f32 %v2760, %v2822
        %v2831 = vadd.f32 %v2761, %v2824
        %v2832 = vadd.f32 %v2762, %v2826
        %v2833 = vadd.f32 %v2763, %v2828
        %v2834 = vld [vmem:[#allocation7] sm:$0xff]
        %v2835 = vld [vmem:[#allocation7 + $0x8] sm:$0xff]
        %v2836 = vld [vmem:[#allocation7 + $0x10] sm:$0xff]
        %v2837 = vld [vmem:[#allocation7 + $0x18] sm:$0xff]
        %v2838 = vld [vmem:[#allocation7 + $0x20] sm:$0xff]
        %v2839 = vld [vmem:[#allocation7 + $0x28] sm:$0xff]
        %v2840 = vpack.c.bf16 %v2835, %v2834
        %v2841 = vpack.c.bf16 %v2837, %v2836
        %v2842 = vpack.c.bf16 %v2839, %v2838
        %v2843 = vpack.c.bf16 %v2832, %v2830
        %v2844 = vpack.c.bf16 %v2833, %v2831
        %v2846 = vsel %vm2167, %v2840, 0
        %v2849 = vsel %vm2167, %v2841, 0
        %v2852 = vsel %vm2167, %v2842, 0
        %2854 = vmatprep.subr.bf16.mxu0 0
        %2855 = vmatpush1.bf16.msra.mxu0 0
        %2856 = vmatprep.subr.bf16.mxu0 0
        %2857 = vmatpush1.bf16.msra.mxu0 0
        %2858 = vmatprep.subr.bf16.mxu0 0
        %2859 = vmatpush1.bf16.msra.mxu0 0
        %2860 = vmatprep.subr.bf16.mxu0 0
        %2861 = vmatpush1.bf16.msra.mxu0 0
        %2862 = vmatprep.subr.bf16.mxu0 0
        %2863 = vmatpush1.bf16.msra.mxu0 0
        %2864 = vmatprep.subr.bf16.mxu0 0
        %2865 = vmatpush1.bf16.msra.mxu0 0
        %2866 = vmatprep.subr.bf16.mxu0 0
        %2867 = vmatpush1.bf16.msra.mxu0 0
        %2868 = vmatprep.subr.bf16.mxu0 %v2844
        %2869 = vmatpush1.bf16.msra.mxu0 %v2843
        %2870 = vmatprep.subr.bf16.mxu0 0
        %2871 = vmatpush2.bf16.msra.mxu0 0
        %2872 = vmatprep.subr.bf16.mxu0 0
        %2873 = vmatpush2.bf16.msra.mxu0 0
        %2874 = vmatprep.subr.bf16.mxu0 0
        %2875 = vmatpush2.bf16.msra.mxu0 0
        %2876 = vmatprep.subr.bf16.mxu0 0
        %2877 = vmatpush2.bf16.msra.mxu0 0
        %2878 = vmatprep.subr.bf16.mxu0 0
        %2879 = vmatpush2.bf16.msra.mxu0 0
        %2880 = vmatprep.subr.bf16.mxu0 0
        %2881 = vmatpush2.bf16.msra.mxu0 0
        %2882 = vmatprep.subr.bf16.mxu0 0
        %2883 = vmatpush2.bf16.msra.mxu0 0
        %2884 = vmatprep.subr.bf16.mxu0 0
        %2885 = vmatpush2.bf16.msra.mxu0 0
        %2886 = vmatprep.mubr.bf16.mxu0 0
        %2887 = vmatmul.mubr.bf16.gmra.mxu0 %v2846
        %v2888 = vpop.f32.mrf.mxu0
        %v2889 = vadd.f32 0.0, %v2888
        %v2890 = vpop.f32.mrf.mxu0
        %v2891 = vadd.f32 0.0, %v2890
        %v2892 = vpop.f32.mrf.mxu0
        %v2893 = vadd.f32 0.0, %v2892
        %v2894 = vpop.f32.mrf.mxu0
        %v2895 = vadd.f32 0.0, %v2894
        %2896 = vmatprep.mubr.bf16.mxu0 0
        %2897 = vmatmul.mubr.bf16.gmra.mxu0 %v2849
        %v2898 = vpop.f32.mrf.mxu0
        %v2899 = vadd.f32 0.0, %v2898
        %v2900 = vpop.f32.mrf.mxu0
        %v2901 = vadd.f32 0.0, %v2900
        %v2902 = vpop.f32.mrf.mxu0
        %v2903 = vadd.f32 0.0, %v2902
        %v2904 = vpop.f32.mrf.mxu0
        %v2905 = vadd.f32 0.0, %v2904
        %2906 = vmatprep.mubr.bf16.mxu0 0
        %2907 = vmatmul.mubr.bf16.gmra.mxu0 %v2852
        %v2908 = vpop.f32.mrf.mxu0
        %v2909 = vadd.f32 0.0, %v2908
        %v2910 = vpop.f32.mrf.mxu0
        %v2911 = vadd.f32 0.0, %v2910
        %v2912 = vpop.f32.mrf.mxu0
        %v2913 = vadd.f32 0.0, %v2912
        %v2914 = vpop.f32.mrf.mxu0
        %v2915 = vadd.f32 0.0, %v2914
        %2916 = vdwg.mxu0
        %v2917 = vmul.f32 %v2909, %v2153
        %v2918 = vmul.f32 %v2911, %v2154
        %v2919 = vmul.f32 %v2913, %v2155
        %v2920 = vmul.f32 %v2915, %v2156
        %v2921 = vmul.f32 %v2889, %v2889
        %v2922 = vmul.f32 %v2891, %v2891
        %v2923 = vmul.f32 %v2893, %v2893
        %v2924 = vmul.f32 %v2895, %v2895
        %2925 = vmatprep.subr.mxu0 0.0
        %2926 = vmatpush1.msra.mxu0 1.0
        %2927 = vmatprep.subr.mxu0 0.0
        %2928 = vmatpush1.msra.mxu0 1.0
        %2929 = vmatprep.subr.mxu0 0.0
        %2930 = vmatpush1.msra.mxu0 1.0
        %2931 = vmatprep.subr.mxu0 0.0
        %2932 = vmatpush1.msra.mxu0 1.0
        %2933 = vmatprep.subr.mxu0 0.0
        %2934 = vmatpush1.msra.mxu0 1.0
        %2935 = vmatprep.subr.mxu0 0.0
        %2936 = vmatpush1.msra.mxu0 1.0
        %2937 = vmatprep.subr.mxu0 0.0
        %2938 = vmatpush1.msra.mxu0 1.0
        %2939 = vmatprep.subr.mxu0 0.0
        %2940 = vmatpush1.msra.mxu0 1.0
        %2941 = vmatprep.subr.mxu0 0.0
        %2942 = vmatpush1.msra.mxu0 1.0
        %2943 = vmatprep.subr.mxu0 0.0
        %2944 = vmatpush1.msra.mxu0 1.0
        %2945 = vmatprep.subr.mxu0 0.0
        %2946 = vmatpush1.msra.mxu0 1.0
        %2947 = vmatprep.subr.mxu0 0.0
        %2948 = vmatpush1.msra.mxu0 1.0
        %2949 = vmatprep.subr.mxu0 0.0
        %2950 = vmatpush1.msra.mxu0 1.0
        %2951 = vmatprep.subr.mxu0 0.0
        %2952 = vmatpush1.msra.mxu0 1.0
        %2953 = vmatprep.subr.mxu0 0.0
        %2954 = vmatpush1.msra.mxu0 1.0
        %2955 = vmatprep.subr.mxu0 0.0
        %2956 = vmatpush1.msra.mxu0 1.0
        %2957 = vmatprep.subr.mxu0 0.0
        %2958 = vmatpush2.msra.mxu0 1.0
        %2959 = vmatprep.subr.mxu0 0.0
        %2960 = vmatpush2.msra.mxu0 1.0
        %2961 = vmatprep.subr.mxu0 0.0
        %2962 = vmatpush2.msra.mxu0 1.0
        %2963 = vmatprep.subr.mxu0 0.0
        %2964 = vmatpush2.msra.mxu0 1.0
        %2965 = vmatprep.subr.mxu0 0.0
        %2966 = vmatpush2.msra.mxu0 1.0
        %2967 = vmatprep.subr.mxu0 0.0
        %2968 = vmatpush2.msra.mxu0 1.0
        %2969 = vmatprep.subr.mxu0 0.0
        %2970 = vmatpush2.msra.mxu0 1.0
        %2971 = vmatprep.subr.mxu0 0.0
        %2972 = vmatpush2.msra.mxu0 1.0
        %2973 = vmatprep.subr.mxu0 0.0
        %2974 = vmatpush2.msra.mxu0 1.0
        %2975 = vmatprep.subr.mxu0 0.0
        %2976 = vmatpush2.msra.mxu0 1.0
        %2977 = vmatprep.subr.mxu0 0.0
        %2978 = vmatpush2.msra.mxu0 1.0
        %2979 = vmatprep.subr.mxu0 0.0
        %2980 = vmatpush2.msra.mxu0 1.0
        %2981 = vmatprep.subr.mxu0 0.0
        %2982 = vmatpush2.msra.mxu0 1.0
        %2983 = vmatprep.subr.mxu0 0.0
        %2984 = vmatpush2.msra.mxu0 1.0
        %2985 = vmatprep.subr.mxu0 0.0
        %2986 = vmatpush2.msra.mxu0 1.0
        %2987 = vmatprep.subr.mxu0 0.0
        %2988 = vmatpush2.msra.mxu0 1.0
        %2989 = vmatprep.mubr.f32.mxu0 %v2922
        %2990 = vmatmul.mubr.f32.gmra.mxu0 %v2921
        %v2991 = vpop.f32.mrf.mxu0
        %v2992 = vadd.f32 0.0, %v2991
        %v2993 = vpop.f32.mrf.mxu0
        %2994 = vmatprep.mubr.f32.mxu0 %v2924
        %2995 = vmatmul.mubr.f32.gmra.mxu0 %v2923
        %v2996 = vpop.f32.mrf.mxu0
        %v2997 = vadd.f32 0.0, %v2996
        %v2998 = vpop.f32.mrf.mxu0
        %2999 = vdwg.mxu0
        %v3000 = vmul.f32 %v2899, %v2899
        %v3001 = vmul.f32 %v2901, %v2901
        %v3002 = vmul.f32 %v2903, %v2903
        %v3003 = vmul.f32 %v2905, %v2905
        %3004 = vmatprep.subr.mxu0 0.0
        %3005 = vmatpush1.msra.mxu0 1.0
        %3006 = vmatprep.subr.mxu0 0.0
        %3007 = vmatpush1.msra.mxu0 1.0
        %3008 = vmatprep.subr.mxu0 0.0
        %3009 = vmatpush1.msra.mxu0 1.0
        %3010 = vmatprep.subr.mxu0 0.0
        %3011 = vmatpush1.msra.mxu0 1.0
        %3012 = vmatprep.subr.mxu0 0.0
        %3013 = vmatpush1.msra.mxu0 1.0
        %3014 = vmatprep.subr.mxu0 0.0
        %3015 = vmatpush1.msra.mxu0 1.0
        %3016 = vmatprep.subr.mxu0 0.0
        %3017 = vmatpush1.msra.mxu0 1.0
        %3018 = vmatprep.subr.mxu0 0.0
        %3019 = vmatpush1.msra.mxu0 1.0
        %3020 = vmatprep.subr.mxu0 0.0
        %3021 = vmatpush1.msra.mxu0 1.0
        %3022 = vmatprep.subr.mxu0 0.0
        %3023 = vmatpush1.msra.mxu0 1.0
        %3024 = vmatprep.subr.mxu0 0.0
        %3025 = vmatpush1.msra.mxu0 1.0
        %3026 = vmatprep.subr.mxu0 0.0
        %3027 = vmatpush1.msra.mxu0 1.0
        %3028 = vmatprep.subr.mxu0 0.0
        %3029 = vmatpush1.msra.mxu0 1.0
        %3030 = vmatprep.subr.mxu0 0.0
        %3031 = vmatpush1.msra.mxu0 1.0
        %3032 = vmatprep.subr.mxu0 0.0
        %3033 = vmatpush1.msra.mxu0 1.0
        %3034 = vmatprep.subr.mxu0 0.0
        %3035 = vmatpush1.msra.mxu0 1.0
        %3036 = vmatprep.subr.mxu0 0.0
        %3037 = vmatpush2.msra.mxu0 1.0
        %3038 = vmatprep.subr.mxu0 0.0
        %3039 = vmatpush2.msra.mxu0 1.0
        %3040 = vmatprep.subr.mxu0 0.0
        %3041 = vmatpush2.msra.mxu0 1.0
        %3042 = vmatprep.subr.mxu0 0.0
        %3043 = vmatpush2.msra.mxu0 1.0
        %3044 = vmatprep.subr.mxu0 0.0
        %3045 = vmatpush2.msra.mxu0 1.0
        %3046 = vmatprep.subr.mxu0 0.0
        %3047 = vmatpush2.msra.mxu0 1.0
        %3048 = vmatprep.subr.mxu0 0.0
        %3049 = vmatpush2.msra.mxu0 1.0
        %3050 = vmatprep.subr.mxu0 0.0
        %3051 = vmatpush2.msra.mxu0 1.0
        %3052 = vmatprep.subr.mxu0 0.0
        %3053 = vmatpush2.msra.mxu0 1.0
        %3054 = vmatprep.subr.mxu0 0.0
        %3055 = vmatpush2.msra.mxu0 1.0
        %3056 = vmatprep.subr.mxu0 0.0
        %3057 = vmatpush2.msra.mxu0 1.0
        %3058 = vmatprep.subr.mxu0 0.0
        %3059 = vmatpush2.msra.mxu0 1.0
        %3060 = vmatprep.subr.mxu0 0.0
        %3061 = vmatpush2.msra.mxu0 1.0
        %3062 = vmatprep.subr.mxu0 0.0
        %3063 = vmatpush2.msra.mxu0 1.0
        %3064 = vmatprep.subr.mxu0 0.0
        %3065 = vmatpush2.msra.mxu0 1.0
        %3066 = vmatprep.subr.mxu0 0.0
        %3067 = vmatpush2.msra.mxu0 1.0
        %3068 = vmatprep.mubr.f32.mxu0 %v3001
        %3069 = vmatmul.mubr.f32.gmra.mxu0 %v3000
        %v3070 = vpop.f32.mrf.mxu0
        %v3071 = vadd.f32 0.0, %v3070
        %v3072 = vpop.f32.mrf.mxu0
        %3073 = vmatprep.mubr.f32.mxu0 %v3003
        %3074 = vmatmul.mubr.f32.gmra.mxu0 %v3002
        %v3075 = vpop.f32.mrf.mxu0
        %v3076 = vadd.f32 0.0, %v3075
        %v3077 = vpop.f32.mrf.mxu0
        %3078 = vdwg.mxu0
        %v3079 = vmax.f32 %v2992, 1e-24
        %v3080 = vmax.f32 %v2997, 1e-24
        %v3081 = vrsqrt.pop %v3079
        %v3082 = vrsqrt.pop %v3080
        %3084 = vset.pattern.permute.xlu0 0
        %3085 = vperm.xlu0 %3084, %v3081
        %v3086 = vpop.permute.xlu0 %3085
        %3089 = vset.pattern.permute.xlu0 0
        %3090 = vperm.xlu0 %3089, %v3082
        %v3091 = vpop.permute.xlu0 %3090
        %v3093 = vmul.f32 %v2889, %v3086
        %v3094 = vmul.f32 %v2891, %v3086
        %v3095 = vmul.f32 %v2893, %v3091
        %v3096 = vmul.f32 %v2895, %v3091
        %v3097 = vmax.f32 %v3071, 1e-24
        %v3098 = vmax.f32 %v3076, 1e-24
        %v3099 = vrsqrt.pop %v3097
        %v3100 = vrsqrt.pop %v3098
        %3102 = vset.pattern.permute.xlu0 0
        %3103 = vperm.xlu0 %3102, %v3099
        %v3104 = vpop.permute.xlu0 %3103
        %3107 = vset.pattern.permute.xlu0 0
        %3108 = vperm.xlu0 %3107, %v3100
        %v3109 = vpop.permute.xlu0 %3108
        %v3111 = vmul.f32 %v2899, %v3104
        %v3112 = vmul.f32 %v2901, %v3104
        %v3113 = vmul.f32 %v2903, %v3109
        %v3114 = vmul.f32 %v2905, %v3109
        %v3115 = vpack.c.bf16 %v3113, %v3111
        %v3116 = vpack.c.bf16 %v3114, %v3112
        %v3117 = vpack.c.bf16 %v3095, %v3093
        %v3118 = vpack.c.bf16 %v3096, %v3094
        %3119 = vmatprep.subr.bf16.mxu0 0
        %3120 = vmatpush1.bf16.xpose.msra.mxu0 0
        %3121 = vmatprep.subr.bf16.mxu0 0
        %3122 = vmatpush1.bf16.xpose.msra.mxu0 0
        %3123 = vmatprep.subr.bf16.mxu0 0
        %3124 = vmatpush1.bf16.xpose.msra.mxu0 0
        %3125 = vmatprep.subr.bf16.mxu0 0
        %3126 = vmatpush1.bf16.xpose.msra.mxu0 0
        %3127 = vmatprep.subr.bf16.mxu0 0
        %3128 = vmatpush1.bf16.xpose.msra.mxu0 0
        %3129 = vmatprep.subr.bf16.mxu0 0
        %3130 = vmatpush1.bf16.xpose.msra.mxu0 0
        %3131 = vmatprep.subr.bf16.mxu0 0
        %3132 = vmatpush1.bf16.xpose.msra.mxu0 0
        %3133 = vmatprep.subr.bf16.mxu0 %v3118
        %3134 = vmatpush1.bf16.xpose.msra.mxu0 %v3117
        %3135 = vmatprep.subr.bf16.mxu0 0
        %3136 = vmatpush2.bf16.xpose.msra.mxu0 0
        %3137 = vmatprep.subr.bf16.mxu0 0
        %3138 = vmatpush2.bf16.xpose.msra.mxu0 0
        %3139 = vmatprep.subr.bf16.mxu0 0
        %3140 = vmatpush2.bf16.xpose.msra.mxu0 0
        %3141 = vmatprep.subr.bf16.mxu0 0
        %3142 = vmatpush2.bf16.xpose.msra.mxu0 0
        %3143 = vmatprep.subr.bf16.mxu0 0
        %3144 = vmatpush2.bf16.xpose.msra.mxu0 0
        %3145 = vmatprep.subr.bf16.mxu0 0
        %3146 = vmatpush2.bf16.xpose.msra.mxu0 0
        %3147 = vmatprep.subr.bf16.mxu0 0
        %3148 = vmatpush2.bf16.xpose.msra.mxu0 0
        %3149 = vmatprep.subr.bf16.mxu0 0
        %3150 = vmatpush2.bf16.xpose.msra.mxu0 0
        %3151 = vmatprep.mubr.bf16.mxu0 %v3116
        %3152 = vmatmul.mubr.bf16.gmra.mxu0 %v3115
        %v3153 = vpop.f32.mrf.mxu0
        %v3154 = vadd.f32 0.0, %v3153
        %v3155 = vpop.f32.mrf.mxu0
        %v3156 = vpop.f32.mrf.mxu0
        %v3157 = vadd.f32 0.0, %v3156
        %v3158 = vpop.f32.mrf.mxu0
        %3159 = vdwg.mxu0
        %s3160 = sld [smem:[#allocation2]]
        %v3161 = vstv %s3160
        %v3162 = vmul.f32 %v3154, %v3161
        %v3163 = vmul.f32 %v3157, %v3161
        %v3164 = vsel %vm2167, %v3162, -inf
        %3165 = vmax.xlane.f32.xlu0 %v3164
        %v3166 = vpop.xlane.xlu0 %3165
        %v3167 = vsel %vm2167, %v3163, -inf
        %3168 = vmax.xlane.f32.xlu0 %v3167
        %v3169 = vpop.xlane.xlu0 %3168
        %v3170 = vsub.f32 %v3162, %v3166
        %v3171 = vsub.f32 %v3163, %v3169
        %v3172 = vmul.f32 %v3170, 1.442695
        %v3173 = vpow.pop %v3172
        %v3174 = vmul.f32 %v3171, 1.442695
        %v3175 = vpow.pop %v3174
        %v3176 = vsel %vm2167, %v3173, 0.0
        %3177 = vadd.xlane.f32.xlu0 %v3176
        %v3178 = vpop.xlane.xlu0 %3177
        %v3179 = vsel %vm2167, %v3175, 0.0
        %3180 = vadd.xlane.f32.xlu0 %v3179
        %v3181 = vpop.xlane.xlu0 %3180
        %v3182 = vrcp.pop %v3178
        %v3183 = vmul.f32 %v3173, %v3182
        %v3184 = vrcp.pop %v3181
        %v3185 = vmul.f32 %v3175, %v3184
        %v3186 = vpack.c.bf16 %v3185, %v3183
        %v3187 = vpack.c.bf16 %v2919, %v2917
        %v3188 = vpack.c.bf16 %v2920, %v2918
        %v3190 = vsel %vm2167, %v3186, 0
        %3192 = vmatprep.subr.bf16.mxu0 0
        %3193 = vmatpush1.bf16.msra.mxu0 0
        %3194 = vmatprep.subr.bf16.mxu0 0
        %3195 = vmatpush1.bf16.msra.mxu0 0
        %3196 = vmatprep.subr.bf16.mxu0 0
        %3197 = vmatpush1.bf16.msra.mxu0 0
        %3198 = vmatprep.subr.bf16.mxu0 0
        %3199 = vmatpush1.bf16.msra.mxu0 0
        %3200 = vmatprep.subr.bf16.mxu0 0
        %3201 = vmatpush1.bf16.msra.mxu0 0
        %3202 = vmatprep.subr.bf16.mxu0 0
        %3203 = vmatpush1.bf16.msra.mxu0 0
        %3204 = vmatprep.subr.bf16.mxu0 0
        %3205 = vmatpush1.bf16.msra.mxu0 0
        %3206 = vmatprep.subr.bf16.mxu0 %v3188
        %3207 = vmatpush1.bf16.msra.mxu0 %v3187
        %3208 = vmatprep.subr.bf16.mxu0 0
        %3209 = vmatpush2.bf16.msra.mxu0 0
        %3210 = vmatprep.subr.bf16.mxu0 0
        %3211 = vmatpush2.bf16.msra.mxu0 0
        %3212 = vmatprep.subr.bf16.mxu0 0
        %3213 = vmatpush2.bf16.msra.mxu0 0
        %3214 = vmatprep.subr.bf16.mxu0 0
        %3215 = vmatpush2.bf16.msra.mxu0 0
        %3216 = vmatprep.subr.bf16.mxu0 0
        %3217 = vmatpush2.bf16.msra.mxu0 0
        %3218 = vmatprep.subr.bf16.mxu0 0
        %3219 = vmatpush2.bf16.msra.mxu0 0
        %3220 = vmatprep.subr.bf16.mxu0 0
        %3221 = vmatpush2.bf16.msra.mxu0 0
        %3222 = vmatprep.subr.bf16.mxu0 0
        %3223 = vmatpush2.bf16.msra.mxu0 0
        %3224 = vmatprep.mubr.bf16.mxu0 0
        %3225 = vmatmul.mubr.bf16.gmra.mxu0 %v3190
        %v3226 = vpop.f32.mrf.mxu0
        %v3227 = vadd.f32 0.0, %v3226
        %v3228 = vpop.f32.mrf.mxu0
        %v3229 = vadd.f32 0.0, %v3228
        %v3230 = vpop.f32.mrf.mxu0
        %v3231 = vadd.f32 0.0, %v3230
        %v3232 = vpop.f32.mrf.mxu0
        %v3233 = vadd.f32 0.0, %v3232
        %3234 = vdwg.mxu0
        %v3235 = vld [vmem:[#allocation8] sm:$0xff]
        %v3236 = vld [vmem:[#allocation8 + $0x8] sm:$0xff]
        %v3237 = vpack.c.bf16 %v3236, %v3235
        %v3238 = vpack.c.bf16 %v3231, %v3227
        %v3239 = vpack.c.bf16 %v3233, %v3229
        %v3240 = vld [vmem:[%s11] sm:$0xff]
        %v3241 = vld [vmem:[%s11 + $0x8] sm:$0xff]
        %3243 = vset.pattern.permute.xlu0 0
        %3244 = vperm.xlu0 %3243, %v3240
        %v3245 = vpop.permute.xlu0 %3244
        %3248 = vset.pattern.permute.xlu0 0
        %3249 = vperm.xlu0 %3248, %v3241
        %v3250 = vpop.permute.xlu0 %3249
        %v3253 = vsel %vm2167, %v3237, 0
        %3255 = vmatprep.subr.bf16.mxu0 0
        %3256 = vmatpush1.bf16.msra.mxu0 0
        %3257 = vmatprep.subr.bf16.mxu0 0
        %3258 = vmatpush1.bf16.msra.mxu0 0
        %3259 = vmatprep.subr.bf16.mxu0 0
        %3260 = vmatpush1.bf16.msra.mxu0 0
        %3261 = vmatprep.subr.bf16.mxu0 0
        %3262 = vmatpush1.bf16.msra.mxu0 0
        %3263 = vmatprep.subr.bf16.mxu0 0
        %3264 = vmatpush1.bf16.msra.mxu0 0
        %3265 = vmatprep.subr.bf16.mxu0 0
        %3266 = vmatpush1.bf16.msra.mxu0 0
        %3267 = vmatprep.subr.bf16.mxu0 0
        %3268 = vmatpush1.bf16.msra.mxu0 0
        %3269 = vmatprep.subr.bf16.mxu0 %v3239
        %3270 = vmatpush1.bf16.msra.mxu0 %v3238
        %3271 = vmatprep.subr.bf16.mxu0 0
        %3272 = vmatpush2.bf16.msra.mxu0 0
        %3273 = vmatprep.subr.bf16.mxu0 0
        %3274 = vmatpush2.bf16.msra.mxu0 0
        %3275 = vmatprep.subr.bf16.mxu0 0
        %3276 = vmatpush2.bf16.msra.mxu0 0
        %3277 = vmatprep.subr.bf16.mxu0 0
        %3278 = vmatpush2.bf16.msra.mxu0 0
        %3279 = vmatprep.subr.bf16.mxu0 0
        %3280 = vmatpush2.bf16.msra.mxu0 0
        %3281 = vmatprep.subr.bf16.mxu0 0
        %3282 = vmatpush2.bf16.msra.mxu0 0
        %3283 = vmatprep.subr.bf16.mxu0 0
        %3284 = vmatpush2.bf16.msra.mxu0 0
        %3285 = vmatprep.subr.bf16.mxu0 0
        %3286 = vmatpush2.bf16.msra.mxu0 0
        %3287 = vmatprep.mubr.bf16.mxu0 0
        %3288 = vmatmul.mubr.bf16.gmra.mxu0 %v3253
        %v3289 = vpop.f32.mrf.mxu0
        %v3290 = vadd.f32 %v3245, %v3289
        %v3291 = vpop.f32.mrf.mxu0
        %v3292 = vadd.f32 %v3245, %v3291
        %v3293 = vpop.f32.mrf.mxu0
        %v3294 = vadd.f32 %v3250, %v3293
        %v3295 = vpop.f32.mrf.mxu0
        %v3296 = vadd.f32 %v3250, %v3295
        %3297 = vdwg.mxu0
        %3298 = vrot.lane.b32.xlu0 %v2909, 17
        %v3299 = vpop.permute.xlu0 %3298
        %3300 = vrot.lane.b32.xlu0 %v2913, 17
        %v3301 = vpop.permute.xlu0 %3300
        %3302 = vrot.lane.b32.xlu0 %v2911, 17
        %v3303 = vpop.permute.xlu0 %3302
        %3304 = vrot.lane.b32.xlu0 %v2915, 17
        %v3305 = vpop.permute.xlu0 %3304
        %v3306 = vsel %vm1197, %v3299, %v3303
        %v3307 = vsel %vm1197, %v3301, %v3305
        %v3308 = vsel %vm1197, %v3303, %v3299
        %v3309 = vsel %vm1197, %v3305, %v3301
        %v3310 = vmul.f32 %v3308, %v1209
        %v3311 = vmul.f32 %v3306, %v1213
        %v3312 = vmul.f32 %v3309, %v1209
        %v3313 = vmul.f32 %v3307, %v1213
        %v3314 = vld [vmem:[#allocation10] sm:$0xff]
        %v3315 = vld [vmem:[#allocation10 + $0x8] sm:$0xff]
        %3317 = vset.pattern.permute.xlu0 0
        %3318 = vperm.xlu0 %3317, %v3314
        %v3319 = vpop.permute.xlu0 %3318
        %3322 = vset.pattern.permute.xlu0 0
        %3323 = vperm.xlu0 %3322, %v3315
        %v3324 = vpop.permute.xlu0 %3323
        %v3326 = vmul.f32 %v3319, %v3310
        %v3327 = vmul.f32 %v3319, %v3311
        %v3328 = vmul.f32 %v3324, %v3312
        %v3329 = vmul.f32 %v3324, %v3313
        %v3330 = vadd.f32 %v3326, 0.0
        %v3331 = vadd.f32 %v3327, 0.0
        %v3332 = vadd.f32 %v3328, 0.0
        %v3333 = vadd.f32 %v3329, 0.0
        %3334 = vrot.lane.b32.xlu0 %v2909, 16
        %v3335 = vpop.permute.xlu0 %3334
        %3336 = vrot.lane.b32.xlu0 %v2913, 16
        %v3337 = vpop.permute.xlu0 %3336
        %3338 = vrot.lane.b32.xlu0 %v2911, 16
        %v3339 = vpop.permute.xlu0 %3338
        %3340 = vrot.lane.b32.xlu0 %v2915, 16
        %v3341 = vpop.permute.xlu0 %3340
        %v3342 = vsel %vm1249, %v3335, %v3339
        %v3343 = vsel %vm1249, %v3337, %v3341
        %v3344 = vsel %vm1249, %v3339, %v3335
        %v3345 = vsel %vm1249, %v3341, %v3337
        %v3346 = vmul.f32 %v3344, %v1260
        %v3347 = vmul.f32 %v3342, %v1264
        %v3348 = vmul.f32 %v3345, %v1260
        %v3349 = vmul.f32 %v3343, %v1264
        %s3350 = scalar_lea.vmem [#allocation10], 16
        %v3351 = vld [vmem:[%s3350] sm:$0xff]
        %v3352 = vld [vmem:[%s3350 + $0x8] sm:$0xff]
        %3354 = vset.pattern.permute.xlu0 0
        %3355 = vperm.xlu0 %3354, %v3351
        %v3356 = vpop.permute.xlu0 %3355
        %3359 = vset.pattern.permute.xlu0 0
        %3360 = vperm.xlu0 %3359, %v3352
        %v3361 = vpop.permute.xlu0 %3360
        %v3363 = vmul.f32 %v3356, %v3346
        %v3364 = vmul.f32 %v3356, %v3347
        %v3365 = vmul.f32 %v3361, %v3348
        %v3366 = vmul.f32 %v3361, %v3349
        %v3367 = vadd.f32 %v3330, %v3363
        %v3368 = vadd.f32 %v3331, %v3364
        %v3369 = vadd.f32 %v3332, %v3365
        %v3370 = vadd.f32 %v3333, %v3366
        %3371 = vrot.lane.b32.xlu0 %v2909, 15
        %v3372 = vpop.permute.xlu0 %3371
        %3373 = vrot.lane.b32.xlu0 %v2913, 15
        %v3374 = vpop.permute.xlu0 %3373
        %3375 = vrot.lane.b32.xlu0 %v2911, 15
        %v3376 = vpop.permute.xlu0 %3375
        %3377 = vrot.lane.b32.xlu0 %v2915, 15
        %v3378 = vpop.permute.xlu0 %3377
        %v3379 = vsel %vm1300, %v3372, %v3376
        %v3380 = vsel %vm1300, %v3374, %v3378
        %v3381 = vsel %vm1300, %v3376, %v3372
        %v3382 = vsel %vm1300, %v3378, %v3374
        %v3383 = vmul.f32 %v3381, %v1312
        %v3384 = vmul.f32 %v3379, %v1316
        %v3385 = vmul.f32 %v3382, %v1312
        %v3386 = vmul.f32 %v3380, %v1316
        %s3387 = scalar_lea.vmem [#allocation10], 32
        %v3388 = vld [vmem:[%s3387] sm:$0xff]
        %v3389 = vld [vmem:[%s3387 + $0x8] sm:$0xff]
        %3391 = vset.pattern.permute.xlu0 0
        %3392 = vperm.xlu0 %3391, %v3388
        %v3393 = vpop.permute.xlu0 %3392
        %3396 = vset.pattern.permute.xlu0 0
        %3397 = vperm.xlu0 %3396, %v3389
        %v3398 = vpop.permute.xlu0 %3397
        %v3400 = vmul.f32 %v3393, %v3383
        %v3401 = vmul.f32 %v3393, %v3384
        %v3402 = vmul.f32 %v3398, %v3385
        %v3403 = vmul.f32 %v3398, %v3386
        %v3404 = vadd.f32 %v3367, %v3400
        %v3405 = vadd.f32 %v3368, %v3401
        %v3406 = vadd.f32 %v3369, %v3402
        %v3407 = vadd.f32 %v3370, %v3403
        %3408 = vrot.lane.b32.xlu0 %v2909, 1
        %v3409 = vpop.permute.xlu0 %3408
        %3410 = vrot.lane.b32.xlu0 %v2913, 1
        %v3411 = vpop.permute.xlu0 %3410
        %3412 = vrot.lane.b32.xlu0 %v2911, 1
        %v3413 = vpop.permute.xlu0 %3412
        %3414 = vrot.lane.b32.xlu0 %v2915, 1
        %v3415 = vpop.permute.xlu0 %3414
        %v3416 = vsel %vm1455, %v3409, %v3413
        %v3417 = vsel %vm1455, %v3411, %v3415
        %v3418 = vsel %vm1455, %v3413, %v3409
        %v3419 = vsel %vm1455, %v3415, %v3411
        %v3420 = vmul.f32 %v3418, %v1466
        %v3421 = vmul.f32 %v3416, %v1470
        %v3422 = vmul.f32 %v3419, %v1466
        %v3423 = vmul.f32 %v3417, %v1470
        %s3424 = scalar_lea.vmem [#allocation10], 48
        %v3425 = vld [vmem:[%s3424] sm:$0xff]
        %v3426 = vld [vmem:[%s3424 + $0x8] sm:$0xff]
        %3428 = vset.pattern.permute.xlu0 0
        %3429 = vperm.xlu0 %3428, %v3425
        %v3430 = vpop.permute.xlu0 %3429
        %3433 = vset.pattern.permute.xlu0 0
        %3434 = vperm.xlu0 %3433, %v3426
        %v3435 = vpop.permute.xlu0 %3434
        %v3437 = vmul.f32 %v3430, %v3420
        %v3438 = vmul.f32 %v3430, %v3421
        %v3439 = vmul.f32 %v3435, %v3422
        %v3440 = vmul.f32 %v3435, %v3423
        %v3441 = vadd.f32 %v3404, %v3437
        %v3442 = vadd.f32 %v3405, %v3438
        %v3443 = vadd.f32 %v3406, %v3439
        %v3444 = vadd.f32 %v3407, %v3440
        %s3445 = scalar_lea.vmem [#allocation10], 64
        %v3446 = vld [vmem:[%s3445] sm:$0xff]
        %v3447 = vld [vmem:[%s3445 + $0x8] sm:$0xff]
        %3449 = vset.pattern.permute.xlu0 0
        %3450 = vperm.xlu0 %3449, %v3446
        %v3451 = vpop.permute.xlu0 %3450
        %3454 = vset.pattern.permute.xlu0 0
        %3455 = vperm.xlu0 %3454, %v3447
        %v3456 = vpop.permute.xlu0 %3455
        %v3458 = vmul.f32 %v3451, %v2909
        %v3459 = vmul.f32 %v3451, %v2911
        %v3460 = vmul.f32 %v3456, %v2913
        %v3461 = vmul.f32 %v3456, %v2915
        %v3462 = vadd.f32 %v3441, %v3458
        %v3463 = vadd.f32 %v3442, %v3459
        %v3464 = vadd.f32 %v3443, %v3460
        %v3465 = vadd.f32 %v3444, %v3461
        %3466 = vrot.lane.b32.xlu0 %v2909, 127
        %v3467 = vpop.permute.xlu0 %3466
        %3468 = vrot.lane.b32.xlu0 %v2913, 127
        %v3469 = vpop.permute.xlu0 %3468
        %3470 = vrot.lane.b32.xlu0 %v2911, 127
        %v3471 = vpop.permute.xlu0 %3470
        %3472 = vrot.lane.b32.xlu0 %v2915, 127
        %v3473 = vpop.permute.xlu0 %3472
        %v3474 = vsel %vm1527, %v3467, %v3471
        %v3475 = vsel %vm1527, %v3469, %v3473
        %v3476 = vsel %vm1527, %v3471, %v3467
        %v3477 = vsel %vm1527, %v3473, %v3469
        %v3478 = vmul.f32 %v3474, %v1538
        %v3479 = vmul.f32 %v3476, %v1542
        %v3480 = vmul.f32 %v3475, %v1538
        %v3481 = vmul.f32 %v3477, %v1542
        %s3482 = scalar_lea.vmem [#allocation10], 80
        %v3483 = vld [vmem:[%s3482] sm:$0xff]
        %v3484 = vld [vmem:[%s3482 + $0x8] sm:$0xff]
        %3486 = vset.pattern.permute.xlu0 0
        %3487 = vperm.xlu0 %3486, %v3483
        %v3488 = vpop.permute.xlu0 %3487
        %3491 = vset.pattern.permute.xlu0 0
        %3492 = vperm.xlu0 %3491, %v3484
        %v3493 = vpop.permute.xlu0 %3492
        %v3495 = vmul.f32 %v3488, %v3478
        %v3496 = vmul.f32 %v3488, %v3479
        %v3497 = vmul.f32 %v3493, %v3480
        %v3498 = vmul.f32 %v3493, %v3481
        %v3499 = vadd.f32 %v3462, %v3495
        %v3500 = vadd.f32 %v3463, %v3496
        %v3501 = vadd.f32 %v3464, %v3497
        %v3502 = vadd.f32 %v3465, %v3498
        %3503 = vrot.lane.b32.xlu0 %v2909, 113
        %v3504 = vpop.permute.xlu0 %3503
        %3505 = vrot.lane.b32.xlu0 %v2913, 113
        %v3506 = vpop.permute.xlu0 %3505
        %3507 = vrot.lane.b32.xlu0 %v2911, 113
        %v3508 = vpop.permute.xlu0 %3507
        %3509 = vrot.lane.b32.xlu0 %v2915, 113
        %v3510 = vpop.permute.xlu0 %3509
        %v3511 = vsel %vm1682, %v3504, %v3508
        %v3512 = vsel %vm1682, %v3506, %v3510
        %v3513 = vsel %vm1682, %v3508, %v3504
        %v3514 = vsel %vm1682, %v3510, %v3506
        %v3515 = vmul.f32 %v3511, %v1694
        %v3516 = vmul.f32 %v3513, %v1698
        %v3517 = vmul.f32 %v3512, %v1694
        %v3518 = vmul.f32 %v3514, %v1698
        %s3519 = scalar_lea.vmem [#allocation10], 96
        %v3520 = vld [vmem:[%s3519] sm:$0xff]
        %v3521 = vld [vmem:[%s3519 + $0x8] sm:$0xff]
        %3523 = vset.pattern.permute.xlu0 0
        %3524 = vperm.xlu0 %3523, %v3520
        %v3525 = vpop.permute.xlu0 %3524
        %3528 = vset.pattern.permute.xlu0 0
        %3529 = vperm.xlu0 %3528, %v3521
        %v3530 = vpop.permute.xlu0 %3529
        %v3532 = vmul.f32 %v3525, %v3515
        %v3533 = vmul.f32 %v3525, %v3516
        %v3534 = vmul.f32 %v3530, %v3517
        %v3535 = vmul.f32 %v3530, %v3518
        %v3536 = vadd.f32 %v3499, %v3532
        %v3537 = vadd.f32 %v3500, %v3533
        %v3538 = vadd.f32 %v3501, %v3534
        %v3539 = vadd.f32 %v3502, %v3535
        %3540 = vrot.lane.b32.xlu0 %v2909, 112
        %v3541 = vpop.permute.xlu0 %3540
        %3542 = vrot.lane.b32.xlu0 %v2913, 112
        %v3543 = vpop.permute.xlu0 %3542
        %3544 = vrot.lane.b32.xlu0 %v2911, 112
        %v3545 = vpop.permute.xlu0 %3544
        %3546 = vrot.lane.b32.xlu0 %v2915, 112
        %v3547 = vpop.permute.xlu0 %3546
        %v3548 = vsel %vm1734, %v3541, %v3545
        %v3549 = vsel %vm1734, %v3543, %v3547
        %v3550 = vsel %vm1734, %v3545, %v3541
        %v3551 = vsel %vm1734, %v3547, %v3543
        %v3552 = vmul.f32 %v3548, %v1745
        %v3553 = vmul.f32 %v3550, %v1749
        %v3554 = vmul.f32 %v3549, %v1745
        %v3555 = vmul.f32 %v3551, %v1749
        %s3556 = scalar_lea.vmem [#allocation10], 112
        %v3557 = vld [vmem:[%s3556] sm:$0xff]
        %v3558 = vld [vmem:[%s3556 + $0x8] sm:$0xff]
        %3560 = vset.pattern.permute.xlu0 0
        %3561 = vperm.xlu0 %3560, %v3557
        %v3562 = vpop.permute.xlu0 %3561
        %3565 = vset.pattern.permute.xlu0 0
        %3566 = vperm.xlu0 %3565, %v3558
        %v3567 = vpop.permute.xlu0 %3566
        %v3569 = vmul.f32 %v3562, %v3552
        %v3570 = vmul.f32 %v3562, %v3553
        %v3571 = vmul.f32 %v3567, %v3554
        %v3572 = vmul.f32 %v3567, %v3555
        %v3573 = vadd.f32 %v3536, %v3569
        %v3574 = vadd.f32 %v3537, %v3570
        %v3575 = vadd.f32 %v3538, %v3571
        %v3576 = vadd.f32 %v3539, %v3572
        %3577 = vrot.lane.b32.xlu0 %v2909, 111
        %v3578 = vpop.permute.xlu0 %3577
        %3579 = vrot.lane.b32.xlu0 %v2913, 111
        %v3580 = vpop.permute.xlu0 %3579
        %3581 = vrot.lane.b32.xlu0 %v2911, 111
        %v3582 = vpop.permute.xlu0 %3581
        %3583 = vrot.lane.b32.xlu0 %v2915, 111
        %v3584 = vpop.permute.xlu0 %3583
        %v3585 = vsel %vm1785, %v3578, %v3582
        %v3586 = vsel %vm1785, %v3580, %v3584
        %v3587 = vsel %vm1785, %v3582, %v3578
        %v3588 = vsel %vm1785, %v3584, %v3580
        %v3589 = vmul.f32 %v3585, %v1797
        %v3590 = vmul.f32 %v3587, %v1801
        %v3591 = vmul.f32 %v3586, %v1797
        %v3592 = vmul.f32 %v3588, %v1801
        %s3593 = scalar_lea.vmem [#allocation10], 128
        %v3594 = vld [vmem:[%s3593] sm:$0xff]
        %v3595 = vld [vmem:[%s3593 + $0x8] sm:$0xff]
        %3597 = vset.pattern.permute.xlu0 0
        %3598 = vperm.xlu0 %3597, %v3594
        %v3599 = vpop.permute.xlu0 %3598
        %3602 = vset.pattern.permute.xlu0 0
        %3603 = vperm.xlu0 %3602, %v3595
        %v3604 = vpop.permute.xlu0 %3603
        %v3606 = vmul.f32 %v3599, %v3589
        %v3607 = vmul.f32 %v3599, %v3590
        %v3608 = vmul.f32 %v3604, %v3591
        %v3609 = vmul.f32 %v3604, %v3592
        %v3610 = vadd.f32 %v3573, %v3606
        %v3611 = vadd.f32 %v3574, %v3607
        %v3612 = vadd.f32 %v3575, %v3608
        %v3613 = vadd.f32 %v3576, %v3609
        %v3614 = vmul.f32 %v3610, %v3610
        %v3615 = vmul.f32 %v3611, %v3611
        %v3616 = vmul.f32 %v3612, %v3612
        %v3617 = vmul.f32 %v3613, %v3613
        %v3618 = vmul.f32 %v3610, %v3614
        %v3619 = vmul.f32 %v3611, %v3615
        %v3620 = vmul.f32 %v3612, %v3616
        %v3621 = vmul.f32 %v3613, %v3617
        %v3622 = vmul.f32 %v3618, 0.044715
        %v3623 = vmul.f32 %v3619, 0.044715
        %v3624 = vmul.f32 %v3620, 0.044715
        %v3625 = vmul.f32 %v3621, 0.044715
        %v3626 = vadd.f32 %v3610, %v3622
        %v3627 = vadd.f32 %v3611, %v3623
        %v3628 = vadd.f32 %v3612, %v3624
        %v3629 = vadd.f32 %v3613, %v3625
        %v3630 = vmul.f32 %v3626, 0.7978846
        %v3631 = vmul.f32 %v3627, 0.7978846
        %v3632 = vmul.f32 %v3628, 0.7978846
        %v3633 = vmul.f32 %v3629, 0.7978846
        %v3634 = vtanh.pop %v3630
        %v3635 = vtanh.pop %v3631
        %v3636 = vtanh.pop %v3632
        %v3637 = vtanh.pop %v3633
        %v3638 = vadd.f32 %v3634, 1.0
        %v3639 = vadd.f32 %v3635, 1.0
        %v3640 = vadd.f32 %v3636, 1.0
        %v3641 = vadd.f32 %v3637, 1.0
        %v3642 = vmul.f32 %v3638, 0.5
        %v3643 = vmul.f32 %v3639, 0.5
        %v3644 = vmul.f32 %v3640, 0.5
        %v3645 = vmul.f32 %v3641, 0.5
        %v3646 = vmul.f32 %v3610, %v3642
        %v3647 = vmul.f32 %v3611, %v3643
        %v3648 = vmul.f32 %v3612, %v3644
        %v3649 = vmul.f32 %v3613, %v3645
        %3650 = vrot.lane.b32.xlu0 %v3646, 17
        %v3651 = vpop.permute.xlu0 %3650
        %3652 = vrot.lane.b32.xlu0 %v3648, 17
        %v3653 = vpop.permute.xlu0 %3652
        %3654 = vrot.lane.b32.xlu0 %v3647, 17
        %v3655 = vpop.permute.xlu0 %3654
        %3656 = vrot.lane.b32.xlu0 %v3649, 17
        %v3657 = vpop.permute.xlu0 %3656
        %v3658 = vsel %vm1197, %v3651, %v3655
        %v3659 = vsel %vm1197, %v3653, %v3657
        %v3660 = vsel %vm1197, %v3655, %v3651
        %v3661 = vsel %vm1197, %v3657, %v3653
        %v3662 = vmul.f32 %v3660, %v1209
        %v3663 = vmul.f32 %v3658, %v1213
        %v3664 = vmul.f32 %v3661, %v1209
        %v3665 = vmul.f32 %v3659, %v1213
        %v3666 = vld [vmem:[%s13] sm:$0xff]
        %v3667 = vld [vmem:[%s13 + $0x8] sm:$0xff]
        %3669 = vset.pattern.permute.xlu0 0
        %3670 = vperm.xlu0 %3669, %v3666
        %v3671 = vpop.permute.xlu0 %3670
        %3674 = vset.pattern.permute.xlu0 0
        %3675 = vperm.xlu0 %3674, %v3667
        %v3676 = vpop.permute.xlu0 %3675
        %v3678 = vmul.f32 %v3671, %v3662
        %v3679 = vmul.f32 %v3671, %v3663
        %v3680 = vmul.f32 %v3676, %v3664
        %v3681 = vmul.f32 %v3676, %v3665
        %v3682 = vadd.f32 %v3678, 0.0
        %v3683 = vadd.f32 %v3679, 0.0
        %v3684 = vadd.f32 %v3680, 0.0
        %v3685 = vadd.f32 %v3681, 0.0
        %3686 = vrot.lane.b32.xlu0 %v3646, 16
        %v3687 = vpop.permute.xlu0 %3686
        %3688 = vrot.lane.b32.xlu0 %v3648, 16
        %v3689 = vpop.permute.xlu0 %3688
        %3690 = vrot.lane.b32.xlu0 %v3647, 16
        %v3691 = vpop.permute.xlu0 %3690
        %3692 = vrot.lane.b32.xlu0 %v3649, 16
        %v3693 = vpop.permute.xlu0 %3692
        %v3694 = vsel %vm1249, %v3687, %v3691
        %v3695 = vsel %vm1249, %v3689, %v3693
        %v3696 = vsel %vm1249, %v3691, %v3687
        %v3697 = vsel %vm1249, %v3693, %v3689
        %v3698 = vmul.f32 %v3696, %v1260
        %v3699 = vmul.f32 %v3694, %v1264
        %v3700 = vmul.f32 %v3697, %v1260
        %v3701 = vmul.f32 %v3695, %v1264
        %s3702 = scalar_lea.vmem %s13, 16
        %v3703 = vld [vmem:[%s3702] sm:$0xff]
        %v3704 = vld [vmem:[%s3702 + $0x8] sm:$0xff]
        %3706 = vset.pattern.permute.xlu0 0
        %3707 = vperm.xlu0 %3706, %v3703
        %v3708 = vpop.permute.xlu0 %3707
        %3711 = vset.pattern.permute.xlu0 0
        %3712 = vperm.xlu0 %3711, %v3704
        %v3713 = vpop.permute.xlu0 %3712
        %v3715 = vmul.f32 %v3708, %v3698
        %v3716 = vmul.f32 %v3708, %v3699
        %v3717 = vmul.f32 %v3713, %v3700
        %v3718 = vmul.f32 %v3713, %v3701
        %v3719 = vadd.f32 %v3682, %v3715
        %v3720 = vadd.f32 %v3683, %v3716
        %v3721 = vadd.f32 %v3684, %v3717
        %v3722 = vadd.f32 %v3685, %v3718
        %3723 = vrot.lane.b32.xlu0 %v3646, 15
        %v3724 = vpop.permute.xlu0 %3723
        %3725 = vrot.lane.b32.xlu0 %v3648, 15
        %v3726 = vpop.permute.xlu0 %3725
        %3727 = vrot.lane.b32.xlu0 %v3647, 15
        %v3728 = vpop.permute.xlu0 %3727
        %3729 = vrot.lane.b32.xlu0 %v3649, 15
        %v3730 = vpop.permute.xlu0 %3729
        %v3731 = vsel %vm1300, %v3724, %v3728
        %v3732 = vsel %vm1300, %v3726, %v3730
        %v3733 = vsel %vm1300, %v3728, %v3724
        %v3734 = vsel %vm1300, %v3730, %v3726
        %v3735 = vmul.f32 %v3733, %v1312
        %v3736 = vmul.f32 %v3731, %v1316
        %v3737 = vmul.f32 %v3734, %v1312
        %v3738 = vmul.f32 %v3732, %v1316
        %s3739 = scalar_lea.vmem %s13, 32
        %v3740 = vld [vmem:[%s3739] sm:$0xff]
        %v3741 = vld [vmem:[%s3739 + $0x8] sm:$0xff]
        %3743 = vset.pattern.permute.xlu0 0
        %3744 = vperm.xlu0 %3743, %v3740
        %v3745 = vpop.permute.xlu0 %3744
        %3748 = vset.pattern.permute.xlu0 0
        %3749 = vperm.xlu0 %3748, %v3741
        %v3750 = vpop.permute.xlu0 %3749
        %v3752 = vmul.f32 %v3745, %v3735
        %v3753 = vmul.f32 %v3745, %v3736
        %v3754 = vmul.f32 %v3750, %v3737
        %v3755 = vmul.f32 %v3750, %v3738
        %v3756 = vadd.f32 %v3719, %v3752
        %v3757 = vadd.f32 %v3720, %v3753
        %v3758 = vadd.f32 %v3721, %v3754
        %v3759 = vadd.f32 %v3722, %v3755
        %3760 = vrot.lane.b32.xlu0 %v3646, 1
        %v3761 = vpop.permute.xlu0 %3760
        %3762 = vrot.lane.b32.xlu0 %v3648, 1
        %v3763 = vpop.permute.xlu0 %3762
        %3764 = vrot.lane.b32.xlu0 %v3647, 1
        %v3765 = vpop.permute.xlu0 %3764
        %3766 = vrot.lane.b32.xlu0 %v3649, 1
        %v3767 = vpop.permute.xlu0 %3766
        %v3768 = vsel %vm1455, %v3761, %v3765
        %v3769 = vsel %vm1455, %v3763, %v3767
        %v3770 = vsel %vm1455, %v3765, %v3761
        %v3771 = vsel %vm1455, %v3767, %v3763
        %v3772 = vmul.f32 %v3770, %v1466
        %v3773 = vmul.f32 %v3768, %v1470
        %v3774 = vmul.f32 %v3771, %v1466
        %v3775 = vmul.f32 %v3769, %v1470
        %s3776 = scalar_lea.vmem %s13, 48
        %v3777 = vld [vmem:[%s3776] sm:$0xff]
        %v3778 = vld [vmem:[%s3776 + $0x8] sm:$0xff]
        %3780 = vset.pattern.permute.xlu0 0
        %3781 = vperm.xlu0 %3780, %v3777
        %v3782 = vpop.permute.xlu0 %3781
        %3785 = vset.pattern.permute.xlu0 0
        %3786 = vperm.xlu0 %3785, %v3778
        %v3787 = vpop.permute.xlu0 %3786
        %v3789 = vmul.f32 %v3782, %v3772
        %v3790 = vmul.f32 %v3782, %v3773
        %v3791 = vmul.f32 %v3787, %v3774
        %v3792 = vmul.f32 %v3787, %v3775
        %v3793 = vadd.f32 %v3756, %v3789
        %v3794 = vadd.f32 %v3757, %v3790
        %v3795 = vadd.f32 %v3758, %v3791
        %v3796 = vadd.f32 %v3759, %v3792
        %s3797 = scalar_lea.vmem %s13, 64
        %v3798 = vld [vmem:[%s3797] sm:$0xff]
        %v3799 = vld [vmem:[%s3797 + $0x8] sm:$0xff]
        %3801 = vset.pattern.permute.xlu0 0
        %3802 = vperm.xlu0 %3801, %v3798
        %v3803 = vpop.permute.xlu0 %3802
        %3806 = vset.pattern.permute.xlu0 0
        %3807 = vperm.xlu0 %3806, %v3799
        %v3808 = vpop.permute.xlu0 %3807
        %v3810 = vmul.f32 %v3803, %v3646
        %v3811 = vmul.f32 %v3803, %v3647
        %v3812 = vmul.f32 %v3808, %v3648
        %v3813 = vmul.f32 %v3808, %v3649
        %v3814 = vadd.f32 %v3793, %v3810
        %v3815 = vadd.f32 %v3794, %v3811
        %v3816 = vadd.f32 %v3795, %v3812
        %v3817 = vadd.f32 %v3796, %v3813
        %3818 = vrot.lane.b32.xlu0 %v3646, 127
        %v3819 = vpop.permute.xlu0 %3818
        %3820 = vrot.lane.b32.xlu0 %v3648, 127
        %v3821 = vpop.permute.xlu0 %3820
        %3822 = vrot.lane.b32.xlu0 %v3647, 127
        %v3823 = vpop.permute.xlu0 %3822
        %3824 = vrot.lane.b32.xlu0 %v3649, 127
        %v3825 = vpop.permute.xlu0 %3824
        %v3826 = vsel %vm1527, %v3819, %v3823
        %v3827 = vsel %vm1527, %v3821, %v3825
        %v3828 = vsel %vm1527, %v3823, %v3819
        %v3829 = vsel %vm1527, %v3825, %v3821
        %v3830 = vmul.f32 %v3826, %v1538
        %v3831 = vmul.f32 %v3828, %v1542
        %v3832 = vmul.f32 %v3827, %v1538
        %v3833 = vmul.f32 %v3829, %v1542
        %s3834 = scalar_lea.vmem %s13, 80
        %v3835 = vld [vmem:[%s3834] sm:$0xff]
        %v3836 = vld [vmem:[%s3834 + $0x8] sm:$0xff]
        %3838 = vset.pattern.permute.xlu0 0
        %3839 = vperm.xlu0 %3838, %v3835
        %v3840 = vpop.permute.xlu0 %3839
        %3843 = vset.pattern.permute.xlu0 0
        %3844 = vperm.xlu0 %3843, %v3836
        %v3845 = vpop.permute.xlu0 %3844
        %v3847 = vmul.f32 %v3840, %v3830
        %v3848 = vmul.f32 %v3840, %v3831
        %v3849 = vmul.f32 %v3845, %v3832
        %v3850 = vmul.f32 %v3845, %v3833
        %v3851 = vadd.f32 %v3814, %v3847
        %v3852 = vadd.f32 %v3815, %v3848
        %v3853 = vadd.f32 %v3816, %v3849
        %v3854 = vadd.f32 %v3817, %v3850
        %3855 = vrot.lane.b32.xlu0 %v3646, 113
        %v3856 = vpop.permute.xlu0 %3855
        %3857 = vrot.lane.b32.xlu0 %v3648, 113
        %v3858 = vpop.permute.xlu0 %3857
        %3859 = vrot.lane.b32.xlu0 %v3647, 113
        %v3860 = vpop.permute.xlu0 %3859
        %3861 = vrot.lane.b32.xlu0 %v3649, 113
        %v3862 = vpop.permute.xlu0 %3861
        %v3863 = vsel %vm1682, %v3856, %v3860
        %v3864 = vsel %vm1682, %v3858, %v3862
        %v3865 = vsel %vm1682, %v3860, %v3856
        %v3866 = vsel %vm1682, %v3862, %v3858
        %v3867 = vmul.f32 %v3863, %v1694
        %v3868 = vmul.f32 %v3865, %v1698
        %v3869 = vmul.f32 %v3864, %v1694
        %v3870 = vmul.f32 %v3866, %v1698
        %s3871 = scalar_lea.vmem %s13, 96
        %v3872 = vld [vmem:[%s3871] sm:$0xff]
        %v3873 = vld [vmem:[%s3871 + $0x8] sm:$0xff]
        %3875 = vset.pattern.permute.xlu0 0
        %3876 = vperm.xlu0 %3875, %v3872
        %v3877 = vpop.permute.xlu0 %3876
        %3880 = vset.pattern.permute.xlu0 0
        %3881 = vperm.xlu0 %3880, %v3873
        %v3882 = vpop.permute.xlu0 %3881
        %v3884 = vmul.f32 %v3877, %v3867
        %v3885 = vmul.f32 %v3877, %v3868
        %v3886 = vmul.f32 %v3882, %v3869
        %v3887 = vmul.f32 %v3882, %v3870
        %v3888 = vadd.f32 %v3851, %v3884
        %v3889 = vadd.f32 %v3852, %v3885
        %v3890 = vadd.f32 %v3853, %v3886
        %v3891 = vadd.f32 %v3854, %v3887
        %3892 = vrot.lane.b32.xlu0 %v3646, 112
        %v3893 = vpop.permute.xlu0 %3892
        %3894 = vrot.lane.b32.xlu0 %v3648, 112
        %v3895 = vpop.permute.xlu0 %3894
        %3896 = vrot.lane.b32.xlu0 %v3647, 112
        %v3897 = vpop.permute.xlu0 %3896
        %3898 = vrot.lane.b32.xlu0 %v3649, 112
        %v3899 = vpop.permute.xlu0 %3898
        %v3900 = vsel %vm1734, %v3893, %v3897
        %v3901 = vsel %vm1734, %v3895, %v3899
        %v3902 = vsel %vm1734, %v3897, %v3893
        %v3903 = vsel %vm1734, %v3899, %v3895
        %v3904 = vmul.f32 %v3900, %v1745
        %v3905 = vmul.f32 %v3902, %v1749
        %v3906 = vmul.f32 %v3901, %v1745
        %v3907 = vmul.f32 %v3903, %v1749
        %s3908 = scalar_lea.vmem %s13, 112
        %v3909 = vld [vmem:[%s3908] sm:$0xff]
        %v3910 = vld [vmem:[%s3908 + $0x8] sm:$0xff]
        %3912 = vset.pattern.permute.xlu0 0
        %3913 = vperm.xlu0 %3912, %v3909
        %v3914 = vpop.permute.xlu0 %3913
        %3917 = vset.pattern.permute.xlu0 0
        %3918 = vperm.xlu0 %3917, %v3910
        %v3919 = vpop.permute.xlu0 %3918
        %v3921 = vmul.f32 %v3914, %v3904
        %v3922 = vmul.f32 %v3914, %v3905
        %v3923 = vmul.f32 %v3919, %v3906
        %v3924 = vmul.f32 %v3919, %v3907
        %v3925 = vadd.f32 %v3888, %v3921
        %v3926 = vadd.f32 %v3889, %v3922
        %v3927 = vadd.f32 %v3890, %v3923
        %v3928 = vadd.f32 %v3891, %v3924
        %3929 = vrot.lane.b32.xlu0 %v3646, 111
        %v3930 = vpop.permute.xlu0 %3929
        %3931 = vrot.lane.b32.xlu0 %v3648, 111
        %v3932 = vpop.permute.xlu0 %3931
        %3933 = vrot.lane.b32.xlu0 %v3647, 111
        %v3934 = vpop.permute.xlu0 %3933
        %3935 = vrot.lane.b32.xlu0 %v3649, 111
        %v3936 = vpop.permute.xlu0 %3935
        %v3937 = vsel %vm1785, %v3930, %v3934
        %v3938 = vsel %vm1785, %v3932, %v3936
        %v3939 = vsel %vm1785, %v3934, %v3930
        %v3940 = vsel %vm1785, %v3936, %v3932
        %v3941 = vmul.f32 %v3937, %v1797
        %v3942 = vmul.f32 %v3939, %v1801
        %v3943 = vmul.f32 %v3938, %v1797
        %v3944 = vmul.f32 %v3940, %v1801
        %s3945 = scalar_lea.vmem %s13, 128
        %v3946 = vld [vmem:[%s3945] sm:$0xff]
        %v3947 = vld [vmem:[%s3945 + $0x8] sm:$0xff]
        %3949 = vset.pattern.permute.xlu0 0
        %3950 = vperm.xlu0 %3949, %v3946
        %v3951 = vpop.permute.xlu0 %3950
        %3954 = vset.pattern.permute.xlu0 0
        %3955 = vperm.xlu0 %3954, %v3947
        %v3956 = vpop.permute.xlu0 %3955
        %v3958 = vmul.f32 %v3951, %v3941
        %v3959 = vmul.f32 %v3951, %v3942
        %v3960 = vmul.f32 %v3956, %v3943
        %v3961 = vmul.f32 %v3956, %v3944
        %v3962 = vadd.f32 %v3925, %v3958
        %v3963 = vadd.f32 %v3926, %v3959
        %v3964 = vadd.f32 %v3927, %v3960
        %v3965 = vadd.f32 %v3928, %v3961
        %v3966 = vadd.f32 %v3290, %v3962
        %v3967 = vadd.f32 %v3292, %v3963
        %v3968 = vadd.f32 %v3294, %v3964
        %v3969 = vadd.f32 %v3296, %v3965
        %v3970 = vadd.f32 %v3966, %v2830
        %v3971 = vadd.f32 %v3967, %v2831
        %v3972 = vadd.f32 %v3968, %v2832
        %v3973 = vadd.f32 %v3969, %v2833
        %v3975 = vsel %vm2167, 0.0625, 0
        %3977 = vmatprep.subr.mxu0 0.0
        %3978 = vmatpush1.msra.mxu0 0.0
        %3979 = vmatprep.subr.mxu0 0.0
        %3980 = vmatpush1.msra.mxu0 0.0
        %3981 = vmatprep.subr.mxu0 0.0
        %3982 = vmatpush1.msra.mxu0 0.0
        %3983 = vmatprep.subr.mxu0 0.0
        %3984 = vmatpush1.msra.mxu0 0.0
        %3985 = vmatprep.subr.mxu0 0.0
        %3986 = vmatpush1.msra.mxu0 0.0
        %3987 = vmatprep.subr.mxu0 0.0
        %3988 = vmatpush1.msra.mxu0 0.0
        %3989 = vmatprep.subr.mxu0 0.0
        %3990 = vmatpush1.msra.mxu0 0.0
        %3991 = vmatprep.subr.mxu0 0.0
        %3992 = vmatpush1.msra.mxu0 0.0
        %3993 = vmatprep.subr.mxu0 0.0
        %3994 = vmatpush1.msra.mxu0 0.0
        %3995 = vmatprep.subr.mxu0 0.0
        %3996 = vmatpush1.msra.mxu0 0.0
        %3997 = vmatprep.subr.mxu0 0.0
        %3998 = vmatpush1.msra.mxu0 0.0
        %3999 = vmatprep.subr.mxu0 0.0
        %4000 = vmatpush1.msra.mxu0 0.0
        %4001 = vmatprep.subr.mxu0 0.0
        %4002 = vmatpush1.msra.mxu0 0.0
        %4003 = vmatprep.subr.mxu0 0.0
        %4004 = vmatpush1.msra.mxu0 0.0
        %4005 = vmatprep.subr.mxu0 %v3973
        %4006 = vmatpush1.msra.mxu0 %v3972
        %4007 = vmatprep.subr.mxu0 %v3971
        %4008 = vmatpush1.msra.mxu0 %v3970
        %4009 = vmatprep.subr.mxu0 0.0
        %4010 = vmatpush2.msra.mxu0 0.0
        %4011 = vmatprep.subr.mxu0 0.0
        %4012 = vmatpush2.msra.mxu0 0.0
        %4013 = vmatprep.subr.mxu0 0.0
        %4014 = vmatpush2.msra.mxu0 0.0
        %4015 = vmatprep.subr.mxu0 0.0
        %4016 = vmatpush2.msra.mxu0 0.0
        %4017 = vmatprep.subr.mxu0 0.0
        %4018 = vmatpush2.msra.mxu0 0.0
        %4019 = vmatprep.subr.mxu0 0.0
        %4020 = vmatpush2.msra.mxu0 0.0
        %4021 = vmatprep.subr.mxu0 0.0
        %4022 = vmatpush2.msra.mxu0 0.0
        %4023 = vmatprep.subr.mxu0 0.0
        %4024 = vmatpush2.msra.mxu0 0.0
        %4025 = vmatprep.subr.mxu0 0.0
        %4026 = vmatpush2.msra.mxu0 0.0
        %4027 = vmatprep.subr.mxu0 0.0
        %4028 = vmatpush2.msra.mxu0 0.0
        %4029 = vmatprep.subr.mxu0 0.0
        %4030 = vmatpush2.msra.mxu0 0.0
        %4031 = vmatprep.subr.mxu0 0.0
        %4032 = vmatpush2.msra.mxu0 0.0
        %4033 = vmatprep.subr.mxu0 0.0
        %4034 = vmatpush2.msra.mxu0 0.0
        %4035 = vmatprep.subr.mxu0 0.0
        %4036 = vmatpush2.msra.mxu0 0.0
        %4037 = vmatprep.subr.mxu0 0.0
        %4038 = vmatpush2.msra.mxu0 0.0
        %4039 = vmatprep.subr.mxu0 0.0
        %4040 = vmatpush2.msra.mxu0 0.0
        %4041 = vmatprep.mubr.f32.mxu0 0.0
        %4042 = vmatmul.mubr.f32.gmra.mxu0 %v3975
        %v4043 = vpop.f32.mrf.mxu0
        %v4044 = vadd.f32 0.0, %v4043
        %v4045 = vpop.f32.mrf.mxu0
        %v4046 = vadd.f32 0.0, %v4045
        %4047 = vdwg.mxu0
        %v4048 = vlaneseq
        %v4049 = vshrl.u32 %v4048, 7
        %v4050 = vsub.s32 0, %v4049
        %v4051 = vrot.slane %v4044, %v4050
        %v4052 = vlaneseq
        %v4053 = vshrl.u32 %v4052, 7
        %v4054 = vsub.s32 0, %v4053
        %v4055 = vrot.slane %v4046, %v4054
        %v4056 = vsub.f32 %v3970, %v4051
        %v4057 = vsub.f32 %v3971, %v4055
        %v4058 = vsub.f32 %v3972, %v4051
        %v4059 = vsub.f32 %v3973, %v4055
        %v4060 = vmul.f32 %v4056, %v4056
        %v4061 = vmul.f32 %v4057, %v4057
        %v4062 = vmul.f32 %v4058, %v4058
        %v4063 = vmul.f32 %v4059, %v4059
        %4064 = vmatprep.subr.mxu0 0.0
        %4065 = vmatpush1.msra.mxu0 0.0
        %4066 = vmatprep.subr.mxu0 0.0
        %4067 = vmatpush1.msra.mxu0 0.0
        %4068 = vmatprep.subr.mxu0 0.0
        %4069 = vmatpush1.msra.mxu0 0.0
        %4070 = vmatprep.subr.mxu0 0.0
        %4071 = vmatpush1.msra.mxu0 0.0
        %4072 = vmatprep.subr.mxu0 0.0
        %4073 = vmatpush1.msra.mxu0 0.0
        %4074 = vmatprep.subr.mxu0 0.0
        %4075 = vmatpush1.msra.mxu0 0.0
        %4076 = vmatprep.subr.mxu0 0.0
        %4077 = vmatpush1.msra.mxu0 0.0
        %4078 = vmatprep.subr.mxu0 0.0
        %4079 = vmatpush1.msra.mxu0 0.0
        %4080 = vmatprep.subr.mxu0 0.0
        %4081 = vmatpush1.msra.mxu0 0.0
        %4082 = vmatprep.subr.mxu0 0.0
        %4083 = vmatpush1.msra.mxu0 0.0
        %4084 = vmatprep.subr.mxu0 0.0
        %4085 = vmatpush1.msra.mxu0 0.0
        %4086 = vmatprep.subr.mxu0 0.0
        %4087 = vmatpush1.msra.mxu0 0.0
        %4088 = vmatprep.subr.mxu0 0.0
        %4089 = vmatpush1.msra.mxu0 0.0
        %4090 = vmatprep.subr.mxu0 0.0
        %4091 = vmatpush1.msra.mxu0 0.0
        %4092 = vmatprep.subr.mxu0 %v4063
        %4093 = vmatpush1.msra.mxu0 %v4062
        %4094 = vmatprep.subr.mxu0 %v4061
        %4095 = vmatpush1.msra.mxu0 %v4060
        %4096 = vmatprep.subr.mxu0 0.0
        %4097 = vmatpush2.msra.mxu0 0.0
        %4098 = vmatprep.subr.mxu0 0.0
        %4099 = vmatpush2.msra.mxu0 0.0
        %4100 = vmatprep.subr.mxu0 0.0
        %4101 = vmatpush2.msra.mxu0 0.0
        %4102 = vmatprep.subr.mxu0 0.0
        %4103 = vmatpush2.msra.mxu0 0.0
        %4104 = vmatprep.subr.mxu0 0.0
        %4105 = vmatpush2.msra.mxu0 0.0
        %4106 = vmatprep.subr.mxu0 0.0
        %4107 = vmatpush2.msra.mxu0 0.0
        %4108 = vmatprep.subr.mxu0 0.0
        %4109 = vmatpush2.msra.mxu0 0.0
        %4110 = vmatprep.subr.mxu0 0.0
        %4111 = vmatpush2.msra.mxu0 0.0
        %4112 = vmatprep.subr.mxu0 0.0
        %4113 = vmatpush2.msra.mxu0 0.0
        %4114 = vmatprep.subr.mxu0 0.0
        %4115 = vmatpush2.msra.mxu0 0.0
        %4116 = vmatprep.subr.mxu0 0.0
        %4117 = vmatpush2.msra.mxu0 0.0
        %4118 = vmatprep.subr.mxu0 0.0
        %4119 = vmatpush2.msra.mxu0 0.0
        %4120 = vmatprep.subr.mxu0 0.0
        %4121 = vmatpush2.msra.mxu0 0.0
        %4122 = vmatprep.subr.mxu0 0.0
        %4123 = vmatpush2.msra.mxu0 0.0
        %4124 = vmatprep.subr.mxu0 0.0
        %4125 = vmatpush2.msra.mxu0 0.0
        %4126 = vmatprep.subr.mxu0 0.0
        %4127 = vmatpush2.msra.mxu0 0.0
        %4128 = vmatprep.mubr.f32.mxu0 0.0
        %4129 = vmatmul.mubr.f32.gmra.mxu0 %v3975
        %v4130 = vpop.f32.mrf.mxu0
        %v4131 = vadd.f32 1e-05, %v4130
        %v4132 = vpop.f32.mrf.mxu0
        %v4133 = vadd.f32 1e-05, %v4132
        %4134 = vdwg.mxu0
        %v4135 = vrsqrt.pop %v4131
        %v4136 = vrsqrt.pop %v4133
        %v4137 = vlaneseq
        %v4138 = vshrl.u32 %v4137, 7
        %v4139 = vsub.s32 0, %v4138
        %v4140 = vrot.slane %v4135, %v4139
        %v4141 = vlaneseq
        %v4142 = vshrl.u32 %v4141, 7
        %v4143 = vsub.s32 0, %v4142
        %v4144 = vrot.slane %v4136, %v4143
        %v4145 = vmul.f32 %v4056, %v4140
        %v4146 = vmul.f32 %v4057, %v4144
        %v4147 = vmul.f32 %v4058, %v4140
        %v4148 = vmul.f32 %v4059, %v4144
        %v4149 = vld [vmem:[%s14] sm:$0xff]
        %v4150 = vld [vmem:[%s14 + $0x8] sm:$0xff]
        %4152 = vset.pattern.permute.xlu0 0
        %4153 = vperm.xlu0 %4152, %v4149
        %v4154 = vpop.permute.xlu0 %4153
        %4157 = vset.pattern.permute.xlu0 0
        %4158 = vperm.xlu0 %4157, %v4150
        %v4159 = vpop.permute.xlu0 %4158
        %v4161 = vmul.f32 %v4145, %v4154
        %v4162 = vmul.f32 %v4146, %v4154
        %v4163 = vmul.f32 %v4147, %v4159
        %v4164 = vmul.f32 %v4148, %v4159
        %v4165 = vld [vmem:[%s15] sm:$0xff]
        %v4166 = vld [vmem:[%s15 + $0x8] sm:$0xff]
        %4168 = vset.pattern.permute.xlu0 0
        %4169 = vperm.xlu0 %4168, %v4165
        %v4170 = vpop.permute.xlu0 %4169
        %4173 = vset.pattern.permute.xlu0 0
        %4174 = vperm.xlu0 %4173, %v4166
        %v4175 = vpop.permute.xlu0 %4174
        %v4177 = vadd.f32 %v4161, %v4170
        %v4178 = vadd.f32 %v4162, %v4170
        %v4179 = vadd.f32 %v4163, %v4175
        %v4180 = vadd.f32 %v4164, %v4175
        %v4181 = vld [vmem:[#allocation11] sm:$0xff]
        %v4182 = vld [vmem:[#allocation11 + $0x8] sm:$0xff]
        %v4183 = vld [vmem:[#allocation11 + $0x10] sm:$0xff]
        %v4184 = vld [vmem:[#allocation11 + $0x18] sm:$0xff]
        %v4185 = vld [vmem:[#allocation11 + $0x20] sm:$0xff]
        %v4186 = vld [vmem:[#allocation11 + $0x28] sm:$0xff]
        %v4187 = vld [vmem:[#allocation11 + $0x30] sm:$0xff]
        %v4188 = vld [vmem:[#allocation11 + $0x38] sm:$0xff]
        %v4189 = vpack.c.bf16 %v4182, %v4181
        %v4190 = vpack.c.bf16 %v4184, %v4183
        %v4191 = vpack.c.bf16 %v4186, %v4185
        %v4192 = vpack.c.bf16 %v4188, %v4187
        %v4193 = vpack.c.bf16 %v4179, %v4177
        %v4194 = vpack.c.bf16 %v4180, %v4178
        %v4196 = vsel %vm2167, %v4189, 0
        %v4199 = vsel %vm2167, %v4190, 0
        %v4202 = vsel %vm2167, %v4191, 0
        %v4205 = vsel %vm2167, %v4192, 0
        %4207 = vmatprep.subr.bf16.mxu0 0
        %4208 = vmatpush1.bf16.msra.mxu0 0
        %4209 = vmatprep.subr.bf16.mxu0 0
        %4210 = vmatpush1.bf16.msra.mxu0 0
        %4211 = vmatprep.subr.bf16.mxu0 0
        %4212 = vmatpush1.bf16.msra.mxu0 0
        %4213 = vmatprep.subr.bf16.mxu0 0
        %4214 = vmatpush1.bf16.msra.mxu0 0
        %4215 = vmatprep.subr.bf16.mxu0 0
        %4216 = vmatpush1.bf16.msra.mxu0 0
        %4217 = vmatprep.subr.bf16.mxu0 0
        %4218 = vmatpush1.bf16.msra.mxu0 0
        %4219 = vmatprep.subr.bf16.mxu0 0
        %4220 = vmatpush1.bf16.msra.mxu0 0
        %4221 = vmatprep.subr.bf16.mxu0 %v4194
        %4222 = vmatpush1.bf16.msra.mxu0 %v4193
        %4223 = vmatprep.subr.bf16.mxu0 0
        %4224 = vmatpush2.bf16.msra.mxu0 0
        %4225 = vmatprep.subr.bf16.mxu0 0
        %4226 = vmatpush2.bf16.msra.mxu0 0
        %4227 = vmatprep.subr.bf16.mxu0 0
        %4228 = vmatpush2.bf16.msra.mxu0 0
        %4229 = vmatprep.subr.bf16.mxu0 0
        %4230 = vmatpush2.bf16.msra.mxu0 0
        %4231 = vmatprep.subr.bf16.mxu0 0
        %4232 = vmatpush2.bf16.msra.mxu0 0
        %4233 = vmatprep.subr.bf16.mxu0 0
        %4234 = vmatpush2.bf16.msra.mxu0 0
        %4235 = vmatprep.subr.bf16.mxu0 0
        %4236 = vmatpush2.bf16.msra.mxu0 0
        %4237 = vmatprep.subr.bf16.mxu0 0
        %4238 = vmatpush2.bf16.msra.mxu0 0
        %4239 = vmatprep.mubr.bf16.mxu0 0
        %4240 = vmatmul.mubr.bf16.gmra.mxu0 %v4196
        %v4241 = vpop.f32.mrf.mxu0
        %v4242 = vadd.f32 0.0, %v4241
        %v4243 = vpop.f32.mrf.mxu0
        %v4244 = vadd.f32 0.0, %v4243
        %v4245 = vpop.f32.mrf.mxu0
        %v4246 = vadd.f32 0.0, %v4245
        %v4247 = vpop.f32.mrf.mxu0
        %v4248 = vadd.f32 0.0, %v4247
        %4249 = vmatprep.mubr.bf16.mxu0 0
        %4250 = vmatmul.mubr.bf16.gmra.mxu0 %v4199
        %v4251 = vpop.f32.mrf.mxu0
        %v4252 = vadd.f32 0.0, %v4251
        %v4253 = vpop.f32.mrf.mxu0
        %v4254 = vadd.f32 0.0, %v4253
        %v4255 = vpop.f32.mrf.mxu0
        %v4256 = vadd.f32 0.0, %v4255
        %v4257 = vpop.f32.mrf.mxu0
        %v4258 = vadd.f32 0.0, %v4257
        %4259 = vmatprep.mubr.bf16.mxu0 0
        %4260 = vmatmul.mubr.bf16.gmra.mxu0 %v4202
        %v4261 = vpop.f32.mrf.mxu0
        %v4262 = vadd.f32 0.0, %v4261
        %v4263 = vpop.f32.mrf.mxu0
        %v4264 = vadd.f32 0.0, %v4263
        %v4265 = vpop.f32.mrf.mxu0
        %v4266 = vadd.f32 0.0, %v4265
        %v4267 = vpop.f32.mrf.mxu0
        %v4268 = vadd.f32 0.0, %v4267
        %4269 = vmatprep.mubr.bf16.mxu0 0
        %4270 = vmatmul.mubr.bf16.gmra.mxu0 %v4205
        %v4271 = vpop.f32.mrf.mxu0
        %v4272 = vadd.f32 0.0, %v4271
        %v4273 = vpop.f32.mrf.mxu0
        %v4274 = vadd.f32 0.0, %v4273
        %v4275 = vpop.f32.mrf.mxu0
        %v4276 = vadd.f32 0.0, %v4275
        %v4277 = vpop.f32.mrf.mxu0
        %v4278 = vadd.f32 0.0, %v4277
        %4279 = vdwg.mxu0
        %v4280 = vmul.f32 %v4242, %v4242
        %v4281 = vmul.f32 %v4244, %v4244
        %v4282 = vmul.f32 %v4246, %v4246
        %v4283 = vmul.f32 %v4248, %v4248
        %v4284 = vmul.f32 %v4252, %v4252
        %v4285 = vmul.f32 %v4254, %v4254
        %v4286 = vmul.f32 %v4256, %v4256
        %v4287 = vmul.f32 %v4258, %v4258
        %v4288 = vmul.f32 %v4262, %v4262
        %v4289 = vmul.f32 %v4264, %v4264
        %v4290 = vmul.f32 %v4266, %v4266
        %v4291 = vmul.f32 %v4268, %v4268
        %v4292 = vmul.f32 %v4272, %v4272
        %v4293 = vmul.f32 %v4274, %v4274
        %v4294 = vmul.f32 %v4276, %v4276
        %v4295 = vmul.f32 %v4278, %v4278
        %v4296 = vmul.f32 %v4242, %v4280
        %v4297 = vmul.f32 %v4244, %v4281
        %v4298 = vmul.f32 %v4246, %v4282
        %v4299 = vmul.f32 %v4248, %v4283
        %v4300 = vmul.f32 %v4252, %v4284
        %v4301 = vmul.f32 %v4254, %v4285
        %v4302 = vmul.f32 %v4256, %v4286
        %v4303 = vmul.f32 %v4258, %v4287
        %v4304 = vmul.f32 %v4262, %v4288
        %v4305 = vmul.f32 %v4264, %v4289
        %v4306 = vmul.f32 %v4266, %v4290
        %v4307 = vmul.f32 %v4268, %v4291
        %v4308 = vmul.f32 %v4272, %v4292
        %v4309 = vmul.f32 %v4274, %v4293
        %v4310 = vmul.f32 %v4276, %v4294
        %v4311 = vmul.f32 %v4278, %v4295
        %v4312 = vmul.f32 %v4296, 0.044715
        %v4313 = vmul.f32 %v4297, 0.044715
        %v4314 = vmul.f32 %v4298, 0.044715
        %v4315 = vmul.f32 %v4299, 0.044715
        %v4316 = vmul.f32 %v4300, 0.044715
        %v4317 = vmul.f32 %v4301, 0.044715
        %v4318 = vmul.f32 %v4302, 0.044715
        %v4319 = vmul.f32 %v4303, 0.044715
        %v4320 = vmul.f32 %v4304, 0.044715
        %v4321 = vmul.f32 %v4305, 0.044715
        %v4322 = vmul.f32 %v4306, 0.044715
        %v4323 = vmul.f32 %v4307, 0.044715
        %v4324 = vmul.f32 %v4308, 0.044715
        %v4325 = vmul.f32 %v4309, 0.044715
        %v4326 = vmul.f32 %v4310, 0.044715
        %v4327 = vmul.f32 %v4311, 0.044715
        %v4328 = vadd.f32 %v4242, %v4312
        %v4329 = vadd.f32 %v4244, %v4313
        %v4330 = vadd.f32 %v4246, %v4314
        %v4331 = vadd.f32 %v4248, %v4315
        %v4332 = vadd.f32 %v4252, %v4316
        %v4333 = vadd.f32 %v4254, %v4317
        %v4334 = vadd.f32 %v4256, %v4318
        %v4335 = vadd.f32 %v4258, %v4319
        %v4336 = vadd.f32 %v4262, %v4320
        %v4337 = vadd.f32 %v4264, %v4321
        %v4338 = vadd.f32 %v4266, %v4322
        %v4339 = vadd.f32 %v4268, %v4323
        %v4340 = vadd.f32 %v4272, %v4324
        %v4341 = vadd.f32 %v4274, %v4325
        %v4342 = vadd.f32 %v4276, %v4326
        %v4343 = vadd.f32 %v4278, %v4327
        %v4344 = vmul.f32 %v4328, 0.7978846
        %v4345 = vmul.f32 %v4329, 0.7978846
        %v4346 = vmul.f32 %v4330, 0.7978846
        %v4347 = vmul.f32 %v4331, 0.7978846
        %v4348 = vmul.f32 %v4332, 0.7978846
        %v4349 = vmul.f32 %v4333, 0.7978846
        %v4350 = vmul.f32 %v4334, 0.7978846
        %v4351 = vmul.f32 %v4335, 0.7978846
        %v4352 = vmul.f32 %v4336, 0.7978846
        %v4353 = vmul.f32 %v4337, 0.7978846
        %v4354 = vmul.f32 %v4338, 0.7978846
        %v4355 = vmul.f32 %v4339, 0.7978846
        %v4356 = vmul.f32 %v4340, 0.7978846
        %v4357 = vmul.f32 %v4341, 0.7978846
        %v4358 = vmul.f32 %v4342, 0.7978846
        %v4359 = vmul.f32 %v4343, 0.7978846
        %v4360 = vtanh.pop %v4344
        %v4361 = vtanh.pop %v4345
        %v4362 = vtanh.pop %v4346
        %v4363 = vtanh.pop %v4347
        %v4364 = vtanh.pop %v4348
        %v4365 = vtanh.pop %v4349
        %v4366 = vtanh.pop %v4350
        %v4367 = vtanh.pop %v4351
        %v4368 = vtanh.pop %v4352
        %v4369 = vtanh.pop %v4353
        %v4370 = vtanh.pop %v4354
        %v4371 = vtanh.pop %v4355
        %v4372 = vtanh.pop %v4356
        %v4373 = vtanh.pop %v4357
        %v4374 = vtanh.pop %v4358
        %v4375 = vtanh.pop %v4359
        %v4376 = vadd.f32 %v4360, 1.0
        %v4377 = vadd.f32 %v4361, 1.0
        %v4378 = vadd.f32 %v4362, 1.0
        %v4379 = vadd.f32 %v4363, 1.0
        %v4380 = vadd.f32 %v4364, 1.0
        %v4381 = vadd.f32 %v4365, 1.0
        %v4382 = vadd.f32 %v4366, 1.0
        %v4383 = vadd.f32 %v4367, 1.0
        %v4384 = vadd.f32 %v4368, 1.0
        %v4385 = vadd.f32 %v4369, 1.0
        %v4386 = vadd.f32 %v4370, 1.0
        %v4387 = vadd.f32 %v4371, 1.0
        %v4388 = vadd.f32 %v4372, 1.0
        %v4389 = vadd.f32 %v4373, 1.0
        %v4390 = vadd.f32 %v4374, 1.0
        %v4391 = vadd.f32 %v4375, 1.0
        %v4392 = vmul.f32 %v4376, 0.5
        %v4393 = vmul.f32 %v4377, 0.5
        %v4394 = vmul.f32 %v4378, 0.5
        %v4395 = vmul.f32 %v4379, 0.5
        %v4396 = vmul.f32 %v4380, 0.5
        %v4397 = vmul.f32 %v4381, 0.5
        %v4398 = vmul.f32 %v4382, 0.5
        %v4399 = vmul.f32 %v4383, 0.5
        %v4400 = vmul.f32 %v4384, 0.5
        %v4401 = vmul.f32 %v4385, 0.5
        %v4402 = vmul.f32 %v4386, 0.5
        %v4403 = vmul.f32 %v4387, 0.5
        %v4404 = vmul.f32 %v4388, 0.5
        %v4405 = vmul.f32 %v4389, 0.5
        %v4406 = vmul.f32 %v4390, 0.5
        %v4407 = vmul.f32 %v4391, 0.5
        %v4408 = vmul.f32 %v4242, %v4392
        %v4409 = vmul.f32 %v4244, %v4393
        %v4410 = vmul.f32 %v4246, %v4394
        %v4411 = vmul.f32 %v4248, %v4395
        %v4412 = vmul.f32 %v4252, %v4396
        %v4413 = vmul.f32 %v4254, %v4397
        %v4414 = vmul.f32 %v4256, %v4398
        %v4415 = vmul.f32 %v4258, %v4399
        %v4416 = vmul.f32 %v4262, %v4400
        %v4417 = vmul.f32 %v4264, %v4401
        %v4418 = vmul.f32 %v4266, %v4402
        %v4419 = vmul.f32 %v4268, %v4403
        %v4420 = vmul.f32 %v4272, %v4404
        %v4421 = vmul.f32 %v4274, %v4405
        %v4422 = vmul.f32 %v4276, %v4406
        %v4423 = vmul.f32 %v4278, %v4407
        %4424 = vrot.lane.b32.xlu0 %v4408, 17
        %v4425 = vpop.permute.xlu0 %4424
        %4426 = vrot.lane.b32.xlu0 %v4410, 17
        %v4427 = vpop.permute.xlu0 %4426
        %4428 = vrot.lane.b32.xlu0 %v4412, 17
        %v4429 = vpop.permute.xlu0 %4428
        %4430 = vrot.lane.b32.xlu0 %v4414, 17
        %v4431 = vpop.permute.xlu0 %4430
        %4432 = vrot.lane.b32.xlu0 %v4416, 17
        %v4433 = vpop.permute.xlu0 %4432
        %4434 = vrot.lane.b32.xlu0 %v4418, 17
        %v4435 = vpop.permute.xlu0 %4434
        %4436 = vrot.lane.b32.xlu0 %v4420, 17
        %v4437 = vpop.permute.xlu0 %4436
        %4438 = vrot.lane.b32.xlu0 %v4422, 17
        %v4439 = vpop.permute.xlu0 %4438
        %4440 = vrot.lane.b32.xlu0 %v4409, 17
        %v4441 = vpop.permute.xlu0 %4440
        %4442 = vrot.lane.b32.xlu0 %v4411, 17
        %v4443 = vpop.permute.xlu0 %4442
        %4444 = vrot.lane.b32.xlu0 %v4413, 17
        %v4445 = vpop.permute.xlu0 %4444
        %4446 = vrot.lane.b32.xlu0 %v4415, 17
        %v4447 = vpop.permute.xlu0 %4446
        %4448 = vrot.lane.b32.xlu0 %v4417, 17
        %v4449 = vpop.permute.xlu0 %4448
        %4450 = vrot.lane.b32.xlu0 %v4419, 17
        %v4451 = vpop.permute.xlu0 %4450
        %4452 = vrot.lane.b32.xlu0 %v4421, 17
        %v4453 = vpop.permute.xlu0 %4452
        %4454 = vrot.lane.b32.xlu0 %v4423, 17
        %v4455 = vpop.permute.xlu0 %4454
        %v4456 = vsel %vm1197, %v4425, %v4441
        %v4457 = vsel %vm1197, %v4427, %v4443
        %v4458 = vsel %vm1197, %v4429, %v4445
        %v4459 = vsel %vm1197, %v4431, %v4447
        %v4460 = vsel %vm1197, %v4433, %v4449
        %v4461 = vsel %vm1197, %v4435, %v4451
        %v4462 = vsel %vm1197, %v4437, %v4453
        %v4463 = vsel %vm1197, %v4439, %v4455
        %v4464 = vsel %vm1197, %v4441, %v4425
        %v4465 = vsel %vm1197, %v4443, %v4427
        %v4466 = vsel %vm1197, %v4445, %v4429
        %v4467 = vsel %vm1197, %v4447, %v4431
        %v4468 = vsel %vm1197, %v4449, %v4433
        %v4469 = vsel %vm1197, %v4451, %v4435
        %v4470 = vsel %vm1197, %v4453, %v4437
        %v4471 = vsel %vm1197, %v4455, %v4439
        %v4472 = vmul.f32 %v4464, %v1209
        %v4473 = vmul.f32 %v4456, %v1213
        %v4474 = vmul.f32 %v4465, %v1209
        %v4475 = vmul.f32 %v4457, %v1213
        %v4476 = vmul.f32 %v4466, %v1209
        %v4477 = vmul.f32 %v4458, %v1213
        %v4478 = vmul.f32 %v4467, %v1209
        %v4479 = vmul.f32 %v4459, %v1213
        %v4480 = vmul.f32 %v4468, %v1209
        %v4481 = vmul.f32 %v4460, %v1213
        %v4482 = vmul.f32 %v4469, %v1209
        %v4483 = vmul.f32 %v4461, %v1213
        %v4484 = vmul.f32 %v4470, %v1209
        %v4485 = vmul.f32 %v4462, %v1213
        %v4486 = vmul.f32 %v4471, %v1209
        %v4487 = vmul.f32 %v4463, %v1213
        %v4488 = vld [vmem:[#allocation13] sm:$0xff]
        %v4489 = vld [vmem:[#allocation13 + $0x8] sm:$0xff]
        %v4490 = vld [vmem:[#allocation13 + $0x10] sm:$0xff]
        %v4491 = vld [vmem:[#allocation13 + $0x18] sm:$0xff]
        %v4492 = vld [vmem:[#allocation13 + $0x20] sm:$0xff]
        %v4493 = vld [vmem:[#allocation13 + $0x28] sm:$0xff]
        %v4494 = vld [vmem:[#allocation13 + $0x30] sm:$0xff]
        %v4495 = vld [vmem:[#allocation13 + $0x38] sm:$0xff]
        %4497 = vset.pattern.permute.xlu0 0
        %4498 = vperm.xlu0 %4497, %v4488
        %v4499 = vpop.permute.xlu0 %4498
        %4502 = vset.pattern.permute.xlu0 0
        %4503 = vperm.xlu0 %4502, %v4489
        %v4504 = vpop.permute.xlu0 %4503
        %4507 = vset.pattern.permute.xlu0 0
        %4508 = vperm.xlu0 %4507, %v4490
        %v4509 = vpop.permute.xlu0 %4508
        %4512 = vset.pattern.permute.xlu0 0
        %4513 = vperm.xlu0 %4512, %v4491
        %v4514 = vpop.permute.xlu0 %4513
        %4517 = vset.pattern.permute.xlu0 0
        %4518 = vperm.xlu0 %4517, %v4492
        %v4519 = vpop.permute.xlu0 %4518
        %4522 = vset.pattern.permute.xlu0 0
        %4523 = vperm.xlu0 %4522, %v4493
        %v4524 = vpop.permute.xlu0 %4523
        %4527 = vset.pattern.permute.xlu0 0
        %4528 = vperm.xlu0 %4527, %v4494
        %v4529 = vpop.permute.xlu0 %4528
        %4532 = vset.pattern.permute.xlu0 0
        %4533 = vperm.xlu0 %4532, %v4495
        %v4534 = vpop.permute.xlu0 %4533
        %v4536 = vmul.f32 %v4499, %v4472
        %v4537 = vmul.f32 %v4499, %v4473
        %v4538 = vmul.f32 %v4504, %v4474
        %v4539 = vmul.f32 %v4504, %v4475
        %v4540 = vmul.f32 %v4509, %v4476
        %v4541 = vmul.f32 %v4509, %v4477
        %v4542 = vmul.f32 %v4514, %v4478
        %v4543 = vmul.f32 %v4514, %v4479
        %v4544 = vmul.f32 %v4519, %v4480
        %v4545 = vmul.f32 %v4519, %v4481
        %v4546 = vmul.f32 %v4524, %v4482
        %v4547 = vmul.f32 %v4524, %v4483
        %v4548 = vmul.f32 %v4529, %v4484
        %v4549 = vmul.f32 %v4529, %v4485
        %v4550 = vmul.f32 %v4534, %v4486
        %v4551 = vmul.f32 %v4534, %v4487
        %v4552 = vadd.f32 %v4536, 0.0
        %v4553 = vadd.f32 %v4537, 0.0
        %v4554 = vadd.f32 %v4538, 0.0
        %v4555 = vadd.f32 %v4539, 0.0
        %v4556 = vadd.f32 %v4540, 0.0
        %v4557 = vadd.f32 %v4541, 0.0
        %v4558 = vadd.f32 %v4542, 0.0
        %v4559 = vadd.f32 %v4543, 0.0
        %v4560 = vadd.f32 %v4544, 0.0
        %v4561 = vadd.f32 %v4545, 0.0
        %v4562 = vadd.f32 %v4546, 0.0
        %v4563 = vadd.f32 %v4547, 0.0
        %v4564 = vadd.f32 %v4548, 0.0
        %v4565 = vadd.f32 %v4549, 0.0
        %v4566 = vadd.f32 %v4550, 0.0
        %v4567 = vadd.f32 %v4551, 0.0
        %4568 = vrot.lane.b32.xlu0 %v4408, 16
        %v4569 = vpop.permute.xlu0 %4568
        %4570 = vrot.lane.b32.xlu0 %v4410, 16
        %v4571 = vpop.permute.xlu0 %4570
        %4572 = vrot.lane.b32.xlu0 %v4412, 16
        %v4573 = vpop.permute.xlu0 %4572
        %4574 = vrot.lane.b32.xlu0 %v4414, 16
        %v4575 = vpop.permute.xlu0 %4574
        %4576 = vrot.lane.b32.xlu0 %v4416, 16
        %v4577 = vpop.permute.xlu0 %4576
        %4578 = vrot.lane.b32.xlu0 %v4418, 16
        %v4579 = vpop.permute.xlu0 %4578
        %4580 = vrot.lane.b32.xlu0 %v4420, 16
        %v4581 = vpop.permute.xlu0 %4580
        %4582 = vrot.lane.b32.xlu0 %v4422, 16
        %v4583 = vpop.permute.xlu0 %4582
        %4584 = vrot.lane.b32.xlu0 %v4409, 16
        %v4585 = vpop.permute.xlu0 %4584
        %4586 = vrot.lane.b32.xlu0 %v4411, 16
        %v4587 = vpop.permute.xlu0 %4586
        %4588 = vrot.lane.b32.xlu0 %v4413, 16
        %v4589 = vpop.permute.xlu0 %4588
        %4590 = vrot.lane.b32.xlu0 %v4415, 16
        %v4591 = vpop.permute.xlu0 %4590
        %4592 = vrot.lane.b32.xlu0 %v4417, 16
        %v4593 = vpop.permute.xlu0 %4592
        %4594 = vrot.lane.b32.xlu0 %v4419, 16
        %v4595 = vpop.permute.xlu0 %4594
        %4596 = vrot.lane.b32.xlu0 %v4421, 16
        %v4597 = vpop.permute.xlu0 %4596
        %4598 = vrot.lane.b32.xlu0 %v4423, 16
        %v4599 = vpop.permute.xlu0 %4598
        %v4600 = vsel %vm1249, %v4569, %v4585
        %v4601 = vsel %vm1249, %v4571, %v4587
        %v4602 = vsel %vm1249, %v4573, %v4589
        %v4603 = vsel %vm1249, %v4575, %v4591
        %v4604 = vsel %vm1249, %v4577, %v4593
        %v4605 = vsel %vm1249, %v4579, %v4595
        %v4606 = vsel %vm1249, %v4581, %v4597
        %v4607 = vsel %vm1249, %v4583, %v4599
        %v4608 = vsel %vm1249, %v4585, %v4569
        %v4609 = vsel %vm1249, %v4587, %v4571
        %v4610 = vsel %vm1249, %v4589, %v4573
        %v4611 = vsel %vm1249, %v4591, %v4575
        %v4612 = vsel %vm1249, %v4593, %v4577
        %v4613 = vsel %vm1249, %v4595, %v4579
        %v4614 = vsel %vm1249, %v4597, %v4581
        %v4615 = vsel %vm1249, %v4599, %v4583
        %v4616 = vmul.f32 %v4608, %v1260
        %v4617 = vmul.f32 %v4600, %v1264
        %v4618 = vmul.f32 %v4609, %v1260
        %v4619 = vmul.f32 %v4601, %v1264
        %v4620 = vmul.f32 %v4610, %v1260
        %v4621 = vmul.f32 %v4602, %v1264
        %v4622 = vmul.f32 %v4611, %v1260
        %v4623 = vmul.f32 %v4603, %v1264
        %v4624 = vmul.f32 %v4612, %v1260
        %v4625 = vmul.f32 %v4604, %v1264
        %v4626 = vmul.f32 %v4613, %v1260
        %v4627 = vmul.f32 %v4605, %v1264
        %v4628 = vmul.f32 %v4614, %v1260
        %v4629 = vmul.f32 %v4606, %v1264
        %v4630 = vmul.f32 %v4615, %v1260
        %v4631 = vmul.f32 %v4607, %v1264
        %s4632 = scalar_lea.vmem [#allocation13], 64
        %v4633 = vld [vmem:[%s4632] sm:$0xff]
        %v4634 = vld [vmem:[%s4632 + $0x8] sm:$0xff]
        %v4635 = vld [vmem:[%s4632 + $0x10] sm:$0xff]
        %v4636 = vld [vmem:[%s4632 + $0x18] sm:$0xff]
        %v4637 = vld [vmem:[%s4632 + $0x20] sm:$0xff]
        %v4638 = vld [vmem:[%s4632 + $0x28] sm:$0xff]
        %v4639 = vld [vmem:[%s4632 + $0x30] sm:$0xff]
        %v4640 = vld [vmem:[%s4632 + $0x38] sm:$0xff]
        %4642 = vset.pattern.permute.xlu0 0
        %4643 = vperm.xlu0 %4642, %v4633
        %v4644 = vpop.permute.xlu0 %4643
        %4647 = vset.pattern.permute.xlu0 0
        %4648 = vperm.xlu0 %4647, %v4634
        %v4649 = vpop.permute.xlu0 %4648
        %4652 = vset.pattern.permute.xlu0 0
        %4653 = vperm.xlu0 %4652, %v4635
        %v4654 = vpop.permute.xlu0 %4653
        %4657 = vset.pattern.permute.xlu0 0
        %4658 = vperm.xlu0 %4657, %v4636
        %v4659 = vpop.permute.xlu0 %4658
        %4662 = vset.pattern.permute.xlu0 0
        %4663 = vperm.xlu0 %4662, %v4637
        %v4664 = vpop.permute.xlu0 %4663
        %4667 = vset.pattern.permute.xlu0 0
        %4668 = vperm.xlu0 %4667, %v4638
        %v4669 = vpop.permute.xlu0 %4668
        %4672 = vset.pattern.permute.xlu0 0
        %4673 = vperm.xlu0 %4672, %v4639
        %v4674 = vpop.permute.xlu0 %4673
        %4677 = vset.pattern.permute.xlu0 0
        %4678 = vperm.xlu0 %4677, %v4640
        %v4679 = vpop.permute.xlu0 %4678
        %v4681 = vmul.f32 %v4644, %v4616
        %v4682 = vmul.f32 %v4644, %v4617
        %v4683 = vmul.f32 %v4649, %v4618
        %v4684 = vmul.f32 %v4649, %v4619
        %v4685 = vmul.f32 %v4654, %v4620
        %v4686 = vmul.f32 %v4654, %v4621
        %v4687 = vmul.f32 %v4659, %v4622
        %v4688 = vmul.f32 %v4659, %v4623
        %v4689 = vmul.f32 %v4664, %v4624
        %v4690 = vmul.f32 %v4664, %v4625
        %v4691 = vmul.f32 %v4669, %v4626
        %v4692 = vmul.f32 %v4669, %v4627
        %v4693 = vmul.f32 %v4674, %v4628
        %v4694 = vmul.f32 %v4674, %v4629
        %v4695 = vmul.f32 %v4679, %v4630
        %v4696 = vmul.f32 %v4679, %v4631
        %v4697 = vadd.f32 %v4552, %v4681
        %v4698 = vadd.f32 %v4553, %v4682
        %v4699 = vadd.f32 %v4554, %v4683
        %v4700 = vadd.f32 %v4555, %v4684
        %v4701 = vadd.f32 %v4556, %v4685
        %v4702 = vadd.f32 %v4557, %v4686
        %v4703 = vadd.f32 %v4558, %v4687
        %v4704 = vadd.f32 %v4559, %v4688
        %v4705 = vadd.f32 %v4560, %v4689
        %v4706 = vadd.f32 %v4561, %v4690
        %v4707 = vadd.f32 %v4562, %v4691
        %v4708 = vadd.f32 %v4563, %v4692
        %v4709 = vadd.f32 %v4564, %v4693
        %v4710 = vadd.f32 %v4565, %v4694
        %v4711 = vadd.f32 %v4566, %v4695
        %v4712 = vadd.f32 %v4567, %v4696
        %4713 = vrot.lane.b32.xlu0 %v4408, 15
        %v4714 = vpop.permute.xlu0 %4713
        %4715 = vrot.lane.b32.xlu0 %v4410, 15
        %v4716 = vpop.permute.xlu0 %4715
        %4717 = vrot.lane.b32.xlu0 %v4412, 15
        %v4718 = vpop.permute.xlu0 %4717
        %4719 = vrot.lane.b32.xlu0 %v4414, 15
        %v4720 = vpop.permute.xlu0 %4719
        %4721 = vrot.lane.b32.xlu0 %v4416, 15
        %v4722 = vpop.permute.xlu0 %4721
        %4723 = vrot.lane.b32.xlu0 %v4418, 15
        %v4724 = vpop.permute.xlu0 %4723
        %4725 = vrot.lane.b32.xlu0 %v4420, 15
        %v4726 = vpop.permute.xlu0 %4725
        %4727 = vrot.lane.b32.xlu0 %v4422, 15
        %v4728 = vpop.permute.xlu0 %4727
        %4729 = vrot.lane.b32.xlu0 %v4409, 15
        %v4730 = vpop.permute.xlu0 %4729
        %4731 = vrot.lane.b32.xlu0 %v4411, 15
        %v4732 = vpop.permute.xlu0 %4731
        %4733 = vrot.lane.b32.xlu0 %v4413, 15
        %v4734 = vpop.permute.xlu0 %4733
        %4735 = vrot.lane.b32.xlu0 %v4415, 15
        %v4736 = vpop.permute.xlu0 %4735
        %4737 = vrot.lane.b32.xlu0 %v4417, 15
        %v4738 = vpop.permute.xlu0 %4737
        %4739 = vrot.lane.b32.xlu0 %v4419, 15
        %v4740 = vpop.permute.xlu0 %4739
        %4741 = vrot.lane.b32.xlu0 %v4421, 15
        %v4742 = vpop.permute.xlu0 %4741
        %4743 = vrot.lane.b32.xlu0 %v4423, 15
        %v4744 = vpop.permute.xlu0 %4743
        %v4745 = vsel %vm1300, %v4714, %v4730
        %v4746 = vsel %vm1300, %v4716, %v4732
        %v4747 = vsel %vm1300, %v4718, %v4734
        %v4748 = vsel %vm1300, %v4720, %v4736
        %v4749 = vsel %vm1300, %v4722, %v4738
        %v4750 = vsel %vm1300, %v4724, %v4740
        %v4751 = vsel %vm1300, %v4726, %v4742
        %v4752 = vsel %vm1300, %v4728, %v4744
        %v4753 = vsel %vm1300, %v4730, %v4714
        %v4754 = vsel %vm1300, %v4732, %v4716
        %v4755 = vsel %vm1300, %v4734, %v4718
        %v4756 = vsel %vm1300, %v4736, %v4720
        %v4757 = vsel %vm1300, %v4738, %v4722
        %v4758 = vsel %vm1300, %v4740, %v4724
        %v4759 = vsel %vm1300, %v4742, %v4726
        %v4760 = vsel %vm1300, %v4744, %v4728
        %v4761 = vmul.f32 %v4753, %v1312
        %v4762 = vmul.f32 %v4745, %v1316
        %v4763 = vmul.f32 %v4754, %v1312
        %v4764 = vmul.f32 %v4746, %v1316
        %v4765 = vmul.f32 %v4755, %v1312
        %v4766 = vmul.f32 %v4747, %v1316
        %v4767 = vmul.f32 %v4756, %v1312
        %v4768 = vmul.f32 %v4748, %v1316
        %v4769 = vmul.f32 %v4757, %v1312
        %v4770 = vmul.f32 %v4749, %v1316
        %v4771 = vmul.f32 %v4758, %v1312
        %v4772 = vmul.f32 %v4750, %v1316
        %v4773 = vmul.f32 %v4759, %v1312
        %v4774 = vmul.f32 %v4751, %v1316
        %v4775 = vmul.f32 %v4760, %v1312
        %v4776 = vmul.f32 %v4752, %v1316
        %s4777 = scalar_lea.vmem [#allocation13], 128
        %v4778 = vld [vmem:[%s4777] sm:$0xff]
        %v4779 = vld [vmem:[%s4777 + $0x8] sm:$0xff]
        %v4780 = vld [vmem:[%s4777 + $0x10] sm:$0xff]
        %v4781 = vld [vmem:[%s4777 + $0x18] sm:$0xff]
        %v4782 = vld [vmem:[%s4777 + $0x20] sm:$0xff]
        %v4783 = vld [vmem:[%s4777 + $0x28] sm:$0xff]
        %v4784 = vld [vmem:[%s4777 + $0x30] sm:$0xff]
        %v4785 = vld [vmem:[%s4777 + $0x38] sm:$0xff]
        %4787 = vset.pattern.permute.xlu0 0
        %4788 = vperm.xlu0 %4787, %v4778
        %v4789 = vpop.permute.xlu0 %4788
        %4792 = vset.pattern.permute.xlu0 0
        %4793 = vperm.xlu0 %4792, %v4779
        %v4794 = vpop.permute.xlu0 %4793
        %4797 = vset.pattern.permute.xlu0 0
        %4798 = vperm.xlu0 %4797, %v4780
        %v4799 = vpop.permute.xlu0 %4798
        %4802 = vset.pattern.permute.xlu0 0
        %4803 = vperm.xlu0 %4802, %v4781
        %v4804 = vpop.permute.xlu0 %4803
        %4807 = vset.pattern.permute.xlu0 0
        %4808 = vperm.xlu0 %4807, %v4782
        %v4809 = vpop.permute.xlu0 %4808
        %4812 = vset.pattern.permute.xlu0 0
        %4813 = vperm.xlu0 %4812, %v4783
        %v4814 = vpop.permute.xlu0 %4813
        %4817 = vset.pattern.permute.xlu0 0
        %4818 = vperm.xlu0 %4817, %v4784
        %v4819 = vpop.permute.xlu0 %4818
        %4822 = vset.pattern.permute.xlu0 0
        %4823 = vperm.xlu0 %4822, %v4785
        %v4824 = vpop.permute.xlu0 %4823
        %v4826 = vmul.f32 %v4789, %v4761
        %v4827 = vmul.f32 %v4789, %v4762
        %v4828 = vmul.f32 %v4794, %v4763
        %v4829 = vmul.f32 %v4794, %v4764
        %v4830 = vmul.f32 %v4799, %v4765
        %v4831 = vmul.f32 %v4799, %v4766
        %v4832 = vmul.f32 %v4804, %v4767
        %v4833 = vmul.f32 %v4804, %v4768
        %v4834 = vmul.f32 %v4809, %v4769
        %v4835 = vmul.f32 %v4809, %v4770
        %v4836 = vmul.f32 %v4814, %v4771
        %v4837 = vmul.f32 %v4814, %v4772
        %v4838 = vmul.f32 %v4819, %v4773
        %v4839 = vmul.f32 %v4819, %v4774
        %v4840 = vmul.f32 %v4824, %v4775
        %v4841 = vmul.f32 %v4824, %v4776
        %v4842 = vadd.f32 %v4697, %v4826
        %v4843 = vadd.f32 %v4698, %v4827
        %v4844 = vadd.f32 %v4699, %v4828
        %v4845 = vadd.f32 %v4700, %v4829
        %v4846 = vadd.f32 %v4701, %v4830
        %v4847 = vadd.f32 %v4702, %v4831
        %v4848 = vadd.f32 %v4703, %v4832
        %v4849 = vadd.f32 %v4704, %v4833
        %v4850 = vadd.f32 %v4705, %v4834
        %v4851 = vadd.f32 %v4706, %v4835
        %v4852 = vadd.f32 %v4707, %v4836
        %v4853 = vadd.f32 %v4708, %v4837
        %v4854 = vadd.f32 %v4709, %v4838
        %v4855 = vadd.f32 %v4710, %v4839
        %v4856 = vadd.f32 %v4711, %v4840
        %v4857 = vadd.f32 %v4712, %v4841
        %4858 = vrot.lane.b32.xlu0 %v4408, 1
        %v4859 = vpop.permute.xlu0 %4858
        %4860 = vrot.lane.b32.xlu0 %v4410, 1
        %v4861 = vpop.permute.xlu0 %4860
        %4862 = vrot.lane.b32.xlu0 %v4412, 1
        %v4863 = vpop.permute.xlu0 %4862
        %4864 = vrot.lane.b32.xlu0 %v4414, 1
        %v4865 = vpop.permute.xlu0 %4864
        %4866 = vrot.lane.b32.xlu0 %v4416, 1
        %v4867 = vpop.permute.xlu0 %4866
        %4868 = vrot.lane.b32.xlu0 %v4418, 1
        %v4869 = vpop.permute.xlu0 %4868
        %4870 = vrot.lane.b32.xlu0 %v4420, 1
        %v4871 = vpop.permute.xlu0 %4870
        %4872 = vrot.lane.b32.xlu0 %v4422, 1
        %v4873 = vpop.permute.xlu0 %4872
        %4874 = vrot.lane.b32.xlu0 %v4409, 1
        %v4875 = vpop.permute.xlu0 %4874
        %4876 = vrot.lane.b32.xlu0 %v4411, 1
        %v4877 = vpop.permute.xlu0 %4876
        %4878 = vrot.lane.b32.xlu0 %v4413, 1
        %v4879 = vpop.permute.xlu0 %4878
        %4880 = vrot.lane.b32.xlu0 %v4415, 1
        %v4881 = vpop.permute.xlu0 %4880
        %4882 = vrot.lane.b32.xlu0 %v4417, 1
        %v4883 = vpop.permute.xlu0 %4882
        %4884 = vrot.lane.b32.xlu0 %v4419, 1
        %v4885 = vpop.permute.xlu0 %4884
        %4886 = vrot.lane.b32.xlu0 %v4421, 1
        %v4887 = vpop.permute.xlu0 %4886
        %4888 = vrot.lane.b32.xlu0 %v4423, 1
        %v4889 = vpop.permute.xlu0 %4888
        %v4890 = vsel %vm1455, %v4859, %v4875
        %v4891 = vsel %vm1455, %v4861, %v4877
        %v4892 = vsel %vm1455, %v4863, %v4879
        %v4893 = vsel %vm1455, %v4865, %v4881
        %v4894 = vsel %vm1455, %v4867, %v4883
        %v4895 = vsel %vm1455, %v4869, %v4885
        %v4896 = vsel %vm1455, %v4871, %v4887
        %v4897 = vsel %vm1455, %v4873, %v4889
        %v4898 = vsel %vm1455, %v4875, %v4859
        %v4899 = vsel %vm1455, %v4877, %v4861
        %v4900 = vsel %vm1455, %v4879, %v4863
        %v4901 = vsel %vm1455, %v4881, %v4865
        %v4902 = vsel %vm1455, %v4883, %v4867
        %v4903 = vsel %vm1455, %v4885, %v4869
        %v4904 = vsel %vm1455, %v4887, %v4871
        %v4905 = vsel %vm1455, %v4889, %v4873
        %v4906 = vmul.f32 %v4898, %v1466
        %v4907 = vmul.f32 %v4890, %v1470
        %v4908 = vmul.f32 %v4899, %v1466
        %v4909 = vmul.f32 %v4891, %v1470
        %v4910 = vmul.f32 %v4900, %v1466
        %v4911 = vmul.f32 %v4892, %v1470
        %v4912 = vmul.f32 %v4901, %v1466
        %v4913 = vmul.f32 %v4893, %v1470
        %v4914 = vmul.f32 %v4902, %v1466
        %v4915 = vmul.f32 %v4894, %v1470
        %v4916 = vmul.f32 %v4903, %v1466
        %v4917 = vmul.f32 %v4895, %v1470
        %v4918 = vmul.f32 %v4904, %v1466
        %v4919 = vmul.f32 %v4896, %v1470
        %v4920 = vmul.f32 %v4905, %v1466
        %v4921 = vmul.f32 %v4897, %v1470
        %s4922 = scalar_lea.vmem [#allocation13], 192
        %v4923 = vld [vmem:[%s4922] sm:$0xff]
        %v4924 = vld [vmem:[%s4922 + $0x8] sm:$0xff]
        %v4925 = vld [vmem:[%s4922 + $0x10] sm:$0xff]
        %v4926 = vld [vmem:[%s4922 + $0x18] sm:$0xff]
        %v4927 = vld [vmem:[%s4922 + $0x20] sm:$0xff]
        %v4928 = vld [vmem:[%s4922 + $0x28] sm:$0xff]
        %v4929 = vld [vmem:[%s4922 + $0x30] sm:$0xff]
        %v4930 = vld [vmem:[%s4922 + $0x38] sm:$0xff]
        %4932 = vset.pattern.permute.xlu0 0
        %4933 = vperm.xlu0 %4932, %v4923
        %v4934 = vpop.permute.xlu0 %4933
        %4937 = vset.pattern.permute.xlu0 0
        %4938 = vperm.xlu0 %4937, %v4924
        %v4939 = vpop.permute.xlu0 %4938
        %4942 = vset.pattern.permute.xlu0 0
        %4943 = vperm.xlu0 %4942, %v4925
        %v4944 = vpop.permute.xlu0 %4943
        %4947 = vset.pattern.permute.xlu0 0
        %4948 = vperm.xlu0 %4947, %v4926
        %v4949 = vpop.permute.xlu0 %4948
        %4952 = vset.pattern.permute.xlu0 0
        %4953 = vperm.xlu0 %4952, %v4927
        %v4954 = vpop.permute.xlu0 %4953
        %4957 = vset.pattern.permute.xlu0 0
        %4958 = vperm.xlu0 %4957, %v4928
        %v4959 = vpop.permute.xlu0 %4958
        %4962 = vset.pattern.permute.xlu0 0
        %4963 = vperm.xlu0 %4962, %v4929
        %v4964 = vpop.permute.xlu0 %4963
        %4967 = vset.pattern.permute.xlu0 0
        %4968 = vperm.xlu0 %4967, %v4930
        %v4969 = vpop.permute.xlu0 %4968
        %v4971 = vmul.f32 %v4934, %v4906
        %v4972 = vmul.f32 %v4934, %v4907
        %v4973 = vmul.f32 %v4939, %v4908
        %v4974 = vmul.f32 %v4939, %v4909
        %v4975 = vmul.f32 %v4944, %v4910
        %v4976 = vmul.f32 %v4944, %v4911
        %v4977 = vmul.f32 %v4949, %v4912
        %v4978 = vmul.f32 %v4949, %v4913
        %v4979 = vmul.f32 %v4954, %v4914
        %v4980 = vmul.f32 %v4954, %v4915
        %v4981 = vmul.f32 %v4959, %v4916
        %v4982 = vmul.f32 %v4959, %v4917
        %v4983 = vmul.f32 %v4964, %v4918
        %v4984 = vmul.f32 %v4964, %v4919
        %v4985 = vmul.f32 %v4969, %v4920
        %v4986 = vmul.f32 %v4969, %v4921
        %v4987 = vadd.f32 %v4842, %v4971
        %v4988 = vadd.f32 %v4843, %v4972
        %v4989 = vadd.f32 %v4844, %v4973
        %v4990 = vadd.f32 %v4845, %v4974
        %v4991 = vadd.f32 %v4846, %v4975
        %v4992 = vadd.f32 %v4847, %v4976
        %v4993 = vadd.f32 %v4848, %v4977
        %v4994 = vadd.f32 %v4849, %v4978
        %v4995 = vadd.f32 %v4850, %v4979
        %v4996 = vadd.f32 %v4851, %v4980
        %v4997 = vadd.f32 %v4852, %v4981
        %v4998 = vadd.f32 %v4853, %v4982
        %v4999 = vadd.f32 %v4854, %v4983
        %v5000 = vadd.f32 %v4855, %v4984
        %v5001 = vadd.f32 %v4856, %v4985
        %v5002 = vadd.f32 %v4857, %v4986
        %s5003 = scalar_lea.vmem [#allocation13], 256
        %v5004 = vld [vmem:[%s5003] sm:$0xff]
        %v5005 = vld [vmem:[%s5003 + $0x8] sm:$0xff]
        %v5006 = vld [vmem:[%s5003 + $0x10] sm:$0xff]
        %v5007 = vld [vmem:[%s5003 + $0x18] sm:$0xff]
        %v5008 = vld [vmem:[%s5003 + $0x20] sm:$0xff]
        %v5009 = vld [vmem:[%s5003 + $0x28] sm:$0xff]
        %v5010 = vld [vmem:[%s5003 + $0x30] sm:$0xff]
        %v5011 = vld [vmem:[%s5003 + $0x38] sm:$0xff]
        %5013 = vset.pattern.permute.xlu0 0
        %5014 = vperm.xlu0 %5013, %v5004
        %v5015 = vpop.permute.xlu0 %5014
        %5018 = vset.pattern.permute.xlu0 0
        %5019 = vperm.xlu0 %5018, %v5005
        %v5020 = vpop.permute.xlu0 %5019
        %5023 = vset.pattern.permute.xlu0 0
        %5024 = vperm.xlu0 %5023, %v5006
        %v5025 = vpop.permute.xlu0 %5024
        %5028 = vset.pattern.permute.xlu0 0
        %5029 = vperm.xlu0 %5028, %v5007
        %v5030 = vpop.permute.xlu0 %5029
        %5033 = vset.pattern.permute.xlu0 0
        %5034 = vperm.xlu0 %5033, %v5008
        %v5035 = vpop.permute.xlu0 %5034
        %5038 = vset.pattern.permute.xlu0 0
        %5039 = vperm.xlu0 %5038, %v5009
        %v5040 = vpop.permute.xlu0 %5039
        %5043 = vset.pattern.permute.xlu0 0
        %5044 = vperm.xlu0 %5043, %v5010
        %v5045 = vpop.permute.xlu0 %5044
        %5048 = vset.pattern.permute.xlu0 0
        %5049 = vperm.xlu0 %5048, %v5011
        %v5050 = vpop.permute.xlu0 %5049
        %v5052 = vmul.f32 %v5015, %v4408
        %v5053 = vmul.f32 %v5015, %v4409
        %v5054 = vmul.f32 %v5020, %v4410
        %v5055 = vmul.f32 %v5020, %v4411
        %v5056 = vmul.f32 %v5025, %v4412
        %v5057 = vmul.f32 %v5025, %v4413
        %v5058 = vmul.f32 %v5030, %v4414
        %v5059 = vmul.f32 %v5030, %v4415
        %v5060 = vmul.f32 %v5035, %v4416
        %v5061 = vmul.f32 %v5035, %v4417
        %v5062 = vmul.f32 %v5040, %v4418
        %v5063 = vmul.f32 %v5040, %v4419
        %v5064 = vmul.f32 %v5045, %v4420
        %v5065 = vmul.f32 %v5045, %v4421
        %v5066 = vmul.f32 %v5050, %v4422
        %v5067 = vmul.f32 %v5050, %v4423
        %v5068 = vadd.f32 %v4987, %v5052
        %v5069 = vadd.f32 %v4988, %v5053
        %v5070 = vadd.f32 %v4989, %v5054
        %v5071 = vadd.f32 %v4990, %v5055
        %v5072 = vadd.f32 %v4991, %v5056
        %v5073 = vadd.f32 %v4992, %v5057
        %v5074 = vadd.f32 %v4993, %v5058
        %v5075 = vadd.f32 %v4994, %v5059
        %v5076 = vadd.f32 %v4995, %v5060
        %v5077 = vadd.f32 %v4996, %v5061
        %v5078 = vadd.f32 %v4997, %v5062
        %v5079 = vadd.f32 %v4998, %v5063
        %v5080 = vadd.f32 %v4999, %v5064
        %v5081 = vadd.f32 %v5000, %v5065
        %v5082 = vadd.f32 %v5001, %v5066
        %v5083 = vadd.f32 %v5002, %v5067
        %5084 = vrot.lane.b32.xlu0 %v4408, 127
        %v5085 = vpop.permute.xlu0 %5084
        %5086 = vrot.lane.b32.xlu0 %v4410, 127
        %v5087 = vpop.permute.xlu0 %5086
        %5088 = vrot.lane.b32.xlu0 %v4412, 127
        %v5089 = vpop.permute.xlu0 %5088
        %5090 = vrot.lane.b32.xlu0 %v4414, 127
        %v5091 = vpop.permute.xlu0 %5090
        %5092 = vrot.lane.b32.xlu0 %v4416, 127
        %v5093 = vpop.permute.xlu0 %5092
        %5094 = vrot.lane.b32.xlu0 %v4418, 127
        %v5095 = vpop.permute.xlu0 %5094
        %5096 = vrot.lane.b32.xlu0 %v4420, 127
        %v5097 = vpop.permute.xlu0 %5096
        %5098 = vrot.lane.b32.xlu0 %v4422, 127
        %v5099 = vpop.permute.xlu0 %5098
        %5100 = vrot.lane.b32.xlu0 %v4409, 127
        %v5101 = vpop.permute.xlu0 %5100
        %5102 = vrot.lane.b32.xlu0 %v4411, 127
        %v5103 = vpop.permute.xlu0 %5102
        %5104 = vrot.lane.b32.xlu0 %v4413, 127
        %v5105 = vpop.permute.xlu0 %5104
        %5106 = vrot.lane.b32.xlu0 %v4415, 127
        %v5107 = vpop.permute.xlu0 %5106
        %5108 = vrot.lane.b32.xlu0 %v4417, 127
        %v5109 = vpop.permute.xlu0 %5108
        %5110 = vrot.lane.b32.xlu0 %v4419, 127
        %v5111 = vpop.permute.xlu0 %5110
        %5112 = vrot.lane.b32.xlu0 %v4421, 127
        %v5113 = vpop.permute.xlu0 %5112
        %5114 = vrot.lane.b32.xlu0 %v4423, 127
        %v5115 = vpop.permute.xlu0 %5114
        %v5116 = vsel %vm1527, %v5085, %v5101
        %v5117 = vsel %vm1527, %v5087, %v5103
        %v5118 = vsel %vm1527, %v5089, %v5105
        %v5119 = vsel %vm1527, %v5091, %v5107
        %v5120 = vsel %vm1527, %v5093, %v5109
        %v5121 = vsel %vm1527, %v5095, %v5111
        %v5122 = vsel %vm1527, %v5097, %v5113
        %v5123 = vsel %vm1527, %v5099, %v5115
        %v5124 = vsel %vm1527, %v5101, %v5085
        %v5125 = vsel %vm1527, %v5103, %v5087
        %v5126 = vsel %vm1527, %v5105, %v5089
        %v5127 = vsel %vm1527, %v5107, %v5091
        %v5128 = vsel %vm1527, %v5109, %v5093
        %v5129 = vsel %vm1527, %v5111, %v5095
        %v5130 = vsel %vm1527, %v5113, %v5097
        %v5131 = vsel %vm1527, %v5115, %v5099
        %v5132 = vmul.f32 %v5116, %v1538
        %v5133 = vmul.f32 %v5124, %v1542
        %v5134 = vmul.f32 %v5117, %v1538
        %v5135 = vmul.f32 %v5125, %v1542
        %v5136 = vmul.f32 %v5118, %v1538
        %v5137 = vmul.f32 %v5126, %v1542
        %v5138 = vmul.f32 %v5119, %v1538
        %v5139 = vmul.f32 %v5127, %v1542
        %v5140 = vmul.f32 %v5120, %v1538
        %v5141 = vmul.f32 %v5128, %v1542
        %v5142 = vmul.f32 %v5121, %v1538
        %v5143 = vmul.f32 %v5129, %v1542
        %v5144 = vmul.f32 %v5122, %v1538
        %v5145 = vmul.f32 %v5130, %v1542
        %v5146 = vmul.f32 %v5123, %v1538
        %v5147 = vmul.f32 %v5131, %v1542
        %s5148 = scalar_lea.vmem [#allocation13], 320
        %v5149 = vld [vmem:[%s5148] sm:$0xff]
        %v5150 = vld [vmem:[%s5148 + $0x8] sm:$0xff]
        %v5151 = vld [vmem:[%s5148 + $0x10] sm:$0xff]
        %v5152 = vld [vmem:[%s5148 + $0x18] sm:$0xff]
        %v5153 = vld [vmem:[%s5148 + $0x20] sm:$0xff]
        %v5154 = vld [vmem:[%s5148 + $0x28] sm:$0xff]
        %v5155 = vld [vmem:[%s5148 + $0x30] sm:$0xff]
        %v5156 = vld [vmem:[%s5148 + $0x38] sm:$0xff]
        %5158 = vset.pattern.permute.xlu0 0
        %5159 = vperm.xlu0 %5158, %v5149
        %v5160 = vpop.permute.xlu0 %5159
        %5163 = vset.pattern.permute.xlu0 0
        %5164 = vperm.xlu0 %5163, %v5150
        %v5165 = vpop.permute.xlu0 %5164
        %5168 = vset.pattern.permute.xlu0 0
        %5169 = vperm.xlu0 %5168, %v5151
        %v5170 = vpop.permute.xlu0 %5169
        %5173 = vset.pattern.permute.xlu0 0
        %5174 = vperm.xlu0 %5173, %v5152
        %v5175 = vpop.permute.xlu0 %5174
        %5178 = vset.pattern.permute.xlu0 0
        %5179 = vperm.xlu0 %5178, %v5153
        %v5180 = vpop.permute.xlu0 %5179
        %5183 = vset.pattern.permute.xlu0 0
        %5184 = vperm.xlu0 %5183, %v5154
        %v5185 = vpop.permute.xlu0 %5184
        %5188 = vset.pattern.permute.xlu0 0
        %5189 = vperm.xlu0 %5188, %v5155
        %v5190 = vpop.permute.xlu0 %5189
        %5193 = vset.pattern.permute.xlu0 0
        %5194 = vperm.xlu0 %5193, %v5156
        %v5195 = vpop.permute.xlu0 %5194
        %v5197 = vmul.f32 %v5160, %v5132
        %v5198 = vmul.f32 %v5160, %v5133
        %v5199 = vmul.f32 %v5165, %v5134
        %v5200 = vmul.f32 %v5165, %v5135
        %v5201 = vmul.f32 %v5170, %v5136
        %v5202 = vmul.f32 %v5170, %v5137
        %v5203 = vmul.f32 %v5175, %v5138
        %v5204 = vmul.f32 %v5175, %v5139
        %v5205 = vmul.f32 %v5180, %v5140
        %v5206 = vmul.f32 %v5180, %v5141
        %v5207 = vmul.f32 %v5185, %v5142
        %v5208 = vmul.f32 %v5185, %v5143
        %v5209 = vmul.f32 %v5190, %v5144
        %v5210 = vmul.f32 %v5190, %v5145
        %v5211 = vmul.f32 %v5195, %v5146
        %v5212 = vmul.f32 %v5195, %v5147
        %v5213 = vadd.f32 %v5068, %v5197
        %v5214 = vadd.f32 %v5069, %v5198
        %v5215 = vadd.f32 %v5070, %v5199
        %v5216 = vadd.f32 %v5071, %v5200
        %v5217 = vadd.f32 %v5072, %v5201
        %v5218 = vadd.f32 %v5073, %v5202
        %v5219 = vadd.f32 %v5074, %v5203
        %v5220 = vadd.f32 %v5075, %v5204
        %v5221 = vadd.f32 %v5076, %v5205
        %v5222 = vadd.f32 %v5077, %v5206
        %v5223 = vadd.f32 %v5078, %v5207
        %v5224 = vadd.f32 %v5079, %v5208
        %v5225 = vadd.f32 %v5080, %v5209
        %v5226 = vadd.f32 %v5081, %v5210
        %v5227 = vadd.f32 %v5082, %v5211
        %v5228 = vadd.f32 %v5083, %v5212
        %5229 = vrot.lane.b32.xlu0 %v4408, 113
        %v5230 = vpop.permute.xlu0 %5229
        %5231 = vrot.lane.b32.xlu0 %v4410, 113
        %v5232 = vpop.permute.xlu0 %5231
        %5233 = vrot.lane.b32.xlu0 %v4412, 113
        %v5234 = vpop.permute.xlu0 %5233
        %5235 = vrot.lane.b32.xlu0 %v4414, 113
        %v5236 = vpop.permute.xlu0 %5235
        %5237 = vrot.lane.b32.xlu0 %v4416, 113
        %v5238 = vpop.permute.xlu0 %5237
        %5239 = vrot.lane.b32.xlu0 %v4418, 113
        %v5240 = vpop.permute.xlu0 %5239
        %5241 = vrot.lane.b32.xlu0 %v4420, 113
        %v5242 = vpop.permute.xlu0 %5241
        %5243 = vrot.lane.b32.xlu0 %v4422, 113
        %v5244 = vpop.permute.xlu0 %5243
        %5245 = vrot.lane.b32.xlu0 %v4409, 113
        %v5246 = vpop.permute.xlu0 %5245
        %5247 = vrot.lane.b32.xlu0 %v4411, 113
        %v5248 = vpop.permute.xlu0 %5247
        %5249 = vrot.lane.b32.xlu0 %v4413, 113
        %v5250 = vpop.permute.xlu0 %5249
        %5251 = vrot.lane.b32.xlu0 %v4415, 113
        %v5252 = vpop.permute.xlu0 %5251
        %5253 = vrot.lane.b32.xlu0 %v4417, 113
        %v5254 = vpop.permute.xlu0 %5253
        %5255 = vrot.lane.b32.xlu0 %v4419, 113
        %v5256 = vpop.permute.xlu0 %5255
        %5257 = vrot.lane.b32.xlu0 %v4421, 113
        %v5258 = vpop.permute.xlu0 %5257
        %5259 = vrot.lane.b32.xlu0 %v4423, 113
        %v5260 = vpop.permute.xlu0 %5259
        %v5261 = vsel %vm1682, %v5230, %v5246
        %v5262 = vsel %vm1682, %v5232, %v5248
        %v5263 = vsel %vm1682, %v5234, %v5250
        %v5264 = vsel %vm1682, %v5236, %v5252
        %v5265 = vsel %vm1682, %v5238, %v5254
        %v5266 = vsel %vm1682, %v5240, %v5256
        %v5267 = vsel %vm1682, %v5242, %v5258
        %v5268 = vsel %vm1682, %v5244, %v5260
        %v5269 = vsel %vm1682, %v5246, %v5230
        %v5270 = vsel %vm1682, %v5248, %v5232
        %v5271 = vsel %vm1682, %v5250, %v5234
        %v5272 = vsel %vm1682, %v5252, %v5236
        %v5273 = vsel %vm1682, %v5254, %v5238
        %v5274 = vsel %vm1682, %v5256, %v5240
        %v5275 = vsel %vm1682, %v5258, %v5242
        %v5276 = vsel %vm1682, %v5260, %v5244
        %v5277 = vmul.f32 %v5261, %v1694
        %v5278 = vmul.f32 %v5269, %v1698
        %v5279 = vmul.f32 %v5262, %v1694
        %v5280 = vmul.f32 %v5270, %v1698
        %v5281 = vmul.f32 %v5263, %v1694
        %v5282 = vmul.f32 %v5271, %v1698
        %v5283 = vmul.f32 %v5264, %v1694
        %v5284 = vmul.f32 %v5272, %v1698
        %v5285 = vmul.f32 %v5265, %v1694
        %v5286 = vmul.f32 %v5273, %v1698
        %v5287 = vmul.f32 %v5266, %v1694
        %v5288 = vmul.f32 %v5274, %v1698
        %v5289 = vmul.f32 %v5267, %v1694
        %v5290 = vmul.f32 %v5275, %v1698
        %v5291 = vmul.f32 %v5268, %v1694
        %v5292 = vmul.f32 %v5276, %v1698
        %s5293 = scalar_lea.vmem [#allocation13], 384
        %v5294 = vld [vmem:[%s5293] sm:$0xff]
        %v5295 = vld [vmem:[%s5293 + $0x8] sm:$0xff]
        %v5296 = vld [vmem:[%s5293 + $0x10] sm:$0xff]
        %v5297 = vld [vmem:[%s5293 + $0x18] sm:$0xff]
        %v5298 = vld [vmem:[%s5293 + $0x20] sm:$0xff]
        %v5299 = vld [vmem:[%s5293 + $0x28] sm:$0xff]
        %v5300 = vld [vmem:[%s5293 + $0x30] sm:$0xff]
        %v5301 = vld [vmem:[%s5293 + $0x38] sm:$0xff]
        %5303 = vset.pattern.permute.xlu0 0
        %5304 = vperm.xlu0 %5303, %v5294
        %v5305 = vpop.permute.xlu0 %5304
        %5308 = vset.pattern.permute.xlu0 0
        %5309 = vperm.xlu0 %5308, %v5295
        %v5310 = vpop.permute.xlu0 %5309
        %5313 = vset.pattern.permute.xlu0 0
        %5314 = vperm.xlu0 %5313, %v5296
        %v5315 = vpop.permute.xlu0 %5314
        %5318 = vset.pattern.permute.xlu0 0
        %5319 = vperm.xlu0 %5318, %v5297
        %v5320 = vpop.permute.xlu0 %5319
        %5323 = vset.pattern.permute.xlu0 0
        %5324 = vperm.xlu0 %5323, %v5298
        %v5325 = vpop.permute.xlu0 %5324
        %5328 = vset.pattern.permute.xlu0 0
        %5329 = vperm.xlu0 %5328, %v5299
        %v5330 = vpop.permute.xlu0 %5329
        %5333 = vset.pattern.permute.xlu0 0
        %5334 = vperm.xlu0 %5333, %v5300
        %v5335 = vpop.permute.xlu0 %5334
        %5338 = vset.pattern.permute.xlu0 0
        %5339 = vperm.xlu0 %5338, %v5301
        %v5340 = vpop.permute.xlu0 %5339
        %v5342 = vmul.f32 %v5305, %v5277
        %v5343 = vmul.f32 %v5305, %v5278
        %v5344 = vmul.f32 %v5310, %v5279
        %v5345 = vmul.f32 %v5310, %v5280
        %v5346 = vmul.f32 %v5315, %v5281
        %v5347 = vmul.f32 %v5315, %v5282
        %v5348 = vmul.f32 %v5320, %v5283
        %v5349 = vmul.f32 %v5320, %v5284
        %v5350 = vmul.f32 %v5325, %v5285
        %v5351 = vmul.f32 %v5325, %v5286
        %v5352 = vmul.f32 %v5330, %v5287
        %v5353 = vmul.f32 %v5330, %v5288
        %v5354 = vmul.f32 %v5335, %v5289
        %v5355 = vmul.f32 %v5335, %v5290
        %v5356 = vmul.f32 %v5340, %v5291
        %v5357 = vmul.f32 %v5340, %v5292
        %v5358 = vadd.f32 %v5213, %v5342
        %v5359 = vadd.f32 %v5214, %v5343
        %v5360 = vadd.f32 %v5215, %v5344
        %v5361 = vadd.f32 %v5216, %v5345
        %v5362 = vadd.f32 %v5217, %v5346
        %v5363 = vadd.f32 %v5218, %v5347
        %v5364 = vadd.f32 %v5219, %v5348
        %v5365 = vadd.f32 %v5220, %v5349
        %v5366 = vadd.f32 %v5221, %v5350
        %v5367 = vadd.f32 %v5222, %v5351
        %v5368 = vadd.f32 %v5223, %v5352
        %v5369 = vadd.f32 %v5224, %v5353
        %v5370 = vadd.f32 %v5225, %v5354
        %v5371 = vadd.f32 %v5226, %v5355
        %v5372 = vadd.f32 %v5227, %v5356
        %v5373 = vadd.f32 %v5228, %v5357
        %5374 = vrot.lane.b32.xlu0 %v4408, 112
        %v5375 = vpop.permute.xlu0 %5374
        %5376 = vrot.lane.b32.xlu0 %v4410, 112
        %v5377 = vpop.permute.xlu0 %5376
        %5378 = vrot.lane.b32.xlu0 %v4412, 112
        %v5379 = vpop.permute.xlu0 %5378
        %5380 = vrot.lane.b32.xlu0 %v4414, 112
        %v5381 = vpop.permute.xlu0 %5380
        %5382 = vrot.lane.b32.xlu0 %v4416, 112
        %v5383 = vpop.permute.xlu0 %5382
        %5384 = vrot.lane.b32.xlu0 %v4418, 112
        %v5385 = vpop.permute.xlu0 %5384
        %5386 = vrot.lane.b32.xlu0 %v4420, 112
        %v5387 = vpop.permute.xlu0 %5386
        %5388 = vrot.lane.b32.xlu0 %v4422, 112
        %v5389 = vpop.permute.xlu0 %5388
        %5390 = vrot.lane.b32.xlu0 %v4409, 112
        %v5391 = vpop.permute.xlu0 %5390
        %5392 = vrot.lane.b32.xlu0 %v4411, 112
        %v5393 = vpop.permute.xlu0 %5392
        %5394 = vrot.lane.b32.xlu0 %v4413, 112
        %v5395 = vpop.permute.xlu0 %5394
        %5396 = vrot.lane.b32.xlu0 %v4415, 112
        %v5397 = vpop.permute.xlu0 %5396
        %5398 = vrot.lane.b32.xlu0 %v4417, 112
        %v5399 = vpop.permute.xlu0 %5398
        %5400 = vrot.lane.b32.xlu0 %v4419, 112
        %v5401 = vpop.permute.xlu0 %5400
        %5402 = vrot.lane.b32.xlu0 %v4421, 112
        %v5403 = vpop.permute.xlu0 %5402
        %5404 = vrot.lane.b32.xlu0 %v4423, 112
        %v5405 = vpop.permute.xlu0 %5404
        %v5406 = vsel %vm1734, %v5375, %v5391
        %v5407 = vsel %vm1734, %v5377, %v5393
        %v5408 = vsel %vm1734, %v5379, %v5395
        %v5409 = vsel %vm1734, %v5381, %v5397
        %v5410 = vsel %vm1734, %v5383, %v5399
        %v5411 = vsel %vm1734, %v5385, %v5401
        %v5412 = vsel %vm1734, %v5387, %v5403
        %v5413 = vsel %vm1734, %v5389, %v5405
        %v5414 = vsel %vm1734, %v5391, %v5375
        %v5415 = vsel %vm1734, %v5393, %v5377
        %v5416 = vsel %vm1734, %v5395, %v5379
        %v5417 = vsel %vm1734, %v5397, %v5381
        %v5418 = vsel %vm1734, %v5399, %v5383
        %v5419 = vsel %vm1734, %v5401, %v5385
        %v5420 = vsel %vm1734, %v5403, %v5387
        %v5421 = vsel %vm1734, %v5405, %v5389
        %v5422 = vmul.f32 %v5406, %v1745
        %v5423 = vmul.f32 %v5414, %v1749
        %v5424 = vmul.f32 %v5407, %v1745
        %v5425 = vmul.f32 %v5415, %v1749
        %v5426 = vmul.f32 %v5408, %v1745
        %v5427 = vmul.f32 %v5416, %v1749
        %v5428 = vmul.f32 %v5409, %v1745
        %v5429 = vmul.f32 %v5417, %v1749
        %v5430 = vmul.f32 %v5410, %v1745
        %v5431 = vmul.f32 %v5418, %v1749
        %v5432 = vmul.f32 %v5411, %v1745
        %v5433 = vmul.f32 %v5419, %v1749
        %v5434 = vmul.f32 %v5412, %v1745
        %v5435 = vmul.f32 %v5420, %v1749
        %v5436 = vmul.f32 %v5413, %v1745
        %v5437 = vmul.f32 %v5421, %v1749
        %s5438 = scalar_lea.vmem [#allocation13], 448
        %v5439 = vld [vmem:[%s5438] sm:$0xff]
        %v5440 = vld [vmem:[%s5438 + $0x8] sm:$0xff]
        %v5441 = vld [vmem:[%s5438 + $0x10] sm:$0xff]
        %v5442 = vld [vmem:[%s5438 + $0x18] sm:$0xff]
        %v5443 = vld [vmem:[%s5438 + $0x20] sm:$0xff]
        %v5444 = vld [vmem:[%s5438 + $0x28] sm:$0xff]
        %v5445 = vld [vmem:[%s5438 + $0x30] sm:$0xff]
        %v5446 = vld [vmem:[%s5438 + $0x38] sm:$0xff]
        %5448 = vset.pattern.permute.xlu0 0
        %5449 = vperm.xlu0 %5448, %v5439
        %v5450 = vpop.permute.xlu0 %5449
        %5453 = vset.pattern.permute.xlu0 0
        %5454 = vperm.xlu0 %5453, %v5440
        %v5455 = vpop.permute.xlu0 %5454
        %5458 = vset.pattern.permute.xlu0 0
        %5459 = vperm.xlu0 %5458, %v5441
        %v5460 = vpop.permute.xlu0 %5459
        %5463 = vset.pattern.permute.xlu0 0
        %5464 = vperm.xlu0 %5463, %v5442
        %v5465 = vpop.permute.xlu0 %5464
        %5468 = vset.pattern.permute.xlu0 0
        %5469 = vperm.xlu0 %5468, %v5443
        %v5470 = vpop.permute.xlu0 %5469
        %5473 = vset.pattern.permute.xlu0 0
        %5474 = vperm.xlu0 %5473, %v5444
        %v5475 = vpop.permute.xlu0 %5474
        %5478 = vset.pattern.permute.xlu0 0
        %5479 = vperm.xlu0 %5478, %v5445
        %v5480 = vpop.permute.xlu0 %5479
        %5483 = vset.pattern.permute.xlu0 0
        %5484 = vperm.xlu0 %5483, %v5446
        %v5485 = vpop.permute.xlu0 %5484
        %v5487 = vmul.f32 %v5450, %v5422
        %v5488 = vmul.f32 %v5450, %v5423
        %v5489 = vmul.f32 %v5455, %v5424
        %v5490 = vmul.f32 %v5455, %v5425
        %v5491 = vmul.f32 %v5460, %v5426
        %v5492 = vmul.f32 %v5460, %v5427
        %v5493 = vmul.f32 %v5465, %v5428
        %v5494 = vmul.f32 %v5465, %v5429
        %v5495 = vmul.f32 %v5470, %v5430
        %v5496 = vmul.f32 %v5470, %v5431
        %v5497 = vmul.f32 %v5475, %v5432
        %v5498 = vmul.f32 %v5475, %v5433
        %v5499 = vmul.f32 %v5480, %v5434
        %v5500 = vmul.f32 %v5480, %v5435
        %v5501 = vmul.f32 %v5485, %v5436
        %v5502 = vmul.f32 %v5485, %v5437
        %v5503 = vadd.f32 %v5358, %v5487
        %v5504 = vadd.f32 %v5359, %v5488
        %v5505 = vadd.f32 %v5360, %v5489
        %v5506 = vadd.f32 %v5361, %v5490
        %v5507 = vadd.f32 %v5362, %v5491
        %v5508 = vadd.f32 %v5363, %v5492
        %v5509 = vadd.f32 %v5364, %v5493
        %v5510 = vadd.f32 %v5365, %v5494
        %v5511 = vadd.f32 %v5366, %v5495
        %v5512 = vadd.f32 %v5367, %v5496
        %v5513 = vadd.f32 %v5368, %v5497
        %v5514 = vadd.f32 %v5369, %v5498
        %v5515 = vadd.f32 %v5370, %v5499
        %v5516 = vadd.f32 %v5371, %v5500
        %v5517 = vadd.f32 %v5372, %v5501
        %v5518 = vadd.f32 %v5373, %v5502
        %5519 = vrot.lane.b32.xlu0 %v4408, 111
        %v5520 = vpop.permute.xlu0 %5519
        %5521 = vrot.lane.b32.xlu0 %v4410, 111
        %v5522 = vpop.permute.xlu0 %5521
        %5523 = vrot.lane.b32.xlu0 %v4412, 111
        %v5524 = vpop.permute.xlu0 %5523
        %5525 = vrot.lane.b32.xlu0 %v4414, 111
        %v5526 = vpop.permute.xlu0 %5525
        %5527 = vrot.lane.b32.xlu0 %v4416, 111
        %v5528 = vpop.permute.xlu0 %5527
        %5529 = vrot.lane.b32.xlu0 %v4418, 111
        %v5530 = vpop.permute.xlu0 %5529
        %5531 = vrot.lane.b32.xlu0 %v4420, 111
        %v5532 = vpop.permute.xlu0 %5531
        %5533 = vrot.lane.b32.xlu0 %v4422, 111
        %v5534 = vpop.permute.xlu0 %5533
        %5535 = vrot.lane.b32.xlu0 %v4409, 111
        %v5536 = vpop.permute.xlu0 %5535
        %5537 = vrot.lane.b32.xlu0 %v4411, 111
        %v5538 = vpop.permute.xlu0 %5537
        %5539 = vrot.lane.b32.xlu0 %v4413, 111
        %v5540 = vpop.permute.xlu0 %5539
        %5541 = vrot.lane.b32.xlu0 %v4415, 111
        %v5542 = vpop.permute.xlu0 %5541
        %5543 = vrot.lane.b32.xlu0 %v4417, 111
        %v5544 = vpop.permute.xlu0 %5543
        %5545 = vrot.lane.b32.xlu0 %v4419, 111
        %v5546 = vpop.permute.xlu0 %5545
        %5547 = vrot.lane.b32.xlu0 %v4421, 111
        %v5548 = vpop.permute.xlu0 %5547
        %5549 = vrot.lane.b32.xlu0 %v4423, 111
        %v5550 = vpop.permute.xlu0 %5549
        %v5551 = vsel %vm1785, %v5520, %v5536
        %v5552 = vsel %vm1785, %v5522, %v5538
        %v5553 = vsel %vm1785, %v5524, %v5540
        %v5554 = vsel %vm1785, %v5526, %v5542
        %v5555 = vsel %vm1785, %v5528, %v5544
        %v5556 = vsel %vm1785, %v5530, %v5546
        %v5557 = vsel %vm1785, %v5532, %v5548
        %v5558 = vsel %vm1785, %v5534, %v5550
        %v5559 = vsel %vm1785, %v5536, %v5520
        %v5560 = vsel %vm1785, %v5538, %v5522
        %v5561 = vsel %vm1785, %v5540, %v5524
        %v5562 = vsel %vm1785, %v5542, %v5526
        %v5563 = vsel %vm1785, %v5544, %v5528
        %v5564 = vsel %vm1785, %v5546, %v5530
        %v5565 = vsel %vm1785, %v5548, %v5532
        %v5566 = vsel %vm1785, %v5550, %v5534
        %v5567 = vmul.f32 %v5551, %v1797
        %v5568 = vmul.f32 %v5559, %v1801
        %v5569 = vmul.f32 %v5552, %v1797
        %v5570 = vmul.f32 %v5560, %v1801
        %v5571 = vmul.f32 %v5553, %v1797
        %v5572 = vmul.f32 %v5561, %v1801
        %v5573 = vmul.f32 %v5554, %v1797
        %v5574 = vmul.f32 %v5562, %v1801
        %v5575 = vmul.f32 %v5555, %v1797
        %v5576 = vmul.f32 %v5563, %v1801
        %v5577 = vmul.f32 %v5556, %v1797
        %v5578 = vmul.f32 %v5564, %v1801
        %v5579 = vmul.f32 %v5557, %v1797
        %v5580 = vmul.f32 %v5565, %v1801
        %v5581 = vmul.f32 %v5558, %v1797
        %v5582 = vmul.f32 %v5566, %v1801
        %s5583 = scalar_lea.vmem [#allocation13], 512
        %v5584 = vld [vmem:[%s5583] sm:$0xff]
        %v5585 = vld [vmem:[%s5583 + $0x8] sm:$0xff]
        %v5586 = vld [vmem:[%s5583 + $0x10] sm:$0xff]
        %v5587 = vld [vmem:[%s5583 + $0x18] sm:$0xff]
        %v5588 = vld [vmem:[%s5583 + $0x20] sm:$0xff]
        %v5589 = vld [vmem:[%s5583 + $0x28] sm:$0xff]
        %v5590 = vld [vmem:[%s5583 + $0x30] sm:$0xff]
        %v5591 = vld [vmem:[%s5583 + $0x38] sm:$0xff]
        %5593 = vset.pattern.permute.xlu0 0
        %5594 = vperm.xlu0 %5593, %v5584
        %v5595 = vpop.permute.xlu0 %5594
        %5598 = vset.pattern.permute.xlu0 0
        %5599 = vperm.xlu0 %5598, %v5585
        %v5600 = vpop.permute.xlu0 %5599
        %5603 = vset.pattern.permute.xlu0 0
        %5604 = vperm.xlu0 %5603, %v5586
        %v5605 = vpop.permute.xlu0 %5604
        %5608 = vset.pattern.permute.xlu0 0
        %5609 = vperm.xlu0 %5608, %v5587
        %v5610 = vpop.permute.xlu0 %5609
        %5613 = vset.pattern.permute.xlu0 0
        %5614 = vperm.xlu0 %5613, %v5588
        %v5615 = vpop.permute.xlu0 %5614
        %5618 = vset.pattern.permute.xlu0 0
        %5619 = vperm.xlu0 %5618, %v5589
        %v5620 = vpop.permute.xlu0 %5619
        %5623 = vset.pattern.permute.xlu0 0
        %5624 = vperm.xlu0 %5623, %v5590
        %v5625 = vpop.permute.xlu0 %5624
        %5628 = vset.pattern.permute.xlu0 0
        %5629 = vperm.xlu0 %5628, %v5591
        %v5630 = vpop.permute.xlu0 %5629
        %v5632 = vmul.f32 %v5595, %v5567
        %v5633 = vmul.f32 %v5595, %v5568
        %v5634 = vmul.f32 %v5600, %v5569
        %v5635 = vmul.f32 %v5600, %v5570
        %v5636 = vmul.f32 %v5605, %v5571
        %v5637 = vmul.f32 %v5605, %v5572
        %v5638 = vmul.f32 %v5610, %v5573
        %v5639 = vmul.f32 %v5610, %v5574
        %v5640 = vmul.f32 %v5615, %v5575
        %v5641 = vmul.f32 %v5615, %v5576
        %v5642 = vmul.f32 %v5620, %v5577
        %v5643 = vmul.f32 %v5620, %v5578
        %v5644 = vmul.f32 %v5625, %v5579
        %v5645 = vmul.f32 %v5625, %v5580
        %v5646 = vmul.f32 %v5630, %v5581
        %v5647 = vmul.f32 %v5630, %v5582
        %v5648 = vadd.f32 %v5503, %v5632
        %v5649 = vadd.f32 %v5504, %v5633
        %v5650 = vadd.f32 %v5505, %v5634
        %v5651 = vadd.f32 %v5506, %v5635
        %v5652 = vadd.f32 %v5507, %v5636
        %v5653 = vadd.f32 %v5508, %v5637
        %v5654 = vadd.f32 %v5509, %v5638
        %v5655 = vadd.f32 %v5510, %v5639
        %v5656 = vadd.f32 %v5511, %v5640
        %v5657 = vadd.f32 %v5512, %v5641
        %v5658 = vadd.f32 %v5513, %v5642
        %v5659 = vadd.f32 %v5514, %v5643
        %v5660 = vadd.f32 %v5515, %v5644
        %v5661 = vadd.f32 %v5516, %v5645
        %v5662 = vadd.f32 %v5517, %v5646
        %v5663 = vadd.f32 %v5518, %v5647
        %v5664 = vmul.f32 %v5648, %v5648
        %v5665 = vmul.f32 %v5649, %v5649
        %v5666 = vmul.f32 %v5650, %v5650
        %v5667 = vmul.f32 %v5651, %v5651
        %v5668 = vmul.f32 %v5652, %v5652
        %v5669 = vmul.f32 %v5653, %v5653
        %v5670 = vmul.f32 %v5654, %v5654
        %v5671 = vmul.f32 %v5655, %v5655
        %v5672 = vmul.f32 %v5656, %v5656
        %v5673 = vmul.f32 %v5657, %v5657
        %v5674 = vmul.f32 %v5658, %v5658
        %v5675 = vmul.f32 %v5659, %v5659
        %v5676 = vmul.f32 %v5660, %v5660
        %v5677 = vmul.f32 %v5661, %v5661
        %v5678 = vmul.f32 %v5662, %v5662
        %v5679 = vmul.f32 %v5663, %v5663
        %v5680 = vmul.f32 %v5648, %v5664
        %v5681 = vmul.f32 %v5649, %v5665
        %v5682 = vmul.f32 %v5650, %v5666
        %v5683 = vmul.f32 %v5651, %v5667
        %v5684 = vmul.f32 %v5652, %v5668
        %v5685 = vmul.f32 %v5653, %v5669
        %v5686 = vmul.f32 %v5654, %v5670
        %v5687 = vmul.f32 %v5655, %v5671
        %v5688 = vmul.f32 %v5656, %v5672
        %v5689 = vmul.f32 %v5657, %v5673
        %v5690 = vmul.f32 %v5658, %v5674
        %v5691 = vmul.f32 %v5659, %v5675
        %v5692 = vmul.f32 %v5660, %v5676
        %v5693 = vmul.f32 %v5661, %v5677
        %v5694 = vmul.f32 %v5662, %v5678
        %v5695 = vmul.f32 %v5663, %v5679
        %v5696 = vmul.f32 %v5680, 0.044715
        %v5697 = vmul.f32 %v5681, 0.044715
        %v5698 = vmul.f32 %v5682, 0.044715
        %v5699 = vmul.f32 %v5683, 0.044715
        %v5700 = vmul.f32 %v5684, 0.044715
        %v5701 = vmul.f32 %v5685, 0.044715
        %v5702 = vmul.f32 %v5686, 0.044715
        %v5703 = vmul.f32 %v5687, 0.044715
        %v5704 = vmul.f32 %v5688, 0.044715
        %v5705 = vmul.f32 %v5689, 0.044715
        %v5706 = vmul.f32 %v5690, 0.044715
        %v5707 = vmul.f32 %v5691, 0.044715
        %v5708 = vmul.f32 %v5692, 0.044715
        %v5709 = vmul.f32 %v5693, 0.044715
        %v5710 = vmul.f32 %v5694, 0.044715
        %v5711 = vmul.f32 %v5695, 0.044715
        %v5712 = vadd.f32 %v5648, %v5696
        %v5713 = vadd.f32 %v5649, %v5697
        %v5714 = vadd.f32 %v5650, %v5698
        %v5715 = vadd.f32 %v5651, %v5699
        %v5716 = vadd.f32 %v5652, %v5700
        %v5717 = vadd.f32 %v5653, %v5701
        %v5718 = vadd.f32 %v5654, %v5702
        %v5719 = vadd.f32 %v5655, %v5703
        %v5720 = vadd.f32 %v5656, %v5704
        %v5721 = vadd.f32 %v5657, %v5705
        %v5722 = vadd.f32 %v5658, %v5706
        %v5723 = vadd.f32 %v5659, %v5707
        %v5724 = vadd.f32 %v5660, %v5708
        %v5725 = vadd.f32 %v5661, %v5709
        %v5726 = vadd.f32 %v5662, %v5710
        %v5727 = vadd.f32 %v5663, %v5711
        %v5728 = vmul.f32 %v5712, 0.7978846
        %v5729 = vmul.f32 %v5713, 0.7978846
        %v5730 = vmul.f32 %v5714, 0.7978846
        %v5731 = vmul.f32 %v5715, 0.7978846
        %v5732 = vmul.f32 %v5716, 0.7978846
        %v5733 = vmul.f32 %v5717, 0.7978846
        %v5734 = vmul.f32 %v5718, 0.7978846
        %v5735 = vmul.f32 %v5719, 0.7978846
        %v5736 = vmul.f32 %v5720, 0.7978846
        %v5737 = vmul.f32 %v5721, 0.7978846
        %v5738 = vmul.f32 %v5722, 0.7978846
        %v5739 = vmul.f32 %v5723, 0.7978846
        %v5740 = vmul.f32 %v5724, 0.7978846
        %v5741 = vmul.f32 %v5725, 0.7978846
        %v5742 = vmul.f32 %v5726, 0.7978846
        %v5743 = vmul.f32 %v5727, 0.7978846
        %v5744 = vtanh.pop %v5728
        %v5745 = vtanh.pop %v5729
        %v5746 = vtanh.pop %v5730
        %v5747 = vtanh.pop %v5731
        %v5748 = vtanh.pop %v5732
        %v5749 = vtanh.pop %v5733
        %v5750 = vtanh.pop %v5734
        %v5751 = vtanh.pop %v5735
        %v5752 = vtanh.pop %v5736
        %v5753 = vtanh.pop %v5737
        %v5754 = vtanh.pop %v5738
        %v5755 = vtanh.pop %v5739
        %v5756 = vtanh.pop %v5740
        %v5757 = vtanh.pop %v5741
        %v5758 = vtanh.pop %v5742
        %v5759 = vtanh.pop %v5743
        %v5760 = vadd.f32 %v5744, 1.0
        %v5761 = vadd.f32 %v5745, 1.0
        %v5762 = vadd.f32 %v5746, 1.0
        %v5763 = vadd.f32 %v5747, 1.0
        %v5764 = vadd.f32 %v5748, 1.0
        %v5765 = vadd.f32 %v5749, 1.0
        %v5766 = vadd.f32 %v5750, 1.0
        %v5767 = vadd.f32 %v5751, 1.0
        %v5768 = vadd.f32 %v5752, 1.0
        %v5769 = vadd.f32 %v5753, 1.0
        %v5770 = vadd.f32 %v5754, 1.0
        %v5771 = vadd.f32 %v5755, 1.0
        %v5772 = vadd.f32 %v5756, 1.0
        %v5773 = vadd.f32 %v5757, 1.0
        %v5774 = vadd.f32 %v5758, 1.0
        %v5775 = vadd.f32 %v5759, 1.0
        %v5776 = vmul.f32 %v5760, 0.5
        %v5777 = vmul.f32 %v5761, 0.5
        %v5778 = vmul.f32 %v5762, 0.5
        %v5779 = vmul.f32 %v5763, 0.5
        %v5780 = vmul.f32 %v5764, 0.5
        %v5781 = vmul.f32 %v5765, 0.5
        %v5782 = vmul.f32 %v5766, 0.5
        %v5783 = vmul.f32 %v5767, 0.5
        %v5784 = vmul.f32 %v5768, 0.5
        %v5785 = vmul.f32 %v5769, 0.5
        %v5786 = vmul.f32 %v5770, 0.5
        %v5787 = vmul.f32 %v5771, 0.5
        %v5788 = vmul.f32 %v5772, 0.5
        %v5789 = vmul.f32 %v5773, 0.5
        %v5790 = vmul.f32 %v5774, 0.5
        %v5791 = vmul.f32 %v5775, 0.5
        %v5792 = vmul.f32 %v5648, %v5776
        %v5793 = vmul.f32 %v5649, %v5777
        %v5794 = vmul.f32 %v5650, %v5778
        %v5795 = vmul.f32 %v5651, %v5779
        %v5796 = vmul.f32 %v5652, %v5780
        %v5797 = vmul.f32 %v5653, %v5781
        %v5798 = vmul.f32 %v5654, %v5782
        %v5799 = vmul.f32 %v5655, %v5783
        %v5800 = vmul.f32 %v5656, %v5784
        %v5801 = vmul.f32 %v5657, %v5785
        %v5802 = vmul.f32 %v5658, %v5786
        %v5803 = vmul.f32 %v5659, %v5787
        %v5804 = vmul.f32 %v5660, %v5788
        %v5805 = vmul.f32 %v5661, %v5789
        %v5806 = vmul.f32 %v5662, %v5790
        %v5807 = vmul.f32 %v5663, %v5791
        %v5808 = vld [vmem:[#allocation14] sm:$0xff]
        %v5809 = vld [vmem:[#allocation14 + $0x8] sm:$0xff]
        %v5810 = vpack.c.bf16 %v5809, %v5808
        %v5811 = vpack.c.bf16 %v5794, %v5792
        %v5812 = vpack.c.bf16 %v5795, %v5793
        %v5813 = vpack.c.bf16 %v5798, %v5796
        %v5814 = vpack.c.bf16 %v5799, %v5797
        %v5815 = vpack.c.bf16 %v5802, %v5800
        %v5816 = vpack.c.bf16 %v5803, %v5801
        %v5817 = vpack.c.bf16 %v5806, %v5804
        %v5818 = vpack.c.bf16 %v5807, %v5805
        %vm5819 = vcmask 523264
        %v5821 = vsel %vm5819, %v5810, 0
        %5823 = vmatprep.subr.bf16.mxu0 0
        %5824 = vmatpush1.bf16.msra.mxu0 0
        %5825 = vmatprep.subr.bf16.mxu0 0
        %5826 = vmatpush1.bf16.msra.mxu0 0
        %5827 = vmatprep.subr.bf16.mxu0 0
        %5828 = vmatpush1.bf16.msra.mxu0 0
        %5829 = vmatprep.subr.bf16.mxu0 0
        %5830 = vmatpush1.bf16.msra.mxu0 0
        %5831 = vmatprep.subr.bf16.mxu0 %v5818
        %5832 = vmatpush1.bf16.msra.mxu0 %v5817
        %5833 = vmatprep.subr.bf16.mxu0 %v5816
        %5834 = vmatpush1.bf16.msra.mxu0 %v5815
        %5835 = vmatprep.subr.bf16.mxu0 %v5814
        %5836 = vmatpush1.bf16.msra.mxu0 %v5813
        %5837 = vmatprep.subr.bf16.mxu0 %v5812
        %5838 = vmatpush1.bf16.msra.mxu0 %v5811
        %5839 = vmatprep.subr.bf16.mxu0 0
        %5840 = vmatpush2.bf16.msra.mxu0 0
        %5841 = vmatprep.subr.bf16.mxu0 0
        %5842 = vmatpush2.bf16.msra.mxu0 0
        %5843 = vmatprep.subr.bf16.mxu0 0
        %5844 = vmatpush2.bf16.msra.mxu0 0
        %5845 = vmatprep.subr.bf16.mxu0 0
        %5846 = vmatpush2.bf16.msra.mxu0 0
        %5847 = vmatprep.subr.bf16.mxu0 0
        %5848 = vmatpush2.bf16.msra.mxu0 0
        %5849 = vmatprep.subr.bf16.mxu0 0
        %5850 = vmatpush2.bf16.msra.mxu0 0
        %5851 = vmatprep.subr.bf16.mxu0 0
        %5852 = vmatpush2.bf16.msra.mxu0 0
        %5853 = vmatprep.subr.bf16.mxu0 0
        %5854 = vmatpush2.bf16.msra.mxu0 0
        %5855 = vmatprep.mubr.bf16.mxu0 0
        %5856 = vmatmul.mubr.bf16.gmra.mxu0 %v5821
        %v5857 = vpop.f32.mrf.mxu0
        %v5858 = vadd.f32 %v3970, %v5857
        %v5859 = vpop.f32.mrf.mxu0
        %v5860 = vadd.f32 %v3971, %v5859
        %v5861 = vpop.f32.mrf.mxu0
        %v5862 = vadd.f32 %v3972, %v5861
        %v5863 = vpop.f32.mrf.mxu0
        %v5864 = vadd.f32 %v3973, %v5863
        %5865 = vdwg.mxu0
        %5866 = vrot.lane.b32.xlu0 %v5858, 17
        %v5867 = vpop.permute.xlu0 %5866
        %5868 = vrot.lane.b32.xlu0 %v5862, 17
        %v5869 = vpop.permute.xlu0 %5868
        %5870 = vrot.lane.b32.xlu0 %v5860, 17
        %v5871 = vpop.permute.xlu0 %5870
        %5872 = vrot.lane.b32.xlu0 %v5864, 17
        %v5873 = vpop.permute.xlu0 %5872
        %v5874 = vsel %vm1197, %v5867, %v5871
        %v5875 = vsel %vm1197, %v5869, %v5873
        %v5876 = vsel %vm1197, %v5871, %v5867
        %v5877 = vsel %vm1197, %v5873, %v5869
        %v5878 = vmul.f32 %v5876, %v1209
        %v5879 = vmul.f32 %v5874, %v1213
        %v5880 = vmul.f32 %v5877, %v1209
        %v5881 = vmul.f32 %v5875, %v1213
        %v5882 = vld [vmem:[#allocation16] sm:$0x7]
        %v5883 = vpack.c.bf16 %v5882, %v5882
        %v5884 = vpack.c.bf16 %v5880, %v5878
        %v5885 = vpack.c.bf16 %v5881, %v5879
        %5886 = vrot.lane.b32.xlu0 %v5858, 16
        %v5887 = vpop.permute.xlu0 %5886
        %5888 = vrot.lane.b32.xlu0 %v5862, 16
        %v5889 = vpop.permute.xlu0 %5888
        %5890 = vrot.lane.b32.xlu0 %v5860, 16
        %v5891 = vpop.permute.xlu0 %5890
        %5892 = vrot.lane.b32.xlu0 %v5864, 16
        %v5893 = vpop.permute.xlu0 %5892
        %v5894 = vsel %vm1249, %v5887, %v5891
        %v5895 = vsel %vm1249, %v5889, %v5893
        %v5896 = vsel %vm1249, %v5891, %v5887
        %v5897 = vsel %vm1249, %v5893, %v5889
        %v5898 = vmul.f32 %v5896, %v1260
        %v5899 = vmul.f32 %v5894, %v1264
        %v5900 = vmul.f32 %v5897, %v1260
        %v5901 = vmul.f32 %v5895, %v1264
        %s5902 = scalar_lea.vmem [#allocation16], 4
        %v5903 = vld [vmem:[%s5902] sm:$0x7]
        %v5904 = vpack.c.bf16 %v5903, %v5903
        %v5905 = vpack.c.bf16 %v5900, %v5898
        %v5906 = vpack.c.bf16 %v5901, %v5899
        %v5908 = vsel %vm2167, %v5904, 0
        %5910 = vmatprep.subr.bf16.mxu0 0
        %5911 = vmatpush1.bf16.msra.mxu0 0
        %5912 = vmatprep.subr.bf16.mxu0 0
        %5913 = vmatpush1.bf16.msra.mxu0 0
        %5914 = vmatprep.subr.bf16.mxu0 0
        %5915 = vmatpush1.bf16.msra.mxu0 0
        %5916 = vmatprep.subr.bf16.mxu0 0
        %5917 = vmatpush1.bf16.msra.mxu0 0
        %5918 = vmatprep.subr.bf16.mxu0 0
        %5919 = vmatpush1.bf16.msra.mxu0 0
        %5920 = vmatprep.subr.bf16.mxu0 0
        %5921 = vmatpush1.bf16.msra.mxu0 0
        %5922 = vmatprep.subr.bf16.mxu0 0
        %5923 = vmatpush1.bf16.msra.mxu0 0
        %5924 = vmatprep.subr.bf16.mxu0 %v5906
        %5925 = vmatpush1.bf16.msra.mxu0 %v5905
        %5926 = vmatprep.subr.bf16.mxu0 0
        %5927 = vmatpush2.bf16.msra.mxu0 0
        %5928 = vmatprep.subr.bf16.mxu0 0
        %5929 = vmatpush2.bf16.msra.mxu0 0
        %5930 = vmatprep.subr.bf16.mxu0 0
        %5931 = vmatpush2.bf16.msra.mxu0 0
        %5932 = vmatprep.subr.bf16.mxu0 0
        %5933 = vmatpush2.bf16.msra.mxu0 0
        %5934 = vmatprep.subr.bf16.mxu0 0
        %5935 = vmatpush2.bf16.msra.mxu0 0
        %5936 = vmatprep.subr.bf16.mxu0 0
        %5937 = vmatpush2.bf16.msra.mxu0 0
        %5938 = vmatprep.subr.bf16.mxu0 0
        %5939 = vmatpush2.bf16.msra.mxu0 0
        %5940 = vmatprep.subr.bf16.mxu0 0
        %5941 = vmatpush2.bf16.msra.mxu0 0
        %5942 = vmatprep.mubr.bf16.mxu0 0
        %5943 = vmatmul.mubr.bf16.gmra.mxu0 %v5908
        %v5944 = vpop.f32.mrf.mxu0
        %v5945 = vadd.f32 0.0, %v5944
        %v5946 = vpop.f32.mrf.mxu0
        %v5947 = vadd.f32 0.0, %v5946
        %v5948 = vpop.f32.mrf.mxu0
        %v5949 = vpop.f32.mrf.mxu0
        %5950 = vdwg.mxu0
        %v5952 = vsel %vm2167, %v5883, 0
        %5954 = vmatprep.subr.bf16.mxu0 0
        %5955 = vmatpush1.bf16.msra.mxu0 0
        %5956 = vmatprep.subr.bf16.mxu0 0
        %5957 = vmatpush1.bf16.msra.mxu0 0
        %5958 = vmatprep.subr.bf16.mxu0 0
        %5959 = vmatpush1.bf16.msra.mxu0 0
        %5960 = vmatprep.subr.bf16.mxu0 0
        %5961 = vmatpush1.bf16.msra.mxu0 0
        %5962 = vmatprep.subr.bf16.mxu0 0
        %5963 = vmatpush1.bf16.msra.mxu0 0
        %5964 = vmatprep.subr.bf16.mxu0 0
        %5965 = vmatpush1.bf16.msra.mxu0 0
        %5966 = vmatprep.subr.bf16.mxu0 0
        %5967 = vmatpush1.bf16.msra.mxu0 0
        %5968 = vmatprep.subr.bf16.mxu0 %v5885
        %5969 = vmatpush1.bf16.msra.mxu0 %v5884
        %5970 = vmatprep.subr.bf16.mxu0 0
        %5971 = vmatpush2.bf16.msra.mxu0 0
        %5972 = vmatprep.subr.bf16.mxu0 0
        %5973 = vmatpush2.bf16.msra.mxu0 0
        %5974 = vmatprep.subr.bf16.mxu0 0
        %5975 = vmatpush2.bf16.msra.mxu0 0
        %5976 = vmatprep.subr.bf16.mxu0 0
        %5977 = vmatpush2.bf16.msra.mxu0 0
        %5978 = vmatprep.subr.bf16.mxu0 0
        %5979 = vmatpush2.bf16.msra.mxu0 0
        %5980 = vmatprep.subr.bf16.mxu0 0
        %5981 = vmatpush2.bf16.msra.mxu0 0
        %5982 = vmatprep.subr.bf16.mxu0 0
        %5983 = vmatpush2.bf16.msra.mxu0 0
        %5984 = vmatprep.subr.bf16.mxu0 0
        %5985 = vmatpush2.bf16.msra.mxu0 0
        %5986 = vmatprep.mubr.bf16.mxu0 0
        %5987 = vmatmul.mubr.bf16.gmra.mxu0 %v5952
        %v5988 = vpop.f32.mrf.mxu0
        %v5989 = vadd.f32 %v5945, %v5988
        %v5990 = vpop.f32.mrf.mxu0
        %v5991 = vadd.f32 %v5947, %v5990
        %v5992 = vpop.f32.mrf.mxu0
        %v5993 = vpop.f32.mrf.mxu0
        %5994 = vdwg.mxu0
        %5995 = vrot.lane.b32.xlu0 %v5858, 15
        %v5996 = vpop.permute.xlu0 %5995
        %5997 = vrot.lane.b32.xlu0 %v5862, 15
        %v5998 = vpop.permute.xlu0 %5997
        %5999 = vrot.lane.b32.xlu0 %v5860, 15
        %v6000 = vpop.permute.xlu0 %5999
        %6001 = vrot.lane.b32.xlu0 %v5864, 15
        %v6002 = vpop.permute.xlu0 %6001
        %v6003 = vsel %vm1300, %v5996, %v6000
        %v6004 = vsel %vm1300, %v5998, %v6002
        %v6005 = vsel %vm1300, %v6000, %v5996
        %v6006 = vsel %vm1300, %v6002, %v5998
        %v6007 = vmul.f32 %v6005, %v1312
        %v6008 = vmul.f32 %v6003, %v1316
        %v6009 = vmul.f32 %v6006, %v1312
        %v6010 = vmul.f32 %v6004, %v1316
        %s6011 = scalar_lea.vmem [#allocation16], 8
        %v6012 = vld [vmem:[%s6011] sm:$0x7]
        %v6013 = vpack.c.bf16 %v6012, %v6012
        %v6014 = vpack.c.bf16 %v6009, %v6007
        %v6015 = vpack.c.bf16 %v6010, %v6008
        %v6017 = vsel %vm2167, %v6013, 0
        %6019 = vmatprep.subr.bf16.mxu0 0
        %6020 = vmatpush1.bf16.msra.mxu0 0
        %6021 = vmatprep.subr.bf16.mxu0 0
        %6022 = vmatpush1.bf16.msra.mxu0 0
        %6023 = vmatprep.subr.bf16.mxu0 0
        %6024 = vmatpush1.bf16.msra.mxu0 0
        %6025 = vmatprep.subr.bf16.mxu0 0
        %6026 = vmatpush1.bf16.msra.mxu0 0
        %6027 = vmatprep.subr.bf16.mxu0 0
        %6028 = vmatpush1.bf16.msra.mxu0 0
        %6029 = vmatprep.subr.bf16.mxu0 0
        %6030 = vmatpush1.bf16.msra.mxu0 0
        %6031 = vmatprep.subr.bf16.mxu0 0
        %6032 = vmatpush1.bf16.msra.mxu0 0
        %6033 = vmatprep.subr.bf16.mxu0 %v6015
        %6034 = vmatpush1.bf16.msra.mxu0 %v6014
        %6035 = vmatprep.subr.bf16.mxu0 0
        %6036 = vmatpush2.bf16.msra.mxu0 0
        %6037 = vmatprep.subr.bf16.mxu0 0
        %6038 = vmatpush2.bf16.msra.mxu0 0
        %6039 = vmatprep.subr.bf16.mxu0 0
        %6040 = vmatpush2.bf16.msra.mxu0 0
        %6041 = vmatprep.subr.bf16.mxu0 0
        %6042 = vmatpush2.bf16.msra.mxu0 0
        %6043 = vmatprep.subr.bf16.mxu0 0
        %6044 = vmatpush2.bf16.msra.mxu0 0
        %6045 = vmatprep.subr.bf16.mxu0 0
        %6046 = vmatpush2.bf16.msra.mxu0 0
        %6047 = vmatprep.subr.bf16.mxu0 0
        %6048 = vmatpush2.bf16.msra.mxu0 0
        %6049 = vmatprep.subr.bf16.mxu0 0
        %6050 = vmatpush2.bf16.msra.mxu0 0
        %6051 = vmatprep.mubr.bf16.mxu0 0
        %6052 = vmatmul.mubr.bf16.gmra.mxu0 %v6017
        %v6053 = vpop.f32.mrf.mxu0
        %v6054 = vadd.f32 0.0, %v6053
        %v6055 = vpop.f32.mrf.mxu0
        %v6056 = vadd.f32 0.0, %v6055
        %v6057 = vpop.f32.mrf.mxu0
        %v6058 = vpop.f32.mrf.mxu0
        %6059 = vdwg.mxu0
        %v6060 = vadd.f32 %v5989, %v6054
        %v6061 = vadd.f32 %v5991, %v6056
        %6062 = vrot.lane.b32.xlu0 %v5858, 1
        %v6063 = vpop.permute.xlu0 %6062
        %6064 = vrot.lane.b32.xlu0 %v5862, 1
        %v6065 = vpop.permute.xlu0 %6064
        %6066 = vrot.lane.b32.xlu0 %v5860, 1
        %v6067 = vpop.permute.xlu0 %6066
        %6068 = vrot.lane.b32.xlu0 %v5864, 1
        %v6069 = vpop.permute.xlu0 %6068
        %v6070 = vsel %vm1455, %v6063, %v6067
        %v6071 = vsel %vm1455, %v6065, %v6069
        %v6072 = vsel %vm1455, %v6067, %v6063
        %v6073 = vsel %vm1455, %v6069, %v6065
        %v6074 = vmul.f32 %v6072, %v1466
        %v6075 = vmul.f32 %v6070, %v1470
        %v6076 = vmul.f32 %v6073, %v1466
        %v6077 = vmul.f32 %v6071, %v1470
        %s6078 = scalar_lea.vmem [#allocation16], 12
        %v6079 = vld [vmem:[%s6078] sm:$0x7]
        %v6080 = vpack.c.bf16 %v6079, %v6079
        %v6081 = vpack.c.bf16 %v6076, %v6074
        %v6082 = vpack.c.bf16 %v6077, %v6075
        %v6084 = vsel %vm2167, %v6080, 0
        %6086 = vmatprep.subr.bf16.mxu0 0
        %6087 = vmatpush1.bf16.msra.mxu0 0
        %6088 = vmatprep.subr.bf16.mxu0 0
        %6089 = vmatpush1.bf16.msra.mxu0 0
        %6090 = vmatprep.subr.bf16.mxu0 0
        %6091 = vmatpush1.bf16.msra.mxu0 0
        %6092 = vmatprep.subr.bf16.mxu0 0
        %6093 = vmatpush1.bf16.msra.mxu0 0
        %6094 = vmatprep.subr.bf16.mxu0 0
        %6095 = vmatpush1.bf16.msra.mxu0 0
        %6096 = vmatprep.subr.bf16.mxu0 0
        %6097 = vmatpush1.bf16.msra.mxu0 0
        %6098 = vmatprep.subr.bf16.mxu0 0
        %6099 = vmatpush1.bf16.msra.mxu0 0
        %6100 = vmatprep.subr.bf16.mxu0 %v6082
        %6101 = vmatpush1.bf16.msra.mxu0 %v6081
        %6102 = vmatprep.subr.bf16.mxu0 0
        %6103 = vmatpush2.bf16.msra.mxu0 0
        %6104 = vmatprep.subr.bf16.mxu0 0
        %6105 = vmatpush2.bf16.msra.mxu0 0
        %6106 = vmatprep.subr.bf16.mxu0 0
        %6107 = vmatpush2.bf16.msra.mxu0 0
        %6108 = vmatprep.subr.bf16.mxu0 0
        %6109 = vmatpush2.bf16.msra.mxu0 0
        %6110 = vmatprep.subr.bf16.mxu0 0
        %6111 = vmatpush2.bf16.msra.mxu0 0
        %6112 = vmatprep.subr.bf16.mxu0 0
        %6113 = vmatpush2.bf16.msra.mxu0 0
        %6114 = vmatprep.subr.bf16.mxu0 0
        %6115 = vmatpush2.bf16.msra.mxu0 0
        %6116 = vmatprep.subr.bf16.mxu0 0
        %6117 = vmatpush2.bf16.msra.mxu0 0
        %6118 = vmatprep.mubr.bf16.mxu0 0
        %6119 = vmatmul.mubr.bf16.gmra.mxu0 %v6084
        %v6120 = vpop.f32.mrf.mxu0
        %v6121 = vadd.f32 0.0, %v6120
        %v6122 = vpop.f32.mrf.mxu0
        %v6123 = vadd.f32 0.0, %v6122
        %v6124 = vpop.f32.mrf.mxu0
        %v6125 = vpop.f32.mrf.mxu0
        %6126 = vdwg.mxu0
        %v6127 = vadd.f32 %v6060, %v6121
        %v6128 = vadd.f32 %v6061, %v6123
        %s6129 = scalar_lea.vmem [#allocation16], 16
        %v6130 = vld [vmem:[%s6129] sm:$0x7]
        %v6131 = vpack.c.bf16 %v6130, %v6130
        %v6132 = vpack.c.bf16 %v5862, %v5858
        %v6133 = vpack.c.bf16 %v5864, %v5860
        %v6135 = vsel %vm2167, %v6131, 0
        %6137 = vmatprep.subr.bf16.mxu0 0
        %6138 = vmatpush1.bf16.msra.mxu0 0
        %6139 = vmatprep.subr.bf16.mxu0 0
        %6140 = vmatpush1.bf16.msra.mxu0 0
        %6141 = vmatprep.subr.bf16.mxu0 0
        %6142 = vmatpush1.bf16.msra.mxu0 0
        %6143 = vmatprep.subr.bf16.mxu0 0
        %6144 = vmatpush1.bf16.msra.mxu0 0
        %6145 = vmatprep.subr.bf16.mxu0 0
        %6146 = vmatpush1.bf16.msra.mxu0 0
        %6147 = vmatprep.subr.bf16.mxu0 0
        %6148 = vmatpush1.bf16.msra.mxu0 0
        %6149 = vmatprep.subr.bf16.mxu0 0
        %6150 = vmatpush1.bf16.msra.mxu0 0
        %6151 = vmatprep.subr.bf16.mxu0 %v6133
        %6152 = vmatpush1.bf16.msra.mxu0 %v6132
        %6153 = vmatprep.subr.bf16.mxu0 0
        %6154 = vmatpush2.bf16.msra.mxu0 0
        %6155 = vmatprep.subr.bf16.mxu0 0
        %6156 = vmatpush2.bf16.msra.mxu0 0
        %6157 = vmatprep.subr.bf16.mxu0 0
        %6158 = vmatpush2.bf16.msra.mxu0 0
        %6159 = vmatprep.subr.bf16.mxu0 0
        %6160 = vmatpush2.bf16.msra.mxu0 0
        %6161 = vmatprep.subr.bf16.mxu0 0
        %6162 = vmatpush2.bf16.msra.mxu0 0
        %6163 = vmatprep.subr.bf16.mxu0 0
        %6164 = vmatpush2.bf16.msra.mxu0 0
        %6165 = vmatprep.subr.bf16.mxu0 0
        %6166 = vmatpush2.bf16.msra.mxu0 0
        %6167 = vmatprep.subr.bf16.mxu0 0
        %6168 = vmatpush2.bf16.msra.mxu0 0
        %6169 = vmatprep.mubr.bf16.mxu0 0
        %6170 = vmatmul.mubr.bf16.gmra.mxu0 %v6135
        %v6171 = vpop.f32.mrf.mxu0
        %v6172 = vadd.f32 0.0, %v6171
        %v6173 = vpop.f32.mrf.mxu0
        %v6174 = vadd.f32 0.0, %v6173
        %v6175 = vpop.f32.mrf.mxu0
        %v6176 = vpop.f32.mrf.mxu0
        %6177 = vdwg.mxu0
        %v6178 = vadd.f32 %v6127, %v6172
        %v6179 = vadd.f32 %v6128, %v6174
        %6180 = vrot.lane.b32.xlu0 %v5858, 127
        %v6181 = vpop.permute.xlu0 %6180
        %6182 = vrot.lane.b32.xlu0 %v5862, 127
        %v6183 = vpop.permute.xlu0 %6182
        %6184 = vrot.lane.b32.xlu0 %v5860, 127
        %v6185 = vpop.permute.xlu0 %6184
        %6186 = vrot.lane.b32.xlu0 %v5864, 127
        %v6187 = vpop.permute.xlu0 %6186
        %v6188 = vsel %vm1527, %v6181, %v6185
        %v6189 = vsel %vm1527, %v6183, %v6187
        %v6190 = vsel %vm1527, %v6185, %v6181
        %v6191 = vsel %vm1527, %v6187, %v6183
        %v6192 = vmul.f32 %v6188, %v1538
        %v6193 = vmul.f32 %v6190, %v1542
        %v6194 = vmul.f32 %v6189, %v1538
        %v6195 = vmul.f32 %v6191, %v1542
        %s6196 = scalar_lea.vmem [#allocation16], 20
        %v6197 = vld [vmem:[%s6196] sm:$0x7]
        %v6198 = vpack.c.bf16 %v6197, %v6197
        %v6199 = vpack.c.bf16 %v6194, %v6192
        %v6200 = vpack.c.bf16 %v6195, %v6193
        %v6202 = vsel %vm2167, %v6198, 0
        %6204 = vmatprep.subr.bf16.mxu0 0
        %6205 = vmatpush1.bf16.msra.mxu0 0
        %6206 = vmatprep.subr.bf16.mxu0 0
        %6207 = vmatpush1.bf16.msra.mxu0 0
        %6208 = vmatprep.subr.bf16.mxu0 0
        %6209 = vmatpush1.bf16.msra.mxu0 0
        %6210 = vmatprep.subr.bf16.mxu0 0
        %6211 = vmatpush1.bf16.msra.mxu0 0
        %6212 = vmatprep.subr.bf16.mxu0 0
        %6213 = vmatpush1.bf16.msra.mxu0 0
        %6214 = vmatprep.subr.bf16.mxu0 0
        %6215 = vmatpush1.bf16.msra.mxu0 0
        %6216 = vmatprep.subr.bf16.mxu0 0
        %6217 = vmatpush1.bf16.msra.mxu0 0
        %6218 = vmatprep.subr.bf16.mxu0 %v6200
        %6219 = vmatpush1.bf16.msra.mxu0 %v6199
        %6220 = vmatprep.subr.bf16.mxu0 0
        %6221 = vmatpush2.bf16.msra.mxu0 0
        %6222 = vmatprep.subr.bf16.mxu0 0
        %6223 = vmatpush2.bf16.msra.mxu0 0
        %6224 = vmatprep.subr.bf16.mxu0 0
        %6225 = vmatpush2.bf16.msra.mxu0 0
        %6226 = vmatprep.subr.bf16.mxu0 0
        %6227 = vmatpush2.bf16.msra.mxu0 0
        %6228 = vmatprep.subr.bf16.mxu0 0
        %6229 = vmatpush2.bf16.msra.mxu0 0
        %6230 = vmatprep.subr.bf16.mxu0 0
        %6231 = vmatpush2.bf16.msra.mxu0 0
        %6232 = vmatprep.subr.bf16.mxu0 0
        %6233 = vmatpush2.bf16.msra.mxu0 0
        %6234 = vmatprep.subr.bf16.mxu0 0
        %6235 = vmatpush2.bf16.msra.mxu0 0
        %6236 = vmatprep.mubr.bf16.mxu0 0
        %6237 = vmatmul.mubr.bf16.gmra.mxu0 %v6202
        %v6238 = vpop.f32.mrf.mxu0
        %v6239 = vadd.f32 0.0, %v6238
        %v6240 = vpop.f32.mrf.mxu0
        %v6241 = vadd.f32 0.0, %v6240
        %v6242 = vpop.f32.mrf.mxu0
        %v6243 = vpop.f32.mrf.mxu0
        %6244 = vdwg.mxu0
        %v6245 = vadd.f32 %v6178, %v6239
        %v6246 = vadd.f32 %v6179, %v6241
        %6247 = vrot.lane.b32.xlu0 %v5858, 113
        %v6248 = vpop.permute.xlu0 %6247
        %6249 = vrot.lane.b32.xlu0 %v5862, 113
        %v6250 = vpop.permute.xlu0 %6249
        %6251 = vrot.lane.b32.xlu0 %v5860, 113
        %v6252 = vpop.permute.xlu0 %6251
        %6253 = vrot.lane.b32.xlu0 %v5864, 113
        %v6254 = vpop.permute.xlu0 %6253
        %v6255 = vsel %vm1682, %v6248, %v6252
        %v6256 = vsel %vm1682, %v6250, %v6254
        %v6257 = vsel %vm1682, %v6252, %v6248
        %v6258 = vsel %vm1682, %v6254, %v6250
        %v6259 = vmul.f32 %v6255, %v1694
        %v6260 = vmul.f32 %v6257, %v1698
        %v6261 = vmul.f32 %v6256, %v1694
        %v6262 = vmul.f32 %v6258, %v1698
        %s6263 = scalar_lea.vmem [#allocation16], 24
        %v6264 = vld [vmem:[%s6263] sm:$0x7]
        %v6265 = vpack.c.bf16 %v6264, %v6264
        %v6266 = vpack.c.bf16 %v6261, %v6259
        %v6267 = vpack.c.bf16 %v6262, %v6260
        %v6269 = vsel %vm2167, %v6265, 0
        %6271 = vmatprep.subr.bf16.mxu0 0
        %6272 = vmatpush1.bf16.msra.mxu0 0
        %6273 = vmatprep.subr.bf16.mxu0 0
        %6274 = vmatpush1.bf16.msra.mxu0 0
        %6275 = vmatprep.subr.bf16.mxu0 0
        %6276 = vmatpush1.bf16.msra.mxu0 0
        %6277 = vmatprep.subr.bf16.mxu0 0
        %6278 = vmatpush1.bf16.msra.mxu0 0
        %6279 = vmatprep.subr.bf16.mxu0 0
        %6280 = vmatpush1.bf16.msra.mxu0 0
        %6281 = vmatprep.subr.bf16.mxu0 0
        %6282 = vmatpush1.bf16.msra.mxu0 0
        %6283 = vmatprep.subr.bf16.mxu0 0
        %6284 = vmatpush1.bf16.msra.mxu0 0
        %6285 = vmatprep.subr.bf16.mxu0 %v6267
        %6286 = vmatpush1.bf16.msra.mxu0 %v6266
        %6287 = vmatprep.subr.bf16.mxu0 0
        %6288 = vmatpush2.bf16.msra.mxu0 0
        %6289 = vmatprep.subr.bf16.mxu0 0
        %6290 = vmatpush2.bf16.msra.mxu0 0
        %6291 = vmatprep.subr.bf16.mxu0 0
        %6292 = vmatpush2.bf16.msra.mxu0 0
        %6293 = vmatprep.subr.bf16.mxu0 0
        %6294 = vmatpush2.bf16.msra.mxu0 0
        %6295 = vmatprep.subr.bf16.mxu0 0
        %6296 = vmatpush2.bf16.msra.mxu0 0
        %6297 = vmatprep.subr.bf16.mxu0 0
        %6298 = vmatpush2.bf16.msra.mxu0 0
        %6299 = vmatprep.subr.bf16.mxu0 0
        %6300 = vmatpush2.bf16.msra.mxu0 0
        %6301 = vmatprep.subr.bf16.mxu0 0
        %6302 = vmatpush2.bf16.msra.mxu0 0
        %6303 = vmatprep.mubr.bf16.mxu0 0
        %6304 = vmatmul.mubr.bf16.gmra.mxu0 %v6269
        %v6305 = vpop.f32.mrf.mxu0
        %v6306 = vadd.f32 0.0, %v6305
        %v6307 = vpop.f32.mrf.mxu0
        %v6308 = vadd.f32 0.0, %v6307
        %v6309 = vpop.f32.mrf.mxu0
        %v6310 = vpop.f32.mrf.mxu0
        %6311 = vdwg.mxu0
        %v6312 = vadd.f32 %v6245, %v6306
        %v6313 = vadd.f32 %v6246, %v6308
        %6314 = vrot.lane.b32.xlu0 %v5858, 112
        %v6315 = vpop.permute.xlu0 %6314
        %6316 = vrot.lane.b32.xlu0 %v5862, 112
        %v6317 = vpop.permute.xlu0 %6316
        %6318 = vrot.lane.b32.xlu0 %v5860, 112
        %v6319 = vpop.permute.xlu0 %6318
        %6320 = vrot.lane.b32.xlu0 %v5864, 112
        %v6321 = vpop.permute.xlu0 %6320
        %v6322 = vsel %vm1734, %v6315, %v6319
        %v6323 = vsel %vm1734, %v6317, %v6321
        %v6324 = vsel %vm1734, %v6319, %v6315
        %v6325 = vsel %vm1734, %v6321, %v6317
        %v6326 = vmul.f32 %v6322, %v1745
        %v6327 = vmul.f32 %v6324, %v1749
        %v6328 = vmul.f32 %v6323, %v1745
        %v6329 = vmul.f32 %v6325, %v1749
        %s6330 = scalar_lea.vmem [#allocation16], 28
        %v6331 = vld [vmem:[%s6330] sm:$0x7]
        %v6332 = vpack.c.bf16 %v6331, %v6331
        %v6333 = vpack.c.bf16 %v6328, %v6326
        %v6334 = vpack.c.bf16 %v6329, %v6327
        %v6336 = vsel %vm2167, %v6332, 0
        %6338 = vmatprep.subr.bf16.mxu0 0
        %6339 = vmatpush1.bf16.msra.mxu0 0
        %6340 = vmatprep.subr.bf16.mxu0 0
        %6341 = vmatpush1.bf16.msra.mxu0 0
        %6342 = vmatprep.subr.bf16.mxu0 0
        %6343 = vmatpush1.bf16.msra.mxu0 0
        %6344 = vmatprep.subr.bf16.mxu0 0
        %6345 = vmatpush1.bf16.msra.mxu0 0
        %6346 = vmatprep.subr.bf16.mxu0 0
        %6347 = vmatpush1.bf16.msra.mxu0 0
        %6348 = vmatprep.subr.bf16.mxu0 0
        %6349 = vmatpush1.bf16.msra.mxu0 0
        %6350 = vmatprep.subr.bf16.mxu0 0
        %6351 = vmatpush1.bf16.msra.mxu0 0
        %6352 = vmatprep.subr.bf16.mxu0 %v6334
        %6353 = vmatpush1.bf16.msra.mxu0 %v6333
        %6354 = vmatprep.subr.bf16.mxu0 0
        %6355 = vmatpush2.bf16.msra.mxu0 0
        %6356 = vmatprep.subr.bf16.mxu0 0
        %6357 = vmatpush2.bf16.msra.mxu0 0
        %6358 = vmatprep.subr.bf16.mxu0 0
        %6359 = vmatpush2.bf16.msra.mxu0 0
        %6360 = vmatprep.subr.bf16.mxu0 0
        %6361 = vmatpush2.bf16.msra.mxu0 0
        %6362 = vmatprep.subr.bf16.mxu0 0
        %6363 = vmatpush2.bf16.msra.mxu0 0
        %6364 = vmatprep.subr.bf16.mxu0 0
        %6365 = vmatpush2.bf16.msra.mxu0 0
        %6366 = vmatprep.subr.bf16.mxu0 0
        %6367 = vmatpush2.bf16.msra.mxu0 0
        %6368 = vmatprep.subr.bf16.mxu0 0
        %6369 = vmatpush2.bf16.msra.mxu0 0
        %6370 = vmatprep.mubr.bf16.mxu0 0
        %6371 = vmatmul.mubr.bf16.gmra.mxu0 %v6336
        %v6372 = vpop.f32.mrf.mxu0
        %v6373 = vadd.f32 0.0, %v6372
        %v6374 = vpop.f32.mrf.mxu0
        %v6375 = vadd.f32 0.0, %v6374
        %v6376 = vpop.f32.mrf.mxu0
        %v6377 = vpop.f32.mrf.mxu0
        %6378 = vdwg.mxu0
        %v6379 = vadd.f32 %v6312, %v6373
        %v6380 = vadd.f32 %v6313, %v6375
        %6381 = vrot.lane.b32.xlu0 %v5858, 111
        %v6382 = vpop.permute.xlu0 %6381
        %6383 = vrot.lane.b32.xlu0 %v5862, 111
        %v6384 = vpop.permute.xlu0 %6383
        %6385 = vrot.lane.b32.xlu0 %v5860, 111
        %v6386 = vpop.permute.xlu0 %6385
        %6387 = vrot.lane.b32.xlu0 %v5864, 111
        %v6388 = vpop.permute.xlu0 %6387
        %v6389 = vsel %vm1785, %v6382, %v6386
        %v6390 = vsel %vm1785, %v6384, %v6388
        %v6391 = vsel %vm1785, %v6386, %v6382
        %v6392 = vsel %vm1785, %v6388, %v6384
        %v6393 = vmul.f32 %v6389, %v1797
        %v6394 = vmul.f32 %v6391, %v1801
        %v6395 = vmul.f32 %v6390, %v1797
        %v6396 = vmul.f32 %v6392, %v1801
        %s6397 = scalar_lea.vmem [#allocation16], 32
        %v6398 = vld [vmem:[%s6397] sm:$0x7]
        %v6399 = vpack.c.bf16 %v6398, %v6398
        %v6400 = vpack.c.bf16 %v6395, %v6393
        %v6401 = vpack.c.bf16 %v6396, %v6394
        %v6403 = vsel %vm2167, %v6399, 0
        %6405 = vmatprep.subr.bf16.mxu0 0
        %6406 = vmatpush1.bf16.msra.mxu0 0
        %6407 = vmatprep.subr.bf16.mxu0 0
        %6408 = vmatpush1.bf16.msra.mxu0 0
        %6409 = vmatprep.subr.bf16.mxu0 0
        %6410 = vmatpush1.bf16.msra.mxu0 0
        %6411 = vmatprep.subr.bf16.mxu0 0
        %6412 = vmatpush1.bf16.msra.mxu0 0
        %6413 = vmatprep.subr.bf16.mxu0 0
        %6414 = vmatpush1.bf16.msra.mxu0 0
        %6415 = vmatprep.subr.bf16.mxu0 0
        %6416 = vmatpush1.bf16.msra.mxu0 0
        %6417 = vmatprep.subr.bf16.mxu0 0
        %6418 = vmatpush1.bf16.msra.mxu0 0
        %6419 = vmatprep.subr.bf16.mxu0 %v6401
        %6420 = vmatpush1.bf16.msra.mxu0 %v6400
        %6421 = vmatprep.subr.bf16.mxu0 0
        %6422 = vmatpush2.bf16.msra.mxu0 0
        %6423 = vmatprep.subr.bf16.mxu0 0
        %6424 = vmatpush2.bf16.msra.mxu0 0
        %6425 = vmatprep.subr.bf16.mxu0 0
        %6426 = vmatpush2.bf16.msra.mxu0 0
        %6427 = vmatprep.subr.bf16.mxu0 0
        %6428 = vmatpush2.bf16.msra.mxu0 0
        %6429 = vmatprep.subr.bf16.mxu0 0
        %6430 = vmatpush2.bf16.msra.mxu0 0
        %6431 = vmatprep.subr.bf16.mxu0 0
        %6432 = vmatpush2.bf16.msra.mxu0 0
        %6433 = vmatprep.subr.bf16.mxu0 0
        %6434 = vmatpush2.bf16.msra.mxu0 0
        %6435 = vmatprep.subr.bf16.mxu0 0
        %6436 = vmatpush2.bf16.msra.mxu0 0
        %6437 = vmatprep.mubr.bf16.mxu0 0
        %6438 = vmatmul.mubr.bf16.gmra.mxu0 %v6403
        %v6439 = vpop.f32.mrf.mxu0
        %v6440 = vadd.f32 0.0, %v6439
        %v6441 = vpop.f32.mrf.mxu0
        %v6442 = vadd.f32 0.0, %v6441
        %v6443 = vpop.f32.mrf.mxu0
        %v6444 = vpop.f32.mrf.mxu0
        %6445 = vdwg.mxu0
        %v6446 = vadd.f32 %v6379, %v6440
        %v6447 = vadd.f32 %v6380, %v6442
        %v6448 = vadd.f32 %v6446, %v2217
        %v6449 = vadd.f32 %v6447, %v2219
        %v6452 = vcombine.low %v6448, %v6449
        %6454 = vst [vmem:[%s788] sm:$0x77] %v6452
        %p6455 = scmp.lt.s32.totalorder %s38, 1
        %s6456 = scalar_select %p6455, %s38, 1
        %s6457 = smul.addr %s6456, 2
        %s6458 = smul.addr %s6457, 4
        %s6459 = scalar_lea.vmem %s21, %s6458
        // Predicated region
        $region141: #{retinexformer_forward.1} parent=103 // pred_check
          %p6460 = pneg %p502
        $region142: #{retinexformer_forward.1} parent=103 // pred_check_branch
          %6462 = sbr.rel (%p6460) target = $region144
        $region143: #{retinexformer_forward.1} parent=103 // pred_region
          _
        $region144: #{retinexformer_forward.1} parent=103 // pred_fallthru
          _
      $region104: #{retinexformer_forward.1} parent=5 // pred_fallthru
        _
      %p6463 = scmp.le.s32.totalorder 2, %s33
      // Predicated region
      $region145: #{retinexformer_forward.1} parent=5 // pred_check
        %p6464 = pneg %p6463
      $region146: #{retinexformer_forward.1} parent=5 // pred_check_branch
        %6466 = sbr.rel (%p6464) target = $region148
      $region147: #{retinexformer_forward.1} parent=5 // pred_region
        %s6467 = ssub.s32 %s33, 2
        // Predicated region
        $region149: #{retinexformer_forward.1} parent=147 // pred_check
          %p6468 = pneg %p508
        $region150: #{retinexformer_forward.1} parent=147 // pred_check_branch
          %6470 = sbr.rel (%p6468) target = $region152
        $region151: #{retinexformer_forward.1} parent=147 // pred_region
          %p6471 = scmp.lt.s32.totalorder %s39, 1
          %s6472 = scalar_select %p6471, %s39, 1
          %s6473 = smul.addr %s6472, 2
          %s6474 = smul.addr %s6473, 4
          %s6475 = scalar_lea.vmem %s21, %s6474
        $region152: #{retinexformer_forward.1} parent=147 // pred_fallthru
          _
      $region148: #{retinexformer_forward.1} parent=5 // pred_fallthru
        _
    $region6: #{retinexformer_forward.1} parent=1 // loop_footer
      %s37 = sadd.s32 1, %s33
    $region7: #{retinexformer_forward.1} parent=1 // loop_footer_branch
      %32 = sbr.rel target = $region3
    $region8: #{retinexformer_forward.1} parent=1 // loop_exit
      _
    %6476 = vsyncpa [#allocation4], 1
    %s6477 = scalar_lea.sflag [#allocation4], 1
    %6478 = vsyncpa %s6477, 1
    %6479 = vsyncpa [#allocation6], 1
    %6480 = vsyncpa [#allocation9], 1
    %6481 = vsyncpa [#allocation12], 1
    %6482 = vsyncpa [#allocation15], 1

</llo_original>
